<compile_context>
chip_gen: v5e
topology: v5e:2x2
jax: 0.10.0
libtpu: 0.0.40
codegen_flags: <defaults>
</compile_context>

<pallas_src>
import jax
import jax.numpy as jnp
from jax.experimental import pallas as pl
from jax.experimental.pallas import tpu as pltpu


# ----------------------------------------------------------------------------
# Generation-aware knobs
# ----------------------------------------------------------------------------
_VMEM_LIMIT = None
_WIDE_MXU = None


def _vmem_limit_bytes():
    """~75% of per-core VMEM (≈48 MiB on v7x, capped at 100 MiB on v5e/v6e)."""
    global _VMEM_LIMIT
    if _VMEM_LIMIT is None:
        try:
            cap = int(pltpu.get_tpu_info().vmem_capacity_bytes)
        except Exception:  # pragma: no cover - conservative fallback
            cap = 64 * 1024 * 1024
        _VMEM_LIMIT = min((cap * 3) // 4, 100 * 1024 * 1024)
    return _VMEM_LIMIT


def _wide_mxu():
    """True on 256-wide-MXU generations (v6e / v7x); False on v5e and older."""
    global _WIDE_MXU
    if _WIDE_MXU is None:
        try:
            kind = jax.devices()[0].device_kind.lower()
            _WIDE_MXU = not any(t in kind for t in ("v2", "v3", "v4", "v5"))
        except Exception:  # pragma: no cover
            _WIDE_MXU = False
    return _WIDE_MXU


# ----------------------------------------------------------------------------
# Pallas kernel: fused  Y = act(BN(X @ W (+ b)))   with (M, C, K) grid
# ----------------------------------------------------------------------------
def _make_fused_kernel(*, has_bias, use_bn, act, slope, eps, m_size, use_acc):
    inv_m = 1.0 / float(m_size)

    def epilogue(y, b_ref, g_ref, bt_ref, o_ref):
        if has_bias:
            y = y + b_ref[...]
        if use_bn:
            # Training-mode batch stats (biased variance) over the full M axis.
            s1 = jnp.sum(y, axis=0, keepdims=True)
            s2 = jnp.sum(y * y, axis=0, keepdims=True)
            mean = s1 * inv_m
            var = jnp.maximum(s2 * inv_m - mean * mean, 0.0)
            y = (y - mean) * jax.lax.rsqrt(var + eps) * g_ref[...] + bt_ref[...]
        if act == "lrelu":
            y = jnp.where(y >= 0, y, slope * y)
        elif act == "sigmoid":
            y = jax.nn.sigmoid(y)
        o_ref[...] = y.astype(o_ref.dtype)

    if use_acc:
        def kernel(*refs):
            it = iter(refs)
            x_ref = next(it)                        # (tm, tk)  bf16
            w_ref = next(it)                        # (tk, tc)  bf16
            b_ref = next(it) if has_bias else None  # (1, tc)   f32
            g_ref = next(it) if use_bn else None    # (1, tc)   f32
            bt_ref = next(it) if use_bn else None   # (1, tc)   f32
            o_ref = next(it)                        # (tm, tc)
            acc_ref = next(it)                      # (tm, tc)  f32 scratch

            k = pl.program_id(2)

            @pl.when(k == 0)
            def _init():
                acc_ref[...] = jnp.zeros_like(acc_ref)

            acc_ref[...] += jnp.dot(x_ref[...], w_ref[...],
                                    preferred_element_type=jnp.float32)

            @pl.when(k == pl.num_programs(2) - 1)
            def _finalize():
                epilogue(acc_ref[...], b_ref, g_ref, bt_ref, o_ref)
    else:
        # Single reduction step: no accumulator round-trip, dot -> epilogue.
        def kernel(*refs):
            it = iter(refs)
            x_ref = next(it)
            w_ref = next(it)
            b_ref = next(it) if has_bias else None
            g_ref = next(it) if use_bn else None
            bt_ref = next(it) if use_bn else None
            o_ref = next(it)
            y = jnp.dot(x_ref[...], w_ref[...],
                        preferred_element_type=jnp.float32)
            epilogue(y, b_ref, g_ref, bt_ref, o_ref)

    return kernel


def fused_matmul_bn_act(x, w, *, bias=None, gamma=None, beta=None,
                        act="lrelu", slope=0.2, eps=1e-5,
                        out_dtype=jnp.bfloat16):
    """x: (M, K) bf16, w: (K, C) bf16, bias/gamma/beta: (1, C) f32 or None."""
    M, K = x.shape
    C = w.shape[1]
    has_bias = bias is not None
    use_bn = gamma is not None

    # Output-channel tile: 256 fills the v6e/v7x MXU; 128 is the exact fit on
    # v5e (and for the 128-channel layers).
    if C % 256 == 0 and _wide_mxu():
        tc = 256
    elif C % 128 == 0:
        tc = 128
    else:
        tc = C
    # Reduction tile: 512 gives nk>=4 pipelined steps on the big-K layers.
    tk = 512 if (K > 512 and K % 512 == 0) else K
    # M tile: BN needs full-M stats in-kernel, so only tile M for non-BN layers.
    tm = M
    if not use_bn:
        for cand in (1024, 512, 256, 128):
            if M > cand and M % cand == 0:
                tm = cand
                break
    nm, nc, nk = M // tm, C // tc, K // tk
    use_acc = nk > 1

    operands = [x, w]
    in_specs = [
        pl.BlockSpec((tm, tk), lambda m, c, k: (m, k)),
        pl.BlockSpec((tk, tc), lambda m, c, k: (k, c)),
    ]
    if has_bias:
        operands.append(bias)
        in_specs.append(pl.BlockSpec((1, tc), lambda m, c, k: (0, c)))
    if use_bn:
        operands += [gamma, beta]
        in_specs += [pl.BlockSpec((1, tc), lambda m, c, k: (0, c)),
                     pl.BlockSpec((1, tc), lambda m, c, k: (0, c))]

    kernel = _make_fused_kernel(has_bias=has_bias, use_bn=use_bn, act=act,
                                slope=slope, eps=eps, m_size=M,
                                use_acc=use_acc)
    scratch = [pltpu.VMEM((tm, tc), jnp.float32)] if use_acc else []

    return pl.pallas_call(
        kernel,
        out_shape=jax.ShapeDtypeStruct((M, C), out_dtype),
        grid=(nm, nc, nk),
        in_specs=in_specs,
        out_specs=pl.BlockSpec((tm, tc), lambda m, c, k: (m, c)),
        scratch_shapes=scratch,
        compiler_params=pltpu.CompilerParams(
            dimension_semantics=("parallel", "parallel", "arbitrary"),
            vmem_limit_bytes=_vmem_limit_bytes()),
    )(*operands)


# ----------------------------------------------------------------------------
# Pallas kernel: conv5 (Cout=1) as a tiled VPU multiply + reduce + sigmoid
# ----------------------------------------------------------------------------
def _rowdot_sigmoid_kernel(x_ref, w_ref, o_ref, acc_ref):
    k = pl.program_id(1)

    @pl.when(k == 0)
    def _init():
        acc_ref[...] = jnp.zeros_like(acc_ref)

    x = x_ref[...].astype(jnp.float32)
    w = w_ref[...].astype(jnp.float32)
    acc_ref[...] += jnp.sum(x * w, axis=-1, keepdims=True)

    @pl.when(k == pl.num_programs(1) - 1)
    def _finalize():
        o_ref[...] = jax.nn.sigmoid(acc_ref[...])


def rowdot_sigmoid(x, w_row):
    """x: (M, K) bf16, w_row: (1, K) bf16 -> sigmoid(x @ w_row.T): (M, 1) f32."""
    M, K = x.shape
    tm = M
    for cand in (512, 256, 128):
        if M > cand and M % cand == 0:
            tm = cand
            break
    tk = 2048 if (K > 2048 and K % 2048 == 0) else K
    nm, nk = M // tm, K // tk
    return pl.pallas_call(
        _rowdot_sigmoid_kernel,
        out_shape=jax.ShapeDtypeStruct((M, 1), jnp.float32),
        grid=(nm, nk),
        in_specs=[pl.BlockSpec((tm, tk), lambda m, k: (m, k)),
                  pl.BlockSpec((1, tk), lambda m, k: (0, k))],
        out_specs=pl.BlockSpec((tm, 1), lambda m, k: (m, 0)),
        scratch_shapes=[pltpu.VMEM((tm, 1), jnp.float32)],
        compiler_params=pltpu.CompilerParams(
            dimension_semantics=("parallel", "arbitrary"),
            vmem_limit_bytes=_vmem_limit_bytes()),
    )(x, w_row)


# ----------------------------------------------------------------------------
# Host-side glue: transpose-free NHWC im2col, conv block, params, forward
# ----------------------------------------------------------------------------
def im2col_nhwc(x, k, stride, pad):
    """NHWC -> (N*Ho*Wo, kh*kw*Cin) patches; (kh, kw, Cin) with Cin fastest."""
    N, H, W, C = x.shape
    if pad:
        x = jnp.pad(x, ((0, 0), (pad, pad), (pad, pad), (0, 0)))
    Ho = (H + 2 * pad - k) // stride + 1
    Wo = (W + 2 * pad - k) // stride + 1
    cols = jnp.concatenate(
        [x[:, i:i + stride * Ho:stride, j:j + stride * Wo:stride, :]
         for i in range(k) for j in range(k)], axis=-1)      # (N,Ho,Wo,k*k*C)
    return cols.reshape(N * Ho * Wo, k * k * C), Ho, Wo


def conv_block(x_nhwc, wmat, gamma=None, beta=None, *, k=4, stride=2, pad=1,
               act="lrelu"):
    """x_nhwc: (N,H,W,Cin) bf16, wmat: (k*k*Cin, Cout) bf16 (pre-reformatted)."""
    N = x_nhwc.shape[0]
    Cout = wmat.shape[1]
    cols, Ho, Wo = im2col_nhwc(x_nhwc, k, stride, pad)
    y = fused_matmul_bn_act(cols, wmat, gamma=gamma, beta=beta, act=act,
                            out_dtype=jnp.bfloat16)
    return y.reshape(N, Ho, Wo, Cout)


def init_params(key, embed_dim=32, projected_embed_dim=128, ndf=64):
    """Parameters in the original PyTorch layouts (OIHW convs, (out,in) Linear)."""
    ks = jax.random.split(key, 8)
    n = lambda k, s: (0.02 * jax.random.normal(k, s)).astype(jnp.float32)
    return {
        "conv1_w": n(ks[0], (ndf, 3, 4, 4)),
        "conv2_w": n(ks[1], (ndf * 2, ndf, 4, 4)),
        "bn2_g": jnp.ones((ndf * 2,), jnp.float32),
        "bn2_b": jnp.zeros((ndf * 2,), jnp.float32),
        "conv3_w": n(ks[2], (ndf * 4, ndf * 2, 4, 4)),
        "bn3_g": jnp.ones((ndf * 4,), jnp.float32),
        "bn3_b": jnp.zeros((ndf * 4,), jnp.float32),
        "conv4_w": n(ks[3], (ndf * 8, ndf * 4, 4, 4)),
        "bn4_g": jnp.ones((ndf * 8,), jnp.float32),
        "bn4_b": jnp.zeros((ndf * 8,), jnp.float32),
        "lin_w": n(ks[4], (projected_embed_dim, embed_dim)),
        "lin_b": jnp.zeros((projected_embed_dim,), jnp.float32),
        "bn1d_g": jnp.ones((projected_embed_dim,), jnp.float32),
        "bn1d_b": jnp.zeros((projected_embed_dim,), jnp.float32),
        "conv5_w": n(ks[5], (1, ndf * 8 + projected_embed_dim, 4, 4)),
    }


def prepare_params(params, *, ndf=64):
    """One-time weight reformatting (pad / transpose / flatten / bf16 cast),
    hoisted out of the per-call forward pass."""
    def conv_w(w_oihw):
        kh, kw = w_oihw.shape[2], w_oihw.shape[3]
        cin, cout = w_oihw.shape[1], w_oihw.shape[0]
        # OIHW -> (kh, kw, Cin, Cout) -> (kh*kw*Cin, Cout): matches im2col order.
        return (w_oihw.transpose(2, 3, 1, 0)
                .reshape(kh * kw * cin, cout).astype(jnp.bfloat16))

    # conv1: pad Cin 3->8 (K=128, lane-dense patches) and Cout 64->128
    # (lane-dense output stores); all padded entries are zero => bit-exact.
    w1 = jnp.pad(params["conv1_w"], ((0, ndf), (0, 5), (0, 0), (0, 0)))
    # conv2: pad Cin 64->128 with zeros to match conv1's padded channels.
    w2 = jnp.pad(params["conv2_w"], ((0, 0), (0, ndf), (0, 0), (0, 0)))

    row = lambda v: v[None, :].astype(jnp.float32)
    return {
        "w1": conv_w(w1),                       # (128, 128)
        "w2": conv_w(w2),                       # (2048, 128)
        "w3": conv_w(params["conv3_w"]),        # (2048, 256)
        "w4": conv_w(params["conv4_w"]),        # (4096, 512)
        "w5_row": (params["conv5_w"].transpose(2, 3, 1, 0)
                   .reshape(1, -1).astype(jnp.bfloat16)),      # (1, 4*4*640)
        "lin_w": params["lin_w"].T.astype(jnp.bfloat16),        # (embed, P)
        "lin_b": row(params["lin_b"]),
        "bn1d_g": row(params["bn1d_g"]), "bn1d_b": row(params["bn1d_b"]),
        "bn2_g": row(params["bn2_g"]), "bn2_b": row(params["bn2_b"]),
        "bn3_g": row(params["bn3_g"]), "bn3_b": row(params["bn3_b"]),
        "bn4_g": row(params["bn4_g"]), "bn4_b": row(params["bn4_b"]),
    }


def discriminator_forward(prep, inp, embed):
    """inp: (N,3,64,64) NCHW f32, embed: (N,embed_dim). -> ((N,), (N,512,4,4))."""
    x = inp.transpose(0, 2, 3, 1).astype(jnp.bfloat16)          # NCHW -> NHWC once
    # Pad input channels 3 -> 8 so conv1's im2col K = 4*4*8 = 128 (the matching
    # weight rows are zero -> bit-exact).
    x = jnp.pad(x, ((0, 0), (0, 0), (0, 0), (0, 5)))

    # --- netD_1 (conv1 output channels padded 64->128 with zero filters) ---
    x = conv_block(x, prep["w1"], act="lrelu")                   # (N,32,32,128)
    x = conv_block(x, prep["w2"], prep["bn2_g"], prep["bn2_b"])  # (N,16,16,128)
    x = conv_block(x, prep["w3"], prep["bn3_g"], prep["bn3_b"])  # (N,8,8,256)
    x4 = conv_block(x, prep["w4"], prep["bn4_g"], prep["bn4_b"])  # (N,4,4,512)

    # --- Concat_embed projector: Linear -> BatchNorm1d -> LeakyReLU ---
    pe = fused_matmul_bn_act(
        embed.astype(jnp.bfloat16), prep["lin_w"],
        bias=prep["lin_b"], gamma=prep["bn1d_g"], beta=prep["bn1d_b"],
        act="lrelu", out_dtype=jnp.bfloat16)                      # (N, P)

    N = x4.shape[0]
    P = pe.shape[1]
    # repeat(4,4,1,1).permute(2,3,0,1) == broadcast over the 4x4 spatial grid.
    replicated = jnp.broadcast_to(pe[:, None, None, :], (N, 4, 4, P))
    hidden = jnp.concatenate([x4, replicated], axis=-1)           # (N,4,4,640)

    # --- netD_2: Conv2d(640 -> 1, 4, 1, 0) -> Sigmoid == per-row dot product ---
    cols5 = hidden.reshape(N, -1)                                 # (kh,kw,C) order
    out = rowdot_sigmoid(cols5, prep["w5_row"])                   # (N, 1) f32

    scores = out.reshape(-1)
    x_intermediate = x4.astype(jnp.float32).transpose(0, 3, 1, 2)  # (N,512,4,4)
    return scores, x_intermediate


if __name__ == "__main__":
    key = jax.random.PRNGKey(0)
    k_inp, k_emb, k_par = jax.random.split(key, 3)

    # Smallest shapes consistent with the module: image_size must be 64
    # (4 stride-2 convs -> 4x4 feature map required by Concat_embed's
    # repeat(4,4,..) and the 4x4 valid conv in netD_2).
    batch, embed_dim, projected_embed_dim = 2, 32, 128
    inp = jax.random.normal(k_inp, (batch, 3, 64, 64), jnp.float32)
    embed = jax.random.normal(k_emb, (batch, embed_dim), jnp.float32)

    params = init_params(k_par, embed_dim=embed_dim,
                         projected_embed_dim=projected_embed_dim)
    prep = prepare_params(params)          # one-time weight reformatting

    fwd = jax.jit(discriminator_forward)
    scores, x_intermediate = fwd(prep, inp, embed)
    jax.block_until_ready((scores, x_intermediate))

    assert scores.shape == (batch,)
    assert x_intermediate.shape == (batch, 512, 4, 4)
    assert bool(jnp.all(jnp.isfinite(scores)))
    assert bool(jnp.all((scores >= 0) & (scores <= 1)))
    print("KERNEL_OK")
</pallas_src>

<mosaic_0001>
module attributes {stable_mosaic.version = 11 : i64} {
  func.func @kernel(%arg0: i32, %arg1: i32, %arg2: i32, %arg3: memref<1024x128xbf16, #tpu.memory_space<vmem>>, %arg4: memref<128x128xbf16, #tpu.memory_space<vmem>>, %arg5: memref<1024x128xbf16, #tpu.memory_space<vmem>>) attributes {dimension_semantics = [#tpu.dimension_semantics<parallel>, #tpu.dimension_semantics<parallel>, #tpu.dimension_semantics<arbitrary>], iteration_bounds = array<i64: 2, 1, 1>, scalar_prefetch = 0 : i64, scratch_operands = 0 : i64, tpu.core_type = #tpu.core_type<tc>, window_params = [{transform_indices = @transform_0, window_bounds = array<i64: 1024, 128>}, {transform_indices = @transform_1, window_bounds = array<i64: 128, 128>}, {transform_indices = @transform_2, window_bounds = array<i64: 1024, 128>}]} {
    %c0 = arith.constant 0 : index
    %c0_0 = arith.constant 0 : index
    %0 = vector.load %arg3[%c0, %c0_0] : memref<1024x128xbf16, #tpu.memory_space<vmem>>, vector<1024x128xbf16>
    %c0_1 = arith.constant 0 : index
    %c0_2 = arith.constant 0 : index
    %1 = vector.load %arg4[%c0_1, %c0_2] : memref<128x128xbf16, #tpu.memory_space<vmem>>, vector<128x128xbf16>
    %cst = arith.constant dense<0.000000e+00> : vector<1024x128xf32>
    %2 = tpu.matmul %0, %1, %cst {dimension_numbers = #tpu.dot_dimension_numbers<[1], [0], [0], [1], [0, 0, 1, 1], [], []>} : vector<1024x128xbf16>, vector<128x128xbf16>, vector<1024x128xf32> -> vector<1024x128xf32>
    %cst_3 = arith.constant 0.000000e+00 : f32
    %3 = vector.broadcast %cst_3 : f32 to vector<1024x128xf32>
    %4 = arith.cmpf oge, %2, %3 : vector<1024x128xf32>
    %cst_4 = arith.constant 2.000000e-01 : f32
    %5 = vector.broadcast %cst_4 : f32 to vector<1024x128xf32>
    %6 = arith.mulf %5, %2 : vector<1024x128xf32>
    %7 = arith.select %4, %2, %6 : vector<1024x128xi1>, vector<1024x128xf32>
    %8 = arith.truncf %7 : vector<1024x128xf32> to vector<1024x128xbf16>
    %c0_5 = arith.constant 0 : index
    %c0_6 = arith.constant 0 : index
    %9 = vector.load %arg5[%c0_5, %c0_6] : memref<1024x128xbf16, #tpu.memory_space<vmem>>, vector<1024x128xbf16>
    tpu.vector_store %arg5[%c0_5, %c0_6], %8 {strides = array<i32>} : memref<1024x128xbf16, #tpu.memory_space<vmem>>, vector<1024x128xbf16>,
    return
  }
  func.func @transform_0(%arg0: i32, %arg1: i32, %arg2: i32) -> (i32, i32) {
    %c0_i32 = arith.constant 0 : i32
    return %arg0, %arg2 : i32, i32
  }
  func.func @transform_1(%arg0: i32, %arg1: i32, %arg2: i32) -> (i32, i32) {
    %c0_i32 = arith.constant 0 : i32
    return %arg2, %arg1 : i32, i32
  }
  func.func @transform_2(%arg0: i32, %arg1: i32, %arg2: i32) -> (i32, i32) {
    %c0_i32 = arith.constant 0 : i32
    return %arg0, %arg1 : i32, i32
  }
}

module attributes {stable_mosaic.version = 11 : i64} {
  func.func @kernel(%arg0: i32, %arg1: i32, %arg2: i32, %arg3: memref<512x512xbf16, #tpu.memory_space<vmem>>, %arg4: memref<512x128xbf16, #tpu.memory_space<vmem>>, %arg5: memref<1x128xf32, #tpu.memory_space<vmem>>, %arg6: memref<1x128xf32, #tpu.memory_space<vmem>>, %arg7: memref<512x128xbf16, #tpu.memory_space<vmem>>, %arg8: memref<512x128xf32, #tpu.memory_space<vmem>>) attributes {dimension_semantics = [#tpu.dimension_semantics<parallel>, #tpu.dimension_semantics<parallel>, #tpu.dimension_semantics<arbitrary>], iteration_bounds = array<i64: 1, 1, 4>, scalar_prefetch = 0 : i64, scratch_operands = 1 : i64, tpu.core_type = #tpu.core_type<tc>, window_params = [{transform_indices = @transform_0, window_bounds = array<i64: 512, 512>}, {transform_indices = @transform_1, window_bounds = array<i64: 512, 128>}, {transform_indices = @transform_2, window_bounds = array<i64: 1, 128>}, {transform_indices = @transform_3, window_bounds = array<i64: 1, 128>}, {transform_indices = @transform_4, window_bounds = array<i64: 512, 128>}]} {
    %c0_i32 = arith.constant 0 : i32
    %0 = arith.cmpi eq, %arg2, %c0_i32 : i32
    %1 = arith.extui %0 : i1 to i32
    %c0_i32_0 = arith.constant 0 : i32
    %2 = arith.cmpi ne, %1, %c0_i32_0 : i32
    scf.if %2 {
      %cst_9 = arith.constant 0.000000e+00 : f32
      %12 = vector.broadcast %cst_9 : f32 to vector<512x128xf32>
      %c0_10 = arith.constant 0 : index
      %c0_11 = arith.constant 0 : index
      %13 = vector.load %arg8[%c0_10, %c0_11] : memref<512x128xf32, #tpu.memory_space<vmem>>, vector<512x128xf32>
      tpu.vector_store %arg8[%c0_10, %c0_11], %12 {strides = array<i32>} : memref<512x128xf32, #tpu.memory_space<vmem>>, vector<512x128xf32>,
    } else {
    }
    %c0 = arith.constant 0 : index
    %c0_1 = arith.constant 0 : index
    %3 = vector.load %arg8[%c0, %c0_1] : memref<512x128xf32, #tpu.memory_space<vmem>>, vector<512x128xf32>
    %c0_2 = arith.constant 0 : index
    %c0_3 = arith.constant 0 : index
    %4 = vector.load %arg3[%c0_2, %c0_3] : memref<512x512xbf16, #tpu.memory_space<vmem>>, vector<512x512xbf16>
    %c0_4 = arith.constant 0 : index
    %c0_5 = arith.constant 0 : index
    %5 = vector.load %arg4[%c0_4, %c0_5] : memref<512x128xbf16, #tpu.memory_space<vmem>>, vector<512x128xbf16>
    %cst = arith.constant dense<0.000000e+00> : vector<512x128xf32>
    %6 = tpu.matmul %4, %5, %cst {dimension_numbers = #tpu.dot_dimension_numbers<[1], [0], [0], [1], [0, 0, 1, 1], [], []>} : vector<512x512xbf16>, vector<512x128xbf16>, vector<512x128xf32> -> vector<512x128xf32>
    %7 = arith.addf %3, %6 : vector<512x128xf32>
    %c0_6 = arith.constant 0 : index
    %c0_7 = arith.constant 0 : index
    %8 = vector.load %arg8[%c0_6, %c0_7] : memref<512x128xf32, #tpu.memory_space<vmem>>, vector<512x128xf32>
    tpu.vector_store %arg8[%c0_6, %c0_7], %7 {strides = array<i32>} : memref<512x128xf32, #tpu.memory_space<vmem>>, vector<512x128xf32>,
    %c3_i32 = arith.constant 3 : i32
    %9 = arith.cmpi eq, %arg2, %c3_i32 : i32
    %10 = arith.extui %9 : i1 to i32
    %c0_i32_8 = arith.constant 0 : i32
    %11 = arith.cmpi ne, %10, %c0_i32_8 : i32
    scf.if %11 {
      %c0_9 = arith.constant 0 : index
      %c0_10 = arith.constant 0 : index
      %12 = vector.load %arg8[%c0_9, %c0_10] : memref<512x128xf32, #tpu.memory_space<vmem>>, vector<512x128xf32>
      %cst_11 = arith.constant dense<0.000000e+00> : vector<128xf32>
      %13 = vector.multi_reduction <add>, %12, %cst_11 [0] : vector<512x128xf32> to vector<128xf32>
      %14 = vector.shape_cast %13 : vector<128xf32> to vector<1x128xf32>
      %15 = arith.mulf %12, %12 : vector<512x128xf32>
      %cst_12 = arith.constant dense<0.000000e+00> : vector<128xf32>
      %16 = vector.multi_reduction <add>, %15, %cst_12 [0] : vector<512x128xf32> to vector<128xf32>
      %17 = vector.shape_cast %16 : vector<128xf32> to vector<1x128xf32>
      %cst_13 = arith.constant 0.001953125 : f32
      %18 = vector.broadcast %cst_13 : f32 to vector<1x128xf32>
      %19 = arith.mulf %14, %18 : vector<1x128xf32>
      %cst_14 = arith.constant 0.001953125 : f32
      %20 = vector.broadcast %cst_14 : f32 to vector<1x128xf32>
      %21 = arith.mulf %17, %20 : vector<1x128xf32>
      %22 = arith.mulf %19, %19 : vector<1x128xf32>
      %23 = arith.subf %21, %22 : vector<1x128xf32>
      %cst_15 = arith.constant 0.000000e+00 : f32
      %24 = vector.broadcast %cst_15 : f32 to vector<1x128xf32>
      %25 = arith.maximumf %23, %24 : vector<1x128xf32>
      %26 = vector.broadcast %19 : vector<1x128xf32> to vector<512x128xf32>
      %27 = arith.subf %12, %26 : vector<512x128xf32>
      %cst_16 = arith.constant 9.99999974E-6 : f32
      %28 = vector.broadcast %cst_16 : f32 to vector<1x128xf32>
      %29 = arith.addf %25, %28 : vector<1x128xf32>
      %30 = math.rsqrt %29 : vector<1x128xf32>
      %31 = vector.broadcast %30 : vector<1x128xf32> to vector<512x128xf32>
      %32 = arith.mulf %27, %31 : vector<512x128xf32>
      %c0_17 = arith.constant 0 : index
      %c0_18 = arith.constant 0 : index
      %33 = vector.load %arg5[%c0_17, %c0_18] : memref<1x128xf32, #tpu.memory_space<vmem>>, vector<1x128xf32>
      %34 = vector.broadcast %33 : vector<1x128xf32> to vector<512x128xf32>
      %35 = arith.mulf %32, %34 : vector<512x128xf32>
      %c0_19 = arith.constant 0 : index
      %c0_20 = arith.constant 0 : index
      %36 = vector.load %arg6[%c0_19, %c0_20] : memref<1x128xf32, #tpu.memory_space<vmem>>, vector<1x128xf32>
      %37 = vector.broadcast %36 : vector<1x128xf32> to vector<512x128xf32>
      %38 = arith.addf %35, %37 : vector<512x128xf32>
      %cst_21 = arith.constant 0.000000e+00 : f32
      %39 = vector.broadcast %cst_21 : f32 to vector<512x128xf32>
      %40 = arith.cmpf oge, %38, %39 : vector<512x128xf32>
      %cst_22 = arith.constant 2.000000e-01 : f32
      %41 = vector.broadcast %cst_22 : f32 to vector<512x128xf32>
      %42 = arith.mulf %41, %38 : vector<512x128xf32>
      %43 = arith.select %40, %38, %42 : vector<512x128xi1>, vector<512x128xf32>
      %44 = arith.truncf %43 : vector<512x128xf32> to vector<512x128xbf16>
      %c0_23 = arith.constant 0 : index
      %c0_24 = arith.constant 0 : index
      %45 = vector.load %arg7[%c0_23, %c0_24] : memref<512x128xbf16, #tpu.memory_space<vmem>>, vector<512x128xbf16>
      tpu.vector_store %arg7[%c0_23, %c0_24], %44 {strides = array<i32>} : memref<512x128xbf16, #tpu.memory_space<vmem>>, vector<512x128xbf16>,
    } else {
    }
    return
  }
  func.func @transform_0(%arg0: i32, %arg1: i32, %arg2: i32) -> (i32, i32) {
    %c0_i32 = arith.constant 0 : i32
    return %arg0, %arg2 : i32, i32
  }
  func.func @transform_1(%arg0: i32, %arg1: i32, %arg2: i32) -> (i32, i32) {
    %c0_i32 = arith.constant 0 : i32
    return %arg2, %arg1 : i32, i32
  }
  func.func @transform_2(%arg0: i32, %arg1: i32, %arg2: i32) -> (i32, i32) {
    %c0_i32 = arith.constant 0 : i32
    %c0_i32_0 = arith.constant 0 : i32
    return %c0_i32, %arg1 : i32, i32
  }
  func.func @transform_3(%arg0: i32, %arg1: i32, %arg2: i32) -> (i32, i32) {
    %c0_i32 = arith.constant 0 : i32
    %c0_i32_0 = arith.constant 0 : i32
    return %c0_i32, %arg1 : i32, i32
  }
  func.func @transform_4(%arg0: i32, %arg1: i32, %arg2: i32) -> (i32, i32) {
    %c0_i32 = arith.constant 0 : i32
    return %arg0, %arg1 : i32, i32
  }
}

module attributes {stable_mosaic.version = 11 : i64} {
  func.func @kernel(%arg0: i32, %arg1: i32, %arg2: i32, %arg3: memref<128x512xbf16, #tpu.memory_space<vmem>>, %arg4: memref<512x256xbf16, #tpu.memory_space<vmem>>, %arg5: memref<1x256xf32, #tpu.memory_space<vmem>>, %arg6: memref<1x256xf32, #tpu.memory_space<vmem>>, %arg7: memref<128x256xbf16, #tpu.memory_space<vmem>>, %arg8: memref<128x256xf32, #tpu.memory_space<vmem>>) attributes {dimension_semantics = [#tpu.dimension_semantics<parallel>, #tpu.dimension_semantics<parallel>, #tpu.dimension_semantics<arbitrary>], iteration_bounds = array<i64: 1, 1, 4>, scalar_prefetch = 0 : i64, scratch_operands = 1 : i64, tpu.core_type = #tpu.core_type<tc>, window_params = [{transform_indices = @transform_0, window_bounds = array<i64: 128, 512>}, {transform_indices = @transform_1, window_bounds = array<i64: 512, 256>}, {transform_indices = @transform_2, window_bounds = array<i64: 1, 256>}, {transform_indices = @transform_3, window_bounds = array<i64: 1, 256>}, {transform_indices = @transform_4, window_bounds = array<i64: 128, 256>}]} {
    %c0_i32 = arith.constant 0 : i32
    %0 = arith.cmpi eq, %arg2, %c0_i32 : i32
    %1 = arith.extui %0 : i1 to i32
    %c0_i32_0 = arith.constant 0 : i32
    %2 = arith.cmpi ne, %1, %c0_i32_0 : i32
    scf.if %2 {
      %cst_9 = arith.constant 0.000000e+00 : f32
      %12 = vector.broadcast %cst_9 : f32 to vector<128x256xf32>
      %c0_10 = arith.constant 0 : index
      %c0_11 = arith.constant 0 : index
      %13 = vector.load %arg8[%c0_10, %c0_11] : memref<128x256xf32, #tpu.memory_space<vmem>>, vector<128x256xf32>
      tpu.vector_store %arg8[%c0_10, %c0_11], %12 {strides = array<i32>} : memref<128x256xf32, #tpu.memory_space<vmem>>, vector<128x256xf32>,
    } else {
    }
    %c0 = arith.constant 0 : index
    %c0_1 = arith.constant 0 : index
    %3 = vector.load %arg8[%c0, %c0_1] : memref<128x256xf32, #tpu.memory_space<vmem>>, vector<128x256xf32>
    %c0_2 = arith.constant 0 : index
    %c0_3 = arith.constant 0 : index
    %4 = vector.load %arg3[%c0_2, %c0_3] : memref<128x512xbf16, #tpu.memory_space<vmem>>, vector<128x512xbf16>
    %c0_4 = arith.constant 0 : index
    %c0_5 = arith.constant 0 : index
    %5 = vector.load %arg4[%c0_4, %c0_5] : memref<512x256xbf16, #tpu.memory_space<vmem>>, vector<512x256xbf16>
    %cst = arith.constant dense<0.000000e+00> : vector<128x256xf32>
    %6 = tpu.matmul %4, %5, %cst {dimension_numbers = #tpu.dot_dimension_numbers<[1], [0], [0], [1], [0, 0, 1, 1], [], []>} : vector<128x512xbf16>, vector<512x256xbf16>, vector<128x256xf32> -> vector<128x256xf32>
    %7 = arith.addf %3, %6 : vector<128x256xf32>
    %c0_6 = arith.constant 0 : index
    %c0_7 = arith.constant 0 : index
    %8 = vector.load %arg8[%c0_6, %c0_7] : memref<128x256xf32, #tpu.memory_space<vmem>>, vector<128x256xf32>
    tpu.vector_store %arg8[%c0_6, %c0_7], %7 {strides = array<i32>} : memref<128x256xf32, #tpu.memory_space<vmem>>, vector<128x256xf32>,
    %c3_i32 = arith.constant 3 : i32
    %9 = arith.cmpi eq, %arg2, %c3_i32 : i32
    %10 = arith.extui %9 : i1 to i32
    %c0_i32_8 = arith.constant 0 : i32
    %11 = arith.cmpi ne, %10, %c0_i32_8 : i32
    scf.if %11 {
      %c0_9 = arith.constant 0 : index
      %c0_10 = arith.constant 0 : index
      %12 = vector.load %arg8[%c0_9, %c0_10] : memref<128x256xf32, #tpu.memory_space<vmem>>, vector<128x256xf32>
      %cst_11 = arith.constant dense<0.000000e+00> : vector<256xf32>
      %13 = vector.multi_reduction <add>, %12, %cst_11 [0] : vector<128x256xf32> to vector<256xf32>
      %14 = vector.shape_cast %13 : vector<256xf32> to vector<1x256xf32>
      %15 = arith.mulf %12, %12 : vector<128x256xf32>
      %cst_12 = arith.constant dense<0.000000e+00> : vector<256xf32>
      %16 = vector.multi_reduction <add>, %15, %cst_12 [0] : vector<128x256xf32> to vector<256xf32>
      %17 = vector.shape_cast %16 : vector<256xf32> to vector<1x256xf32>
      %cst_13 = arith.constant 7.812500e-03 : f32
      %18 = vector.broadcast %cst_13 : f32 to vector<1x256xf32>
      %19 = arith.mulf %14, %18 : vector<1x256xf32>
      %cst_14 = arith.constant 7.812500e-03 : f32
      %20 = vector.broadcast %cst_14 : f32 to vector<1x256xf32>
      %21 = arith.mulf %17, %20 : vector<1x256xf32>
      %22 = arith.mulf %19, %19 : vector<1x256xf32>
      %23 = arith.subf %21, %22 : vector<1x256xf32>
      %cst_15 = arith.constant 0.000000e+00 : f32
      %24 = vector.broadcast %cst_15 : f32 to vector<1x256xf32>
      %25 = arith.maximumf %23, %24 : vector<1x256xf32>
      %26 = vector.broadcast %19 : vector<1x256xf32> to vector<128x256xf32>
      %27 = arith.subf %12, %26 : vector<128x256xf32>
      %cst_16 = arith.constant 9.99999974E-6 : f32
      %28 = vector.broadcast %cst_16 : f32 to vector<1x256xf32>
      %29 = arith.addf %25, %28 : vector<1x256xf32>
      %30 = math.rsqrt %29 : vector<1x256xf32>
      %31 = vector.broadcast %30 : vector<1x256xf32> to vector<128x256xf32>
      %32 = arith.mulf %27, %31 : vector<128x256xf32>
      %c0_17 = arith.constant 0 : index
      %c0_18 = arith.constant 0 : index
      %33 = vector.load %arg5[%c0_17, %c0_18] : memref<1x256xf32, #tpu.memory_space<vmem>>, vector<1x256xf32>
      %34 = vector.broadcast %33 : vector<1x256xf32> to vector<128x256xf32>
      %35 = arith.mulf %32, %34 : vector<128x256xf32>
      %c0_19 = arith.constant 0 : index
      %c0_20 = arith.constant 0 : index
      %36 = vector.load %arg6[%c0_19, %c0_20] : memref<1x256xf32, #tpu.memory_space<vmem>>, vector<1x256xf32>
      %37 = vector.broadcast %36 : vector<1x256xf32> to vector<128x256xf32>
      %38 = arith.addf %35, %37 : vector<128x256xf32>
      %cst_21 = arith.constant 0.000000e+00 : f32
      %39 = vector.broadcast %cst_21 : f32 to vector<128x256xf32>
      %40 = arith.cmpf oge, %38, %39 : vector<128x256xf32>
      %cst_22 = arith.constant 2.000000e-01 : f32
      %41 = vector.broadcast %cst_22 : f32 to vector<128x256xf32>
      %42 = arith.mulf %41, %38 : vector<128x256xf32>
      %43 = arith.select %40, %38, %42 : vector<128x256xi1>, vector<128x256xf32>
      %44 = arith.truncf %43 : vector<128x256xf32> to vector<128x256xbf16>
      %c0_23 = arith.constant 0 : index
      %c0_24 = arith.constant 0 : index
      %45 = vector.load %arg7[%c0_23, %c0_24] : memref<128x256xbf16, #tpu.memory_space<vmem>>, vector<128x256xbf16>
      tpu.vector_store %arg7[%c0_23, %c0_24], %44 {strides = array<i32>} : memref<128x256xbf16, #tpu.memory_space<vmem>>, vector<128x256xbf16>,
    } else {
    }
    return
  }
  func.func @transform_0(%arg0: i32, %arg1: i32, %arg2: i32) -> (i32, i32) {
    %c0_i32 = arith.constant 0 : i32
    return %arg0, %arg2 : i32, i32
  }
  func.func @transform_1(%arg0: i32, %arg1: i32, %arg2: i32) -> (i32, i32) {
    %c0_i32 = arith.constant 0 : i32
    return %arg2, %arg1 : i32, i32
  }
  func.func @transform_2(%arg0: i32, %arg1: i32, %arg2: i32) -> (i32, i32) {
    %c0_i32 = arith.constant 0 : i32
    %c0_i32_0 = arith.constant 0 : i32
    return %c0_i32, %arg1 : i32, i32
  }
  func.func @transform_3(%arg0: i32, %arg1: i32, %arg2: i32) -> (i32, i32) {
    %c0_i32 = arith.constant 0 : i32
    %c0_i32_0 = arith.constant 0 : i32
    return %c0_i32, %arg1 : i32, i32
  }
  func.func @transform_4(%arg0: i32, %arg1: i32, %arg2: i32) -> (i32, i32) {
    %c0_i32 = arith.constant 0 : i32
    return %arg0, %arg1 : i32, i32
  }
}

module attributes {stable_mosaic.version = 11 : i64} {
  func.func @kernel(%arg0: i32, %arg1: i32, %arg2: i32, %arg3: memref<2x32xbf16, #tpu.memory_space<vmem>>, %arg4: memref<32x128xbf16, #tpu.memory_space<vmem>>, %arg5: memref<1x128xf32, #tpu.memory_space<vmem>>, %arg6: memref<1x128xf32, #tpu.memory_space<vmem>>, %arg7: memref<1x128xf32, #tpu.memory_space<vmem>>, %arg8: memref<2x128xbf16, #tpu.memory_space<vmem>>) attributes {dimension_semantics = [#tpu.dimension_semantics<parallel>, #tpu.dimension_semantics<parallel>, #tpu.dimension_semantics<arbitrary>], iteration_bounds = array<i64: 1, 1, 1>, scalar_prefetch = 0 : i64, scratch_operands = 0 : i64, tpu.core_type = #tpu.core_type<tc>, window_params = [{transform_indices = @transform_0, window_bounds = array<i64: 2, 32>}, {transform_indices = @transform_1, window_bounds = array<i64: 32, 128>}, {transform_indices = @transform_2, window_bounds = array<i64: 1, 128>}, {transform_indices = @transform_3, window_bounds = array<i64: 1, 128>}, {transform_indices = @transform_4, window_bounds = array<i64: 1, 128>}, {transform_indices = @transform_5, window_bounds = array<i64: 2, 128>}]} {
    %c0 = arith.constant 0 : index
    %c0_0 = arith.constant 0 : index
    %0 = vector.load %arg3[%c0, %c0_0] : memref<2x32xbf16, #tpu.memory_space<vmem>>, vector<2x32xbf16>
    %c0_1 = arith.constant 0 : index
    %c0_2 = arith.constant 0 : index
    %1 = vector.load %arg4[%c0_1, %c0_2] : memref<32x128xbf16, #tpu.memory_space<vmem>>, vector<32x128xbf16>
    %cst = arith.constant dense<0.000000e+00> : vector<2x128xf32>
    %2 = tpu.matmul %0, %1, %cst {dimension_numbers = #tpu.dot_dimension_numbers<[1], [0], [0], [1], [0, 0, 1, 1], [], []>} : vector<2x32xbf16>, vector<32x128xbf16>, vector<2x128xf32> -> vector<2x128xf32>
    %c0_3 = arith.constant 0 : index
    %c0_4 = arith.constant 0 : index
    %3 = vector.load %arg5[%c0_3, %c0_4] : memref<1x128xf32, #tpu.memory_space<vmem>>, vector<1x128xf32>
    %4 = vector.broadcast %3 : vector<1x128xf32> to vector<2x128xf32>
    %5 = arith.addf %2, %4 : vector<2x128xf32>
    %cst_5 = arith.constant dense<0.000000e+00> : vector<128xf32>
    %6 = vector.multi_reduction <add>, %5, %cst_5 [0] : vector<2x128xf32> to vector<128xf32>
    %7 = vector.shape_cast %6 : vector<128xf32> to vector<1x128xf32>
    %8 = arith.mulf %5, %5 : vector<2x128xf32>
    %cst_6 = arith.constant dense<0.000000e+00> : vector<128xf32>
    %9 = vector.multi_reduction <add>, %8, %cst_6 [0] : vector<2x128xf32> to vector<128xf32>
    %10 = vector.shape_cast %9 : vector<128xf32> to vector<1x128xf32>
    %cst_7 = arith.constant 5.000000e-01 : f32
    %11 = vector.broadcast %cst_7 : f32 to vector<1x128xf32>
    %12 = arith.mulf %7, %11 : vector<1x128xf32>
    %cst_8 = arith.constant 5.000000e-01 : f32
    %13 = vector.broadcast %cst_8 : f32 to vector<1x128xf32>
    %14 = arith.mulf %10, %13 : vector<1x128xf32>
    %15 = arith.mulf %12, %12 : vector<1x128xf32>
    %16 = arith.subf %14, %15 : vector<1x128xf32>
    %cst_9 = arith.constant 0.000000e+00 : f32
    %17 = vector.broadcast %cst_9 : f32 to vector<1x128xf32>
    %18 = arith.maximumf %16, %17 : vector<1x128xf32>
    %19 = vector.broadcast %12 : vector<1x128xf32> to vector<2x128xf32>
    %20 = arith.subf %5, %19 : vector<2x128xf32>
    %cst_10 = arith.constant 9.99999974E-6 : f32
    %21 = vector.broadcast %cst_10 : f32 to vector<1x128xf32>
    %22 = arith.addf %18, %21 : vector<1x128xf32>
    %23 = math.rsqrt %22 : vector<1x128xf32>
    %24 = vector.broadcast %23 : vector<1x128xf32> to vector<2x128xf32>
    %25 = arith.mulf %20, %24 : vector<2x128xf32>
    %c0_11 = arith.constant 0 : index
    %c0_12 = arith.constant 0 : index
    %26 = vector.load %arg6[%c0_11, %c0_12] : memref<1x128xf32, #tpu.memory_space<vmem>>, vector<1x128xf32>
    %27 = vector.broadcast %26 : vector<1x128xf32> to vector<2x128xf32>
    %28 = arith.mulf %25, %27 : vector<2x128xf32>
    %c0_13 = arith.constant 0 : index
    %c0_14 = arith.constant 0 : index
    %29 = vector.load %arg7[%c0_13, %c0_14] : memref<1x128xf32, #tpu.memory_space<vmem>>, vector<1x128xf32>
    %30 = vector.broadcast %29 : vector<1x128xf32> to vector<2x128xf32>
    %31 = arith.addf %28, %30 : vector<2x128xf32>
    %cst_15 = arith.constant 0.000000e+00 : f32
    %32 = vector.broadcast %cst_15 : f32 to vector<2x128xf32>
    %33 = arith.cmpf oge, %31, %32 : vector<2x128xf32>
    %cst_16 = arith.constant 2.000000e-01 : f32
    %34 = vector.broadcast %cst_16 : f32 to vector<2x128xf32>
    %35 = arith.mulf %34, %31 : vector<2x128xf32>
    %36 = arith.select %33, %31, %35 : vector<2x128xi1>, vector<2x128xf32>
    %37 = arith.truncf %36 : vector<2x128xf32> to vector<2x128xbf16>
    %c0_17 = arith.constant 0 : index
    %c0_18 = arith.constant 0 : index
    %38 = vector.load %arg8[%c0_17, %c0_18] : memref<2x128xbf16, #tpu.memory_space<vmem>>, vector<2x128xbf16>
    tpu.vector_store %arg8[%c0_17, %c0_18], %37 {strides = array<i32>} : memref<2x128xbf16, #tpu.memory_space<vmem>>, vector<2x128xbf16>,
    return
  }
  func.func @transform_0(%arg0: i32, %arg1: i32, %arg2: i32) -> (i32, i32) {
    %c0_i32 = arith.constant 0 : i32
    return %arg0, %arg2 : i32, i32
  }
  func.func @transform_1(%arg0: i32, %arg1: i32, %arg2: i32) -> (i32, i32) {
    %c0_i32 = arith.constant 0 : i32
    return %arg2, %arg1 : i32, i32
  }
  func.func @transform_2(%arg0: i32, %arg1: i32, %arg2: i32) -> (i32, i32) {
    %c0_i32 = arith.constant 0 : i32
    %c0_i32_0 = arith.constant 0 : i32
    return %c0_i32, %arg1 : i32, i32
  }
  func.func @transform_3(%arg0: i32, %arg1: i32, %arg2: i32) -> (i32, i32) {
    %c0_i32 = arith.constant 0 : i32
    %c0_i32_0 = arith.constant 0 : i32
    return %c0_i32, %arg1 : i32, i32
  }
  func.func @transform_4(%arg0: i32, %arg1: i32, %arg2: i32) -> (i32, i32) {
    %c0_i32 = arith.constant 0 : i32
    %c0_i32_0 = arith.constant 0 : i32
    return %c0_i32, %arg1 : i32, i32
  }
  func.func @transform_5(%arg0: i32, %arg1: i32, %arg2: i32) -> (i32, i32) {
    %c0_i32 = arith.constant 0 : i32
    return %arg0, %arg1 : i32, i32
  }
}

module attributes {stable_mosaic.version = 11 : i64} {
  func.func @kernel(%arg0: i32, %arg1: i32, %arg2: i32, %arg3: memref<32x512xbf16, #tpu.memory_space<vmem>>, %arg4: memref<512x256xbf16, #tpu.memory_space<vmem>>, %arg5: memref<1x256xf32, #tpu.memory_space<vmem>>, %arg6: memref<1x256xf32, #tpu.memory_space<vmem>>, %arg7: memref<32x256xbf16, #tpu.memory_space<vmem>>, %arg8: memref<32x256xf32, #tpu.memory_space<vmem>>) attributes {dimension_semantics = [#tpu.dimension_semantics<parallel>, #tpu.dimension_semantics<parallel>, #tpu.dimension_semantics<arbitrary>], iteration_bounds = array<i64: 1, 2, 8>, scalar_prefetch = 0 : i64, scratch_operands = 1 : i64, tpu.core_type = #tpu.core_type<tc>, window_params = [{transform_indices = @transform_0, window_bounds = array<i64: 32, 512>}, {transform_indices = @transform_1, window_bounds = array<i64: 512, 256>}, {transform_indices = @transform_2, window_bounds = array<i64: 1, 256>}, {transform_indices = @transform_3, window_bounds = array<i64: 1, 256>}, {transform_indices = @transform_4, window_bounds = array<i64: 32, 256>}]} {
    %c0_i32 = arith.constant 0 : i32
    %0 = arith.cmpi eq, %arg2, %c0_i32 : i32
    %1 = arith.extui %0 : i1 to i32
    %c0_i32_0 = arith.constant 0 : i32
    %2 = arith.cmpi ne, %1, %c0_i32_0 : i32
    scf.if %2 {
      %cst_9 = arith.constant 0.000000e+00 : f32
      %12 = vector.broadcast %cst_9 : f32 to vector<32x256xf32>
      %c0_10 = arith.constant 0 : index
      %c0_11 = arith.constant 0 : index
      %13 = vector.load %arg8[%c0_10, %c0_11] : memref<32x256xf32, #tpu.memory_space<vmem>>, vector<32x256xf32>
      tpu.vector_store %arg8[%c0_10, %c0_11], %12 {strides = array<i32>} : memref<32x256xf32, #tpu.memory_space<vmem>>, vector<32x256xf32>,
    } else {
    }
    %c0 = arith.constant 0 : index
    %c0_1 = arith.constant 0 : index
    %3 = vector.load %arg8[%c0, %c0_1] : memref<32x256xf32, #tpu.memory_space<vmem>>, vector<32x256xf32>
    %c0_2 = arith.constant 0 : index
    %c0_3 = arith.constant 0 : index
    %4 = vector.load %arg3[%c0_2, %c0_3] : memref<32x512xbf16, #tpu.memory_space<vmem>>, vector<32x512xbf16>
    %c0_4 = arith.constant 0 : index
    %c0_5 = arith.constant 0 : index
    %5 = vector.load %arg4[%c0_4, %c0_5] : memref<512x256xbf16, #tpu.memory_space<vmem>>, vector<512x256xbf16>
    %cst = arith.constant dense<0.000000e+00> : vector<32x256xf32>
    %6 = tpu.matmul %4, %5, %cst {dimension_numbers = #tpu.dot_dimension_numbers<[1], [0], [0], [1], [0, 0, 1, 1], [], []>} : vector<32x512xbf16>, vector<512x256xbf16>, vector<32x256xf32> -> vector<32x256xf32>
    %7 = arith.addf %3, %6 : vector<32x256xf32>
    %c0_6 = arith.constant 0 : index
    %c0_7 = arith.constant 0 : index
    %8 = vector.load %arg8[%c0_6, %c0_7] : memref<32x256xf32, #tpu.memory_space<vmem>>, vector<32x256xf32>
    tpu.vector_store %arg8[%c0_6, %c0_7], %7 {strides = array<i32>} : memref<32x256xf32, #tpu.memory_space<vmem>>, vector<32x256xf32>,
    %c7_i32 = arith.constant 7 : i32
    %9 = arith.cmpi eq, %arg2, %c7_i32 : i32
    %10 = arith.extui %9 : i1 to i32
    %c0_i32_8 = arith.constant 0 : i32
    %11 = arith.cmpi ne, %10, %c0_i32_8 : i32
    scf.if %11 {
      %c0_9 = arith.constant 0 : index
      %c0_10 = arith.constant 0 : index
      %12 = vector.load %arg8[%c0_9, %c0_10] : memref<32x256xf32, #tpu.memory_space<vmem>>, vector<32x256xf32>
      %cst_11 = arith.constant dense<0.000000e+00> : vector<256xf32>
      %13 = vector.multi_reduction <add>, %12, %cst_11 [0] : vector<32x256xf32> to vector<256xf32>
      %14 = vector.shape_cast %13 : vector<256xf32> to vector<1x256xf32>
      %15 = arith.mulf %12, %12 : vector<32x256xf32>
      %cst_12 = arith.constant dense<0.000000e+00> : vector<256xf32>
      %16 = vector.multi_reduction <add>, %15, %cst_12 [0] : vector<32x256xf32> to vector<256xf32>
      %17 = vector.shape_cast %16 : vector<256xf32> to vector<1x256xf32>
      %cst_13 = arith.constant 3.125000e-02 : f32
      %18 = vector.broadcast %cst_13 : f32 to vector<1x256xf32>
      %19 = arith.mulf %14, %18 : vector<1x256xf32>
      %cst_14 = arith.constant 3.125000e-02 : f32
      %20 = vector.broadcast %cst_14 : f32 to vector<1x256xf32>
      %21 = arith.mulf %17, %20 : vector<1x256xf32>
      %22 = arith.mulf %19, %19 : vector<1x256xf32>
      %23 = arith.subf %21, %22 : vector<1x256xf32>
      %cst_15 = arith.constant 0.000000e+00 : f32
      %24 = vector.broadcast %cst_15 : f32 to vector<1x256xf32>
      %25 = arith.maximumf %23, %24 : vector<1x256xf32>
      %26 = vector.broadcast %19 : vector<1x256xf32> to vector<32x256xf32>
      %27 = arith.subf %12, %26 : vector<32x256xf32>
      %cst_16 = arith.constant 9.99999974E-6 : f32
      %28 = vector.broadcast %cst_16 : f32 to vector<1x256xf32>
      %29 = arith.addf %25, %28 : vector<1x256xf32>
      %30 = math.rsqrt %29 : vector<1x256xf32>
      %31 = vector.broadcast %30 : vector<1x256xf32> to vector<32x256xf32>
      %32 = arith.mulf %27, %31 : vector<32x256xf32>
      %c0_17 = arith.constant 0 : index
      %c0_18 = arith.constant 0 : index
      %33 = vector.load %arg5[%c0_17, %c0_18] : memref<1x256xf32, #tpu.memory_space<vmem>>, vector<1x256xf32>
      %34 = vector.broadcast %33 : vector<1x256xf32> to vector<32x256xf32>
      %35 = arith.mulf %32, %34 : vector<32x256xf32>
      %c0_19 = arith.constant 0 : index
      %c0_20 = arith.constant 0 : index
      %36 = vector.load %arg6[%c0_19, %c0_20] : memref<1x256xf32, #tpu.memory_space<vmem>>, vector<1x256xf32>
      %37 = vector.broadcast %36 : vector<1x256xf32> to vector<32x256xf32>
      %38 = arith.addf %35, %37 : vector<32x256xf32>
      %cst_21 = arith.constant 0.000000e+00 : f32
      %39 = vector.broadcast %cst_21 : f32 to vector<32x256xf32>
      %40 = arith.cmpf oge, %38, %39 : vector<32x256xf32>
      %cst_22 = arith.constant 2.000000e-01 : f32
      %41 = vector.broadcast %cst_22 : f32 to vector<32x256xf32>
      %42 = arith.mulf %41, %38 : vector<32x256xf32>
      %43 = arith.select %40, %38, %42 : vector<32x256xi1>, vector<32x256xf32>
      %44 = arith.truncf %43 : vector<32x256xf32> to vector<32x256xbf16>
      %c0_23 = arith.constant 0 : index
      %c0_24 = arith.constant 0 : index
      %45 = vector.load %arg7[%c0_23, %c0_24] : memref<32x256xbf16, #tpu.memory_space<vmem>>, vector<32x256xbf16>
      tpu.vector_store %arg7[%c0_23, %c0_24], %44 {strides = array<i32>} : memref<32x256xbf16, #tpu.memory_space<vmem>>, vector<32x256xbf16>,
    } else {
    }
    return
  }
  func.func @transform_0(%arg0: i32, %arg1: i32, %arg2: i32) -> (i32, i32) {
    %c0_i32 = arith.constant 0 : i32
    return %arg0, %arg2 : i32, i32
  }
  func.func @transform_1(%arg0: i32, %arg1: i32, %arg2: i32) -> (i32, i32) {
    %c0_i32 = arith.constant 0 : i32
    return %arg2, %arg1 : i32, i32
  }
  func.func @transform_2(%arg0: i32, %arg1: i32, %arg2: i32) -> (i32, i32) {
    %c0_i32 = arith.constant 0 : i32
    %c0_i32_0 = arith.constant 0 : i32
    return %c0_i32, %arg1 : i32, i32
  }
  func.func @transform_3(%arg0: i32, %arg1: i32, %arg2: i32) -> (i32, i32) {
    %c0_i32 = arith.constant 0 : i32
    %c0_i32_0 = arith.constant 0 : i32
    return %c0_i32, %arg1 : i32, i32
  }
  func.func @transform_4(%arg0: i32, %arg1: i32, %arg2: i32) -> (i32, i32) {
    %c0_i32 = arith.constant 0 : i32
    return %arg0, %arg1 : i32, i32
  }
}

module attributes {stable_mosaic.version = 11 : i64} {
  func.func @_rowdot_sigmoid_kernel(%arg0: i32, %arg1: i32, %arg2: memref<2x2048xbf16, #tpu.memory_space<vmem>>, %arg3: memref<1x2048xbf16, #tpu.memory_space<vmem>>, %arg4: memref<2x1xf32, #tpu.memory_space<vmem>>, %arg5: memref<2x1xf32, #tpu.memory_space<vmem>>) attributes {dimension_semantics = [#tpu.dimension_semantics<parallel>, #tpu.dimension_semantics<arbitrary>], iteration_bounds = array<i64: 1, 5>, scalar_prefetch = 0 : i64, scratch_operands = 1 : i64, tpu.core_type = #tpu.core_type<tc>, window_params = [{transform_indices = @transform_0, window_bounds = array<i64: 2, 2048>}, {transform_indices = @transform_1, window_bounds = array<i64: 1, 2048>}, {transform_indices = @transform_2, window_bounds = array<i64: 2, 1>}]} {
    %c0_i32 = arith.constant 0 : i32
    %0 = arith.cmpi eq, %arg1, %c0_i32 : i32
    %1 = arith.extui %0 : i1 to i32
    %c0_i32_0 = arith.constant 0 : i32
    %2 = arith.cmpi ne, %1, %c0_i32_0 : i32
    scf.if %2 {
      %cst_9 = arith.constant 0.000000e+00 : f32
      %17 = vector.broadcast %cst_9 : f32 to vector<2x1xf32>
      %c0_10 = arith.constant 0 : index
      %c0_11 = arith.constant 0 : index
      %18 = vector.load %arg5[%c0_10, %c0_11] : memref<2x1xf32, #tpu.memory_space<vmem>>, vector<2x1xf32>
      tpu.vector_store %arg5[%c0_10, %c0_11], %17 {strides = array<i32>} : memref<2x1xf32, #tpu.memory_space<vmem>>, vector<2x1xf32>,
    } else {
    }
    %c0 = arith.constant 0 : index
    %c0_1 = arith.constant 0 : index
    %3 = vector.load %arg2[%c0, %c0_1] : memref<2x2048xbf16, #tpu.memory_space<vmem>>, vector<2x2048xbf16>
    %4 = arith.extf %3 : vector<2x2048xbf16> to vector<2x2048xf32>
    %c0_2 = arith.constant 0 : index
    %c0_3 = arith.constant 0 : index
    %5 = vector.load %arg3[%c0_2, %c0_3] : memref<1x2048xbf16, #tpu.memory_space<vmem>>, vector<1x2048xbf16>
    %6 = arith.extf %5 : vector<1x2048xbf16> to vector<1x2048xf32>
    %c0_4 = arith.constant 0 : index
    %c0_5 = arith.constant 0 : index
    %7 = vector.load %arg5[%c0_4, %c0_5] : memref<2x1xf32, #tpu.memory_space<vmem>>, vector<2x1xf32>
    %8 = vector.broadcast %6 : vector<1x2048xf32> to vector<2x2048xf32>
    %9 = arith.mulf %4, %8 : vector<2x2048xf32>
    %cst = arith.constant dense<0.000000e+00> : vector<2xf32>
    %10 = vector.multi_reduction <add>, %9, %cst [1] : vector<2x2048xf32> to vector<2xf32>
    %11 = vector.shape_cast %10 : vector<2xf32> to vector<2x1xf32>
    %12 = arith.addf %7, %11 : vector<2x1xf32>
    %c0_6 = arith.constant 0 : index
    %c0_7 = arith.constant 0 : index
    %13 = vector.load %arg5[%c0_6, %c0_7] : memref<2x1xf32, #tpu.memory_space<vmem>>, vector<2x1xf32>
    tpu.vector_store %arg5[%c0_6, %c0_7], %12 {strides = array<i32>} : memref<2x1xf32, #tpu.memory_space<vmem>>, vector<2x1xf32>,
    %c4_i32 = arith.constant 4 : i32
    %14 = arith.cmpi eq, %arg1, %c4_i32 : i32
    %15 = arith.extui %14 : i1 to i32
    %c0_i32_8 = arith.constant 0 : i32
    %16 = arith.cmpi ne, %15, %c0_i32_8 : i32
    scf.if %16 {
      %c0_9 = arith.constant 0 : index
      %c0_10 = arith.constant 0 : index
      %17 = vector.load %arg5[%c0_9, %c0_10] : memref<2x1xf32, #tpu.memory_space<vmem>>, vector<2x1xf32>
      %18 = arith.negf %17 : vector<2x1xf32>
      %19 = math.exp %18 : vector<2x1xf32>
      %cst_11 = arith.constant 1.000000e+00 : f32
      %20 = vector.broadcast %cst_11 : f32 to vector<2x1xf32>
      %21 = arith.addf %20, %19 : vector<2x1xf32>
      %22 = arith.divf %20, %21 : vector<2x1xf32>
      %c0_12 = arith.constant 0 : index
      %c0_13 = arith.constant 0 : index
      %23 = vector.load %arg4[%c0_12, %c0_13] : memref<2x1xf32, #tpu.memory_space<vmem>>, vector<2x1xf32>
      tpu.vector_store %arg4[%c0_12, %c0_13], %22 {strides = array<i32>} : memref<2x1xf32, #tpu.memory_space<vmem>>, vector<2x1xf32>,
    } else {
    }
    return
  }
  func.func @transform_0(%arg0: i32, %arg1: i32) -> (i32, i32) {
    %c0_i32 = arith.constant 0 : i32
    return %arg0, %arg1 : i32, i32
  }
  func.func @transform_1(%arg0: i32, %arg1: i32) -> (i32, i32) {
    %c0_i32 = arith.constant 0 : i32
    %c0_i32_0 = arith.constant 0 : i32
    return %c0_i32, %arg1 : i32, i32
  }
  func.func @transform_2(%arg0: i32, %arg1: i32) -> (i32, i32) {
    %c0_i32 = arith.constant 0 : i32
    %c0_i32_0 = arith.constant 0 : i32
    return %arg0, %c0_i32 : i32, i32
  }
}

</mosaic_0001>

<llo_original>
// kernel: discriminator_forward.6
$region0: #{discriminator_forward.6}
  #allocation0 [shape = 'u32[]', space=smem, size = 0x4, offset = 0x4, fixed_abs, tag = 'smem constant byte address 0x4 - core index']
  #allocation1 [shape = 'u32[72,128]{1,0:T(1,128)}', space=vmem, size = 0x9000, scoped, tag = 'internal scratch']
  %s0 = inlined_call_operand.vmem [shape: bf16[2048,128], index: 0, kind: input, shape index: {}]
  %s1 = inlined_call_operand.vmem [shape: bf16[128,128], index: 1, kind: input, shape index: {}]
  %s2 = inlined_call_operand.vmem [shape: bf16[2048,128], index: 2, kind: output, shape index: {}]
  %s3 = sld [smem:[#allocation0]]
  $region41: #{discriminator_forward.6} parent=0
    _
  %s5 = ssub.s32 1, %s3
  %s6 = scalar_select 0, %s5, %s3
  loop: start=0, step=1, limit=4
  $region2: #{discriminator_forward.6} parent=0 // loop_pre_header
    _
  $region3: #{discriminator_forward.6} parent=0 // loop_header
    %s8 = sphi 0, %s12
    %p9 = scmp.ge.s32.totalorder %s8, 4
    %s15 = sphi 0, %s34
    %s16 = sphi 0, %s30
    %s17 = sphi 0, %s26
    %s18 = sphi 0, %s15
    %s19 = sphi 0, %s16
    %s20 = sphi 0, %s17
    %s21 = sphi 0, %s18
    %s22 = sphi 0, %s19
    %s23 = sphi 0, %s20
    %s39 = sphi 0, %s41
    %s42 = sphi 0, %s39
    %s43 = sphi 0, %s42
    %s59 = sphi 0, %s43
    %s67 = sphi 0, %s69
    %s70 = sphi 0, %s67
    %s71 = sphi 0, %s70
    %s87 = sphi 0, %s71
    %s95 = sphi 0, %s97
    %s98 = sphi 0, %s95
    %s99 = sphi 0, %s98
    %s115 = sphi 0, %s99
  $region4: #{discriminator_forward.6} parent=0 // loop_header_branch
    %11 = sbr.rel (%p9) target = $region8
  $region5: #{discriminator_forward.6} parent=0 // loop_body
    %s13 = ssub.s32 %s8, 1
    %s14 = ssub.s32 %s8, 2
    %s24 = sadd.s32 1, %s17
    %p25 = scmp.ge.s32.totalorder %s24, 1
    %s26 = scalar_select %p25, 0, %s24
    %s27 = sadd.s32 1, %s16
    %s28 = scalar_select %p25, %s27, %s16
    %p29 = scmp.ge.s32.totalorder %s28, 1
    %s30 = scalar_select %p29, 0, %s28
    %s31 = sadd.s32 1, %s15
    %s32 = scalar_select %p29, %s31, %s15
    %p33 = scmp.ge.s32.totalorder %s32, 2
    %s34 = scalar_select %p33, 0, %s32
    %s35 = ssub.s32 %s15, %s34
    %s36 = ssub.s32 %s17, %s26
    %s37 = sor.u32 %s35, %s36
    %p38 = scmp.eq.s32.totalorder %s37, 0
    %s40 = sadd.s32 %s39, 1
    %s41 = scalar_select %p38, %s39, %s40
    %p44 = pneg %p38
    %p45 = scmp.eq.s32.totalorder %s8, 1
    %p46 = por %p44, %p45
    %p47 = scmp.ne.s32.totalorder %s39, %s42
    %p48 = scmp.eq.s32.totalorder %s8, 0
    %p49 = por %p47, %p48
    %p50 = scmp.ne.s32.totalorder %s39, %s42
    %p51 = scmp.eq.s32.totalorder %s13, 1
    %p52 = por %p50, %p51
    %p53 = scmp.ne.s32.totalorder %s42, %s43
    %p54 = scmp.eq.s32.totalorder %s13, 0
    %p55 = por %p53, %p54
    %p56 = scmp.ne.s32.totalorder %s42, %s43
    %p57 = scmp.eq.s32.totalorder %s14, 1
    %p58 = por %p56, %p57
    %p60 = scmp.ne.s32.totalorder %s43, %s59
    %p61 = scmp.eq.s32.totalorder %s14, 0
    %p62 = por %p60, %p61
    %s63 = ssub.s32 %s17, %s26
    %s64 = ssub.s32 %s16, %s30
    %s65 = sor.u32 %s63, %s64
    %p66 = scmp.eq.s32.totalorder %s65, 0
    %s68 = sadd.s32 %s67, 1
    %s69 = scalar_select %p66, %s67, %s68
    %p72 = pneg %p66
    %p73 = scmp.eq.s32.totalorder %s8, 1
    %p74 = por %p72, %p73
    %p75 = scmp.ne.s32.totalorder %s67, %s70
    %p76 = scmp.eq.s32.totalorder %s8, 0
    %p77 = por %p75, %p76
    %p78 = scmp.ne.s32.totalorder %s67, %s70
    %p79 = scmp.eq.s32.totalorder %s13, 1
    %p80 = por %p78, %p79
    %p81 = scmp.ne.s32.totalorder %s70, %s71
    %p82 = scmp.eq.s32.totalorder %s13, 0
    %p83 = por %p81, %p82
    %p84 = scmp.ne.s32.totalorder %s70, %s71
    %p85 = scmp.eq.s32.totalorder %s14, 1
    %p86 = por %p84, %p85
    %p88 = scmp.ne.s32.totalorder %s71, %s87
    %p89 = scmp.eq.s32.totalorder %s14, 0
    %p90 = por %p88, %p89
    %s91 = ssub.s32 %s15, %s34
    %s92 = ssub.s32 %s16, %s30
    %s93 = sor.u32 %s91, %s92
    %p94 = scmp.eq.s32.totalorder %s93, 0
    %s96 = sadd.s32 %s95, 1
    %s97 = scalar_select %p94, %s95, %s96
    %p100 = pneg %p94
    %p101 = scmp.eq.s32.totalorder %s8, 1
    %p102 = por %p100, %p101
    %p103 = scmp.ne.s32.totalorder %s95, %s98
    %p104 = scmp.eq.s32.totalorder %s8, 0
    %p105 = por %p103, %p104
    %p106 = scmp.ne.s32.totalorder %s95, %s98
    %p107 = scmp.eq.s32.totalorder %s13, 1
    %p108 = por %p106, %p107
    %p109 = scmp.ne.s32.totalorder %s98, %s99
    %p110 = scmp.eq.s32.totalorder %s13, 0
    %p111 = por %p109, %p110
    %p112 = scmp.ne.s32.totalorder %s98, %s99
    %p113 = scmp.eq.s32.totalorder %s14, 1
    %p114 = por %p112, %p113
    %p116 = scmp.ne.s32.totalorder %s99, %s115
    %p117 = scmp.eq.s32.totalorder %s14, 0
    %p118 = por %p116, %p117
    %p119 = scmp.le.s32.totalorder 1, %s8
    %p120 = scmp.lt.s32.totalorder %s8, 3
    %p121 = pnand %p119, %p120
    %p122 = pneg %p121
    // Predicated region
    $region9: #{discriminator_forward.6} parent=5 // pred_check
      _
    $region10: #{discriminator_forward.6} parent=5 // pred_check_branch
      %124 = sbr.rel (%p121) target = $region12
    $region11: #{discriminator_forward.6} parent=5 // pred_region
      %s125 = ssub.s32 %s8, 1
      // Predicated region
      $region13: #{discriminator_forward.6} parent=11 // pred_check
        %p126 = pneg %p83
      $region14: #{discriminator_forward.6} parent=11 // pred_check_branch
        %128 = sbr.rel (%p126) target = $region16
      $region15: #{discriminator_forward.6} parent=11 // pred_region
        %s129 = smul.u32 16, %s20
        %p130 = scmp.lt.s32.totalorder %s129, 15
        %s131 = scalar_select %p130, %s129, 15
        %p132 = scmp.lt.s32.totalorder %s19, 0
        %s133 = scalar_select %p132, %s19, 0
        %s134 = sadd.s32 %s133, %s131
        %s135 = smul.addr %s134, 4
        %s136 = scalar_lea.vmem %s1, %s135
        %s137 = smul.u32 16, %s20
      $region16: #{discriminator_forward.6} parent=11 // pred_fallthru
        _
    $region12: #{discriminator_forward.6} parent=5 // pred_fallthru
      _
    %p138 = scmp.lt.s32.totalorder %s8, 2
    // Predicated region
    $region17: #{discriminator_forward.6} parent=5 // pred_check
      %p139 = pneg %p138
    $region18: #{discriminator_forward.6} parent=5 // pred_check_branch
      %141 = sbr.rel (%p139) target = $region20
    $region19: #{discriminator_forward.6} parent=5 // pred_region
      // Predicated region
      $region21: #{discriminator_forward.6} parent=19 // pred_check
        %p142 = pneg %p49
      $region22: #{discriminator_forward.6} parent=19 // pred_check_branch
        %144 = sbr.rel (%p142) target = $region24
      $region23: #{discriminator_forward.6} parent=19 // pred_region
        %s145 = smul.u32 128, %s15
        %p146 = scmp.lt.s32.totalorder %s145, 255
        %s147 = scalar_select %p146, %s145, 255
        %p148 = scmp.lt.s32.totalorder %s17, 0
        %s149 = scalar_select %p148, %s17, 0
        %s150 = sadd.s32 %s149, %s147
        %s151 = smul.addr %s150, 4
        %s152 = scalar_lea.vmem %s0, %s151
        %s153 = smul.u32 128, %s15
      $region24: #{discriminator_forward.6} parent=19 // pred_fallthru
        _
    $region20: #{discriminator_forward.6} parent=5 // pred_fallthru
      _
    %p154 = scmp.le.s32.totalorder 1, %s8
    %p155 = scmp.lt.s32.totalorder %s8, 3
    %p156 = pnand %p154, %p155
    %p157 = pneg %p156
    // Predicated region
    $region25: #{discriminator_forward.6} parent=5 // pred_check
      _
    $region26: #{discriminator_forward.6} parent=5 // pred_check_branch
      %159 = sbr.rel (%p156) target = $region28
    $region27: #{discriminator_forward.6} parent=5 // pred_region
      %s160 = ssub.s32 %s8, 1
      %s161 = smul.u32 128, %s18
      %p162 = scmp.lt.s32.totalorder %s161, 255
      %s163 = scalar_select %p162, %s161, 255
      %p164 = scmp.lt.s32.totalorder %s20, 0
      %s165 = scalar_select %p164, %s20, 0
      %s166 = sadd.s32 %s165, %s163
      %s167 = smul.addr %s166, 4
      %s168 = scalar_lea.vmem %s0, %s167
      %p169 = pneg %p55
      %p170 = pneg %p52
      %s171 = smul.u32 16, %s20
      %p172 = scmp.lt.s32.totalorder %s171, 15
      %s173 = scalar_select %p172, %s171, 15
      %p174 = scmp.lt.s32.totalorder %s19, 0
      %s175 = scalar_select %p174, %s19, 0
      %s176 = sadd.s32 %s175, %s173
      %s177 = smul.addr %s176, 4
      %s178 = scalar_lea.vmem %s1, %s177
      %p179 = pneg %p83
      %p180 = pneg %p80
      %p181 = pneg %p111
      %p182 = pneg %p108
      %s183 = smul.u32 128, %s18
      %p184 = scmp.lt.s32.totalorder %s183, 255
      %s185 = scalar_select %p184, %s183, 255
      %p186 = scmp.lt.s32.totalorder %s19, 0
      %s187 = scalar_select %p186, %s19, 0
      %s188 = sadd.s32 %s187, %s185
      %s189 = smul.addr %s188, 4
      %s190 = scalar_lea.vmem %s2, %s189
      %s191 = smul.u32 128, %s18
      %p192 = scmp.lt.s32.totalorder %s191, 255
      %s193 = scalar_select %p192, %s191, 255
      %p194 = scmp.lt.s32.totalorder %s20, 0
      %s195 = scalar_select %p194, %s20, 0
      %s196 = sadd.s32 %s195, %s193
      %s197 = smul.addr %s196, 4
      %s198 = scalar_lea.vmem %s0, %s197
      %s199 = smul.u32 128, %s18
      %s200 = smul.u32 16, %s20
      %p201 = scmp.lt.s32.totalorder %s200, 15
      %s202 = scalar_select %p201, %s200, 15
      %p203 = scmp.lt.s32.totalorder %s19, 0
      %s204 = scalar_select %p203, %s19, 0
      %s205 = sadd.s32 %s204, %s202
      %s206 = smul.addr %s205, 4
      %s207 = scalar_lea.vmem %s1, %s206
      %s208 = smul.u32 16, %s20
      %s209 = smul.u32 128, %s18
      %p210 = scmp.lt.s32.totalorder %s209, 255
      %s211 = scalar_select %p210, %s209, 255
      %p212 = scmp.lt.s32.totalorder %s19, 0
      %s213 = scalar_select %p212, %s19, 0
      %s214 = sadd.s32 %s213, %s211
      %s215 = smul.addr %s214, 4
      %s216 = scalar_lea.vmem %s2, %s215
      %s217 = smul.u32 128, %s18
      %v218 = vld [vmem:[%s198] sm:$0xf]
      %v219 = vld [vmem:[%s198 + $0x4] sm:$0xf]
      %v220 = vld [vmem:[%s198 + $0x8] sm:$0xf]
      %v221 = vld [vmem:[%s198 + $0xc] sm:$0xf]
      %v222 = vld [vmem:[%s198 + $0x10] sm:$0xf]
      %v223 = vld [vmem:[%s198 + $0x14] sm:$0xf]
      %v224 = vld [vmem:[%s198 + $0x18] sm:$0xf]
      %v225 = vld [vmem:[%s198 + $0x1c] sm:$0xf]
      %v226 = vld [vmem:[%s198 + $0x20] sm:$0xf]
      %v227 = vld [vmem:[%s198 + $0x24] sm:$0xf]
      %v228 = vld [vmem:[%s198 + $0x28] sm:$0xf]
      %v229 = vld [vmem:[%s198 + $0x2c] sm:$0xf]
      %v230 = vld [vmem:[%s198 + $0x30] sm:$0xf]
      %v231 = vld [vmem:[%s198 + $0x34] sm:$0xf]
      %v232 = vld [vmem:[%s198 + $0x38] sm:$0xf]
      %v233 = vld [vmem:[%s198 + $0x3c] sm:$0xf]
      %v234 = vld [vmem:[%s198 + $0x40] sm:$0xf]
      %v235 = vld [vmem:[%s198 + $0x44] sm:$0xf]
      %v236 = vld [vmem:[%s198 + $0x48] sm:$0xf]
      %v237 = vld [vmem:[%s198 + $0x4c] sm:$0xf]
      %v238 = vld [vmem:[%s198 + $0x50] sm:$0xf]
      %v239 = vld [vmem:[%s198 + $0x54] sm:$0xf]
      %v240 = vld [vmem:[%s198 + $0x58] sm:$0xf]
      %v241 = vld [vmem:[%s198 + $0x5c] sm:$0xf]
      %v242 = vld [vmem:[%s198 + $0x60] sm:$0xf]
      %v243 = vld [vmem:[%s198 + $0x64] sm:$0xf]
      %v244 = vld [vmem:[%s198 + $0x68] sm:$0xf]
      %v245 = vld [vmem:[%s198 + $0x6c] sm:$0xf]
      %v246 = vld [vmem:[%s198 + $0x70] sm:$0xf]
      %v247 = vld [vmem:[%s198 + $0x74] sm:$0xf]
      %v248 = vld [vmem:[%s198 + $0x78] sm:$0xf]
      %v249 = vld [vmem:[%s198 + $0x7c] sm:$0xf]
      %v250 = vld [vmem:[%s198 + $0x80] sm:$0xf]
      %v251 = vld [vmem:[%s198 + $0x84] sm:$0xf]
      %v252 = vld [vmem:[%s198 + $0x88] sm:$0xf]
      %v253 = vld [vmem:[%s198 + $0x8c] sm:$0xf]
      %v254 = vld [vmem:[%s198 + $0x90] sm:$0xf]
      %v255 = vld [vmem:[%s198 + $0x94] sm:$0xf]
      %v256 = vld [vmem:[%s198 + $0x98] sm:$0xf]
      %v257 = vld [vmem:[%s198 + $0x9c] sm:$0xf]
      %v258 = vld [vmem:[%s198 + $0xa0] sm:$0xf]
      %v259 = vld [vmem:[%s198 + $0xa4] sm:$0xf]
      %v260 = vld [vmem:[%s198 + $0xa8] sm:$0xf]
      %v261 = vld [vmem:[%s198 + $0xac] sm:$0xf]
      %v262 = vld [vmem:[%s198 + $0xb0] sm:$0xf]
      %v263 = vld [vmem:[%s198 + $0xb4] sm:$0xf]
      %v264 = vld [vmem:[%s198 + $0xb8] sm:$0xf]
      %v265 = vld [vmem:[%s198 + $0xbc] sm:$0xf]
      %v266 = vld [vmem:[%s198 + $0xc0] sm:$0xf]
      %v267 = vld [vmem:[%s198 + $0xc4] sm:$0xf]
      %v268 = vld [vmem:[%s198 + $0xc8] sm:$0xf]
      %v269 = vld [vmem:[%s198 + $0xcc] sm:$0xf]
      %v270 = vld [vmem:[%s198 + $0xd0] sm:$0xf]
      %v271 = vld [vmem:[%s198 + $0xd4] sm:$0xf]
      %v272 = vld [vmem:[%s198 + $0xd8] sm:$0xf]
      %v273 = vld [vmem:[%s198 + $0xdc] sm:$0xf]
      %v274 = vld [vmem:[%s198 + $0xe0] sm:$0xf]
      %v275 = vld [vmem:[%s198 + $0xe4] sm:$0xf]
      %v276 = vld [vmem:[%s198 + $0xe8] sm:$0xf]
      %v277 = vld [vmem:[%s198 + $0xec] sm:$0xf]
      %v278 = vld [vmem:[%s198 + $0xf0] sm:$0xf]
      %v279 = vld [vmem:[%s198 + $0xf4] sm:$0xf]
      %v280 = vld [vmem:[%s198 + $0xf8] sm:$0xf]
      %v281 = vld [vmem:[%s198 + $0xfc] sm:$0xf]
      %v282 = vld [vmem:[%s198 + $0x100] sm:$0xf]
      %v283 = vld [vmem:[%s198 + $0x104] sm:$0xf]
      %v284 = vld [vmem:[%s198 + $0x108] sm:$0xf]
      %v285 = vld [vmem:[%s198 + $0x10c] sm:$0xf]
      %v286 = vld [vmem:[%s198 + $0x110] sm:$0xf]
      %v287 = vld [vmem:[%s198 + $0x114] sm:$0xf]
      %v288 = vld [vmem:[%s198 + $0x118] sm:$0xf]
      %v289 = vld [vmem:[%s198 + $0x11c] sm:$0xf]
      %v290 = vld [vmem:[%s198 + $0x120] sm:$0xf]
      %v291 = vld [vmem:[%s198 + $0x124] sm:$0xf]
      %v292 = vld [vmem:[%s198 + $0x128] sm:$0xf]
      %v293 = vld [vmem:[%s198 + $0x12c] sm:$0xf]
      %v294 = vld [vmem:[%s198 + $0x130] sm:$0xf]
      %v295 = vld [vmem:[%s198 + $0x134] sm:$0xf]
      %v296 = vld [vmem:[%s198 + $0x138] sm:$0xf]
      %v297 = vld [vmem:[%s198 + $0x13c] sm:$0xf]
      %v298 = vld [vmem:[%s198 + $0x140] sm:$0xf]
      %v299 = vld [vmem:[%s198 + $0x144] sm:$0xf]
      %v300 = vld [vmem:[%s198 + $0x148] sm:$0xf]
      %v301 = vld [vmem:[%s198 + $0x14c] sm:$0xf]
      %v302 = vld [vmem:[%s198 + $0x150] sm:$0xf]
      %v303 = vld [vmem:[%s198 + $0x154] sm:$0xf]
      %v304 = vld [vmem:[%s198 + $0x158] sm:$0xf]
      %v305 = vld [vmem:[%s198 + $0x15c] sm:$0xf]
      %v306 = vld [vmem:[%s198 + $0x160] sm:$0xf]
      %v307 = vld [vmem:[%s198 + $0x164] sm:$0xf]
      %v308 = vld [vmem:[%s198 + $0x168] sm:$0xf]
      %v309 = vld [vmem:[%s198 + $0x16c] sm:$0xf]
      %v310 = vld [vmem:[%s198 + $0x170] sm:$0xf]
      %v311 = vld [vmem:[%s198 + $0x174] sm:$0xf]
      %v312 = vld [vmem:[%s198 + $0x178] sm:$0xf]
      %v313 = vld [vmem:[%s198 + $0x17c] sm:$0xf]
      %v314 = vld [vmem:[%s198 + $0x180] sm:$0xf]
      %v315 = vld [vmem:[%s198 + $0x184] sm:$0xf]
      %v316 = vld [vmem:[%s198 + $0x188] sm:$0xf]
      %v317 = vld [vmem:[%s198 + $0x18c] sm:$0xf]
      %v318 = vld [vmem:[%s198 + $0x190] sm:$0xf]
      %v319 = vld [vmem:[%s198 + $0x194] sm:$0xf]
      %v320 = vld [vmem:[%s198 + $0x198] sm:$0xf]
      %v321 = vld [vmem:[%s198 + $0x19c] sm:$0xf]
      %v322 = vld [vmem:[%s198 + $0x1a0] sm:$0xf]
      %v323 = vld [vmem:[%s198 + $0x1a4] sm:$0xf]
      %v324 = vld [vmem:[%s198 + $0x1a8] sm:$0xf]
      %v325 = vld [vmem:[%s198 + $0x1ac] sm:$0xf]
      %v326 = vld [vmem:[%s198 + $0x1b0] sm:$0xf]
      %v327 = vld [vmem:[%s198 + $0x1b4] sm:$0xf]
      %v328 = vld [vmem:[%s198 + $0x1b8] sm:$0xf]
      %v329 = vld [vmem:[%s198 + $0x1bc] sm:$0xf]
      %v330 = vld [vmem:[%s198 + $0x1c0] sm:$0xf]
      %v331 = vld [vmem:[%s198 + $0x1c4] sm:$0xf]
      %v332 = vld [vmem:[%s198 + $0x1c8] sm:$0xf]
      %v333 = vld [vmem:[%s198 + $0x1cc] sm:$0xf]
      %v334 = vld [vmem:[%s198 + $0x1d0] sm:$0xf]
      %v335 = vld [vmem:[%s198 + $0x1d4] sm:$0xf]
      %v336 = vld [vmem:[%s198 + $0x1d8] sm:$0xf]
      %v337 = vld [vmem:[%s198 + $0x1dc] sm:$0xf]
      %v338 = vld [vmem:[%s198 + $0x1e0] sm:$0xf]
      %v339 = vld [vmem:[%s198 + $0x1e4] sm:$0xf]
      %v340 = vld [vmem:[%s198 + $0x1e8] sm:$0xf]
      %v341 = vld [vmem:[%s198 + $0x1ec] sm:$0xf]
      %v342 = vld [vmem:[%s198 + $0x1f0] sm:$0xf]
      %v343 = vld [vmem:[%s198 + $0x1f4] sm:$0xf]
      %v344 = vld [vmem:[%s198 + $0x1f8] sm:$0xf]
      %v345 = vld [vmem:[%s198 + $0x1fc] sm:$0xf]
      %v346 = vld [vmem:[%s207] sm:$0xf]
      %v347 = vld [vmem:[%s207 + $0x4] sm:$0xf]
      %v348 = vld [vmem:[%s207 + $0x8] sm:$0xf]
      %v349 = vld [vmem:[%s207 + $0xc] sm:$0xf]
      %v350 = vld [vmem:[%s207 + $0x10] sm:$0xf]
      %v351 = vld [vmem:[%s207 + $0x14] sm:$0xf]
      %v352 = vld [vmem:[%s207 + $0x18] sm:$0xf]
      %v353 = vld [vmem:[%s207 + $0x1c] sm:$0xf]
      %v354 = vld [vmem:[%s207 + $0x20] sm:$0xf]
      %v355 = vld [vmem:[%s207 + $0x24] sm:$0xf]
      %v356 = vld [vmem:[%s207 + $0x28] sm:$0xf]
      %v357 = vld [vmem:[%s207 + $0x2c] sm:$0xf]
      %v358 = vld [vmem:[%s207 + $0x30] sm:$0xf]
      %v359 = vld [vmem:[%s207 + $0x34] sm:$0xf]
      %v360 = vld [vmem:[%s207 + $0x38] sm:$0xf]
      %v361 = vld [vmem:[%s207 + $0x3c] sm:$0xf]
      %v490 = vunpack.c.l.b16 %v218
      %v491 = vunpack.c.l.b16 %v219
      %v492 = vunpack.c.l.b16 %v220
      %v493 = vunpack.c.l.b16 %v221
      %v494 = vunpack.c.l.b16 %v222
      %v495 = vunpack.c.l.b16 %v223
      %v496 = vunpack.c.l.b16 %v224
      %v497 = vunpack.c.l.b16 %v225
      %v498 = vunpack.c.l.b16 %v226
      %v499 = vunpack.c.l.b16 %v227
      %v500 = vunpack.c.l.b16 %v228
      %v501 = vunpack.c.l.b16 %v229
      %v502 = vunpack.c.l.b16 %v230
      %v503 = vunpack.c.l.b16 %v231
      %v504 = vunpack.c.l.b16 %v232
      %v505 = vunpack.c.l.b16 %v233
      %v506 = vunpack.c.l.b16 %v234
      %v507 = vunpack.c.l.b16 %v235
      %v508 = vunpack.c.l.b16 %v236
      %v509 = vunpack.c.l.b16 %v237
      %v510 = vunpack.c.l.b16 %v238
      %v511 = vunpack.c.l.b16 %v239
      %v512 = vunpack.c.l.b16 %v240
      %v513 = vunpack.c.l.b16 %v241
      %v514 = vunpack.c.l.b16 %v242
      %v515 = vunpack.c.l.b16 %v243
      %v516 = vunpack.c.l.b16 %v244
      %v517 = vunpack.c.l.b16 %v245
      %v518 = vunpack.c.l.b16 %v246
      %v519 = vunpack.c.l.b16 %v247
      %v520 = vunpack.c.l.b16 %v248
      %v521 = vunpack.c.l.b16 %v249
      %v522 = vunpack.c.l.b16 %v250
      %v523 = vunpack.c.l.b16 %v251
      %v524 = vunpack.c.l.b16 %v252
      %v525 = vunpack.c.l.b16 %v253
      %v526 = vunpack.c.l.b16 %v254
      %v527 = vunpack.c.l.b16 %v255
      %v528 = vunpack.c.l.b16 %v256
      %v529 = vunpack.c.l.b16 %v257
      %v530 = vunpack.c.l.b16 %v258
      %v531 = vunpack.c.l.b16 %v259
      %v532 = vunpack.c.l.b16 %v260
      %v533 = vunpack.c.l.b16 %v261
      %v534 = vunpack.c.l.b16 %v262
      %v535 = vunpack.c.l.b16 %v263
      %v536 = vunpack.c.l.b16 %v264
      %v537 = vunpack.c.l.b16 %v265
      %v538 = vunpack.c.l.b16 %v266
      %v539 = vunpack.c.l.b16 %v267
      %v540 = vunpack.c.l.b16 %v268
      %v541 = vunpack.c.l.b16 %v269
      %v542 = vunpack.c.l.b16 %v270
      %v543 = vunpack.c.l.b16 %v271
      %v544 = vunpack.c.l.b16 %v272
      %v545 = vunpack.c.l.b16 %v273
      %v546 = vunpack.c.l.b16 %v274
      %v547 = vunpack.c.l.b16 %v275
      %v548 = vunpack.c.l.b16 %v276
      %v549 = vunpack.c.l.b16 %v277
      %v550 = vunpack.c.l.b16 %v278
      %v551 = vunpack.c.l.b16 %v279
      %v552 = vunpack.c.l.b16 %v280
      %v553 = vunpack.c.l.b16 %v281
      %v554 = vunpack.c.l.b16 %v282
      %v555 = vunpack.c.l.b16 %v283
      %v556 = vunpack.c.l.b16 %v284
      %v557 = vunpack.c.l.b16 %v285
      %v558 = vunpack.c.l.b16 %v286
      %v559 = vunpack.c.l.b16 %v287
      %v560 = vunpack.c.l.b16 %v288
      %v561 = vunpack.c.l.b16 %v289
      %v562 = vunpack.c.l.b16 %v290
      %v563 = vunpack.c.l.b16 %v291
      %v564 = vunpack.c.l.b16 %v292
      %v565 = vunpack.c.l.b16 %v293
      %v566 = vunpack.c.l.b16 %v294
      %v567 = vunpack.c.l.b16 %v295
      %v568 = vunpack.c.l.b16 %v296
      %v569 = vunpack.c.l.b16 %v297
      %v570 = vunpack.c.l.b16 %v298
      %v571 = vunpack.c.l.b16 %v299
      %v572 = vunpack.c.l.b16 %v300
      %v573 = vunpack.c.l.b16 %v301
      %v574 = vunpack.c.l.b16 %v302
      %v575 = vunpack.c.l.b16 %v303
      %v576 = vunpack.c.l.b16 %v304
      %v577 = vunpack.c.l.b16 %v305
      %v578 = vunpack.c.l.b16 %v306
      %v579 = vunpack.c.l.b16 %v307
      %v580 = vunpack.c.l.b16 %v308
      %v581 = vunpack.c.l.b16 %v309
      %v582 = vunpack.c.l.b16 %v310
      %v583 = vunpack.c.l.b16 %v311
      %v584 = vunpack.c.l.b16 %v312
      %v585 = vunpack.c.l.b16 %v313
      %v586 = vunpack.c.l.b16 %v314
      %v587 = vunpack.c.l.b16 %v315
      %v588 = vunpack.c.l.b16 %v316
      %v589 = vunpack.c.l.b16 %v317
      %v590 = vunpack.c.l.b16 %v318
      %v591 = vunpack.c.l.b16 %v319
      %v592 = vunpack.c.l.b16 %v320
      %v593 = vunpack.c.l.b16 %v321
      %v594 = vunpack.c.l.b16 %v322
      %v595 = vunpack.c.l.b16 %v323
      %v596 = vunpack.c.l.b16 %v324
      %v597 = vunpack.c.l.b16 %v325
      %v598 = vunpack.c.l.b16 %v326
      %v599 = vunpack.c.l.b16 %v327
      %v600 = vunpack.c.l.b16 %v328
      %v601 = vunpack.c.l.b16 %v329
      %v602 = vunpack.c.l.b16 %v330
      %v603 = vunpack.c.l.b16 %v331
      %v604 = vunpack.c.l.b16 %v332
      %v605 = vunpack.c.l.b16 %v333
      %v606 = vunpack.c.l.b16 %v334
      %v607 = vunpack.c.l.b16 %v335
      %v608 = vunpack.c.l.b16 %v336
      %v609 = vunpack.c.l.b16 %v337
      %v610 = vunpack.c.l.b16 %v338
      %v611 = vunpack.c.l.b16 %v339
      %v612 = vunpack.c.l.b16 %v340
      %v613 = vunpack.c.l.b16 %v341
      %v614 = vunpack.c.l.b16 %v342
      %v615 = vunpack.c.l.b16 %v343
      %v616 = vunpack.c.l.b16 %v344
      %v617 = vunpack.c.l.b16 %v345
      %v618 = vpack.c.b16 %v491, %v490
      %v619 = vpack.c.b16 %v493, %v492
      %v620 = vpack.c.b16 %v495, %v494
      %v621 = vpack.c.b16 %v497, %v496
      %v622 = vpack.c.b16 %v499, %v498
      %v623 = vpack.c.b16 %v501, %v500
      %v624 = vpack.c.b16 %v503, %v502
      %v625 = vpack.c.b16 %v505, %v504
      %v626 = vpack.c.b16 %v507, %v506
      %v627 = vpack.c.b16 %v509, %v508
      %v628 = vpack.c.b16 %v511, %v510
      %v629 = vpack.c.b16 %v513, %v512
      %v630 = vpack.c.b16 %v515, %v514
      %v631 = vpack.c.b16 %v517, %v516
      %v632 = vpack.c.b16 %v519, %v518
      %v633 = vpack.c.b16 %v521, %v520
      %v634 = vpack.c.b16 %v523, %v522
      %v635 = vpack.c.b16 %v525, %v524
      %v636 = vpack.c.b16 %v527, %v526
      %v637 = vpack.c.b16 %v529, %v528
      %v638 = vpack.c.b16 %v531, %v530
      %v639 = vpack.c.b16 %v533, %v532
      %v640 = vpack.c.b16 %v535, %v534
      %v641 = vpack.c.b16 %v537, %v536
      %v642 = vpack.c.b16 %v539, %v538
      %v643 = vpack.c.b16 %v541, %v540
      %v644 = vpack.c.b16 %v543, %v542
      %v645 = vpack.c.b16 %v545, %v544
      %v646 = vpack.c.b16 %v547, %v546
      %v647 = vpack.c.b16 %v549, %v548
      %v648 = vpack.c.b16 %v551, %v550
      %v649 = vpack.c.b16 %v553, %v552
      %v650 = vpack.c.b16 %v555, %v554
      %v651 = vpack.c.b16 %v557, %v556
      %v652 = vpack.c.b16 %v559, %v558
      %v653 = vpack.c.b16 %v561, %v560
      %v654 = vpack.c.b16 %v563, %v562
      %v655 = vpack.c.b16 %v565, %v564
      %v656 = vpack.c.b16 %v567, %v566
      %v657 = vpack.c.b16 %v569, %v568
      %v658 = vpack.c.b16 %v571, %v570
      %v659 = vpack.c.b16 %v573, %v572
      %v660 = vpack.c.b16 %v575, %v574
      %v661 = vpack.c.b16 %v577, %v576
      %v662 = vpack.c.b16 %v579, %v578
      %v663 = vpack.c.b16 %v581, %v580
      %v664 = vpack.c.b16 %v583, %v582
      %v665 = vpack.c.b16 %v585, %v584
      %v666 = vpack.c.b16 %v587, %v586
      %v667 = vpack.c.b16 %v589, %v588
      %v668 = vpack.c.b16 %v591, %v590
      %v669 = vpack.c.b16 %v593, %v592
      %v670 = vpack.c.b16 %v595, %v594
      %v671 = vpack.c.b16 %v597, %v596
      %v672 = vpack.c.b16 %v599, %v598
      %v673 = vpack.c.b16 %v601, %v600
      %v674 = vpack.c.b16 %v603, %v602
      %v675 = vpack.c.b16 %v605, %v604
      %v676 = vpack.c.b16 %v607, %v606
      %v677 = vpack.c.b16 %v609, %v608
      %v678 = vpack.c.b16 %v611, %v610
      %v679 = vpack.c.b16 %v613, %v612
      %v680 = vpack.c.b16 %v615, %v614
      %v681 = vpack.c.b16 %v617, %v616
      %v762 = vunpack.c.l.b16 %v346
      %v763 = vunpack.c.l.b16 %v347
      %v764 = vunpack.c.l.b16 %v348
      %v765 = vunpack.c.l.b16 %v349
      %v766 = vunpack.c.l.b16 %v350
      %v767 = vunpack.c.l.b16 %v351
      %v768 = vunpack.c.l.b16 %v352
      %v769 = vunpack.c.l.b16 %v353
      %v770 = vunpack.c.l.b16 %v354
      %v771 = vunpack.c.l.b16 %v355
      %v772 = vunpack.c.l.b16 %v356
      %v773 = vunpack.c.l.b16 %v357
      %v774 = vunpack.c.l.b16 %v358
      %v775 = vunpack.c.l.b16 %v359
      %v776 = vunpack.c.l.b16 %v360
      %v777 = vunpack.c.l.b16 %v361
      %v778 = vpack.c.b16 %v763, %v762
      %v779 = vpack.c.b16 %v765, %v764
      %v780 = vpack.c.b16 %v767, %v766
      %v781 = vpack.c.b16 %v769, %v768
      %v782 = vpack.c.b16 %v771, %v770
      %v783 = vpack.c.b16 %v773, %v772
      %v784 = vpack.c.b16 %v775, %v774
      %v785 = vpack.c.b16 %v777, %v776
      %794 = vmatpush.bf16.msra.mxu0 %v785
      %795 = vmatpush.bf16.msra.mxu0 %v784
      %796 = vmatpush.bf16.msra.mxu0 %v783
      %797 = vmatpush.bf16.msra.mxu0 %v782
      %798 = vmatpush.bf16.msra.mxu0 %v781
      %799 = vmatpush.bf16.msra.mxu0 %v780
      %800 = vmatpush.bf16.msra.mxu0 %v779
      %801 = vmatpush.bf16.msra.mxu0 %v778
      %802 = vmatmul.bf16.gmra.mxu0 %v618
      %v803 = vpop.f32.mrf.mxu0
      %v804 = vadd.f32 0.0, %v803
      %v805 = vpop.f32.mrf.mxu0
      %v806 = vadd.f32 0.0, %v805
      %807 = vmatmul.bf16.gmra.mxu0 %v619
      %v808 = vpop.f32.mrf.mxu0
      %v809 = vadd.f32 0.0, %v808
      %v810 = vpop.f32.mrf.mxu0
      %v811 = vadd.f32 0.0, %v810
      %812 = vmatmul.bf16.gmra.mxu0 %v620
      %v813 = vpop.f32.mrf.mxu0
      %v814 = vadd.f32 0.0, %v813
      %v815 = vpop.f32.mrf.mxu0
      %v816 = vadd.f32 0.0, %v815
      %817 = vmatmul.bf16.gmra.mxu0 %v621
      %v818 = vpop.f32.mrf.mxu0
      %v819 = vadd.f32 0.0, %v818
      %v820 = vpop.f32.mrf.mxu0
      %v821 = vadd.f32 0.0, %v820
      %822 = vmatmul.bf16.gmra.mxu0 %v622
      %v823 = vpop.f32.mrf.mxu0
      %v824 = vadd.f32 0.0, %v823
      %v825 = vpop.f32.mrf.mxu0
      %v826 = vadd.f32 0.0, %v825
      %827 = vmatmul.bf16.gmra.mxu0 %v623
      %v828 = vpop.f32.mrf.mxu0
      %v829 = vadd.f32 0.0, %v828
      %v830 = vpop.f32.mrf.mxu0
      %v831 = vadd.f32 0.0, %v830
      %832 = vmatmul.bf16.gmra.mxu0 %v624
      %v833 = vpop.f32.mrf.mxu0
      %v834 = vadd.f32 0.0, %v833
      %v835 = vpop.f32.mrf.mxu0
      %v836 = vadd.f32 0.0, %v835
      %837 = vmatmul.bf16.gmra.mxu0 %v625
      %v838 = vpop.f32.mrf.mxu0
      %v839 = vadd.f32 0.0, %v838
      %v840 = vpop.f32.mrf.mxu0
      %v841 = vadd.f32 0.0, %v840
      %842 = vmatmul.bf16.gmra.mxu0 %v626
      %v843 = vpop.f32.mrf.mxu0
      %v844 = vadd.f32 0.0, %v843
      %v845 = vpop.f32.mrf.mxu0
      %v846 = vadd.f32 0.0, %v845
      %847 = vmatmul.bf16.gmra.mxu0 %v627
      %v848 = vpop.f32.mrf.mxu0
      %v849 = vadd.f32 0.0, %v848
      %v850 = vpop.f32.mrf.mxu0
      %v851 = vadd.f32 0.0, %v850
      %852 = vmatmul.bf16.gmra.mxu0 %v628
      %v853 = vpop.f32.mrf.mxu0
      %v854 = vadd.f32 0.0, %v853
      %v855 = vpop.f32.mrf.mxu0
      %v856 = vadd.f32 0.0, %v855
      %857 = vmatmul.bf16.gmra.mxu0 %v629
      %v858 = vpop.f32.mrf.mxu0
      %v859 = vadd.f32 0.0, %v858
      %v860 = vpop.f32.mrf.mxu0
      %v861 = vadd.f32 0.0, %v860
      %862 = vmatmul.bf16.gmra.mxu0 %v630
      %v863 = vpop.f32.mrf.mxu0
      %v864 = vadd.f32 0.0, %v863
      %v865 = vpop.f32.mrf.mxu0
      %v866 = vadd.f32 0.0, %v865
      %867 = vmatmul.bf16.gmra.mxu0 %v631
      %v868 = vpop.f32.mrf.mxu0
      %v869 = vadd.f32 0.0, %v868
      %v870 = vpop.f32.mrf.mxu0
      %v871 = vadd.f32 0.0, %v870
      %872 = vmatmul.bf16.gmra.mxu0 %v632
      %v873 = vpop.f32.mrf.mxu0
      %v874 = vadd.f32 0.0, %v873
      %v875 = vpop.f32.mrf.mxu0
      %v876 = vadd.f32 0.0, %v875
      %877 = vmatmul.bf16.gmra.mxu0 %v633
      %v878 = vpop.f32.mrf.mxu0
      %v879 = vadd.f32 0.0, %v878
      %v880 = vpop.f32.mrf.mxu0
      %v881 = vadd.f32 0.0, %v880
      %882 = vmatmul.bf16.gmra.mxu0 %v634
      %v883 = vpop.f32.mrf.mxu0
      %v884 = vadd.f32 0.0, %v883
      %v885 = vpop.f32.mrf.mxu0
      %v886 = vadd.f32 0.0, %v885
      %887 = vmatmul.bf16.gmra.mxu0 %v635
      %v888 = vpop.f32.mrf.mxu0
      %v889 = vadd.f32 0.0, %v888
      %v890 = vpop.f32.mrf.mxu0
      %v891 = vadd.f32 0.0, %v890
      %892 = vmatmul.bf16.gmra.mxu0 %v636
      %v893 = vpop.f32.mrf.mxu0
      %v894 = vadd.f32 0.0, %v893
      %v895 = vpop.f32.mrf.mxu0
      %v896 = vadd.f32 0.0, %v895
      %897 = vmatmul.bf16.gmra.mxu0 %v637
      %v898 = vpop.f32.mrf.mxu0
      %v899 = vadd.f32 0.0, %v898
      %v900 = vpop.f32.mrf.mxu0
      %v901 = vadd.f32 0.0, %v900
      %902 = vmatmul.bf16.gmra.mxu0 %v638
      %v903 = vpop.f32.mrf.mxu0
      %v904 = vadd.f32 0.0, %v903
      %v905 = vpop.f32.mrf.mxu0
      %v906 = vadd.f32 0.0, %v905
      %907 = vmatmul.bf16.gmra.mxu0 %v639
      %v908 = vpop.f32.mrf.mxu0
      %v909 = vadd.f32 0.0, %v908
      %v910 = vpop.f32.mrf.mxu0
      %v911 = vadd.f32 0.0, %v910
      %912 = vmatmul.bf16.gmra.mxu0 %v640
      %v913 = vpop.f32.mrf.mxu0
      %v914 = vadd.f32 0.0, %v913
      %v915 = vpop.f32.mrf.mxu0
      %v916 = vadd.f32 0.0, %v915
      %917 = vmatmul.bf16.gmra.mxu0 %v641
      %v918 = vpop.f32.mrf.mxu0
      %v919 = vadd.f32 0.0, %v918
      %v920 = vpop.f32.mrf.mxu0
      %v921 = vadd.f32 0.0, %v920
      %922 = vmatmul.bf16.gmra.mxu0 %v642
      %v923 = vpop.f32.mrf.mxu0
      %v924 = vadd.f32 0.0, %v923
      %v925 = vpop.f32.mrf.mxu0
      %v926 = vadd.f32 0.0, %v925
      %927 = vmatmul.bf16.gmra.mxu0 %v643
      %v928 = vpop.f32.mrf.mxu0
      %v929 = vadd.f32 0.0, %v928
      %v930 = vpop.f32.mrf.mxu0
      %v931 = vadd.f32 0.0, %v930
      %932 = vmatmul.bf16.gmra.mxu0 %v644
      %v933 = vpop.f32.mrf.mxu0
      %v934 = vadd.f32 0.0, %v933
      %v935 = vpop.f32.mrf.mxu0
      %v936 = vadd.f32 0.0, %v935
      %937 = vmatmul.bf16.gmra.mxu0 %v645
      %v938 = vpop.f32.mrf.mxu0
      %v939 = vadd.f32 0.0, %v938
      %v940 = vpop.f32.mrf.mxu0
      %v941 = vadd.f32 0.0, %v940
      %942 = vmatmul.bf16.gmra.mxu0 %v646
      %v943 = vpop.f32.mrf.mxu0
      %v944 = vadd.f32 0.0, %v943
      %v945 = vpop.f32.mrf.mxu0
      %v946 = vadd.f32 0.0, %v945
      %947 = vmatmul.bf16.gmra.mxu0 %v647
      %v948 = vpop.f32.mrf.mxu0
      %v949 = vadd.f32 0.0, %v948
      %v950 = vpop.f32.mrf.mxu0
      %v951 = vadd.f32 0.0, %v950
      %952 = vmatmul.bf16.gmra.mxu0 %v648
      %v953 = vpop.f32.mrf.mxu0
      %v954 = vadd.f32 0.0, %v953
      %v955 = vpop.f32.mrf.mxu0
      %v956 = vadd.f32 0.0, %v955
      %957 = vmatmul.bf16.gmra.mxu0 %v649
      %v958 = vpop.f32.mrf.mxu0
      %v959 = vadd.f32 0.0, %v958
      %v960 = vpop.f32.mrf.mxu0
      %v961 = vadd.f32 0.0, %v960
      %962 = vmatmul.bf16.gmra.mxu0 %v650
      %v963 = vpop.f32.mrf.mxu0
      %v964 = vadd.f32 0.0, %v963
      %v965 = vpop.f32.mrf.mxu0
      %v966 = vadd.f32 0.0, %v965
      %967 = vmatmul.bf16.gmra.mxu0 %v651
      %v968 = vpop.f32.mrf.mxu0
      %v969 = vadd.f32 0.0, %v968
      %v970 = vpop.f32.mrf.mxu0
      %v971 = vadd.f32 0.0, %v970
      %972 = vmatmul.bf16.gmra.mxu0 %v652
      %v973 = vpop.f32.mrf.mxu0
      %v974 = vadd.f32 0.0, %v973
      %v975 = vpop.f32.mrf.mxu0
      %v976 = vadd.f32 0.0, %v975
      %977 = vmatmul.bf16.gmra.mxu0 %v653
      %v978 = vpop.f32.mrf.mxu0
      %v979 = vadd.f32 0.0, %v978
      %v980 = vpop.f32.mrf.mxu0
      %v981 = vadd.f32 0.0, %v980
      %982 = vmatmul.bf16.gmra.mxu0 %v654
      %v983 = vpop.f32.mrf.mxu0
      %v984 = vadd.f32 0.0, %v983
      %v985 = vpop.f32.mrf.mxu0
      %v986 = vadd.f32 0.0, %v985
      %987 = vmatmul.bf16.gmra.mxu0 %v655
      %v988 = vpop.f32.mrf.mxu0
      %v989 = vadd.f32 0.0, %v988
      %v990 = vpop.f32.mrf.mxu0
      %v991 = vadd.f32 0.0, %v990
      %992 = vmatmul.bf16.gmra.mxu0 %v656
      %v993 = vpop.f32.mrf.mxu0
      %v994 = vadd.f32 0.0, %v993
      %v995 = vpop.f32.mrf.mxu0
      %v996 = vadd.f32 0.0, %v995
      %997 = vmatmul.bf16.gmra.mxu0 %v657
      %v998 = vpop.f32.mrf.mxu0
      %v999 = vadd.f32 0.0, %v998
      %v1000 = vpop.f32.mrf.mxu0
      %v1001 = vadd.f32 0.0, %v1000
      %1002 = vmatmul.bf16.gmra.mxu0 %v658
      %v1003 = vpop.f32.mrf.mxu0
      %v1004 = vadd.f32 0.0, %v1003
      %v1005 = vpop.f32.mrf.mxu0
      %v1006 = vadd.f32 0.0, %v1005
      %1007 = vmatmul.bf16.gmra.mxu0 %v659
      %v1008 = vpop.f32.mrf.mxu0
      %v1009 = vadd.f32 0.0, %v1008
      %v1010 = vpop.f32.mrf.mxu0
      %v1011 = vadd.f32 0.0, %v1010
      %1012 = vmatmul.bf16.gmra.mxu0 %v660
      %v1013 = vpop.f32.mrf.mxu0
      %v1014 = vadd.f32 0.0, %v1013
      %v1015 = vpop.f32.mrf.mxu0
      %v1016 = vadd.f32 0.0, %v1015
      %1017 = vmatmul.bf16.gmra.mxu0 %v661
      %v1018 = vpop.f32.mrf.mxu0
      %v1019 = vadd.f32 0.0, %v1018
      %v1020 = vpop.f32.mrf.mxu0
      %v1021 = vadd.f32 0.0, %v1020
      %1022 = vmatmul.bf16.gmra.mxu0 %v662
      %v1023 = vpop.f32.mrf.mxu0
      %v1024 = vadd.f32 0.0, %v1023
      %v1025 = vpop.f32.mrf.mxu0
      %v1026 = vadd.f32 0.0, %v1025
      %1027 = vmatmul.bf16.gmra.mxu0 %v663
      %v1028 = vpop.f32.mrf.mxu0
      %v1029 = vadd.f32 0.0, %v1028
      %v1030 = vpop.f32.mrf.mxu0
      %v1031 = vadd.f32 0.0, %v1030
      %1032 = vmatmul.bf16.gmra.mxu0 %v664
      %v1033 = vpop.f32.mrf.mxu0
      %v1034 = vadd.f32 0.0, %v1033
      %v1035 = vpop.f32.mrf.mxu0
      %v1036 = vadd.f32 0.0, %v1035
      %1037 = vmatmul.bf16.gmra.mxu0 %v665
      %v1038 = vpop.f32.mrf.mxu0
      %v1039 = vadd.f32 0.0, %v1038
      %v1040 = vpop.f32.mrf.mxu0
      %v1041 = vadd.f32 0.0, %v1040
      %1042 = vmatmul.bf16.gmra.mxu0 %v666
      %v1043 = vpop.f32.mrf.mxu0
      %v1044 = vadd.f32 0.0, %v1043
      %v1045 = vpop.f32.mrf.mxu0
      %v1046 = vadd.f32 0.0, %v1045
      %1047 = vmatmul.bf16.gmra.mxu0 %v667
      %v1048 = vpop.f32.mrf.mxu0
      %v1049 = vadd.f32 0.0, %v1048
      %v1050 = vpop.f32.mrf.mxu0
      %v1051 = vadd.f32 0.0, %v1050
      %1052 = vmatmul.bf16.gmra.mxu0 %v668
      %v1053 = vpop.f32.mrf.mxu0
      %v1054 = vadd.f32 0.0, %v1053
      %v1055 = vpop.f32.mrf.mxu0
      %v1056 = vadd.f32 0.0, %v1055
      %1057 = vmatmul.bf16.gmra.mxu0 %v669
      %v1058 = vpop.f32.mrf.mxu0
      %v1059 = vadd.f32 0.0, %v1058
      %v1060 = vpop.f32.mrf.mxu0
      %v1061 = vadd.f32 0.0, %v1060
      %1062 = vmatmul.bf16.gmra.mxu0 %v670
      %v1063 = vpop.f32.mrf.mxu0
      %v1064 = vadd.f32 0.0, %v1063
      %v1065 = vpop.f32.mrf.mxu0
      %v1066 = vadd.f32 0.0, %v1065
      %1067 = vmatmul.bf16.gmra.mxu0 %v671
      %v1068 = vpop.f32.mrf.mxu0
      %v1069 = vadd.f32 0.0, %v1068
      %v1070 = vpop.f32.mrf.mxu0
      %v1071 = vadd.f32 0.0, %v1070
      %1072 = vmatmul.bf16.gmra.mxu0 %v672
      %v1073 = vpop.f32.mrf.mxu0
      %v1074 = vadd.f32 0.0, %v1073
      %v1075 = vpop.f32.mrf.mxu0
      %v1076 = vadd.f32 0.0, %v1075
      %1077 = vmatmul.bf16.gmra.mxu0 %v673
      %v1078 = vpop.f32.mrf.mxu0
      %v1079 = vadd.f32 0.0, %v1078
      %v1080 = vpop.f32.mrf.mxu0
      %v1081 = vadd.f32 0.0, %v1080
      %1082 = vmatmul.bf16.gmra.mxu0 %v674
      %v1083 = vpop.f32.mrf.mxu0
      %v1084 = vadd.f32 0.0, %v1083
      %v1085 = vpop.f32.mrf.mxu0
      %v1086 = vadd.f32 0.0, %v1085
      %1087 = vmatmul.bf16.gmra.mxu0 %v675
      %v1088 = vpop.f32.mrf.mxu0
      %v1089 = vadd.f32 0.0, %v1088
      %v1090 = vpop.f32.mrf.mxu0
      %v1091 = vadd.f32 0.0, %v1090
      %1092 = vmatmul.bf16.gmra.mxu0 %v676
      %v1093 = vpop.f32.mrf.mxu0
      %v1094 = vadd.f32 0.0, %v1093
      %v1095 = vpop.f32.mrf.mxu0
      %v1096 = vadd.f32 0.0, %v1095
      %1097 = vmatmul.bf16.gmra.mxu0 %v677
      %v1098 = vpop.f32.mrf.mxu0
      %v1099 = vadd.f32 0.0, %v1098
      %v1100 = vpop.f32.mrf.mxu0
      %v1101 = vadd.f32 0.0, %v1100
      %1102 = vmatmul.bf16.gmra.mxu0 %v678
      %v1103 = vpop.f32.mrf.mxu0
      %v1104 = vadd.f32 0.0, %v1103
      %v1105 = vpop.f32.mrf.mxu0
      %v1106 = vadd.f32 0.0, %v1105
      %1107 = vmatmul.bf16.gmra.mxu0 %v679
      %v1108 = vpop.f32.mrf.mxu0
      %v1109 = vadd.f32 0.0, %v1108
      %v1110 = vpop.f32.mrf.mxu0
      %v1111 = vadd.f32 0.0, %v1110
      %1112 = vmatmul.bf16.gmra.mxu0 %v680
      %v1113 = vpop.f32.mrf.mxu0
      %v1114 = vadd.f32 0.0, %v1113
      %v1115 = vpop.f32.mrf.mxu0
      %v1116 = vadd.f32 0.0, %v1115
      %1117 = vmatmul.bf16.gmra.mxu0 %v681
      %v1118 = vpop.f32.mrf.mxu0
      %v1119 = vadd.f32 0.0, %v1118
      %v1120 = vpop.f32.mrf.mxu0
      %v1121 = vadd.f32 0.0, %v1120
      %1122 = vdwg.mxu0
      %vm1123 = vcmp.ge.f32.partialorder %v804, 0.0
      %vm1124 = vcmp.ge.f32.partialorder %v806, 0.0
      %vm1125 = vcmp.ge.f32.partialorder %v809, 0.0
      %vm1126 = vcmp.ge.f32.partialorder %v811, 0.0
      %vm1127 = vcmp.ge.f32.partialorder %v814, 0.0
      %vm1128 = vcmp.ge.f32.partialorder %v816, 0.0
      %vm1129 = vcmp.ge.f32.partialorder %v819, 0.0
      %vm1130 = vcmp.ge.f32.partialorder %v821, 0.0
      %vm1131 = vcmp.ge.f32.partialorder %v824, 0.0
      %vm1132 = vcmp.ge.f32.partialorder %v826, 0.0
      %vm1133 = vcmp.ge.f32.partialorder %v829, 0.0
      %vm1134 = vcmp.ge.f32.partialorder %v831, 0.0
      %vm1135 = vcmp.ge.f32.partialorder %v834, 0.0
      %vm1136 = vcmp.ge.f32.partialorder %v836, 0.0
      %vm1137 = vcmp.ge.f32.partialorder %v839, 0.0
      %vm1138 = vcmp.ge.f32.partialorder %v841, 0.0
      %vm1139 = vcmp.ge.f32.partialorder %v844, 0.0
      %vm1140 = vcmp.ge.f32.partialorder %v846, 0.0
      %vm1141 = vcmp.ge.f32.partialorder %v849, 0.0
      %vm1142 = vcmp.ge.f32.partialorder %v851, 0.0
      %vm1143 = vcmp.ge.f32.partialorder %v854, 0.0
      %vm1144 = vcmp.ge.f32.partialorder %v856, 0.0
      %vm1145 = vcmp.ge.f32.partialorder %v859, 0.0
      %vm1146 = vcmp.ge.f32.partialorder %v861, 0.0
      %vm1147 = vcmp.ge.f32.partialorder %v864, 0.0
      %vm1148 = vcmp.ge.f32.partialorder %v866, 0.0
      %vm1149 = vcmp.ge.f32.partialorder %v869, 0.0
      %vm1150 = vcmp.ge.f32.partialorder %v871, 0.0
      %vm1151 = vcmp.ge.f32.partialorder %v874, 0.0
      %vm1152 = vcmp.ge.f32.partialorder %v876, 0.0
      %vm1153 = vcmp.ge.f32.partialorder %v879, 0.0
      %vm1154 = vcmp.ge.f32.partialorder %v881, 0.0
      %vm1155 = vcmp.ge.f32.partialorder %v884, 0.0
      %vm1156 = vcmp.ge.f32.partialorder %v886, 0.0
      %vm1157 = vcmp.ge.f32.partialorder %v889, 0.0
      %vm1158 = vcmp.ge.f32.partialorder %v891, 0.0
      %vm1159 = vcmp.ge.f32.partialorder %v894, 0.0
      %vm1160 = vcmp.ge.f32.partialorder %v896, 0.0
      %vm1161 = vcmp.ge.f32.partialorder %v899, 0.0
      %vm1162 = vcmp.ge.f32.partialorder %v901, 0.0
      %vm1163 = vcmp.ge.f32.partialorder %v904, 0.0
      %vm1164 = vcmp.ge.f32.partialorder %v906, 0.0
      %vm1165 = vcmp.ge.f32.partialorder %v909, 0.0
      %vm1166 = vcmp.ge.f32.partialorder %v911, 0.0
      %vm1167 = vcmp.ge.f32.partialorder %v914, 0.0
      %vm1168 = vcmp.ge.f32.partialorder %v916, 0.0
      %vm1169 = vcmp.ge.f32.partialorder %v919, 0.0
      %vm1170 = vcmp.ge.f32.partialorder %v921, 0.0
      %vm1171 = vcmp.ge.f32.partialorder %v924, 0.0
      %vm1172 = vcmp.ge.f32.partialorder %v926, 0.0
      %vm1173 = vcmp.ge.f32.partialorder %v929, 0.0
      %vm1174 = vcmp.ge.f32.partialorder %v931, 0.0
      %vm1175 = vcmp.ge.f32.partialorder %v934, 0.0
      %vm1176 = vcmp.ge.f32.partialorder %v936, 0.0
      %vm1177 = vcmp.ge.f32.partialorder %v939, 0.0
      %vm1178 = vcmp.ge.f32.partialorder %v941, 0.0
      %vm1179 = vcmp.ge.f32.partialorder %v944, 0.0
      %vm1180 = vcmp.ge.f32.partialorder %v946, 0.0
      %vm1181 = vcmp.ge.f32.partialorder %v949, 0.0
      %vm1182 = vcmp.ge.f32.partialorder %v951, 0.0
      %vm1183 = vcmp.ge.f32.partialorder %v954, 0.0
      %vm1184 = vcmp.ge.f32.partialorder %v956, 0.0
      %vm1185 = vcmp.ge.f32.partialorder %v959, 0.0
      %vm1186 = vcmp.ge.f32.partialorder %v961, 0.0
      %vm1187 = vcmp.ge.f32.partialorder %v964, 0.0
      %vm1188 = vcmp.ge.f32.partialorder %v966, 0.0
      %vm1189 = vcmp.ge.f32.partialorder %v969, 0.0
      %vm1190 = vcmp.ge.f32.partialorder %v971, 0.0
      %vm1191 = vcmp.ge.f32.partialorder %v974, 0.0
      %vm1192 = vcmp.ge.f32.partialorder %v976, 0.0
      %vm1193 = vcmp.ge.f32.partialorder %v979, 0.0
      %vm1194 = vcmp.ge.f32.partialorder %v981, 0.0
      %vm1195 = vcmp.ge.f32.partialorder %v984, 0.0
      %vm1196 = vcmp.ge.f32.partialorder %v986, 0.0
      %vm1197 = vcmp.ge.f32.partialorder %v989, 0.0
      %vm1198 = vcmp.ge.f32.partialorder %v991, 0.0
      %vm1199 = vcmp.ge.f32.partialorder %v994, 0.0
      %vm1200 = vcmp.ge.f32.partialorder %v996, 0.0
      %vm1201 = vcmp.ge.f32.partialorder %v999, 0.0
      %vm1202 = vcmp.ge.f32.partialorder %v1001, 0.0
      %vm1203 = vcmp.ge.f32.partialorder %v1004, 0.0
      %vm1204 = vcmp.ge.f32.partialorder %v1006, 0.0
      %vm1205 = vcmp.ge.f32.partialorder %v1009, 0.0
      %vm1206 = vcmp.ge.f32.partialorder %v1011, 0.0
      %vm1207 = vcmp.ge.f32.partialorder %v1014, 0.0
      %vm1208 = vcmp.ge.f32.partialorder %v1016, 0.0
      %vm1209 = vcmp.ge.f32.partialorder %v1019, 0.0
      %vm1210 = vcmp.ge.f32.partialorder %v1021, 0.0
      %vm1211 = vcmp.ge.f32.partialorder %v1024, 0.0
      %vm1212 = vcmp.ge.f32.partialorder %v1026, 0.0
      %vm1213 = vcmp.ge.f32.partialorder %v1029, 0.0
      %vm1214 = vcmp.ge.f32.partialorder %v1031, 0.0
      %vm1215 = vcmp.ge.f32.partialorder %v1034, 0.0
      %vm1216 = vcmp.ge.f32.partialorder %v1036, 0.0
      %vm1217 = vcmp.ge.f32.partialorder %v1039, 0.0
      %vm1218 = vcmp.ge.f32.partialorder %v1041, 0.0
      %vm1219 = vcmp.ge.f32.partialorder %v1044, 0.0
      %vm1220 = vcmp.ge.f32.partialorder %v1046, 0.0
      %vm1221 = vcmp.ge.f32.partialorder %v1049, 0.0
      %vm1222 = vcmp.ge.f32.partialorder %v1051, 0.0
      %vm1223 = vcmp.ge.f32.partialorder %v1054, 0.0
      %vm1224 = vcmp.ge.f32.partialorder %v1056, 0.0
      %vm1225 = vcmp.ge.f32.partialorder %v1059, 0.0
      %vm1226 = vcmp.ge.f32.partialorder %v1061, 0.0
      %vm1227 = vcmp.ge.f32.partialorder %v1064, 0.0
      %vm1228 = vcmp.ge.f32.partialorder %v1066, 0.0
      %vm1229 = vcmp.ge.f32.partialorder %v1069, 0.0
      %vm1230 = vcmp.ge.f32.partialorder %v1071, 0.0
      %vm1231 = vcmp.ge.f32.partialorder %v1074, 0.0
      %vm1232 = vcmp.ge.f32.partialorder %v1076, 0.0
      %vm1233 = vcmp.ge.f32.partialorder %v1079, 0.0
      %vm1234 = vcmp.ge.f32.partialorder %v1081, 0.0
      %vm1235 = vcmp.ge.f32.partialorder %v1084, 0.0
      %vm1236 = vcmp.ge.f32.partialorder %v1086, 0.0
      %vm1237 = vcmp.ge.f32.partialorder %v1089, 0.0
      %vm1238 = vcmp.ge.f32.partialorder %v1091, 0.0
      %vm1239 = vcmp.ge.f32.partialorder %v1094, 0.0
      %vm1240 = vcmp.ge.f32.partialorder %v1096, 0.0
      %vm1241 = vcmp.ge.f32.partialorder %v1099, 0.0
      %vm1242 = vcmp.ge.f32.partialorder %v1101, 0.0
      %vm1243 = vcmp.ge.f32.partialorder %v1104, 0.0
      %vm1244 = vcmp.ge.f32.partialorder %v1106, 0.0
      %vm1245 = vcmp.ge.f32.partialorder %v1109, 0.0
      %vm1246 = vcmp.ge.f32.partialorder %v1111, 0.0
      %vm1247 = vcmp.ge.f32.partialorder %v1114, 0.0
      %vm1248 = vcmp.ge.f32.partialorder %v1116, 0.0
      %vm1249 = vcmp.ge.f32.partialorder %v1119, 0.0
      %vm1250 = vcmp.ge.f32.partialorder %v1121, 0.0
      %v1251 = vmul.f32 %v804, 0.2
      %v1252 = vmul.f32 %v806, 0.2
      %v1253 = vmul.f32 %v809, 0.2
      %v1254 = vmul.f32 %v811, 0.2
      %v1255 = vmul.f32 %v814, 0.2
      %v1256 = vmul.f32 %v816, 0.2
      %v1257 = vmul.f32 %v819, 0.2
      %v1258 = vmul.f32 %v821, 0.2
      %v1259 = vmul.f32 %v824, 0.2
      %v1260 = vmul.f32 %v826, 0.2
      %v1261 = vmul.f32 %v829, 0.2
      %v1262 = vmul.f32 %v831, 0.2
      %v1263 = vmul.f32 %v834, 0.2
      %v1264 = vmul.f32 %v836, 0.2
      %v1265 = vmul.f32 %v839, 0.2
      %v1266 = vmul.f32 %v841, 0.2
      %v1267 = vmul.f32 %v844, 0.2
      %v1268 = vmul.f32 %v846, 0.2
      %v1269 = vmul.f32 %v849, 0.2
      %v1270 = vmul.f32 %v851, 0.2
      %v1271 = vmul.f32 %v854, 0.2
      %v1272 = vmul.f32 %v856, 0.2
      %v1273 = vmul.f32 %v859, 0.2
      %v1274 = vmul.f32 %v861, 0.2
      %v1275 = vmul.f32 %v864, 0.2
      %v1276 = vmul.f32 %v866, 0.2
      %v1277 = vmul.f32 %v869, 0.2
      %v1278 = vmul.f32 %v871, 0.2
      %v1279 = vmul.f32 %v874, 0.2
      %v1280 = vmul.f32 %v876, 0.2
      %v1281 = vmul.f32 %v879, 0.2
      %v1282 = vmul.f32 %v881, 0.2
      %v1283 = vmul.f32 %v884, 0.2
      %v1284 = vmul.f32 %v886, 0.2
      %v1285 = vmul.f32 %v889, 0.2
      %v1286 = vmul.f32 %v891, 0.2
      %v1287 = vmul.f32 %v894, 0.2
      %v1288 = vmul.f32 %v896, 0.2
      %v1289 = vmul.f32 %v899, 0.2
      %v1290 = vmul.f32 %v901, 0.2
      %v1291 = vmul.f32 %v904, 0.2
      %v1292 = vmul.f32 %v906, 0.2
      %v1293 = vmul.f32 %v909, 0.2
      %v1294 = vmul.f32 %v911, 0.2
      %v1295 = vmul.f32 %v914, 0.2
      %v1296 = vmul.f32 %v916, 0.2
      %v1297 = vmul.f32 %v919, 0.2
      %v1298 = vmul.f32 %v921, 0.2
      %v1299 = vmul.f32 %v924, 0.2
      %v1300 = vmul.f32 %v926, 0.2
      %v1301 = vmul.f32 %v929, 0.2
      %v1302 = vmul.f32 %v931, 0.2
      %v1303 = vmul.f32 %v934, 0.2
      %v1304 = vmul.f32 %v936, 0.2
      %v1305 = vmul.f32 %v939, 0.2
      %v1306 = vmul.f32 %v941, 0.2
      %v1307 = vmul.f32 %v944, 0.2
      %v1308 = vmul.f32 %v946, 0.2
      %v1309 = vmul.f32 %v949, 0.2
      %v1310 = vmul.f32 %v951, 0.2
      %v1311 = vmul.f32 %v954, 0.2
      %v1312 = vmul.f32 %v956, 0.2
      %v1313 = vmul.f32 %v959, 0.2
      %v1314 = vmul.f32 %v961, 0.2
      %v1315 = vmul.f32 %v964, 0.2
      %v1316 = vmul.f32 %v966, 0.2
      %v1317 = vmul.f32 %v969, 0.2
      %v1318 = vmul.f32 %v971, 0.2
      %v1319 = vmul.f32 %v974, 0.2
      %v1320 = vmul.f32 %v976, 0.2
      %v1321 = vmul.f32 %v979, 0.2
      %v1322 = vmul.f32 %v981, 0.2
      %v1323 = vmul.f32 %v984, 0.2
      %v1324 = vmul.f32 %v986, 0.2
      %v1325 = vmul.f32 %v989, 0.2
      %v1326 = vmul.f32 %v991, 0.2
      %v1327 = vmul.f32 %v994, 0.2
      %v1328 = vmul.f32 %v996, 0.2
      %v1329 = vmul.f32 %v999, 0.2
      %v1330 = vmul.f32 %v1001, 0.2
      %v1331 = vmul.f32 %v1004, 0.2
      %v1332 = vmul.f32 %v1006, 0.2
      %v1333 = vmul.f32 %v1009, 0.2
      %v1334 = vmul.f32 %v1011, 0.2
      %v1335 = vmul.f32 %v1014, 0.2
      %v1336 = vmul.f32 %v1016, 0.2
      %v1337 = vmul.f32 %v1019, 0.2
      %v1338 = vmul.f32 %v1021, 0.2
      %v1339 = vmul.f32 %v1024, 0.2
      %v1340 = vmul.f32 %v1026, 0.2
      %v1341 = vmul.f32 %v1029, 0.2
      %v1342 = vmul.f32 %v1031, 0.2
      %v1343 = vmul.f32 %v1034, 0.2
      %v1344 = vmul.f32 %v1036, 0.2
      %v1345 = vmul.f32 %v1039, 0.2
      %v1346 = vmul.f32 %v1041, 0.2
      %v1347 = vmul.f32 %v1044, 0.2
      %v1348 = vmul.f32 %v1046, 0.2
      %v1349 = vmul.f32 %v1049, 0.2
      %v1350 = vmul.f32 %v1051, 0.2
      %v1351 = vmul.f32 %v1054, 0.2
      %v1352 = vmul.f32 %v1056, 0.2
      %v1353 = vmul.f32 %v1059, 0.2
      %v1354 = vmul.f32 %v1061, 0.2
      %v1355 = vmul.f32 %v1064, 0.2
      %v1356 = vmul.f32 %v1066, 0.2
      %v1357 = vmul.f32 %v1069, 0.2
      %v1358 = vmul.f32 %v1071, 0.2
      %v1359 = vmul.f32 %v1074, 0.2
      %v1360 = vmul.f32 %v1076, 0.2
      %v1361 = vmul.f32 %v1079, 0.2
      %v1362 = vmul.f32 %v1081, 0.2
      %v1363 = vmul.f32 %v1084, 0.2
      %v1364 = vmul.f32 %v1086, 0.2
      %v1365 = vmul.f32 %v1089, 0.2
      %v1366 = vmul.f32 %v1091, 0.2
      %v1367 = vmul.f32 %v1094, 0.2
      %v1368 = vmul.f32 %v1096, 0.2
      %v1369 = vmul.f32 %v1099, 0.2
      %v1370 = vmul.f32 %v1101, 0.2
      %v1371 = vmul.f32 %v1104, 0.2
      %v1372 = vmul.f32 %v1106, 0.2
      %v1373 = vmul.f32 %v1109, 0.2
      %v1374 = vmul.f32 %v1111, 0.2
      %v1375 = vmul.f32 %v1114, 0.2
      %v1376 = vmul.f32 %v1116, 0.2
      %v1377 = vmul.f32 %v1119, 0.2
      %v1378 = vmul.f32 %v1121, 0.2
      %v1379 = vsel %vm1123, %v804, %v1251
      %v1380 = vsel %vm1124, %v806, %v1252
      %v1381 = vsel %vm1125, %v809, %v1253
      %v1382 = vsel %vm1126, %v811, %v1254
      %v1383 = vsel %vm1127, %v814, %v1255
      %v1384 = vsel %vm1128, %v816, %v1256
      %v1385 = vsel %vm1129, %v819, %v1257
      %v1386 = vsel %vm1130, %v821, %v1258
      %v1387 = vsel %vm1131, %v824, %v1259
      %v1388 = vsel %vm1132, %v826, %v1260
      %v1389 = vsel %vm1133, %v829, %v1261
      %v1390 = vsel %vm1134, %v831, %v1262
      %v1391 = vsel %vm1135, %v834, %v1263
      %v1392 = vsel %vm1136, %v836, %v1264
      %v1393 = vsel %vm1137, %v839, %v1265
      %v1394 = vsel %vm1138, %v841, %v1266
      %v1395 = vsel %vm1139, %v844, %v1267
      %v1396 = vsel %vm1140, %v846, %v1268
      %v1397 = vsel %vm1141, %v849, %v1269
      %v1398 = vsel %vm1142, %v851, %v1270
      %v1399 = vsel %vm1143, %v854, %v1271
      %v1400 = vsel %vm1144, %v856, %v1272
      %v1401 = vsel %vm1145, %v859, %v1273
      %v1402 = vsel %vm1146, %v861, %v1274
      %v1403 = vsel %vm1147, %v864, %v1275
      %v1404 = vsel %vm1148, %v866, %v1276
      %v1405 = vsel %vm1149, %v869, %v1277
      %v1406 = vsel %vm1150, %v871, %v1278
      %v1407 = vsel %vm1151, %v874, %v1279
      %v1408 = vsel %vm1152, %v876, %v1280
      %v1409 = vsel %vm1153, %v879, %v1281
      %v1410 = vsel %vm1154, %v881, %v1282
      %v1411 = vsel %vm1155, %v884, %v1283
      %v1412 = vsel %vm1156, %v886, %v1284
      %v1413 = vsel %vm1157, %v889, %v1285
      %v1414 = vsel %vm1158, %v891, %v1286
      %v1415 = vsel %vm1159, %v894, %v1287
      %v1416 = vsel %vm1160, %v896, %v1288
      %v1417 = vsel %vm1161, %v899, %v1289
      %v1418 = vsel %vm1162, %v901, %v1290
      %v1419 = vsel %vm1163, %v904, %v1291
      %v1420 = vsel %vm1164, %v906, %v1292
      %v1421 = vsel %vm1165, %v909, %v1293
      %v1422 = vsel %vm1166, %v911, %v1294
      %v1423 = vsel %vm1167, %v914, %v1295
      %v1424 = vsel %vm1168, %v916, %v1296
      %v1425 = vsel %vm1169, %v919, %v1297
      %v1426 = vsel %vm1170, %v921, %v1298
      %v1427 = vsel %vm1171, %v924, %v1299
      %v1428 = vsel %vm1172, %v926, %v1300
      %v1429 = vsel %vm1173, %v929, %v1301
      %v1430 = vsel %vm1174, %v931, %v1302
      %v1431 = vsel %vm1175, %v934, %v1303
      %v1432 = vsel %vm1176, %v936, %v1304
      %v1433 = vsel %vm1177, %v939, %v1305
      %v1434 = vsel %vm1178, %v941, %v1306
      %v1435 = vsel %vm1179, %v944, %v1307
      %v1436 = vsel %vm1180, %v946, %v1308
      %v1437 = vsel %vm1181, %v949, %v1309
      %v1438 = vsel %vm1182, %v951, %v1310
      %v1439 = vsel %vm1183, %v954, %v1311
      %v1440 = vsel %vm1184, %v956, %v1312
      %v1441 = vsel %vm1185, %v959, %v1313
      %v1442 = vsel %vm1186, %v961, %v1314
      %v1443 = vsel %vm1187, %v964, %v1315
      %v1444 = vsel %vm1188, %v966, %v1316
      %v1445 = vsel %vm1189, %v969, %v1317
      %v1446 = vsel %vm1190, %v971, %v1318
      %v1447 = vsel %vm1191, %v974, %v1319
      %v1448 = vsel %vm1192, %v976, %v1320
      %v1449 = vsel %vm1193, %v979, %v1321
      %v1450 = vsel %vm1194, %v981, %v1322
      %v1451 = vsel %vm1195, %v984, %v1323
      %v1452 = vsel %vm1196, %v986, %v1324
      %v1453 = vsel %vm1197, %v989, %v1325
      %v1454 = vsel %vm1198, %v991, %v1326
      %v1455 = vsel %vm1199, %v994, %v1327
      %v1456 = vsel %vm1200, %v996, %v1328
      %v1457 = vsel %vm1201, %v999, %v1329
      %v1458 = vsel %vm1202, %v1001, %v1330
      %v1459 = vsel %vm1203, %v1004, %v1331
      %v1460 = vsel %vm1204, %v1006, %v1332
      %v1461 = vsel %vm1205, %v1009, %v1333
      %v1462 = vsel %vm1206, %v1011, %v1334
      %v1463 = vsel %vm1207, %v1014, %v1335
      %v1464 = vsel %vm1208, %v1016, %v1336
      %v1465 = vsel %vm1209, %v1019, %v1337
      %v1466 = vsel %vm1210, %v1021, %v1338
      %v1467 = vsel %vm1211, %v1024, %v1339
      %v1468 = vsel %vm1212, %v1026, %v1340
      %v1469 = vsel %vm1213, %v1029, %v1341
      %v1470 = vsel %vm1214, %v1031, %v1342
      %v1471 = vsel %vm1215, %v1034, %v1343
      %v1472 = vsel %vm1216, %v1036, %v1344
      %v1473 = vsel %vm1217, %v1039, %v1345
      %v1474 = vsel %vm1218, %v1041, %v1346
      %v1475 = vsel %vm1219, %v1044, %v1347
      %v1476 = vsel %vm1220, %v1046, %v1348
      %v1477 = vsel %vm1221, %v1049, %v1349
      %v1478 = vsel %vm1222, %v1051, %v1350
      %v1479 = vsel %vm1223, %v1054, %v1351
      %v1480 = vsel %vm1224, %v1056, %v1352
      %v1481 = vsel %vm1225, %v1059, %v1353
      %v1482 = vsel %vm1226, %v1061, %v1354
      %v1483 = vsel %vm1227, %v1064, %v1355
      %v1484 = vsel %vm1228, %v1066, %v1356
      %v1485 = vsel %vm1229, %v1069, %v1357
      %v1486 = vsel %vm1230, %v1071, %v1358
      %v1487 = vsel %vm1231, %v1074, %v1359
      %v1488 = vsel %vm1232, %v1076, %v1360
      %v1489 = vsel %vm1233, %v1079, %v1361
      %v1490 = vsel %vm1234, %v1081, %v1362
      %v1491 = vsel %vm1235, %v1084, %v1363
      %v1492 = vsel %vm1236, %v1086, %v1364
      %v1493 = vsel %vm1237, %v1089, %v1365
      %v1494 = vsel %vm1238, %v1091, %v1366
      %v1495 = vsel %vm1239, %v1094, %v1367
      %v1496 = vsel %vm1240, %v1096, %v1368
      %v1497 = vsel %vm1241, %v1099, %v1369
      %v1498 = vsel %vm1242, %v1101, %v1370
      %v1499 = vsel %vm1243, %v1104, %v1371
      %v1500 = vsel %vm1244, %v1106, %v1372
      %v1501 = vsel %vm1245, %v1109, %v1373
      %v1502 = vsel %vm1246, %v1111, %v1374
      %v1503 = vsel %vm1247, %v1114, %v1375
      %v1504 = vsel %vm1248, %v1116, %v1376
      %v1505 = vsel %vm1249, %v1119, %v1377
      %v1506 = vsel %vm1250, %v1121, %v1378
      %v1507 = vpack.c.bf16 %v1379, %v1379
      %v1508 = vpack.c.bf16 %v1380, %v1380
      %v1509 = vpack.c.bf16 %v1381, %v1381
      %v1510 = vpack.c.bf16 %v1382, %v1382
      %v1511 = vpack.c.bf16 %v1383, %v1383
      %v1512 = vpack.c.bf16 %v1384, %v1384
      %v1513 = vpack.c.bf16 %v1385, %v1385
      %v1514 = vpack.c.bf16 %v1386, %v1386
      %v1515 = vpack.c.bf16 %v1387, %v1387
      %v1516 = vpack.c.bf16 %v1388, %v1388
      %v1517 = vpack.c.bf16 %v1389, %v1389
      %v1518 = vpack.c.bf16 %v1390, %v1390
      %v1519 = vpack.c.bf16 %v1391, %v1391
      %v1520 = vpack.c.bf16 %v1392, %v1392
      %v1521 = vpack.c.bf16 %v1393, %v1393
      %v1522 = vpack.c.bf16 %v1394, %v1394
      %v1523 = vpack.c.bf16 %v1395, %v1395
      %v1524 = vpack.c.bf16 %v1396, %v1396
      %v1525 = vpack.c.bf16 %v1397, %v1397
      %v1526 = vpack.c.bf16 %v1398, %v1398
      %v1527 = vpack.c.bf16 %v1399, %v1399
      %v1528 = vpack.c.bf16 %v1400, %v1400
      %v1529 = vpack.c.bf16 %v1401, %v1401
      %v1530 = vpack.c.bf16 %v1402, %v1402
      %v1531 = vpack.c.bf16 %v1403, %v1403
      %v1532 = vpack.c.bf16 %v1404, %v1404
      %v1533 = vpack.c.bf16 %v1405, %v1405
      %v1534 = vpack.c.bf16 %v1406, %v1406
      %v1535 = vpack.c.bf16 %v1407, %v1407
      %v1536 = vpack.c.bf16 %v1408, %v1408
      %v1537 = vpack.c.bf16 %v1409, %v1409
      %v1538 = vpack.c.bf16 %v1410, %v1410
      %v1539 = vpack.c.bf16 %v1411, %v1411
      %v1540 = vpack.c.bf16 %v1412, %v1412
      %v1541 = vpack.c.bf16 %v1413, %v1413
      %v1542 = vpack.c.bf16 %v1414, %v1414
      %v1543 = vpack.c.bf16 %v1415, %v1415
      %v1544 = vpack.c.bf16 %v1416, %v1416
      %v1545 = vpack.c.bf16 %v1417, %v1417
      %v1546 = vpack.c.bf16 %v1418, %v1418
      %v1547 = vpack.c.bf16 %v1419, %v1419
      %v1548 = vpack.c.bf16 %v1420, %v1420
      %v1549 = vpack.c.bf16 %v1421, %v1421
      %v1550 = vpack.c.bf16 %v1422, %v1422
      %v1551 = vpack.c.bf16 %v1423, %v1423
      %v1552 = vpack.c.bf16 %v1424, %v1424
      %v1553 = vpack.c.bf16 %v1425, %v1425
      %v1554 = vpack.c.bf16 %v1426, %v1426
      %v1555 = vpack.c.bf16 %v1427, %v1427
      %v1556 = vpack.c.bf16 %v1428, %v1428
      %v1557 = vpack.c.bf16 %v1429, %v1429
      %v1558 = vpack.c.bf16 %v1430, %v1430
      %v1559 = vpack.c.bf16 %v1431, %v1431
      %v1560 = vpack.c.bf16 %v1432, %v1432
      %v1561 = vpack.c.bf16 %v1433, %v1433
      %v1562 = vpack.c.bf16 %v1434, %v1434
      %v1563 = vpack.c.bf16 %v1435, %v1435
      %v1564 = vpack.c.bf16 %v1436, %v1436
      %v1565 = vpack.c.bf16 %v1437, %v1437
      %v1566 = vpack.c.bf16 %v1438, %v1438
      %v1567 = vpack.c.bf16 %v1439, %v1439
      %v1568 = vpack.c.bf16 %v1440, %v1440
      %v1569 = vpack.c.bf16 %v1441, %v1441
      %v1570 = vpack.c.bf16 %v1442, %v1442
      %v1571 = vpack.c.bf16 %v1443, %v1443
      %v1572 = vpack.c.bf16 %v1444, %v1444
      %v1573 = vpack.c.bf16 %v1445, %v1445
      %v1574 = vpack.c.bf16 %v1446, %v1446
      %v1575 = vpack.c.bf16 %v1447, %v1447
      %v1576 = vpack.c.bf16 %v1448, %v1448
      %v1577 = vpack.c.bf16 %v1449, %v1449
      %v1578 = vpack.c.bf16 %v1450, %v1450
      %v1579 = vpack.c.bf16 %v1451, %v1451
      %v1580 = vpack.c.bf16 %v1452, %v1452
      %v1581 = vpack.c.bf16 %v1453, %v1453
      %v1582 = vpack.c.bf16 %v1454, %v1454
      %v1583 = vpack.c.bf16 %v1455, %v1455
      %v1584 = vpack.c.bf16 %v1456, %v1456
      %v1585 = vpack.c.bf16 %v1457, %v1457
      %v1586 = vpack.c.bf16 %v1458, %v1458
      %v1587 = vpack.c.bf16 %v1459, %v1459
      %v1588 = vpack.c.bf16 %v1460, %v1460
      %v1589 = vpack.c.bf16 %v1461, %v1461
      %v1590 = vpack.c.bf16 %v1462, %v1462
      %v1591 = vpack.c.bf16 %v1463, %v1463
      %v1592 = vpack.c.bf16 %v1464, %v1464
      %v1593 = vpack.c.bf16 %v1465, %v1465
      %v1594 = vpack.c.bf16 %v1466, %v1466
      %v1595 = vpack.c.bf16 %v1467, %v1467
      %v1596 = vpack.c.bf16 %v1468, %v1468
      %v1597 = vpack.c.bf16 %v1469, %v1469
      %v1598 = vpack.c.bf16 %v1470, %v1470
      %v1599 = vpack.c.bf16 %v1471, %v1471
      %v1600 = vpack.c.bf16 %v1472, %v1472
      %v1601 = vpack.c.bf16 %v1473, %v1473
      %v1602 = vpack.c.bf16 %v1474, %v1474
      %v1603 = vpack.c.bf16 %v1475, %v1475
      %v1604 = vpack.c.bf16 %v1476, %v1476
      %v1605 = vpack.c.bf16 %v1477, %v1477
      %v1606 = vpack.c.bf16 %v1478, %v1478
      %v1607 = vpack.c.bf16 %v1479, %v1479
      %v1608 = vpack.c.bf16 %v1480, %v1480
      %v1609 = vpack.c.bf16 %v1481, %v1481
      %v1610 = vpack.c.bf16 %v1482, %v1482
      %v1611 = vpack.c.bf16 %v1483, %v1483
      %v1612 = vpack.c.bf16 %v1484, %v1484
      %v1613 = vpack.c.bf16 %v1485, %v1485
      %v1614 = vpack.c.bf16 %v1486, %v1486
      %v1615 = vpack.c.bf16 %v1487, %v1487
      %v1616 = vpack.c.bf16 %v1488, %v1488
      %v1617 = vpack.c.bf16 %v1489, %v1489
      %v1618 = vpack.c.bf16 %v1490, %v1490
      %v1619 = vpack.c.bf16 %v1491, %v1491
      %v1620 = vpack.c.bf16 %v1492, %v1492
      %v1621 = vpack.c.bf16 %v1493, %v1493
      %v1622 = vpack.c.bf16 %v1494, %v1494
      %v1623 = vpack.c.bf16 %v1495, %v1495
      %v1624 = vpack.c.bf16 %v1496, %v1496
      %v1625 = vpack.c.bf16 %v1497, %v1497
      %v1626 = vpack.c.bf16 %v1498, %v1498
      %v1627 = vpack.c.bf16 %v1499, %v1499
      %v1628 = vpack.c.bf16 %v1500, %v1500
      %v1629 = vpack.c.bf16 %v1501, %v1501
      %v1630 = vpack.c.bf16 %v1502, %v1502
      %v1631 = vpack.c.bf16 %v1503, %v1503
      %v1632 = vpack.c.bf16 %v1504, %v1504
      %v1633 = vpack.c.bf16 %v1505, %v1505
      %v1634 = vpack.c.bf16 %v1506, %v1506
      %1635 = vst [vmem:[%s216] sm:$0xf] %v1507
      %1636 = vst [vmem:[%s216 + $0x4] sm:$0xf] %v1508
      %1637 = vst [vmem:[%s216 + $0x8] sm:$0xf] %v1509
      %1638 = vst [vmem:[%s216 + $0xc] sm:$0xf] %v1510
      %1639 = vst [vmem:[%s216 + $0x10] sm:$0xf] %v1511
      %1640 = vst [vmem:[%s216 + $0x14] sm:$0xf] %v1512
      %1641 = vst [vmem:[%s216 + $0x18] sm:$0xf] %v1513
      %1642 = vst [vmem:[%s216 + $0x1c] sm:$0xf] %v1514
      %1643 = vst [vmem:[%s216 + $0x20] sm:$0xf] %v1515
      %1644 = vst [vmem:[%s216 + $0x24] sm:$0xf] %v1516
      %1645 = vst [vmem:[%s216 + $0x28] sm:$0xf] %v1517
      %1646 = vst [vmem:[%s216 + $0x2c] sm:$0xf] %v1518
      %1647 = vst [vmem:[%s216 + $0x30] sm:$0xf] %v1519
      %1648 = vst [vmem:[%s216 + $0x34] sm:$0xf] %v1520
      %1649 = vst [vmem:[%s216 + $0x38] sm:$0xf] %v1521
      %1650 = vst [vmem:[%s216 + $0x3c] sm:$0xf] %v1522
      %1651 = vst [vmem:[%s216 + $0x40] sm:$0xf] %v1523
      %1652 = vst [vmem:[%s216 + $0x44] sm:$0xf] %v1524
      %1653 = vst [vmem:[%s216 + $0x48] sm:$0xf] %v1525
      %1654 = vst [vmem:[%s216 + $0x4c] sm:$0xf] %v1526
      %1655 = vst [vmem:[%s216 + $0x50] sm:$0xf] %v1527
      %1656 = vst [vmem:[%s216 + $0x54] sm:$0xf] %v1528
      %1657 = vst [vmem:[%s216 + $0x58] sm:$0xf] %v1529
      %1658 = vst [vmem:[%s216 + $0x5c] sm:$0xf] %v1530
      %1659 = vst [vmem:[%s216 + $0x60] sm:$0xf] %v1531
      %1660 = vst [vmem:[%s216 + $0x64] sm:$0xf] %v1532
      %1661 = vst [vmem:[%s216 + $0x68] sm:$0xf] %v1533
      %1662 = vst [vmem:[%s216 + $0x6c] sm:$0xf] %v1534
      %1663 = vst [vmem:[%s216 + $0x70] sm:$0xf] %v1535
      %1664 = vst [vmem:[%s216 + $0x74] sm:$0xf] %v1536
      %1665 = vst [vmem:[%s216 + $0x78] sm:$0xf] %v1537
      %1666 = vst [vmem:[%s216 + $0x7c] sm:$0xf] %v1538
      %1667 = vst [vmem:[%s216 + $0x80] sm:$0xf] %v1539
      %1668 = vst [vmem:[%s216 + $0x84] sm:$0xf] %v1540
      %1669 = vst [vmem:[%s216 + $0x88] sm:$0xf] %v1541
      %1670 = vst [vmem:[%s216 + $0x8c] sm:$0xf] %v1542
      %1671 = vst [vmem:[%s216 + $0x90] sm:$0xf] %v1543
      %1672 = vst [vmem:[%s216 + $0x94] sm:$0xf] %v1544
      %1673 = vst [vmem:[%s216 + $0x98] sm:$0xf] %v1545
      %1674 = vst [vmem:[%s216 + $0x9c] sm:$0xf] %v1546
      %1675 = vst [vmem:[%s216 + $0xa0] sm:$0xf] %v1547
      %1676 = vst [vmem:[%s216 + $0xa4] sm:$0xf] %v1548
      %1677 = vst [vmem:[%s216 + $0xa8] sm:$0xf] %v1549
      %1678 = vst [vmem:[%s216 + $0xac] sm:$0xf] %v1550
      %1679 = vst [vmem:[%s216 + $0xb0] sm:$0xf] %v1551
      %1680 = vst [vmem:[%s216 + $0xb4] sm:$0xf] %v1552
      %1681 = vst [vmem:[%s216 + $0xb8] sm:$0xf] %v1553
      %1682 = vst [vmem:[%s216 + $0xbc] sm:$0xf] %v1554
      %1683 = vst [vmem:[%s216 + $0xc0] sm:$0xf] %v1555
      %1684 = vst [vmem:[%s216 + $0xc4] sm:$0xf] %v1556
      %1685 = vst [vmem:[%s216 + $0xc8] sm:$0xf] %v1557
      %1686 = vst [vmem:[%s216 + $0xcc] sm:$0xf] %v1558
      %1687 = vst [vmem:[%s216 + $0xd0] sm:$0xf] %v1559
      %1688 = vst [vmem:[%s216 + $0xd4] sm:$0xf] %v1560
      %1689 = vst [vmem:[%s216 + $0xd8] sm:$0xf] %v1561
      %1690 = vst [vmem:[%s216 + $0xdc] sm:$0xf] %v1562
      %1691 = vst [vmem:[%s216 + $0xe0] sm:$0xf] %v1563
      %1692 = vst [vmem:[%s216 + $0xe4] sm:$0xf] %v1564
      %1693 = vst [vmem:[%s216 + $0xe8] sm:$0xf] %v1565
      %1694 = vst [vmem:[%s216 + $0xec] sm:$0xf] %v1566
      %1695 = vst [vmem:[%s216 + $0xf0] sm:$0xf] %v1567
      %1696 = vst [vmem:[%s216 + $0xf4] sm:$0xf] %v1568
      %1697 = vst [vmem:[%s216 + $0xf8] sm:$0xf] %v1569
      %1698 = vst [vmem:[%s216 + $0xfc] sm:$0xf] %v1570
      %1699 = vst [vmem:[%s216 + $0x100] sm:$0xf] %v1571
      %1700 = vst [vmem:[%s216 + $0x104] sm:$0xf] %v1572
      %1701 = vst [vmem:[%s216 + $0x108] sm:$0xf] %v1573
      %1702 = vst [vmem:[%s216 + $0x10c] sm:$0xf] %v1574
      %1703 = vst [vmem:[%s216 + $0x110] sm:$0xf] %v1575
      %1704 = vst [vmem:[%s216 + $0x114] sm:$0xf] %v1576
      %1705 = vst [vmem:[%s216 + $0x118] sm:$0xf] %v1577
      %1706 = vst [vmem:[%s216 + $0x11c] sm:$0xf] %v1578
      %1707 = vst [vmem:[%s216 + $0x120] sm:$0xf] %v1579
      %1708 = vst [vmem:[%s216 + $0x124] sm:$0xf] %v1580
      %1709 = vst [vmem:[%s216 + $0x128] sm:$0xf] %v1581
      %1710 = vst [vmem:[%s216 + $0x12c] sm:$0xf] %v1582
      %1711 = vst [vmem:[%s216 + $0x130] sm:$0xf] %v1583
      %1712 = vst [vmem:[%s216 + $0x134] sm:$0xf] %v1584
      %1713 = vst [vmem:[%s216 + $0x138] sm:$0xf] %v1585
      %1714 = vst [vmem:[%s216 + $0x13c] sm:$0xf] %v1586
      %1715 = vst [vmem:[%s216 + $0x140] sm:$0xf] %v1587
      %1716 = vst [vmem:[%s216 + $0x144] sm:$0xf] %v1588
      %1717 = vst [vmem:[%s216 + $0x148] sm:$0xf] %v1589
      %1718 = vst [vmem:[%s216 + $0x14c] sm:$0xf] %v1590
      %1719 = vst [vmem:[%s216 + $0x150] sm:$0xf] %v1591
      %1720 = vst [vmem:[%s216 + $0x154] sm:$0xf] %v1592
      %1721 = vst [vmem:[%s216 + $0x158] sm:$0xf] %v1593
      %1722 = vst [vmem:[%s216 + $0x15c] sm:$0xf] %v1594
      %1723 = vst [vmem:[%s216 + $0x160] sm:$0xf] %v1595
      %1724 = vst [vmem:[%s216 + $0x164] sm:$0xf] %v1596
      %1725 = vst [vmem:[%s216 + $0x168] sm:$0xf] %v1597
      %1726 = vst [vmem:[%s216 + $0x16c] sm:$0xf] %v1598
      %1727 = vst [vmem:[%s216 + $0x170] sm:$0xf] %v1599
      %1728 = vst [vmem:[%s216 + $0x174] sm:$0xf] %v1600
      %1729 = vst [vmem:[%s216 + $0x178] sm:$0xf] %v1601
      %1730 = vst [vmem:[%s216 + $0x17c] sm:$0xf] %v1602
      %1731 = vst [vmem:[%s216 + $0x180] sm:$0xf] %v1603
      %1732 = vst [vmem:[%s216 + $0x184] sm:$0xf] %v1604
      %1733 = vst [vmem:[%s216 + $0x188] sm:$0xf] %v1605
      %1734 = vst [vmem:[%s216 + $0x18c] sm:$0xf] %v1606
      %1735 = vst [vmem:[%s216 + $0x190] sm:$0xf] %v1607
      %1736 = vst [vmem:[%s216 + $0x194] sm:$0xf] %v1608
      %1737 = vst [vmem:[%s216 + $0x198] sm:$0xf] %v1609
      %1738 = vst [vmem:[%s216 + $0x19c] sm:$0xf] %v1610
      %1739 = vst [vmem:[%s216 + $0x1a0] sm:$0xf] %v1611
      %1740 = vst [vmem:[%s216 + $0x1a4] sm:$0xf] %v1612
      %1741 = vst [vmem:[%s216 + $0x1a8] sm:$0xf] %v1613
      %1742 = vst [vmem:[%s216 + $0x1ac] sm:$0xf] %v1614
      %1743 = vst [vmem:[%s216 + $0x1b0] sm:$0xf] %v1615
      %1744 = vst [vmem:[%s216 + $0x1b4] sm:$0xf] %v1616
      %1745 = vst [vmem:[%s216 + $0x1b8] sm:$0xf] %v1617
      %1746 = vst [vmem:[%s216 + $0x1bc] sm:$0xf] %v1618
      %1747 = vst [vmem:[%s216 + $0x1c0] sm:$0xf] %v1619
      %1748 = vst [vmem:[%s216 + $0x1c4] sm:$0xf] %v1620
      %1749 = vst [vmem:[%s216 + $0x1c8] sm:$0xf] %v1621
      %1750 = vst [vmem:[%s216 + $0x1cc] sm:$0xf] %v1622
      %1751 = vst [vmem:[%s216 + $0x1d0] sm:$0xf] %v1623
      %1752 = vst [vmem:[%s216 + $0x1d4] sm:$0xf] %v1624
      %1753 = vst [vmem:[%s216 + $0x1d8] sm:$0xf] %v1625
      %1754 = vst [vmem:[%s216 + $0x1dc] sm:$0xf] %v1626
      %1755 = vst [vmem:[%s216 + $0x1e0] sm:$0xf] %v1627
      %1756 = vst [vmem:[%s216 + $0x1e4] sm:$0xf] %v1628
      %1757 = vst [vmem:[%s216 + $0x1e8] sm:$0xf] %v1629
      %1758 = vst [vmem:[%s216 + $0x1ec] sm:$0xf] %v1630
      %1759 = vst [vmem:[%s216 + $0x1f0] sm:$0xf] %v1631
      %1760 = vst [vmem:[%s216 + $0x1f4] sm:$0xf] %v1632
      %1761 = vst [vmem:[%s216 + $0x1f8] sm:$0xf] %v1633
      %1762 = vst [vmem:[%s216 + $0x1fc] sm:$0xf] %v1634
      %s1763 = smul.u32 128, %s18
      %p1764 = scmp.lt.s32.totalorder %s1763, 255
      %s1765 = scalar_select %p1764, %s1763, 255
      %p1766 = scmp.lt.s32.totalorder %s19, 0
      %s1767 = scalar_select %p1766, %s19, 0
      %s1768 = sadd.s32 %s1767, %s1765
      %s1769 = smul.addr %s1768, 4
      %s1770 = scalar_lea.vmem %s2, %s1769
      // Predicated region
      $region29: #{discriminator_forward.6} parent=27 // pred_check
        %p1771 = pneg %p108
      $region30: #{discriminator_forward.6} parent=27 // pred_check_branch
        %1773 = sbr.rel (%p1771) target = $region32
      $region31: #{discriminator_forward.6} parent=27 // pred_region
        %s1774 = smul.u32 128, %s18
      $region32: #{discriminator_forward.6} parent=27 // pred_fallthru
        _
    $region28: #{discriminator_forward.6} parent=5 // pred_fallthru
      _
    %p1775 = scmp.le.s32.totalorder 2, %s8
    // Predicated region
    $region33: #{discriminator_forward.6} parent=5 // pred_check
      %p1776 = pneg %p1775
    $region34: #{discriminator_forward.6} parent=5 // pred_check_branch
      %1778 = sbr.rel (%p1776) target = $region36
    $region35: #{discriminator_forward.6} parent=5 // pred_region
      %s1779 = ssub.s32 %s8, 2
      // Predicated region
      $region37: #{discriminator_forward.6} parent=35 // pred_check
        %p1780 = pneg %p114
      $region38: #{discriminator_forward.6} parent=35 // pred_check_branch
        %1782 = sbr.rel (%p1780) target = $region40
      $region39: #{discriminator_forward.6} parent=35 // pred_region
        %s1783 = smul.u32 128, %s21
        %p1784 = scmp.lt.s32.totalorder %s1783, 255
        %s1785 = scalar_select %p1784, %s1783, 255
        %p1786 = scmp.lt.s32.totalorder %s22, 0
        %s1787 = scalar_select %p1786, %s22, 0
        %s1788 = sadd.s32 %s1787, %s1785
        %s1789 = smul.addr %s1788, 4
        %s1790 = scalar_lea.vmem %s2, %s1789
      $region40: #{discriminator_forward.6} parent=35 // pred_fallthru
        _
    $region36: #{discriminator_forward.6} parent=5 // pred_fallthru
      _
  $region6: #{discriminator_forward.6} parent=0 // loop_footer
    %s12 = sadd.s32 1, %s8
  $region7: #{discriminator_forward.6} parent=0 // loop_footer_branch
    %7 = sbr.rel target = $region3
  $region8: #{discriminator_forward.6} parent=0 // loop_exit
    _

// kernel: discriminator_forward.7
$region0: #{discriminator_forward.7}
  #allocation0 [shape = 'u32[]', space=smem, size = 0x4, offset = 0x4, fixed_abs, tag = 'smem constant byte address 0x4 - core index']
  #allocation1 [shape = 'u32[72,128]{1,0:T(1,128)}', space=vmem, size = 0x9000, scoped, tag = 'internal scratch']
  #allocation2 [shape = 'f32[512,128]{1,0:T(8,128)}', space=vmem, size = 0x40000, scoped, tag = 'scratch operand']
  %s0 = inlined_call_operand.vmem [shape: bf16[512,2048], index: 0, kind: input, shape index: {}]
  %s1 = inlined_call_operand.vmem [shape: bf16[2048,128], index: 1, kind: input, shape index: {}]
  %s2 = inlined_call_operand.vmem [shape: f32[1,128], index: 2, kind: input, shape index: {}]
  %s3 = inlined_call_operand.vmem [shape: f32[1,128], index: 3, kind: input, shape index: {}]
  %s4 = inlined_call_operand.vmem [shape: bf16[512,128], index: 4, kind: output, shape index: {}]
  %s5 = sld [smem:[#allocation0]]
  $region80: #{discriminator_forward.7} parent=0
    _
  %s7 = ssub.s32 1, %s5
  %s8 = scalar_select 0, %s7, %s5
  $region1: #{discriminator_forward.7} parent=0
    #allocation3 [shape = 'u8[1048576]{0}', space=vmem, size = 0x100000, scoped, tag = 'input window, operand 0']
    loop: start=0, step=1, limit=6
    $region2: #{discriminator_forward.7} parent=1 // loop_pre_header
      _
    $region3: #{discriminator_forward.7} parent=1 // loop_header
      %s10 = sphi 0, %s14
      %p11 = scmp.ge.s32.totalorder %s10, 6
      %s17 = sphi 0, %s36
      %s18 = sphi 0, %s32
      %s19 = sphi 0, %s28
      %s20 = sphi 0, %s17
      %s21 = sphi 0, %s18
      %s22 = sphi 0, %s19
      %s23 = sphi 0, %s20
      %s24 = sphi 0, %s21
      %s25 = sphi 0, %s22
      %s41 = sphi 0, %s43
      %s44 = sphi 0, %s41
      %s45 = sphi 0, %s44
      %s61 = sphi 0, %s45
      %s69 = sphi 0, %s71
      %s72 = sphi 0, %s69
      %s73 = sphi 0, %s72
      %s89 = sphi 0, %s73
      %s95 = sphi 0, %s97
      %s98 = sphi 0, %s95
      %s99 = sphi 0, %s98
      %s115 = sphi 0, %s99
      %s121 = sphi 0, %s123
      %s124 = sphi 0, %s121
      %s125 = sphi 0, %s124
      %s141 = sphi 0, %s125
      %s149 = sphi 0, %s151
      %s152 = sphi 0, %s149
      %s153 = sphi 0, %s152
      %s169 = sphi 0, %s153
    $region4: #{discriminator_forward.7} parent=1 // loop_header_branch
      %13 = sbr.rel (%p11) target = $region8
    $region5: #{discriminator_forward.7} parent=1 // loop_body
      %s15 = ssub.s32 %s10, 1
      %s16 = ssub.s32 %s10, 2
      %s26 = sadd.s32 1, %s19
      %p27 = scmp.ge.s32.totalorder %s26, 4
      %s28 = scalar_select %p27, 0, %s26
      %s29 = sadd.s32 1, %s18
      %s30 = scalar_select %p27, %s29, %s18
      %p31 = scmp.ge.s32.totalorder %s30, 1
      %s32 = scalar_select %p31, 0, %s30
      %s33 = sadd.s32 1, %s17
      %s34 = scalar_select %p31, %s33, %s17
      %p35 = scmp.ge.s32.totalorder %s34, 1
      %s36 = scalar_select %p35, 0, %s34
      %s37 = ssub.s32 %s17, %s36
      %s38 = ssub.s32 %s19, %s28
      %s39 = sor.u32 %s37, %s38
      %p40 = scmp.eq.s32.totalorder %s39, 0
      %s42 = sadd.s32 %s41, 1
      %s43 = scalar_select %p40, %s41, %s42
      %p46 = pneg %p40
      %p47 = scmp.eq.s32.totalorder %s10, 3
      %p48 = por %p46, %p47
      %p49 = scmp.ne.s32.totalorder %s41, %s44
      %p50 = scmp.eq.s32.totalorder %s10, 0
      %p51 = por %p49, %p50
      %p52 = scmp.ne.s32.totalorder %s41, %s44
      %p53 = scmp.eq.s32.totalorder %s15, 3
      %p54 = por %p52, %p53
      %p55 = scmp.ne.s32.totalorder %s44, %s45
      %p56 = scmp.eq.s32.totalorder %s15, 0
      %p57 = por %p55, %p56
      %p58 = scmp.ne.s32.totalorder %s44, %s45
      %p59 = scmp.eq.s32.totalorder %s16, 3
      %p60 = por %p58, %p59
      %p62 = scmp.ne.s32.totalorder %s45, %s61
      %p63 = scmp.eq.s32.totalorder %s16, 0
      %p64 = por %p62, %p63
      %s65 = ssub.s32 %s19, %s28
      %s66 = ssub.s32 %s18, %s32
      %s67 = sor.u32 %s65, %s66
      %p68 = scmp.eq.s32.totalorder %s67, 0
      %s70 = sadd.s32 %s69, 1
      %s71 = scalar_select %p68, %s69, %s70
      %p74 = pneg %p68
      %p75 = scmp.eq.s32.totalorder %s10, 3
      %p76 = por %p74, %p75
      %p77 = scmp.ne.s32.totalorder %s69, %s72
      %p78 = scmp.eq.s32.totalorder %s10, 0
      %p79 = por %p77, %p78
      %p80 = scmp.ne.s32.totalorder %s69, %s72
      %p81 = scmp.eq.s32.totalorder %s15, 3
      %p82 = por %p80, %p81
      %p83 = scmp.ne.s32.totalorder %s72, %s73
      %p84 = scmp.eq.s32.totalorder %s15, 0
      %p85 = por %p83, %p84
      %p86 = scmp.ne.s32.totalorder %s72, %s73
      %p87 = scmp.eq.s32.totalorder %s16, 3
      %p88 = por %p86, %p87
      %p90 = scmp.ne.s32.totalorder %s73, %s89
      %p91 = scmp.eq.s32.totalorder %s16, 0
      %p92 = por %p90, %p91
      %s93 = ssub.s32 %s18, %s32
      %p94 = scmp.eq.s32.totalorder %s93, 0
      %s96 = sadd.s32 %s95, 1
      %s97 = scalar_select %p94, %s95, %s96
      %p100 = pneg %p94
      %p101 = scmp.eq.s32.totalorder %s10, 3
      %p102 = por %p100, %p101
      %p103 = scmp.ne.s32.totalorder %s95, %s98
      %p104 = scmp.eq.s32.totalorder %s10, 0
      %p105 = por %p103, %p104
      %p106 = scmp.ne.s32.totalorder %s95, %s98
      %p107 = scmp.eq.s32.totalorder %s15, 3
      %p108 = por %p106, %p107
      %p109 = scmp.ne.s32.totalorder %s98, %s99
      %p110 = scmp.eq.s32.totalorder %s15, 0
      %p111 = por %p109, %p110
      %p112 = scmp.ne.s32.totalorder %s98, %s99
      %p113 = scmp.eq.s32.totalorder %s16, 3
      %p114 = por %p112, %p113
      %p116 = scmp.ne.s32.totalorder %s99, %s115
      %p117 = scmp.eq.s32.totalorder %s16, 0
      %p118 = por %p116, %p117
      %s119 = ssub.s32 %s18, %s32
      %p120 = scmp.eq.s32.totalorder %s119, 0
      %s122 = sadd.s32 %s121, 1
      %s123 = scalar_select %p120, %s121, %s122
      %p126 = pneg %p120
      %p127 = scmp.eq.s32.totalorder %s10, 3
      %p128 = por %p126, %p127
      %p129 = scmp.ne.s32.totalorder %s121, %s124
      %p130 = scmp.eq.s32.totalorder %s10, 0
      %p131 = por %p129, %p130
      %p132 = scmp.ne.s32.totalorder %s121, %s124
      %p133 = scmp.eq.s32.totalorder %s15, 3
      %p134 = por %p132, %p133
      %p135 = scmp.ne.s32.totalorder %s124, %s125
      %p136 = scmp.eq.s32.totalorder %s15, 0
      %p137 = por %p135, %p136
      %p138 = scmp.ne.s32.totalorder %s124, %s125
      %p139 = scmp.eq.s32.totalorder %s16, 3
      %p140 = por %p138, %p139
      %p142 = scmp.ne.s32.totalorder %s125, %s141
      %p143 = scmp.eq.s32.totalorder %s16, 0
      %p144 = por %p142, %p143
      %s145 = ssub.s32 %s17, %s36
      %s146 = ssub.s32 %s18, %s32
      %s147 = sor.u32 %s145, %s146
      %p148 = scmp.eq.s32.totalorder %s147, 0
      %s150 = sadd.s32 %s149, 1
      %s151 = scalar_select %p148, %s149, %s150
      %p154 = pneg %p148
      %p155 = scmp.eq.s32.totalorder %s10, 3
      %p156 = por %p154, %p155
      %p157 = scmp.ne.s32.totalorder %s149, %s152
      %p158 = scmp.eq.s32.totalorder %s10, 0
      %p159 = por %p157, %p158
      %p160 = scmp.ne.s32.totalorder %s149, %s152
      %p161 = scmp.eq.s32.totalorder %s15, 3
      %p162 = por %p160, %p161
      %p163 = scmp.ne.s32.totalorder %s152, %s153
      %p164 = scmp.eq.s32.totalorder %s15, 0
      %p165 = por %p163, %p164
      %p166 = scmp.ne.s32.totalorder %s152, %s153
      %p167 = scmp.eq.s32.totalorder %s16, 3
      %p168 = por %p166, %p167
      %p170 = scmp.ne.s32.totalorder %s153, %s169
      %p171 = scmp.eq.s32.totalorder %s16, 0
      %p172 = por %p170, %p171
      %p173 = scmp.le.s32.totalorder 1, %s10
      %p174 = scmp.lt.s32.totalorder %s10, 5
      %p175 = pnand %p173, %p174
      %p176 = pneg %p175
      // Predicated region
      $region9: #{discriminator_forward.7} parent=5 // pred_check
        _
      $region10: #{discriminator_forward.7} parent=5 // pred_check_branch
        %178 = sbr.rel (%p175) target = $region12
      $region11: #{discriminator_forward.7} parent=5 // pred_region
        %s179 = ssub.s32 %s10, 1
        // Predicated region
        $region13: #{discriminator_forward.7} parent=11 // pred_check
          %p180 = pneg %p111
        $region14: #{discriminator_forward.7} parent=11 // pred_check_branch
          %182 = sbr.rel (%p180) target = $region16
        $region15: #{discriminator_forward.7} parent=11 // pred_region
          %p183 = scmp.lt.s32.totalorder %s21, 0
          %s184 = scalar_select %p183, %s21, 0
          %s185 = scalar_lea.vmem %s2, %s184
        $region16: #{discriminator_forward.7} parent=11 // pred_fallthru
          _
        // Predicated region
        $region17: #{discriminator_forward.7} parent=11 // pred_check
          %p186 = pneg %p137
        $region18: #{discriminator_forward.7} parent=11 // pred_check_branch
          %188 = sbr.rel (%p186) target = $region20
        $region19: #{discriminator_forward.7} parent=11 // pred_region
          %p189 = scmp.lt.s32.totalorder %s21, 0
          %s190 = scalar_select %p189, %s21, 0
          %s191 = scalar_lea.vmem %s3, %s190
        $region20: #{discriminator_forward.7} parent=11 // pred_fallthru
          _
      $region12: #{discriminator_forward.7} parent=5 // pred_fallthru
        _
      %p192 = scmp.lt.s32.totalorder %s10, 4
      // Predicated region
      $region21: #{discriminator_forward.7} parent=5 // pred_check
        %p193 = pneg %p192
      $region22: #{discriminator_forward.7} parent=5 // pred_check_branch
        %195 = sbr.rel (%p193) target = $region24
      $region23: #{discriminator_forward.7} parent=5 // pred_region
        // Predicated region
        $region25: #{discriminator_forward.7} parent=23 // pred_check
          %p196 = pneg %p51
        $region26: #{discriminator_forward.7} parent=23 // pred_check_branch
          %198 = sbr.rel (%p196) target = $region28
        $region27: #{discriminator_forward.7} parent=23 // pred_region
          %s199 = sand.u32 %s41, 1
          %s200 = sand.u32 %s41, 1
          %s201 = smul.addr %s200, 1024
          %s202 = scalar_lea.vmem [#allocation3], %s201
          %s203 = smul.u32 64, %s17
          %s204 = smul.u32 4, %s19
          %s205 = smul.addr %s203, 16
          %s206 = sadd.s32 %s204, %s205
          %s207 = smul.addr %s206, 4
          %s208 = scalar_lea.vmem %s0, %s207
          // Predicated region
          $region29: #{discriminator_forward.7} parent=27 // pred_check
            _
          $region30: #{discriminator_forward.7} parent=27 // pred_check_branch
            %210 = sbr.rel (0) target = $region32
          $region31: #{discriminator_forward.7} parent=27 // pred_region
            // Predicated region
            $region33: #{discriminator_forward.7} parent=31 // pred_check
              _
            $region34: #{discriminator_forward.7} parent=31 // pred_check_branch
              %212 = sbr.rel (0) target = $region36
            $region35: #{discriminator_forward.7} parent=31 // pred_region
              loop: start=0, step=1, limit=1
              $region37: #{discriminator_forward.7} parent=35 // loop_pre_header
                _
              $region38: #{discriminator_forward.7} parent=35 // loop_header
                %s214 = sphi 0, %s218
                %p215 = scmp.ge.s32.totalorder %s214, 1
                %s219 = sphi %s208, %s208
                %s220 = sphi %s202, %s202
              $region39: #{discriminator_forward.7} parent=35 // loop_header_branch
                %217 = sbr.rel (%p215) target = $region43
              $region40: #{discriminator_forward.7} parent=35 // loop_body
                %v221 = vld [vmem:[%s219] sm:$0xff]
                %222 = vst [vmem:[%s220] sm:$0xff] %v221
                %v223 = vld [vmem:[%s219 + $0x8] sm:$0xff]
                %224 = vst [vmem:[%s220 + $0x8] sm:$0xff] %v223
                %v225 = vld [vmem:[%s219 + $0x40] sm:$0xff]
                %226 = vst [vmem:[%s220 + $0x10] sm:$0xff] %v225
                %v227 = vld [vmem:[%s219 + $0x48] sm:$0xff]
                %228 = vst [vmem:[%s220 + $0x18] sm:$0xff] %v227
                %v229 = vld [vmem:[%s219 + $0x80] sm:$0xff]
                %230 = vst [vmem:[%s220 + $0x20] sm:$0xff] %v229
                %v231 = vld [vmem:[%s219 + $0x88] sm:$0xff]
                %232 = vst [vmem:[%s220 + $0x28] sm:$0xff] %v231
                %v233 = vld [vmem:[%s219 + $0xc0] sm:$0xff]
                %234 = vst [vmem:[%s220 + $0x30] sm:$0xff] %v233
                %v235 = vld [vmem:[%s219 + $0xc8] sm:$0xff]
                %236 = vst [vmem:[%s220 + $0x38] sm:$0xff] %v235
                %v237 = vld [vmem:[%s219 + $0x100] sm:$0xff]
                %238 = vst [vmem:[%s220 + $0x40] sm:$0xff] %v237
                %v239 = vld [vmem:[%s219 + $0x108] sm:$0xff]
                %240 = vst [vmem:[%s220 + $0x48] sm:$0xff] %v239
                %v241 = vld [vmem:[%s219 + $0x140] sm:$0xff]
                %242 = vst [vmem:[%s220 + $0x50] sm:$0xff] %v241
                %v243 = vld [vmem:[%s219 + $0x148] sm:$0xff]
                %244 = vst [vmem:[%s220 + $0x58] sm:$0xff] %v243
                %v245 = vld [vmem:[%s219 + $0x180] sm:$0xff]
                %246 = vst [vmem:[%s220 + $0x60] sm:$0xff] %v245
                %v247 = vld [vmem:[%s219 + $0x188] sm:$0xff]
                %248 = vst [vmem:[%s220 + $0x68] sm:$0xff] %v247
                %v249 = vld [vmem:[%s219 + $0x1c0] sm:$0xff]
                %250 = vst [vmem:[%s220 + $0x70] sm:$0xff] %v249
                %v251 = vld [vmem:[%s219 + $0x1c8] sm:$0xff]
                %252 = vst [vmem:[%s220 + $0x78] sm:$0xff] %v251
                %v253 = vld [vmem:[%s219 + $0x200] sm:$0xff]
                %254 = vst [vmem:[%s220 + $0x80] sm:$0xff] %v253
                %v255 = vld [vmem:[%s219 + $0x208] sm:$0xff]
                %256 = vst [vmem:[%s220 + $0x88] sm:$0xff] %v255
                %v257 = vld [vmem:[%s219 + $0x240] sm:$0xff]
                %258 = vst [vmem:[%s220 + $0x90] sm:$0xff] %v257
                %v259 = vld [vmem:[%s219 + $0x248] sm:$0xff]
                %260 = vst [vmem:[%s220 + $0x98] sm:$0xff] %v259
                %v261 = vld [vmem:[%s219 + $0x280] sm:$0xff]
                %262 = vst [vmem:[%s220 + $0xa0] sm:$0xff] %v261
                %v263 = vld [vmem:[%s219 + $0x288] sm:$0xff]
                %264 = vst [vmem:[%s220 + $0xa8] sm:$0xff] %v263
                %v265 = vld [vmem:[%s219 + $0x2c0] sm:$0xff]
                %266 = vst [vmem:[%s220 + $0xb0] sm:$0xff] %v265
                %v267 = vld [vmem:[%s219 + $0x2c8] sm:$0xff]
                %268 = vst [vmem:[%s220 + $0xb8] sm:$0xff] %v267
                %v269 = vld [vmem:[%s219 + $0x300] sm:$0xff]
                %270 = vst [vmem:[%s220 + $0xc0] sm:$0xff] %v269
                %v271 = vld [vmem:[%s219 + $0x308] sm:$0xff]
                %272 = vst [vmem:[%s220 + $0xc8] sm:$0xff] %v271
                %v273 = vld [vmem:[%s219 + $0x340] sm:$0xff]
                %274 = vst [vmem:[%s220 + $0xd0] sm:$0xff] %v273
                %v275 = vld [vmem:[%s219 + $0x348] sm:$0xff]
                %276 = vst [vmem:[%s220 + $0xd8] sm:$0xff] %v275
                %v277 = vld [vmem:[%s219 + $0x380] sm:$0xff]
                %278 = vst [vmem:[%s220 + $0xe0] sm:$0xff] %v277
                %v279 = vld [vmem:[%s219 + $0x388] sm:$0xff]
                %280 = vst [vmem:[%s220 + $0xe8] sm:$0xff] %v279
                %v281 = vld [vmem:[%s219 + $0x3c0] sm:$0xff]
                %282 = vst [vmem:[%s220 + $0xf0] sm:$0xff] %v281
                %v283 = vld [vmem:[%s219 + $0x3c8] sm:$0xff]
                %284 = vst [vmem:[%s220 + $0xf8] sm:$0xff] %v283
                %v285 = vld [vmem:[%s219 + $0x400] sm:$0xff]
                %286 = vst [vmem:[%s220 + $0x100] sm:$0xff] %v285
                %v287 = vld [vmem:[%s219 + $0x408] sm:$0xff]
                %288 = vst [vmem:[%s220 + $0x108] sm:$0xff] %v287
                %v289 = vld [vmem:[%s219 + $0x440] sm:$0xff]
                %290 = vst [vmem:[%s220 + $0x110] sm:$0xff] %v289
                %v291 = vld [vmem:[%s219 + $0x448] sm:$0xff]
                %292 = vst [vmem:[%s220 + $0x118] sm:$0xff] %v291
                %v293 = vld [vmem:[%s219 + $0x480] sm:$0xff]
                %294 = vst [vmem:[%s220 + $0x120] sm:$0xff] %v293
                %v295 = vld [vmem:[%s219 + $0x488] sm:$0xff]
                %296 = vst [vmem:[%s220 + $0x128] sm:$0xff] %v295
                %v297 = vld [vmem:[%s219 + $0x4c0] sm:$0xff]
                %298 = vst [vmem:[%s220 + $0x130] sm:$0xff] %v297
                %v299 = vld [vmem:[%s219 + $0x4c8] sm:$0xff]
                %300 = vst [vmem:[%s220 + $0x138] sm:$0xff] %v299
                %v301 = vld [vmem:[%s219 + $0x500] sm:$0xff]
                %302 = vst [vmem:[%s220 + $0x140] sm:$0xff] %v301
                %v303 = vld [vmem:[%s219 + $0x508] sm:$0xff]
                %304 = vst [vmem:[%s220 + $0x148] sm:$0xff] %v303
                %v305 = vld [vmem:[%s219 + $0x540] sm:$0xff]
                %306 = vst [vmem:[%s220 + $0x150] sm:$0xff] %v305
                %v307 = vld [vmem:[%s219 + $0x548] sm:$0xff]
                %308 = vst [vmem:[%s220 + $0x158] sm:$0xff] %v307
                %v309 = vld [vmem:[%s219 + $0x580] sm:$0xff]
                %310 = vst [vmem:[%s220 + $0x160] sm:$0xff] %v309
                %v311 = vld [vmem:[%s219 + $0x588] sm:$0xff]
                %312 = vst [vmem:[%s220 + $0x168] sm:$0xff] %v311
                %v313 = vld [vmem:[%s219 + $0x5c0] sm:$0xff]
                %314 = vst [vmem:[%s220 + $0x170] sm:$0xff] %v313
                %v315 = vld [vmem:[%s219 + $0x5c8] sm:$0xff]
                %316 = vst [vmem:[%s220 + $0x178] sm:$0xff] %v315
                %v317 = vld [vmem:[%s219 + $0x600] sm:$0xff]
                %318 = vst [vmem:[%s220 + $0x180] sm:$0xff] %v317
                %v319 = vld [vmem:[%s219 + $0x608] sm:$0xff]
                %320 = vst [vmem:[%s220 + $0x188] sm:$0xff] %v319
                %v321 = vld [vmem:[%s219 + $0x640] sm:$0xff]
                %322 = vst [vmem:[%s220 + $0x190] sm:$0xff] %v321
                %v323 = vld [vmem:[%s219 + $0x648] sm:$0xff]
                %324 = vst [vmem:[%s220 + $0x198] sm:$0xff] %v323
                %v325 = vld [vmem:[%s219 + $0x680] sm:$0xff]
                %326 = vst [vmem:[%s220 + $0x1a0] sm:$0xff] %v325
                %v327 = vld [vmem:[%s219 + $0x688] sm:$0xff]
                %328 = vst [vmem:[%s220 + $0x1a8] sm:$0xff] %v327
                %v329 = vld [vmem:[%s219 + $0x6c0] sm:$0xff]
                %330 = vst [vmem:[%s220 + $0x1b0] sm:$0xff] %v329
                %v331 = vld [vmem:[%s219 + $0x6c8] sm:$0xff]
                %332 = vst [vmem:[%s220 + $0x1b8] sm:$0xff] %v331
                %v333 = vld [vmem:[%s219 + $0x700] sm:$0xff]
                %334 = vst [vmem:[%s220 + $0x1c0] sm:$0xff] %v333
                %v335 = vld [vmem:[%s219 + $0x708] sm:$0xff]
                %336 = vst [vmem:[%s220 + $0x1c8] sm:$0xff] %v335
                %v337 = vld [vmem:[%s219 + $0x740] sm:$0xff]
                %338 = vst [vmem:[%s220 + $0x1d0] sm:$0xff] %v337
                %v339 = vld [vmem:[%s219 + $0x748] sm:$0xff]
                %340 = vst [vmem:[%s220 + $0x1d8] sm:$0xff] %v339
                %v341 = vld [vmem:[%s219 + $0x780] sm:$0xff]
                %342 = vst [vmem:[%s220 + $0x1e0] sm:$0xff] %v341
                %v343 = vld [vmem:[%s219 + $0x788] sm:$0xff]
                %344 = vst [vmem:[%s220 + $0x1e8] sm:$0xff] %v343
                %v345 = vld [vmem:[%s219 + $0x7c0] sm:$0xff]
                %346 = vst [vmem:[%s220 + $0x1f0] sm:$0xff] %v345
                %v347 = vld [vmem:[%s219 + $0x7c8] sm:$0xff]
                %348 = vst [vmem:[%s220 + $0x1f8] sm:$0xff] %v347
                %v349 = vld [vmem:[%s219 + $0x800] sm:$0xff]
                %350 = vst [vmem:[%s220 + $0x200] sm:$0xff] %v349
                %v351 = vld [vmem:[%s219 + $0x808] sm:$0xff]
                %352 = vst [vmem:[%s220 + $0x208] sm:$0xff] %v351
                %v353 = vld [vmem:[%s219 + $0x840] sm:$0xff]
                %354 = vst [vmem:[%s220 + $0x210] sm:$0xff] %v353
                %v355 = vld [vmem:[%s219 + $0x848] sm:$0xff]
                %356 = vst [vmem:[%s220 + $0x218] sm:$0xff] %v355
                %v357 = vld [vmem:[%s219 + $0x880] sm:$0xff]
                %358 = vst [vmem:[%s220 + $0x220] sm:$0xff] %v357
                %v359 = vld [vmem:[%s219 + $0x888] sm:$0xff]
                %360 = vst [vmem:[%s220 + $0x228] sm:$0xff] %v359
                %v361 = vld [vmem:[%s219 + $0x8c0] sm:$0xff]
                %362 = vst [vmem:[%s220 + $0x230] sm:$0xff] %v361
                %v363 = vld [vmem:[%s219 + $0x8c8] sm:$0xff]
                %364 = vst [vmem:[%s220 + $0x238] sm:$0xff] %v363
                %v365 = vld [vmem:[%s219 + $0x900] sm:$0xff]
                %366 = vst [vmem:[%s220 + $0x240] sm:$0xff] %v365
                %v367 = vld [vmem:[%s219 + $0x908] sm:$0xff]
                %368 = vst [vmem:[%s220 + $0x248] sm:$0xff] %v367
                %v369 = vld [vmem:[%s219 + $0x940] sm:$0xff]
                %370 = vst [vmem:[%s220 + $0x250] sm:$0xff] %v369
                %v371 = vld [vmem:[%s219 + $0x948] sm:$0xff]
                %372 = vst [vmem:[%s220 + $0x258] sm:$0xff] %v371
                %v373 = vld [vmem:[%s219 + $0x980] sm:$0xff]
                %374 = vst [vmem:[%s220 + $0x260] sm:$0xff] %v373
                %v375 = vld [vmem:[%s219 + $0x988] sm:$0xff]
                %376 = vst [vmem:[%s220 + $0x268] sm:$0xff] %v375
                %v377 = vld [vmem:[%s219 + $0x9c0] sm:$0xff]
                %378 = vst [vmem:[%s220 + $0x270] sm:$0xff] %v377
                %v379 = vld [vmem:[%s219 + $0x9c8] sm:$0xff]
                %380 = vst [vmem:[%s220 + $0x278] sm:$0xff] %v379
                %v381 = vld [vmem:[%s219 + $0xa00] sm:$0xff]
                %382 = vst [vmem:[%s220 + $0x280] sm:$0xff] %v381
                %v383 = vld [vmem:[%s219 + $0xa08] sm:$0xff]
                %384 = vst [vmem:[%s220 + $0x288] sm:$0xff] %v383
                %v385 = vld [vmem:[%s219 + $0xa40] sm:$0xff]
                %386 = vst [vmem:[%s220 + $0x290] sm:$0xff] %v385
                %v387 = vld [vmem:[%s219 + $0xa48] sm:$0xff]
                %388 = vst [vmem:[%s220 + $0x298] sm:$0xff] %v387
                %v389 = vld [vmem:[%s219 + $0xa80] sm:$0xff]
                %390 = vst [vmem:[%s220 + $0x2a0] sm:$0xff] %v389
                %v391 = vld [vmem:[%s219 + $0xa88] sm:$0xff]
                %392 = vst [vmem:[%s220 + $0x2a8] sm:$0xff] %v391
                %v393 = vld [vmem:[%s219 + $0xac0] sm:$0xff]
                %394 = vst [vmem:[%s220 + $0x2b0] sm:$0xff] %v393
                %v395 = vld [vmem:[%s219 + $0xac8] sm:$0xff]
                %396 = vst [vmem:[%s220 + $0x2b8] sm:$0xff] %v395
                %v397 = vld [vmem:[%s219 + $0xb00] sm:$0xff]
                %398 = vst [vmem:[%s220 + $0x2c0] sm:$0xff] %v397
                %v399 = vld [vmem:[%s219 + $0xb08] sm:$0xff]
                %400 = vst [vmem:[%s220 + $0x2c8] sm:$0xff] %v399
                %v401 = vld [vmem:[%s219 + $0xb40] sm:$0xff]
                %402 = vst [vmem:[%s220 + $0x2d0] sm:$0xff] %v401
                %v403 = vld [vmem:[%s219 + $0xb48] sm:$0xff]
                %404 = vst [vmem:[%s220 + $0x2d8] sm:$0xff] %v403
                %v405 = vld [vmem:[%s219 + $0xb80] sm:$0xff]
                %406 = vst [vmem:[%s220 + $0x2e0] sm:$0xff] %v405
                %v407 = vld [vmem:[%s219 + $0xb88] sm:$0xff]
                %408 = vst [vmem:[%s220 + $0x2e8] sm:$0xff] %v407
                %v409 = vld [vmem:[%s219 + $0xbc0] sm:$0xff]
                %410 = vst [vmem:[%s220 + $0x2f0] sm:$0xff] %v409
                %v411 = vld [vmem:[%s219 + $0xbc8] sm:$0xff]
                %412 = vst [vmem:[%s220 + $0x2f8] sm:$0xff] %v411
                %v413 = vld [vmem:[%s219 + $0xc00] sm:$0xff]
                %414 = vst [vmem:[%s220 + $0x300] sm:$0xff] %v413
                %v415 = vld [vmem:[%s219 + $0xc08] sm:$0xff]
                %416 = vst [vmem:[%s220 + $0x308] sm:$0xff] %v415
                %v417 = vld [vmem:[%s219 + $0xc40] sm:$0xff]
                %418 = vst [vmem:[%s220 + $0x310] sm:$0xff] %v417
                %v419 = vld [vmem:[%s219 + $0xc48] sm:$0xff]
                %420 = vst [vmem:[%s220 + $0x318] sm:$0xff] %v419
                %v421 = vld [vmem:[%s219 + $0xc80] sm:$0xff]
                %422 = vst [vmem:[%s220 + $0x320] sm:$0xff] %v421
                %v423 = vld [vmem:[%s219 + $0xc88] sm:$0xff]
                %424 = vst [vmem:[%s220 + $0x328] sm:$0xff] %v423
                %v425 = vld [vmem:[%s219 + $0xcc0] sm:$0xff]
                %426 = vst [vmem:[%s220 + $0x330] sm:$0xff] %v425
                %v427 = vld [vmem:[%s219 + $0xcc8] sm:$0xff]
                %428 = vst [vmem:[%s220 + $0x338] sm:$0xff] %v427
                %v429 = vld [vmem:[%s219 + $0xd00] sm:$0xff]
                %430 = vst [vmem:[%s220 + $0x340] sm:$0xff] %v429
                %v431 = vld [vmem:[%s219 + $0xd08] sm:$0xff]
                %432 = vst [vmem:[%s220 + $0x348] sm:$0xff] %v431
                %v433 = vld [vmem:[%s219 + $0xd40] sm:$0xff]
                %434 = vst [vmem:[%s220 + $0x350] sm:$0xff] %v433
                %v435 = vld [vmem:[%s219 + $0xd48] sm:$0xff]
                %436 = vst [vmem:[%s220 + $0x358] sm:$0xff] %v435
                %v437 = vld [vmem:[%s219 + $0xd80] sm:$0xff]
                %438 = vst [vmem:[%s220 + $0x360] sm:$0xff] %v437
                %v439 = vld [vmem:[%s219 + $0xd88] sm:$0xff]
                %440 = vst [vmem:[%s220 + $0x368] sm:$0xff] %v439
                %v441 = vld [vmem:[%s219 + $0xdc0] sm:$0xff]
                %442 = vst [vmem:[%s220 + $0x370] sm:$0xff] %v441
                %v443 = vld [vmem:[%s219 + $0xdc8] sm:$0xff]
                %444 = vst [vmem:[%s220 + $0x378] sm:$0xff] %v443
                %v445 = vld [vmem:[%s219 + $0xe00] sm:$0xff]
                %446 = vst [vmem:[%s220 + $0x380] sm:$0xff] %v445
                %v447 = vld [vmem:[%s219 + $0xe08] sm:$0xff]
                %448 = vst [vmem:[%s220 + $0x388] sm:$0xff] %v447
                %v449 = vld [vmem:[%s219 + $0xe40] sm:$0xff]
                %450 = vst [vmem:[%s220 + $0x390] sm:$0xff] %v449
                %v451 = vld [vmem:[%s219 + $0xe48] sm:$0xff]
                %452 = vst [vmem:[%s220 + $0x398] sm:$0xff] %v451
                %v453 = vld [vmem:[%s219 + $0xe80] sm:$0xff]
                %454 = vst [vmem:[%s220 + $0x3a0] sm:$0xff] %v453
                %v455 = vld [vmem:[%s219 + $0xe88] sm:$0xff]
                %456 = vst [vmem:[%s220 + $0x3a8] sm:$0xff] %v455
                %v457 = vld [vmem:[%s219 + $0xec0] sm:$0xff]
                %458 = vst [vmem:[%s220 + $0x3b0] sm:$0xff] %v457
                %v459 = vld [vmem:[%s219 + $0xec8] sm:$0xff]
                %460 = vst [vmem:[%s220 + $0x3b8] sm:$0xff] %v459
                %v461 = vld [vmem:[%s219 + $0xf00] sm:$0xff]
                %462 = vst [vmem:[%s220 + $0x3c0] sm:$0xff] %v461
                %v463 = vld [vmem:[%s219 + $0xf08] sm:$0xff]
                %464 = vst [vmem:[%s220 + $0x3c8] sm:$0xff] %v463
                %v465 = vld [vmem:[%s219 + $0xf40] sm:$0xff]
                %466 = vst [vmem:[%s220 + $0x3d0] sm:$0xff] %v465
                %v467 = vld [vmem:[%s219 + $0xf48] sm:$0xff]
                %468 = vst [vmem:[%s220 + $0x3d8] sm:$0xff] %v467
                %v469 = vld [vmem:[%s219 + $0xf80] sm:$0xff]
                %470 = vst [vmem:[%s220 + $0x3e0] sm:$0xff] %v469
                %v471 = vld [vmem:[%s219 + $0xf88] sm:$0xff]
                %472 = vst [vmem:[%s220 + $0x3e8] sm:$0xff] %v471
                %v473 = vld [vmem:[%s219 + $0xfc0] sm:$0xff]
                %474 = vst [vmem:[%s220 + $0x3f0] sm:$0xff] %v473
                %v475 = vld [vmem:[%s219 + $0xfc8] sm:$0xff]
                %476 = vst [vmem:[%s220 + $0x3f8] sm:$0xff] %v475
              $region41: #{discriminator_forward.7} parent=35 // loop_footer
                %s218 = sadd.s32 1, %s214
              $region42: #{discriminator_forward.7} parent=35 // loop_footer_branch
                %213 = sbr.rel target = $region38
              $region43: #{discriminator_forward.7} parent=35 // loop_exit
                _
            $region36: #{discriminator_forward.7} parent=31 // pred_fallthru
              _
            // Predicated region
            $region44: #{discriminator_forward.7} parent=31 // pred_check
              _
            $region45: #{discriminator_forward.7} parent=31 // pred_check_branch
              %478 = sbr.rel target = $region47
            $region46: #{discriminator_forward.7} parent=31 // pred_region
              _
            $region47: #{discriminator_forward.7} parent=31 // pred_fallthru
              _
          $region32: #{discriminator_forward.7} parent=27 // pred_fallthru
            _
          %479 = vnop
        $region28: #{discriminator_forward.7} parent=23 // pred_fallthru
          _
        // Predicated region
        $region48: #{discriminator_forward.7} parent=23 // pred_check
          %p480 = pneg %p79
        $region49: #{discriminator_forward.7} parent=23 // pred_check_branch
          %482 = sbr.rel (%p480) target = $region51
        $region50: #{discriminator_forward.7} parent=23 // pred_region
          %s483 = smul.u32 64, %s19
          %p484 = scmp.lt.s32.totalorder %s483, 255
          %s485 = scalar_select %p484, %s483, 255
          %p486 = scmp.lt.s32.totalorder %s18, 0
          %s487 = scalar_select %p486, %s18, 0
          %s488 = sadd.s32 %s487, %s485
          %s489 = smul.addr %s488, 4
          %s490 = scalar_lea.vmem %s1, %s489
          %s491 = smul.u32 64, %s19
        $region51: #{discriminator_forward.7} parent=23 // pred_fallthru
          _
      $region24: #{discriminator_forward.7} parent=5 // pred_fallthru
        _
      %p492 = scmp.le.s32.totalorder 1, %s10
      %p493 = scmp.lt.s32.totalorder %s10, 5
      %p494 = pnand %p492, %p493
      %p495 = pneg %p494
      // Predicated region
      $region52: #{discriminator_forward.7} parent=5 // pred_check
        _
      $region53: #{discriminator_forward.7} parent=5 // pred_check_branch
        %497 = sbr.rel (%p494) target = $region55
      $region54: #{discriminator_forward.7} parent=5 // pred_region
        %s498 = ssub.s32 %s10, 1
        %s499 = sand.u32 %s44, 1
        %s500 = sand.u32 %s44, 1
        %s501 = smul.addr %s500, 1024
        %s502 = scalar_lea.vmem [#allocation3], %s501
        // Predicated region
        $region56: #{discriminator_forward.7} parent=54 // pred_check
          %p503 = pneg %p57
        $region57: #{discriminator_forward.7} parent=54 // pred_check_branch
          %505 = sbr.rel (%p503) target = $region59
        $region58: #{discriminator_forward.7} parent=54 // pred_region
          _
        $region59: #{discriminator_forward.7} parent=54 // pred_fallthru
          _
        %s506 = sand.u32 %s44, 1
        %s507 = sand.u32 %s44, 1
        %s508 = smul.addr %s507, 1024
        %s509 = scalar_lea.vmem [#allocation3], %s508
        %p510 = pneg %p57
        %p511 = pneg %p54
        %s512 = smul.u32 64, %s22
        %p513 = scmp.lt.s32.totalorder %s512, 255
        %s514 = scalar_select %p513, %s512, 255
        %p515 = scmp.lt.s32.totalorder %s21, 0
        %s516 = scalar_select %p515, %s21, 0
        %s517 = sadd.s32 %s516, %s514
        %s518 = smul.addr %s517, 4
        %s519 = scalar_lea.vmem %s1, %s518
        %p520 = pneg %p85
        %p521 = pneg %p82
        %p522 = scmp.lt.s32.totalorder %s21, 0
        %s523 = scalar_select %p522, %s21, 0
        %s524 = scalar_lea.vmem %s2, %s523
        %p525 = pneg %p111
        %p526 = pneg %p108
        %p527 = scmp.lt.s32.totalorder %s21, 0
        %s528 = scalar_select %p527, %s21, 0
        %s529 = scalar_lea.vmem %s3, %s528
        %p530 = pneg %p137
        %p531 = pneg %p134
        %p532 = pneg %p165
        %p533 = pneg %p162
        %s534 = smul.u32 64, %s20
        %p535 = scmp.lt.s32.totalorder %s534, 63
        %s536 = scalar_select %p535, %s534, 63
        %p537 = scmp.lt.s32.totalorder %s21, 0
        %s538 = scalar_select %p537, %s21, 0
        %s539 = sadd.s32 %s538, %s536
        %s540 = smul.addr %s539, 4
        %s541 = scalar_lea.vmem %s4, %s540
        %s542 = smul.u32 64, %s20
        %s543 = smul.u32 4, %s22
        %s544 = smul.u32 64, %s22
        %p545 = scmp.lt.s32.totalorder %s544, 255
        %s546 = scalar_select %p545, %s544, 255
        %p547 = scmp.lt.s32.totalorder %s21, 0
        %s548 = scalar_select %p547, %s21, 0
        %s549 = sadd.s32 %s548, %s546
        %s550 = smul.addr %s549, 4
        %s551 = scalar_lea.vmem %s1, %s550
        %s552 = smul.u32 64, %s22
        %p553 = scmp.lt.s32.totalorder %s21, 0
        %s554 = scalar_select %p553, %s21, 0
        %s555 = scalar_lea.vmem %s2, %s554
        %p556 = scmp.lt.s32.totalorder %s21, 0
        %s557 = scalar_select %p556, %s21, 0
        %s558 = scalar_lea.vmem %s3, %s557
        %s559 = smul.u32 64, %s20
        %p560 = scmp.lt.s32.totalorder %s559, 63
        %s561 = scalar_select %p560, %s559, 63
        %p562 = scmp.lt.s32.totalorder %s21, 0
        %s563 = scalar_select %p562, %s21, 0
        %s564 = sadd.s32 %s563, %s561
        %s565 = smul.addr %s564, 4
        %s566 = scalar_lea.vmem %s4, %s565
        %s567 = smul.u32 64, %s20
        %p568 = scmp.eq.s32.totalorder %s22, 0
        // Predicated region
        $region60: #{discriminator_forward.7} parent=54 // pred_check
          %p569 = pneg %p568
        $region61: #{discriminator_forward.7} parent=54 // pred_check_branch
          %571 = sbr.rel (%p569) target = $region63
        $region62: #{discriminator_forward.7} parent=54 // pred_region
          %572 = vst [vmem:[#allocation2] sm:$0xff] 0.0
          %573 = vst [vmem:[#allocation2 + $0x8] sm:$0xff] 0.0
          %574 = vst [vmem:[#allocation2 + $0x10] sm:$0xff] 0.0
          %575 = vst [vmem:[#allocation2 + $0x18] sm:$0xff] 0.0
          %576 = vst [vmem:[#allocation2 + $0x20] sm:$0xff] 0.0
          %577 = vst [vmem:[#allocation2 + $0x28] sm:$0xff] 0.0
          %578 = vst [vmem:[#allocation2 + $0x30] sm:$0xff] 0.0
          %579 = vst [vmem:[#allocation2 + $0x38] sm:$0xff] 0.0
          %580 = vst [vmem:[#allocation2 + $0x40] sm:$0xff] 0.0
          %581 = vst [vmem:[#allocation2 + $0x48] sm:$0xff] 0.0
          %582 = vst [vmem:[#allocation2 + $0x50] sm:$0xff] 0.0
          %583 = vst [vmem:[#allocation2 + $0x58] sm:$0xff] 0.0
          %584 = vst [vmem:[#allocation2 + $0x60] sm:$0xff] 0.0
          %585 = vst [vmem:[#allocation2 + $0x68] sm:$0xff] 0.0
          %586 = vst [vmem:[#allocation2 + $0x70] sm:$0xff] 0.0
          %587 = vst [vmem:[#allocation2 + $0x78] sm:$0xff] 0.0
          %588 = vst [vmem:[#allocation2 + $0x80] sm:$0xff] 0.0
          %589 = vst [vmem:[#allocation2 + $0x88] sm:$0xff] 0.0
          %590 = vst [vmem:[#allocation2 + $0x90] sm:$0xff] 0.0
          %591 = vst [vmem:[#allocation2 + $0x98] sm:$0xff] 0.0
          %592 = vst [vmem:[#allocation2 + $0xa0] sm:$0xff] 0.0
          %593 = vst [vmem:[#allocation2 + $0xa8] sm:$0xff] 0.0
          %594 = vst [vmem:[#allocation2 + $0xb0] sm:$0xff] 0.0
          %595 = vst [vmem:[#allocation2 + $0xb8] sm:$0xff] 0.0
          %596 = vst [vmem:[#allocation2 + $0xc0] sm:$0xff] 0.0
          %597 = vst [vmem:[#allocation2 + $0xc8] sm:$0xff] 0.0
          %598 = vst [vmem:[#allocation2 + $0xd0] sm:$0xff] 0.0
          %599 = vst [vmem:[#allocation2 + $0xd8] sm:$0xff] 0.0
          %600 = vst [vmem:[#allocation2 + $0xe0] sm:$0xff] 0.0
          %601 = vst [vmem:[#allocation2 + $0xe8] sm:$0xff] 0.0
          %602 = vst [vmem:[#allocation2 + $0xf0] sm:$0xff] 0.0
          %603 = vst [vmem:[#allocation2 + $0xf8] sm:$0xff] 0.0
          %604 = vst [vmem:[#allocation2 + $0x100] sm:$0xff] 0.0
          %605 = vst [vmem:[#allocation2 + $0x108] sm:$0xff] 0.0
          %606 = vst [vmem:[#allocation2 + $0x110] sm:$0xff] 0.0
          %607 = vst [vmem:[#allocation2 + $0x118] sm:$0xff] 0.0
          %608 = vst [vmem:[#allocation2 + $0x120] sm:$0xff] 0.0
          %609 = vst [vmem:[#allocation2 + $0x128] sm:$0xff] 0.0
          %610 = vst [vmem:[#allocation2 + $0x130] sm:$0xff] 0.0
          %611 = vst [vmem:[#allocation2 + $0x138] sm:$0xff] 0.0
          %612 = vst [vmem:[#allocation2 + $0x140] sm:$0xff] 0.0
          %613 = vst [vmem:[#allocation2 + $0x148] sm:$0xff] 0.0
          %614 = vst [vmem:[#allocation2 + $0x150] sm:$0xff] 0.0
          %615 = vst [vmem:[#allocation2 + $0x158] sm:$0xff] 0.0
          %616 = vst [vmem:[#allocation2 + $0x160] sm:$0xff] 0.0
          %617 = vst [vmem:[#allocation2 + $0x168] sm:$0xff] 0.0
          %618 = vst [vmem:[#allocation2 + $0x170] sm:$0xff] 0.0
          %619 = vst [vmem:[#allocation2 + $0x178] sm:$0xff] 0.0
          %620 = vst [vmem:[#allocation2 + $0x180] sm:$0xff] 0.0
          %621 = vst [vmem:[#allocation2 + $0x188] sm:$0xff] 0.0
          %622 = vst [vmem:[#allocation2 + $0x190] sm:$0xff] 0.0
          %623 = vst [vmem:[#allocation2 + $0x198] sm:$0xff] 0.0
          %624 = vst [vmem:[#allocation2 + $0x1a0] sm:$0xff] 0.0
          %625 = vst [vmem:[#allocation2 + $0x1a8] sm:$0xff] 0.0
          %626 = vst [vmem:[#allocation2 + $0x1b0] sm:$0xff] 0.0
          %627 = vst [vmem:[#allocation2 + $0x1b8] sm:$0xff] 0.0
          %628 = vst [vmem:[#allocation2 + $0x1c0] sm:$0xff] 0.0
          %629 = vst [vmem:[#allocation2 + $0x1c8] sm:$0xff] 0.0
          %630 = vst [vmem:[#allocation2 + $0x1d0] sm:$0xff] 0.0
          %631 = vst [vmem:[#allocation2 + $0x1d8] sm:$0xff] 0.0
          %632 = vst [vmem:[#allocation2 + $0x1e0] sm:$0xff] 0.0
          %633 = vst [vmem:[#allocation2 + $0x1e8] sm:$0xff] 0.0
          %634 = vst [vmem:[#allocation2 + $0x1f0] sm:$0xff] 0.0
          %635 = vst [vmem:[#allocation2 + $0x1f8] sm:$0xff] 0.0
        $region63: #{discriminator_forward.7} parent=54 // pred_fallthru
          _
        %v636 = vld [vmem:[#allocation2] sm:$0xff]
        %v637 = vld [vmem:[#allocation2 + $0x8] sm:$0xff]
        %v638 = vld [vmem:[#allocation2 + $0x10] sm:$0xff]
        %v639 = vld [vmem:[#allocation2 + $0x18] sm:$0xff]
        %v640 = vld [vmem:[#allocation2 + $0x20] sm:$0xff]
        %v641 = vld [vmem:[#allocation2 + $0x28] sm:$0xff]
        %v642 = vld [vmem:[#allocation2 + $0x30] sm:$0xff]
        %v643 = vld [vmem:[#allocation2 + $0x38] sm:$0xff]
        %v644 = vld [vmem:[#allocation2 + $0x40] sm:$0xff]
        %v645 = vld [vmem:[#allocation2 + $0x48] sm:$0xff]
        %v646 = vld [vmem:[#allocation2 + $0x50] sm:$0xff]
        %v647 = vld [vmem:[#allocation2 + $0x58] sm:$0xff]
        %v648 = vld [vmem:[#allocation2 + $0x60] sm:$0xff]
        %v649 = vld [vmem:[#allocation2 + $0x68] sm:$0xff]
        %v650 = vld [vmem:[#allocation2 + $0x70] sm:$0xff]
        %v651 = vld [vmem:[#allocation2 + $0x78] sm:$0xff]
        %v652 = vld [vmem:[#allocation2 + $0x80] sm:$0xff]
        %v653 = vld [vmem:[#allocation2 + $0x88] sm:$0xff]
        %v654 = vld [vmem:[#allocation2 + $0x90] sm:$0xff]
        %v655 = vld [vmem:[#allocation2 + $0x98] sm:$0xff]
        %v656 = vld [vmem:[#allocation2 + $0xa0] sm:$0xff]
        %v657 = vld [vmem:[#allocation2 + $0xa8] sm:$0xff]
        %v658 = vld [vmem:[#allocation2 + $0xb0] sm:$0xff]
        %v659 = vld [vmem:[#allocation2 + $0xb8] sm:$0xff]
        %v660 = vld [vmem:[#allocation2 + $0xc0] sm:$0xff]
        %v661 = vld [vmem:[#allocation2 + $0xc8] sm:$0xff]
        %v662 = vld [vmem:[#allocation2 + $0xd0] sm:$0xff]
        %v663 = vld [vmem:[#allocation2 + $0xd8] sm:$0xff]
        %v664 = vld [vmem:[#allocation2 + $0xe0] sm:$0xff]
        %v665 = vld [vmem:[#allocation2 + $0xe8] sm:$0xff]
        %v666 = vld [vmem:[#allocation2 + $0xf0] sm:$0xff]
        %v667 = vld [vmem:[#allocation2 + $0xf8] sm:$0xff]
        %v668 = vld [vmem:[#allocation2 + $0x100] sm:$0xff]
        %v669 = vld [vmem:[#allocation2 + $0x108] sm:$0xff]
        %v670 = vld [vmem:[#allocation2 + $0x110] sm:$0xff]
        %v671 = vld [vmem:[#allocation2 + $0x118] sm:$0xff]
        %v672 = vld [vmem:[#allocation2 + $0x120] sm:$0xff]
        %v673 = vld [vmem:[#allocation2 + $0x128] sm:$0xff]
        %v674 = vld [vmem:[#allocation2 + $0x130] sm:$0xff]
        %v675 = vld [vmem:[#allocation2 + $0x138] sm:$0xff]
        %v676 = vld [vmem:[#allocation2 + $0x140] sm:$0xff]
        %v677 = vld [vmem:[#allocation2 + $0x148] sm:$0xff]
        %v678 = vld [vmem:[#allocation2 + $0x150] sm:$0xff]
        %v679 = vld [vmem:[#allocation2 + $0x158] sm:$0xff]
        %v680 = vld [vmem:[#allocation2 + $0x160] sm:$0xff]
        %v681 = vld [vmem:[#allocation2 + $0x168] sm:$0xff]
        %v682 = vld [vmem:[#allocation2 + $0x170] sm:$0xff]
        %v683 = vld [vmem:[#allocation2 + $0x178] sm:$0xff]
        %v684 = vld [vmem:[#allocation2 + $0x180] sm:$0xff]
        %v685 = vld [vmem:[#allocation2 + $0x188] sm:$0xff]
        %v686 = vld [vmem:[#allocation2 + $0x190] sm:$0xff]
        %v687 = vld [vmem:[#allocation2 + $0x198] sm:$0xff]
        %v688 = vld [vmem:[#allocation2 + $0x1a0] sm:$0xff]
        %v689 = vld [vmem:[#allocation2 + $0x1a8] sm:$0xff]
        %v690 = vld [vmem:[#allocation2 + $0x1b0] sm:$0xff]
        %v691 = vld [vmem:[#allocation2 + $0x1b8] sm:$0xff]
        %v692 = vld [vmem:[#allocation2 + $0x1c0] sm:$0xff]
        %v693 = vld [vmem:[#allocation2 + $0x1c8] sm:$0xff]
        %v694 = vld [vmem:[#allocation2 + $0x1d0] sm:$0xff]
        %v695 = vld [vmem:[#allocation2 + $0x1d8] sm:$0xff]
        %v696 = vld [vmem:[#allocation2 + $0x1e0] sm:$0xff]
        %v697 = vld [vmem:[#allocation2 + $0x1e8] sm:$0xff]
        %v698 = vld [vmem:[#allocation2 + $0x1f0] sm:$0xff]
        %v699 = vld [vmem:[#allocation2 + $0x1f8] sm:$0xff]
        %v700 = vld [vmem:[%s502] sm:$0xff]
        %v701 = vld [vmem:[%s502 + $0x8] sm:$0xff]
        %v702 = vld [vmem:[%s502 + $0x10] sm:$0xff]
        %v703 = vld [vmem:[%s502 + $0x18] sm:$0xff]
        %v704 = vld [vmem:[%s502 + $0x20] sm:$0xff]
        %v705 = vld [vmem:[%s502 + $0x28] sm:$0xff]
        %v706 = vld [vmem:[%s502 + $0x30] sm:$0xff]
        %v707 = vld [vmem:[%s502 + $0x38] sm:$0xff]
        %v708 = vld [vmem:[%s502 + $0x40] sm:$0xff]
        %v709 = vld [vmem:[%s502 + $0x48] sm:$0xff]
        %v710 = vld [vmem:[%s502 + $0x50] sm:$0xff]
        %v711 = vld [vmem:[%s502 + $0x58] sm:$0xff]
        %v712 = vld [vmem:[%s502 + $0x60] sm:$0xff]
        %v713 = vld [vmem:[%s502 + $0x68] sm:$0xff]
        %v714 = vld [vmem:[%s502 + $0x70] sm:$0xff]
        %v715 = vld [vmem:[%s502 + $0x78] sm:$0xff]
        %v716 = vld [vmem:[%s502 + $0x80] sm:$0xff]
        %v717 = vld [vmem:[%s502 + $0x88] sm:$0xff]
        %v718 = vld [vmem:[%s502 + $0x90] sm:$0xff]
        %v719 = vld [vmem:[%s502 + $0x98] sm:$0xff]
        %v720 = vld [vmem:[%s502 + $0xa0] sm:$0xff]
        %v721 = vld [vmem:[%s502 + $0xa8] sm:$0xff]
        %v722 = vld [vmem:[%s502 + $0xb0] sm:$0xff]
        %v723 = vld [vmem:[%s502 + $0xb8] sm:$0xff]
        %v724 = vld [vmem:[%s502 + $0xc0] sm:$0xff]
        %v725 = vld [vmem:[%s502 + $0xc8] sm:$0xff]
        %v726 = vld [vmem:[%s502 + $0xd0] sm:$0xff]
        %v727 = vld [vmem:[%s502 + $0xd8] sm:$0xff]
        %v728 = vld [vmem:[%s502 + $0xe0] sm:$0xff]
        %v729 = vld [vmem:[%s502 + $0xe8] sm:$0xff]
        %v730 = vld [vmem:[%s502 + $0xf0] sm:$0xff]
        %v731 = vld [vmem:[%s502 + $0xf8] sm:$0xff]
        %v732 = vld [vmem:[%s502 + $0x100] sm:$0xff]
        %v733 = vld [vmem:[%s502 + $0x108] sm:$0xff]
        %v734 = vld [vmem:[%s502 + $0x110] sm:$0xff]
        %v735 = vld [vmem:[%s502 + $0x118] sm:$0xff]
        %v736 = vld [vmem:[%s502 + $0x120] sm:$0xff]
        %v737 = vld [vmem:[%s502 + $0x128] sm:$0xff]
        %v738 = vld [vmem:[%s502 + $0x130] sm:$0xff]
        %v739 = vld [vmem:[%s502 + $0x138] sm:$0xff]
        %v740 = vld [vmem:[%s502 + $0x140] sm:$0xff]
        %v741 = vld [vmem:[%s502 + $0x148] sm:$0xff]
        %v742 = vld [vmem:[%s502 + $0x150] sm:$0xff]
        %v743 = vld [vmem:[%s502 + $0x158] sm:$0xff]
        %v744 = vld [vmem:[%s502 + $0x160] sm:$0xff]
        %v745 = vld [vmem:[%s502 + $0x168] sm:$0xff]
        %v746 = vld [vmem:[%s502 + $0x170] sm:$0xff]
        %v747 = vld [vmem:[%s502 + $0x178] sm:$0xff]
        %v748 = vld [vmem:[%s502 + $0x180] sm:$0xff]
        %v749 = vld [vmem:[%s502 + $0x188] sm:$0xff]
        %v750 = vld [vmem:[%s502 + $0x190] sm:$0xff]
        %v751 = vld [vmem:[%s502 + $0x198] sm:$0xff]
        %v752 = vld [vmem:[%s502 + $0x1a0] sm:$0xff]
        %v753 = vld [vmem:[%s502 + $0x1a8] sm:$0xff]
        %v754 = vld [vmem:[%s502 + $0x1b0] sm:$0xff]
        %v755 = vld [vmem:[%s502 + $0x1b8] sm:$0xff]
        %v756 = vld [vmem:[%s502 + $0x1c0] sm:$0xff]
        %v757 = vld [vmem:[%s502 + $0x1c8] sm:$0xff]
        %v758 = vld [vmem:[%s502 + $0x1d0] sm:$0xff]
        %v759 = vld [vmem:[%s502 + $0x1d8] sm:$0xff]
        %v760 = vld [vmem:[%s502 + $0x1e0] sm:$0xff]
        %v761 = vld [vmem:[%s502 + $0x1e8] sm:$0xff]
        %v762 = vld [vmem:[%s502 + $0x1f0] sm:$0xff]
        %v763 = vld [vmem:[%s502 + $0x1f8] sm:$0xff]
        %v764 = vld [vmem:[%s502 + $0x200] sm:$0xff]
        %v765 = vld [vmem:[%s502 + $0x208] sm:$0xff]
        %v766 = vld [vmem:[%s502 + $0x210] sm:$0xff]
        %v767 = vld [vmem:[%s502 + $0x218] sm:$0xff]
        %v768 = vld [vmem:[%s502 + $0x220] sm:$0xff]
        %v769 = vld [vmem:[%s502 + $0x228] sm:$0xff]
        %v770 = vld [vmem:[%s502 + $0x230] sm:$0xff]
        %v771 = vld [vmem:[%s502 + $0x238] sm:$0xff]
        %v772 = vld [vmem:[%s502 + $0x240] sm:$0xff]
        %v773 = vld [vmem:[%s502 + $0x248] sm:$0xff]
        %v774 = vld [vmem:[%s502 + $0x250] sm:$0xff]
        %v775 = vld [vmem:[%s502 + $0x258] sm:$0xff]
        %v776 = vld [vmem:[%s502 + $0x260] sm:$0xff]
        %v777 = vld [vmem:[%s502 + $0x268] sm:$0xff]
        %v778 = vld [vmem:[%s502 + $0x270] sm:$0xff]
        %v779 = vld [vmem:[%s502 + $0x278] sm:$0xff]
        %v780 = vld [vmem:[%s502 + $0x280] sm:$0xff]
        %v781 = vld [vmem:[%s502 + $0x288] sm:$0xff]
        %v782 = vld [vmem:[%s502 + $0x290] sm:$0xff]
        %v783 = vld [vmem:[%s502 + $0x298] sm:$0xff]
        %v784 = vld [vmem:[%s502 + $0x2a0] sm:$0xff]
        %v785 = vld [vmem:[%s502 + $0x2a8] sm:$0xff]
        %v786 = vld [vmem:[%s502 + $0x2b0] sm:$0xff]
        %v787 = vld [vmem:[%s502 + $0x2b8] sm:$0xff]
        %v788 = vld [vmem:[%s502 + $0x2c0] sm:$0xff]
        %v789 = vld [vmem:[%s502 + $0x2c8] sm:$0xff]
        %v790 = vld [vmem:[%s502 + $0x2d0] sm:$0xff]
        %v791 = vld [vmem:[%s502 + $0x2d8] sm:$0xff]
        %v792 = vld [vmem:[%s502 + $0x2e0] sm:$0xff]
        %v793 = vld [vmem:[%s502 + $0x2e8] sm:$0xff]
        %v794 = vld [vmem:[%s502 + $0x2f0] sm:$0xff]
        %v795 = vld [vmem:[%s502 + $0x2f8] sm:$0xff]
        %v796 = vld [vmem:[%s502 + $0x300] sm:$0xff]
        %v797 = vld [vmem:[%s502 + $0x308] sm:$0xff]
        %v798 = vld [vmem:[%s502 + $0x310] sm:$0xff]
        %v799 = vld [vmem:[%s502 + $0x318] sm:$0xff]
        %v800 = vld [vmem:[%s502 + $0x320] sm:$0xff]
        %v801 = vld [vmem:[%s502 + $0x328] sm:$0xff]
        %v802 = vld [vmem:[%s502 + $0x330] sm:$0xff]
        %v803 = vld [vmem:[%s502 + $0x338] sm:$0xff]
        %v804 = vld [vmem:[%s502 + $0x340] sm:$0xff]
        %v805 = vld [vmem:[%s502 + $0x348] sm:$0xff]
        %v806 = vld [vmem:[%s502 + $0x350] sm:$0xff]
        %v807 = vld [vmem:[%s502 + $0x358] sm:$0xff]
        %v808 = vld [vmem:[%s502 + $0x360] sm:$0xff]
        %v809 = vld [vmem:[%s502 + $0x368] sm:$0xff]
        %v810 = vld [vmem:[%s502 + $0x370] sm:$0xff]
        %v811 = vld [vmem:[%s502 + $0x378] sm:$0xff]
        %v812 = vld [vmem:[%s502 + $0x380] sm:$0xff]
        %v813 = vld [vmem:[%s502 + $0x388] sm:$0xff]
        %v814 = vld [vmem:[%s502 + $0x390] sm:$0xff]
        %v815 = vld [vmem:[%s502 + $0x398] sm:$0xff]
        %v816 = vld [vmem:[%s502 + $0x3a0] sm:$0xff]
        %v817 = vld [vmem:[%s502 + $0x3a8] sm:$0xff]
        %v818 = vld [vmem:[%s502 + $0x3b0] sm:$0xff]
        %v819 = vld [vmem:[%s502 + $0x3b8] sm:$0xff]
        %v820 = vld [vmem:[%s502 + $0x3c0] sm:$0xff]
        %v821 = vld [vmem:[%s502 + $0x3c8] sm:$0xff]
        %v822 = vld [vmem:[%s502 + $0x3d0] sm:$0xff]
        %v823 = vld [vmem:[%s502 + $0x3d8] sm:$0xff]
        %v824 = vld [vmem:[%s502 + $0x3e0] sm:$0xff]
        %v825 = vld [vmem:[%s502 + $0x3e8] sm:$0xff]
        %v826 = vld [vmem:[%s502 + $0x3f0] sm:$0xff]
        %v827 = vld [vmem:[%s502 + $0x3f8] sm:$0xff]
        %v828 = vld [vmem:[%s551] sm:$0xf]
        %v829 = vld [vmem:[%s551 + $0x4] sm:$0xf]
        %v830 = vld [vmem:[%s551 + $0x8] sm:$0xf]
        %v831 = vld [vmem:[%s551 + $0xc] sm:$0xf]
        %v832 = vld [vmem:[%s551 + $0x10] sm:$0xf]
        %v833 = vld [vmem:[%s551 + $0x14] sm:$0xf]
        %v834 = vld [vmem:[%s551 + $0x18] sm:$0xf]
        %v835 = vld [vmem:[%s551 + $0x1c] sm:$0xf]
        %v836 = vld [vmem:[%s551 + $0x20] sm:$0xf]
        %v837 = vld [vmem:[%s551 + $0x24] sm:$0xf]
        %v838 = vld [vmem:[%s551 + $0x28] sm:$0xf]
        %v839 = vld [vmem:[%s551 + $0x2c] sm:$0xf]
        %v840 = vld [vmem:[%s551 + $0x30] sm:$0xf]
        %v841 = vld [vmem:[%s551 + $0x34] sm:$0xf]
        %v842 = vld [vmem:[%s551 + $0x38] sm:$0xf]
        %v843 = vld [vmem:[%s551 + $0x3c] sm:$0xf]
        %v844 = vld [vmem:[%s551 + $0x40] sm:$0xf]
        %v845 = vld [vmem:[%s551 + $0x44] sm:$0xf]
        %v846 = vld [vmem:[%s551 + $0x48] sm:$0xf]
        %v847 = vld [vmem:[%s551 + $0x4c] sm:$0xf]
        %v848 = vld [vmem:[%s551 + $0x50] sm:$0xf]
        %v849 = vld [vmem:[%s551 + $0x54] sm:$0xf]
        %v850 = vld [vmem:[%s551 + $0x58] sm:$0xf]
        %v851 = vld [vmem:[%s551 + $0x5c] sm:$0xf]
        %v852 = vld [vmem:[%s551 + $0x60] sm:$0xf]
        %v853 = vld [vmem:[%s551 + $0x64] sm:$0xf]
        %v854 = vld [vmem:[%s551 + $0x68] sm:$0xf]
        %v855 = vld [vmem:[%s551 + $0x6c] sm:$0xf]
        %v856 = vld [vmem:[%s551 + $0x70] sm:$0xf]
        %v857 = vld [vmem:[%s551 + $0x74] sm:$0xf]
        %v858 = vld [vmem:[%s551 + $0x78] sm:$0xf]
        %v859 = vld [vmem:[%s551 + $0x7c] sm:$0xf]
        %v860 = vld [vmem:[%s551 + $0x80] sm:$0xf]
        %v861 = vld [vmem:[%s551 + $0x84] sm:$0xf]
        %v862 = vld [vmem:[%s551 + $0x88] sm:$0xf]
        %v863 = vld [vmem:[%s551 + $0x8c] sm:$0xf]
        %v864 = vld [vmem:[%s551 + $0x90] sm:$0xf]
        %v865 = vld [vmem:[%s551 + $0x94] sm:$0xf]
        %v866 = vld [vmem:[%s551 + $0x98] sm:$0xf]
        %v867 = vld [vmem:[%s551 + $0x9c] sm:$0xf]
        %v868 = vld [vmem:[%s551 + $0xa0] sm:$0xf]
        %v869 = vld [vmem:[%s551 + $0xa4] sm:$0xf]
        %v870 = vld [vmem:[%s551 + $0xa8] sm:$0xf]
        %v871 = vld [vmem:[%s551 + $0xac] sm:$0xf]
        %v872 = vld [vmem:[%s551 + $0xb0] sm:$0xf]
        %v873 = vld [vmem:[%s551 + $0xb4] sm:$0xf]
        %v874 = vld [vmem:[%s551 + $0xb8] sm:$0xf]
        %v875 = vld [vmem:[%s551 + $0xbc] sm:$0xf]
        %v876 = vld [vmem:[%s551 + $0xc0] sm:$0xf]
        %v877 = vld [vmem:[%s551 + $0xc4] sm:$0xf]
        %v878 = vld [vmem:[%s551 + $0xc8] sm:$0xf]
        %v879 = vld [vmem:[%s551 + $0xcc] sm:$0xf]
        %v880 = vld [vmem:[%s551 + $0xd0] sm:$0xf]
        %v881 = vld [vmem:[%s551 + $0xd4] sm:$0xf]
        %v882 = vld [vmem:[%s551 + $0xd8] sm:$0xf]
        %v883 = vld [vmem:[%s551 + $0xdc] sm:$0xf]
        %v884 = vld [vmem:[%s551 + $0xe0] sm:$0xf]
        %v885 = vld [vmem:[%s551 + $0xe4] sm:$0xf]
        %v886 = vld [vmem:[%s551 + $0xe8] sm:$0xf]
        %v887 = vld [vmem:[%s551 + $0xec] sm:$0xf]
        %v888 = vld [vmem:[%s551 + $0xf0] sm:$0xf]
        %v889 = vld [vmem:[%s551 + $0xf4] sm:$0xf]
        %v890 = vld [vmem:[%s551 + $0xf8] sm:$0xf]
        %v891 = vld [vmem:[%s551 + $0xfc] sm:$0xf]
        %v1020 = vunpack.c.l.b16 %v700
        %v1021 = vunpack.c.h.b16 %v700
        %v1022 = vunpack.c.l.b16 %v701
        %v1023 = vunpack.c.h.b16 %v701
        %v1024 = vunpack.c.l.b16 %v702
        %v1025 = vunpack.c.h.b16 %v702
        %v1026 = vunpack.c.l.b16 %v703
        %v1027 = vunpack.c.h.b16 %v703
        %v1028 = vunpack.c.l.b16 %v704
        %v1029 = vunpack.c.h.b16 %v704
        %v1030 = vunpack.c.l.b16 %v705
        %v1031 = vunpack.c.h.b16 %v705
        %v1032 = vunpack.c.l.b16 %v706
        %v1033 = vunpack.c.h.b16 %v706
        %v1034 = vunpack.c.l.b16 %v707
        %v1035 = vunpack.c.h.b16 %v707
        %v1036 = vunpack.c.l.b16 %v708
        %v1037 = vunpack.c.h.b16 %v708
        %v1038 = vunpack.c.l.b16 %v709
        %v1039 = vunpack.c.h.b16 %v709
        %v1040 = vunpack.c.l.b16 %v710
        %v1041 = vunpack.c.h.b16 %v710
        %v1042 = vunpack.c.l.b16 %v711
        %v1043 = vunpack.c.h.b16 %v711
        %v1044 = vunpack.c.l.b16 %v712
        %v1045 = vunpack.c.h.b16 %v712
        %v1046 = vunpack.c.l.b16 %v713
        %v1047 = vunpack.c.h.b16 %v713
        %v1048 = vunpack.c.l.b16 %v714
        %v1049 = vunpack.c.h.b16 %v714
        %v1050 = vunpack.c.l.b16 %v715
        %v1051 = vunpack.c.h.b16 %v715
        %v1052 = vunpack.c.l.b16 %v716
        %v1053 = vunpack.c.h.b16 %v716
        %v1054 = vunpack.c.l.b16 %v717
        %v1055 = vunpack.c.h.b16 %v717
        %v1056 = vunpack.c.l.b16 %v718
        %v1057 = vunpack.c.h.b16 %v718
        %v1058 = vunpack.c.l.b16 %v719
        %v1059 = vunpack.c.h.b16 %v719
        %v1060 = vunpack.c.l.b16 %v720
        %v1061 = vunpack.c.h.b16 %v720
        %v1062 = vunpack.c.l.b16 %v721
        %v1063 = vunpack.c.h.b16 %v721
        %v1064 = vunpack.c.l.b16 %v722
        %v1065 = vunpack.c.h.b16 %v722
        %v1066 = vunpack.c.l.b16 %v723
        %v1067 = vunpack.c.h.b16 %v723
        %v1068 = vunpack.c.l.b16 %v724
        %v1069 = vunpack.c.h.b16 %v724
        %v1070 = vunpack.c.l.b16 %v725
        %v1071 = vunpack.c.h.b16 %v725
        %v1072 = vunpack.c.l.b16 %v726
        %v1073 = vunpack.c.h.b16 %v726
        %v1074 = vunpack.c.l.b16 %v727
        %v1075 = vunpack.c.h.b16 %v727
        %v1076 = vunpack.c.l.b16 %v728
        %v1077 = vunpack.c.h.b16 %v728
        %v1078 = vunpack.c.l.b16 %v729
        %v1079 = vunpack.c.h.b16 %v729
        %v1080 = vunpack.c.l.b16 %v730
        %v1081 = vunpack.c.h.b16 %v730
        %v1082 = vunpack.c.l.b16 %v731
        %v1083 = vunpack.c.h.b16 %v731
        %v1084 = vunpack.c.l.b16 %v732
        %v1085 = vunpack.c.h.b16 %v732
        %v1086 = vunpack.c.l.b16 %v733
        %v1087 = vunpack.c.h.b16 %v733
        %v1088 = vunpack.c.l.b16 %v734
        %v1089 = vunpack.c.h.b16 %v734
        %v1090 = vunpack.c.l.b16 %v735
        %v1091 = vunpack.c.h.b16 %v735
        %v1092 = vunpack.c.l.b16 %v736
        %v1093 = vunpack.c.h.b16 %v736
        %v1094 = vunpack.c.l.b16 %v737
        %v1095 = vunpack.c.h.b16 %v737
        %v1096 = vunpack.c.l.b16 %v738
        %v1097 = vunpack.c.h.b16 %v738
        %v1098 = vunpack.c.l.b16 %v739
        %v1099 = vunpack.c.h.b16 %v739
        %v1100 = vunpack.c.l.b16 %v740
        %v1101 = vunpack.c.h.b16 %v740
        %v1102 = vunpack.c.l.b16 %v741
        %v1103 = vunpack.c.h.b16 %v741
        %v1104 = vunpack.c.l.b16 %v742
        %v1105 = vunpack.c.h.b16 %v742
        %v1106 = vunpack.c.l.b16 %v743
        %v1107 = vunpack.c.h.b16 %v743
        %v1108 = vunpack.c.l.b16 %v744
        %v1109 = vunpack.c.h.b16 %v744
        %v1110 = vunpack.c.l.b16 %v745
        %v1111 = vunpack.c.h.b16 %v745
        %v1112 = vunpack.c.l.b16 %v746
        %v1113 = vunpack.c.h.b16 %v746
        %v1114 = vunpack.c.l.b16 %v747
        %v1115 = vunpack.c.h.b16 %v747
        %v1116 = vunpack.c.l.b16 %v748
        %v1117 = vunpack.c.h.b16 %v748
        %v1118 = vunpack.c.l.b16 %v749
        %v1119 = vunpack.c.h.b16 %v749
        %v1120 = vunpack.c.l.b16 %v750
        %v1121 = vunpack.c.h.b16 %v750
        %v1122 = vunpack.c.l.b16 %v751
        %v1123 = vunpack.c.h.b16 %v751
        %v1124 = vunpack.c.l.b16 %v752
        %v1125 = vunpack.c.h.b16 %v752
        %v1126 = vunpack.c.l.b16 %v753
        %v1127 = vunpack.c.h.b16 %v753
        %v1128 = vunpack.c.l.b16 %v754
        %v1129 = vunpack.c.h.b16 %v754
        %v1130 = vunpack.c.l.b16 %v755
        %v1131 = vunpack.c.h.b16 %v755
        %v1132 = vunpack.c.l.b16 %v756
        %v1133 = vunpack.c.h.b16 %v756
        %v1134 = vunpack.c.l.b16 %v757
        %v1135 = vunpack.c.h.b16 %v757
        %v1136 = vunpack.c.l.b16 %v758
        %v1137 = vunpack.c.h.b16 %v758
        %v1138 = vunpack.c.l.b16 %v759
        %v1139 = vunpack.c.h.b16 %v759
        %v1140 = vunpack.c.l.b16 %v760
        %v1141 = vunpack.c.h.b16 %v760
        %v1142 = vunpack.c.l.b16 %v761
        %v1143 = vunpack.c.h.b16 %v761
        %v1144 = vunpack.c.l.b16 %v762
        %v1145 = vunpack.c.h.b16 %v762
        %v1146 = vunpack.c.l.b16 %v763
        %v1147 = vunpack.c.h.b16 %v763
        %v1148 = vunpack.c.l.b16 %v764
        %v1149 = vunpack.c.h.b16 %v764
        %v1150 = vunpack.c.l.b16 %v765
        %v1151 = vunpack.c.h.b16 %v765
        %v1152 = vunpack.c.l.b16 %v766
        %v1153 = vunpack.c.h.b16 %v766
        %v1154 = vunpack.c.l.b16 %v767
        %v1155 = vunpack.c.h.b16 %v767
        %v1156 = vunpack.c.l.b16 %v768
        %v1157 = vunpack.c.h.b16 %v768
        %v1158 = vunpack.c.l.b16 %v769
        %v1159 = vunpack.c.h.b16 %v769
        %v1160 = vunpack.c.l.b16 %v770
        %v1161 = vunpack.c.h.b16 %v770
        %v1162 = vunpack.c.l.b16 %v771
        %v1163 = vunpack.c.h.b16 %v771
        %v1164 = vunpack.c.l.b16 %v772
        %v1165 = vunpack.c.h.b16 %v772
        %v1166 = vunpack.c.l.b16 %v773
        %v1167 = vunpack.c.h.b16 %v773
        %v1168 = vunpack.c.l.b16 %v774
        %v1169 = vunpack.c.h.b16 %v774
        %v1170 = vunpack.c.l.b16 %v775
        %v1171 = vunpack.c.h.b16 %v775
        %v1172 = vunpack.c.l.b16 %v776
        %v1173 = vunpack.c.h.b16 %v776
        %v1174 = vunpack.c.l.b16 %v777
        %v1175 = vunpack.c.h.b16 %v777
        %v1176 = vunpack.c.l.b16 %v778
        %v1177 = vunpack.c.h.b16 %v778
        %v1178 = vunpack.c.l.b16 %v779
        %v1179 = vunpack.c.h.b16 %v779
        %v1180 = vunpack.c.l.b16 %v780
        %v1181 = vunpack.c.h.b16 %v780
        %v1182 = vunpack.c.l.b16 %v781
        %v1183 = vunpack.c.h.b16 %v781
        %v1184 = vunpack.c.l.b16 %v782
        %v1185 = vunpack.c.h.b16 %v782
        %v1186 = vunpack.c.l.b16 %v783
        %v1187 = vunpack.c.h.b16 %v783
        %v1188 = vunpack.c.l.b16 %v784
        %v1189 = vunpack.c.h.b16 %v784
        %v1190 = vunpack.c.l.b16 %v785
        %v1191 = vunpack.c.h.b16 %v785
        %v1192 = vunpack.c.l.b16 %v786
        %v1193 = vunpack.c.h.b16 %v786
        %v1194 = vunpack.c.l.b16 %v787
        %v1195 = vunpack.c.h.b16 %v787
        %v1196 = vunpack.c.l.b16 %v788
        %v1197 = vunpack.c.h.b16 %v788
        %v1198 = vunpack.c.l.b16 %v789
        %v1199 = vunpack.c.h.b16 %v789
        %v1200 = vunpack.c.l.b16 %v790
        %v1201 = vunpack.c.h.b16 %v790
        %v1202 = vunpack.c.l.b16 %v791
        %v1203 = vunpack.c.h.b16 %v791
        %v1204 = vunpack.c.l.b16 %v792
        %v1205 = vunpack.c.h.b16 %v792
        %v1206 = vunpack.c.l.b16 %v793
        %v1207 = vunpack.c.h.b16 %v793
        %v1208 = vunpack.c.l.b16 %v794
        %v1209 = vunpack.c.h.b16 %v794
        %v1210 = vunpack.c.l.b16 %v795
        %v1211 = vunpack.c.h.b16 %v795
        %v1212 = vunpack.c.l.b16 %v796
        %v1213 = vunpack.c.h.b16 %v796
        %v1214 = vunpack.c.l.b16 %v797
        %v1215 = vunpack.c.h.b16 %v797
        %v1216 = vunpack.c.l.b16 %v798
        %v1217 = vunpack.c.h.b16 %v798
        %v1218 = vunpack.c.l.b16 %v799
        %v1219 = vunpack.c.h.b16 %v799
        %v1220 = vunpack.c.l.b16 %v800
        %v1221 = vunpack.c.h.b16 %v800
        %v1222 = vunpack.c.l.b16 %v801
        %v1223 = vunpack.c.h.b16 %v801
        %v1224 = vunpack.c.l.b16 %v802
        %v1225 = vunpack.c.h.b16 %v802
        %v1226 = vunpack.c.l.b16 %v803
        %v1227 = vunpack.c.h.b16 %v803
        %v1228 = vunpack.c.l.b16 %v804
        %v1229 = vunpack.c.h.b16 %v804
        %v1230 = vunpack.c.l.b16 %v805
        %v1231 = vunpack.c.h.b16 %v805
        %v1232 = vunpack.c.l.b16 %v806
        %v1233 = vunpack.c.h.b16 %v806
        %v1234 = vunpack.c.l.b16 %v807
        %v1235 = vunpack.c.h.b16 %v807
        %v1236 = vunpack.c.l.b16 %v808
        %v1237 = vunpack.c.h.b16 %v808
        %v1238 = vunpack.c.l.b16 %v809
        %v1239 = vunpack.c.h.b16 %v809
        %v1240 = vunpack.c.l.b16 %v810
        %v1241 = vunpack.c.h.b16 %v810
        %v1242 = vunpack.c.l.b16 %v811
        %v1243 = vunpack.c.h.b16 %v811
        %v1244 = vunpack.c.l.b16 %v812
        %v1245 = vunpack.c.h.b16 %v812
        %v1246 = vunpack.c.l.b16 %v813
        %v1247 = vunpack.c.h.b16 %v813
        %v1248 = vunpack.c.l.b16 %v814
        %v1249 = vunpack.c.h.b16 %v814
        %v1250 = vunpack.c.l.b16 %v815
        %v1251 = vunpack.c.h.b16 %v815
        %v1252 = vunpack.c.l.b16 %v816
        %v1253 = vunpack.c.h.b16 %v816
        %v1254 = vunpack.c.l.b16 %v817
        %v1255 = vunpack.c.h.b16 %v817
        %v1256 = vunpack.c.l.b16 %v818
        %v1257 = vunpack.c.h.b16 %v818
        %v1258 = vunpack.c.l.b16 %v819
        %v1259 = vunpack.c.h.b16 %v819
        %v1260 = vunpack.c.l.b16 %v820
        %v1261 = vunpack.c.h.b16 %v820
        %v1262 = vunpack.c.l.b16 %v821
        %v1263 = vunpack.c.h.b16 %v821
        %v1264 = vunpack.c.l.b16 %v822
        %v1265 = vunpack.c.h.b16 %v822
        %v1266 = vunpack.c.l.b16 %v823
        %v1267 = vunpack.c.h.b16 %v823
        %v1268 = vunpack.c.l.b16 %v824
        %v1269 = vunpack.c.h.b16 %v824
        %v1270 = vunpack.c.l.b16 %v825
        %v1271 = vunpack.c.h.b16 %v825
        %v1272 = vunpack.c.l.b16 %v826
        %v1273 = vunpack.c.h.b16 %v826
        %v1274 = vunpack.c.l.b16 %v827
        %v1275 = vunpack.c.h.b16 %v827
        %v1276 = vpack.c.b16 %v1024, %v1020
        %v1277 = vpack.c.b16 %v1025, %v1021
        %v1278 = vpack.c.b16 %v1026, %v1022
        %v1279 = vpack.c.b16 %v1027, %v1023
        %v1280 = vpack.c.b16 %v1032, %v1028
        %v1281 = vpack.c.b16 %v1033, %v1029
        %v1282 = vpack.c.b16 %v1034, %v1030
        %v1283 = vpack.c.b16 %v1035, %v1031
        %v1284 = vpack.c.b16 %v1040, %v1036
        %v1285 = vpack.c.b16 %v1041, %v1037
        %v1286 = vpack.c.b16 %v1042, %v1038
        %v1287 = vpack.c.b16 %v1043, %v1039
        %v1288 = vpack.c.b16 %v1048, %v1044
        %v1289 = vpack.c.b16 %v1049, %v1045
        %v1290 = vpack.c.b16 %v1050, %v1046
        %v1291 = vpack.c.b16 %v1051, %v1047
        %v1292 = vpack.c.b16 %v1056, %v1052
        %v1293 = vpack.c.b16 %v1057, %v1053
        %v1294 = vpack.c.b16 %v1058, %v1054
        %v1295 = vpack.c.b16 %v1059, %v1055
        %v1296 = vpack.c.b16 %v1064, %v1060
        %v1297 = vpack.c.b16 %v1065, %v1061
        %v1298 = vpack.c.b16 %v1066, %v1062
        %v1299 = vpack.c.b16 %v1067, %v1063
        %v1300 = vpack.c.b16 %v1072, %v1068
        %v1301 = vpack.c.b16 %v1073, %v1069
        %v1302 = vpack.c.b16 %v1074, %v1070
        %v1303 = vpack.c.b16 %v1075, %v1071
        %v1304 = vpack.c.b16 %v1080, %v1076
        %v1305 = vpack.c.b16 %v1081, %v1077
        %v1306 = vpack.c.b16 %v1082, %v1078
        %v1307 = vpack.c.b16 %v1083, %v1079
        %v1308 = vpack.c.b16 %v1088, %v1084
        %v1309 = vpack.c.b16 %v1089, %v1085
        %v1310 = vpack.c.b16 %v1090, %v1086
        %v1311 = vpack.c.b16 %v1091, %v1087
        %v1312 = vpack.c.b16 %v1096, %v1092
        %v1313 = vpack.c.b16 %v1097, %v1093
        %v1314 = vpack.c.b16 %v1098, %v1094
        %v1315 = vpack.c.b16 %v1099, %v1095
        %v1316 = vpack.c.b16 %v1104, %v1100
        %v1317 = vpack.c.b16 %v1105, %v1101
        %v1318 = vpack.c.b16 %v1106, %v1102
        %v1319 = vpack.c.b16 %v1107, %v1103
        %v1320 = vpack.c.b16 %v1112, %v1108
        %v1321 = vpack.c.b16 %v1113, %v1109
        %v1322 = vpack.c.b16 %v1114, %v1110
        %v1323 = vpack.c.b16 %v1115, %v1111
        %v1324 = vpack.c.b16 %v1120, %v1116
        %v1325 = vpack.c.b16 %v1121, %v1117
        %v1326 = vpack.c.b16 %v1122, %v1118
        %v1327 = vpack.c.b16 %v1123, %v1119
        %v1328 = vpack.c.b16 %v1128, %v1124
        %v1329 = vpack.c.b16 %v1129, %v1125
        %v1330 = vpack.c.b16 %v1130, %v1126
        %v1331 = vpack.c.b16 %v1131, %v1127
        %v1332 = vpack.c.b16 %v1136, %v1132
        %v1333 = vpack.c.b16 %v1137, %v1133
        %v1334 = vpack.c.b16 %v1138, %v1134
        %v1335 = vpack.c.b16 %v1139, %v1135
        %v1336 = vpack.c.b16 %v1144, %v1140
        %v1337 = vpack.c.b16 %v1145, %v1141
        %v1338 = vpack.c.b16 %v1146, %v1142
        %v1339 = vpack.c.b16 %v1147, %v1143
        %v1340 = vpack.c.b16 %v1152, %v1148
        %v1341 = vpack.c.b16 %v1153, %v1149
        %v1342 = vpack.c.b16 %v1154, %v1150
        %v1343 = vpack.c.b16 %v1155, %v1151
        %v1344 = vpack.c.b16 %v1160, %v1156
        %v1345 = vpack.c.b16 %v1161, %v1157
        %v1346 = vpack.c.b16 %v1162, %v1158
        %v1347 = vpack.c.b16 %v1163, %v1159
        %v1348 = vpack.c.b16 %v1168, %v1164
        %v1349 = vpack.c.b16 %v1169, %v1165
        %v1350 = vpack.c.b16 %v1170, %v1166
        %v1351 = vpack.c.b16 %v1171, %v1167
        %v1352 = vpack.c.b16 %v1176, %v1172
        %v1353 = vpack.c.b16 %v1177, %v1173
        %v1354 = vpack.c.b16 %v1178, %v1174
        %v1355 = vpack.c.b16 %v1179, %v1175
        %v1356 = vpack.c.b16 %v1184, %v1180
        %v1357 = vpack.c.b16 %v1185, %v1181
        %v1358 = vpack.c.b16 %v1186, %v1182
        %v1359 = vpack.c.b16 %v1187, %v1183
        %v1360 = vpack.c.b16 %v1192, %v1188
        %v1361 = vpack.c.b16 %v1193, %v1189
        %v1362 = vpack.c.b16 %v1194, %v1190
        %v1363 = vpack.c.b16 %v1195, %v1191
        %v1364 = vpack.c.b16 %v1200, %v1196
        %v1365 = vpack.c.b16 %v1201, %v1197
        %v1366 = vpack.c.b16 %v1202, %v1198
        %v1367 = vpack.c.b16 %v1203, %v1199
        %v1368 = vpack.c.b16 %v1208, %v1204
        %v1369 = vpack.c.b16 %v1209, %v1205
        %v1370 = vpack.c.b16 %v1210, %v1206
        %v1371 = vpack.c.b16 %v1211, %v1207
        %v1372 = vpack.c.b16 %v1216, %v1212
        %v1373 = vpack.c.b16 %v1217, %v1213
        %v1374 = vpack.c.b16 %v1218, %v1214
        %v1375 = vpack.c.b16 %v1219, %v1215
        %v1376 = vpack.c.b16 %v1224, %v1220
        %v1377 = vpack.c.b16 %v1225, %v1221
        %v1378 = vpack.c.b16 %v1226, %v1222
        %v1379 = vpack.c.b16 %v1227, %v1223
        %v1380 = vpack.c.b16 %v1232, %v1228
        %v1381 = vpack.c.b16 %v1233, %v1229
        %v1382 = vpack.c.b16 %v1234, %v1230
        %v1383 = vpack.c.b16 %v1235, %v1231
        %v1384 = vpack.c.b16 %v1240, %v1236
        %v1385 = vpack.c.b16 %v1241, %v1237
        %v1386 = vpack.c.b16 %v1242, %v1238
        %v1387 = vpack.c.b16 %v1243, %v1239
        %v1388 = vpack.c.b16 %v1248, %v1244
        %v1389 = vpack.c.b16 %v1249, %v1245
        %v1390 = vpack.c.b16 %v1250, %v1246
        %v1391 = vpack.c.b16 %v1251, %v1247
        %v1392 = vpack.c.b16 %v1256, %v1252
        %v1393 = vpack.c.b16 %v1257, %v1253
        %v1394 = vpack.c.b16 %v1258, %v1254
        %v1395 = vpack.c.b16 %v1259, %v1255
        %v1396 = vpack.c.b16 %v1264, %v1260
        %v1397 = vpack.c.b16 %v1265, %v1261
        %v1398 = vpack.c.b16 %v1266, %v1262
        %v1399 = vpack.c.b16 %v1267, %v1263
        %v1400 = vpack.c.b16 %v1272, %v1268
        %v1401 = vpack.c.b16 %v1273, %v1269
        %v1402 = vpack.c.b16 %v1274, %v1270
        %v1403 = vpack.c.b16 %v1275, %v1271
        %v1596 = vunpack.c.l.b16 %v828
        %v1597 = vunpack.c.l.b16 %v829
        %v1598 = vunpack.c.l.b16 %v830
        %v1599 = vunpack.c.l.b16 %v831
        %v1600 = vunpack.c.l.b16 %v832
        %v1601 = vunpack.c.l.b16 %v833
        %v1602 = vunpack.c.l.b16 %v834
        %v1603 = vunpack.c.l.b16 %v835
        %v1604 = vunpack.c.l.b16 %v836
        %v1605 = vunpack.c.l.b16 %v837
        %v1606 = vunpack.c.l.b16 %v838
        %v1607 = vunpack.c.l.b16 %v839
        %v1608 = vunpack.c.l.b16 %v840
        %v1609 = vunpack.c.l.b16 %v841
        %v1610 = vunpack.c.l.b16 %v842
        %v1611 = vunpack.c.l.b16 %v843
        %v1612 = vunpack.c.l.b16 %v844
        %v1613 = vunpack.c.l.b16 %v845
        %v1614 = vunpack.c.l.b16 %v846
        %v1615 = vunpack.c.l.b16 %v847
        %v1616 = vunpack.c.l.b16 %v848
        %v1617 = vunpack.c.l.b16 %v849
        %v1618 = vunpack.c.l.b16 %v850
        %v1619 = vunpack.c.l.b16 %v851
        %v1620 = vunpack.c.l.b16 %v852
        %v1621 = vunpack.c.l.b16 %v853
        %v1622 = vunpack.c.l.b16 %v854
        %v1623 = vunpack.c.l.b16 %v855
        %v1624 = vunpack.c.l.b16 %v856
        %v1625 = vunpack.c.l.b16 %v857
        %v1626 = vunpack.c.l.b16 %v858
        %v1627 = vunpack.c.l.b16 %v859
        %v1628 = vunpack.c.l.b16 %v860
        %v1629 = vunpack.c.l.b16 %v861
        %v1630 = vunpack.c.l.b16 %v862
        %v1631 = vunpack.c.l.b16 %v863
        %v1632 = vunpack.c.l.b16 %v864
        %v1633 = vunpack.c.l.b16 %v865
        %v1634 = vunpack.c.l.b16 %v866
        %v1635 = vunpack.c.l.b16 %v867
        %v1636 = vunpack.c.l.b16 %v868
        %v1637 = vunpack.c.l.b16 %v869
        %v1638 = vunpack.c.l.b16 %v870
        %v1639 = vunpack.c.l.b16 %v871
        %v1640 = vunpack.c.l.b16 %v872
        %v1641 = vunpack.c.l.b16 %v873
        %v1642 = vunpack.c.l.b16 %v874
        %v1643 = vunpack.c.l.b16 %v875
        %v1644 = vunpack.c.l.b16 %v876
        %v1645 = vunpack.c.l.b16 %v877
        %v1646 = vunpack.c.l.b16 %v878
        %v1647 = vunpack.c.l.b16 %v879
        %v1648 = vunpack.c.l.b16 %v880
        %v1649 = vunpack.c.l.b16 %v881
        %v1650 = vunpack.c.l.b16 %v882
        %v1651 = vunpack.c.l.b16 %v883
        %v1652 = vunpack.c.l.b16 %v884
        %v1653 = vunpack.c.l.b16 %v885
        %v1654 = vunpack.c.l.b16 %v886
        %v1655 = vunpack.c.l.b16 %v887
        %v1656 = vunpack.c.l.b16 %v888
        %v1657 = vunpack.c.l.b16 %v889
        %v1658 = vunpack.c.l.b16 %v890
        %v1659 = vunpack.c.l.b16 %v891
        %v1660 = vpack.c.b16 %v1597, %v1596
        %v1661 = vpack.c.b16 %v1599, %v1598
        %v1662 = vpack.c.b16 %v1601, %v1600
        %v1663 = vpack.c.b16 %v1603, %v1602
        %v1664 = vpack.c.b16 %v1605, %v1604
        %v1665 = vpack.c.b16 %v1607, %v1606
        %v1666 = vpack.c.b16 %v1609, %v1608
        %v1667 = vpack.c.b16 %v1611, %v1610
        %v1668 = vpack.c.b16 %v1613, %v1612
        %v1669 = vpack.c.b16 %v1615, %v1614
        %v1670 = vpack.c.b16 %v1617, %v1616
        %v1671 = vpack.c.b16 %v1619, %v1618
        %v1672 = vpack.c.b16 %v1621, %v1620
        %v1673 = vpack.c.b16 %v1623, %v1622
        %v1674 = vpack.c.b16 %v1625, %v1624
        %v1675 = vpack.c.b16 %v1627, %v1626
        %v1676 = vpack.c.b16 %v1629, %v1628
        %v1677 = vpack.c.b16 %v1631, %v1630
        %v1678 = vpack.c.b16 %v1633, %v1632
        %v1679 = vpack.c.b16 %v1635, %v1634
        %v1680 = vpack.c.b16 %v1637, %v1636
        %v1681 = vpack.c.b16 %v1639, %v1638
        %v1682 = vpack.c.b16 %v1641, %v1640
        %v1683 = vpack.c.b16 %v1643, %v1642
        %v1684 = vpack.c.b16 %v1645, %v1644
        %v1685 = vpack.c.b16 %v1647, %v1646
        %v1686 = vpack.c.b16 %v1649, %v1648
        %v1687 = vpack.c.b16 %v1651, %v1650
        %v1688 = vpack.c.b16 %v1653, %v1652
        %v1689 = vpack.c.b16 %v1655, %v1654
        %v1690 = vpack.c.b16 %v1657, %v1656
        %v1691 = vpack.c.b16 %v1659, %v1658
        %1724 = vmatpush.bf16.msra.mxu0 %v1667
        %1725 = vmatpush.bf16.msra.mxu0 %v1666
        %1726 = vmatpush.bf16.msra.mxu0 %v1665
        %1727 = vmatpush.bf16.msra.mxu0 %v1664
        %1728 = vmatpush.bf16.msra.mxu0 %v1663
        %1729 = vmatpush.bf16.msra.mxu0 %v1662
        %1730 = vmatpush.bf16.msra.mxu0 %v1661
        %1731 = vmatpush.bf16.msra.mxu0 %v1660
        %1732 = vmatmul.bf16.gmra.mxu0 %v1276
        %v1733 = vpop.f32.mrf.mxu0
        %v1734 = vadd.f32 0.0, %v1733
        %v1735 = vpop.f32.mrf.mxu0
        %v1736 = vadd.f32 0.0, %v1735
        %1737 = vmatmul.bf16.gmra.mxu0 %v1280
        %v1738 = vpop.f32.mrf.mxu0
        %v1739 = vadd.f32 0.0, %v1738
        %v1740 = vpop.f32.mrf.mxu0
        %v1741 = vadd.f32 0.0, %v1740
        %1742 = vmatmul.bf16.gmra.mxu0 %v1284
        %v1743 = vpop.f32.mrf.mxu0
        %v1744 = vadd.f32 0.0, %v1743
        %v1745 = vpop.f32.mrf.mxu0
        %v1746 = vadd.f32 0.0, %v1745
        %1747 = vmatmul.bf16.gmra.mxu0 %v1288
        %v1748 = vpop.f32.mrf.mxu0
        %v1749 = vadd.f32 0.0, %v1748
        %v1750 = vpop.f32.mrf.mxu0
        %v1751 = vadd.f32 0.0, %v1750
        %1752 = vmatmul.bf16.gmra.mxu0 %v1292
        %v1753 = vpop.f32.mrf.mxu0
        %v1754 = vadd.f32 0.0, %v1753
        %v1755 = vpop.f32.mrf.mxu0
        %v1756 = vadd.f32 0.0, %v1755
        %1757 = vmatmul.bf16.gmra.mxu0 %v1296
        %v1758 = vpop.f32.mrf.mxu0
        %v1759 = vadd.f32 0.0, %v1758
        %v1760 = vpop.f32.mrf.mxu0
        %v1761 = vadd.f32 0.0, %v1760
        %1762 = vmatmul.bf16.gmra.mxu0 %v1300
        %v1763 = vpop.f32.mrf.mxu0
        %v1764 = vadd.f32 0.0, %v1763
        %v1765 = vpop.f32.mrf.mxu0
        %v1766 = vadd.f32 0.0, %v1765
        %1767 = vmatmul.bf16.gmra.mxu0 %v1304
        %v1768 = vpop.f32.mrf.mxu0
        %v1769 = vadd.f32 0.0, %v1768
        %v1770 = vpop.f32.mrf.mxu0
        %v1771 = vadd.f32 0.0, %v1770
        %1772 = vmatmul.bf16.gmra.mxu0 %v1308
        %v1773 = vpop.f32.mrf.mxu0
        %v1774 = vadd.f32 0.0, %v1773
        %v1775 = vpop.f32.mrf.mxu0
        %v1776 = vadd.f32 0.0, %v1775
        %1777 = vmatmul.bf16.gmra.mxu0 %v1312
        %v1778 = vpop.f32.mrf.mxu0
        %v1779 = vadd.f32 0.0, %v1778
        %v1780 = vpop.f32.mrf.mxu0
        %v1781 = vadd.f32 0.0, %v1780
        %1782 = vmatmul.bf16.gmra.mxu0 %v1316
        %v1783 = vpop.f32.mrf.mxu0
        %v1784 = vadd.f32 0.0, %v1783
        %v1785 = vpop.f32.mrf.mxu0
        %v1786 = vadd.f32 0.0, %v1785
        %1787 = vmatmul.bf16.gmra.mxu0 %v1320
        %v1788 = vpop.f32.mrf.mxu0
        %v1789 = vadd.f32 0.0, %v1788
        %v1790 = vpop.f32.mrf.mxu0
        %v1791 = vadd.f32 0.0, %v1790
        %1792 = vmatmul.bf16.gmra.mxu0 %v1324
        %v1793 = vpop.f32.mrf.mxu0
        %v1794 = vadd.f32 0.0, %v1793
        %v1795 = vpop.f32.mrf.mxu0
        %v1796 = vadd.f32 0.0, %v1795
        %1797 = vmatmul.bf16.gmra.mxu0 %v1328
        %v1798 = vpop.f32.mrf.mxu0
        %v1799 = vadd.f32 0.0, %v1798
        %v1800 = vpop.f32.mrf.mxu0
        %v1801 = vadd.f32 0.0, %v1800
        %1802 = vmatmul.bf16.gmra.mxu0 %v1332
        %v1803 = vpop.f32.mrf.mxu0
        %v1804 = vadd.f32 0.0, %v1803
        %v1805 = vpop.f32.mrf.mxu0
        %v1806 = vadd.f32 0.0, %v1805
        %1807 = vmatmul.bf16.gmra.mxu0 %v1336
        %v1808 = vpop.f32.mrf.mxu0
        %v1809 = vadd.f32 0.0, %v1808
        %v1810 = vpop.f32.mrf.mxu0
        %v1811 = vadd.f32 0.0, %v1810
        %1812 = vmatmul.bf16.gmra.mxu0 %v1340
        %v1813 = vpop.f32.mrf.mxu0
        %v1814 = vadd.f32 0.0, %v1813
        %v1815 = vpop.f32.mrf.mxu0
        %v1816 = vadd.f32 0.0, %v1815
        %1817 = vmatmul.bf16.gmra.mxu0 %v1344
        %v1818 = vpop.f32.mrf.mxu0
        %v1819 = vadd.f32 0.0, %v1818
        %v1820 = vpop.f32.mrf.mxu0
        %v1821 = vadd.f32 0.0, %v1820
        %1822 = vmatmul.bf16.gmra.mxu0 %v1348
        %v1823 = vpop.f32.mrf.mxu0
        %v1824 = vadd.f32 0.0, %v1823
        %v1825 = vpop.f32.mrf.mxu0
        %v1826 = vadd.f32 0.0, %v1825
        %1827 = vmatmul.bf16.gmra.mxu0 %v1352
        %v1828 = vpop.f32.mrf.mxu0
        %v1829 = vadd.f32 0.0, %v1828
        %v1830 = vpop.f32.mrf.mxu0
        %v1831 = vadd.f32 0.0, %v1830
        %1832 = vmatmul.bf16.gmra.mxu0 %v1356
        %v1833 = vpop.f32.mrf.mxu0
        %v1834 = vadd.f32 0.0, %v1833
        %v1835 = vpop.f32.mrf.mxu0
        %v1836 = vadd.f32 0.0, %v1835
        %1837 = vmatmul.bf16.gmra.mxu0 %v1360
        %v1838 = vpop.f32.mrf.mxu0
        %v1839 = vadd.f32 0.0, %v1838
        %v1840 = vpop.f32.mrf.mxu0
        %v1841 = vadd.f32 0.0, %v1840
        %1842 = vmatmul.bf16.gmra.mxu0 %v1364
        %v1843 = vpop.f32.mrf.mxu0
        %v1844 = vadd.f32 0.0, %v1843
        %v1845 = vpop.f32.mrf.mxu0
        %v1846 = vadd.f32 0.0, %v1845
        %1847 = vmatmul.bf16.gmra.mxu0 %v1368
        %v1848 = vpop.f32.mrf.mxu0
        %v1849 = vadd.f32 0.0, %v1848
        %v1850 = vpop.f32.mrf.mxu0
        %v1851 = vadd.f32 0.0, %v1850
        %1852 = vmatmul.bf16.gmra.mxu0 %v1372
        %v1853 = vpop.f32.mrf.mxu0
        %v1854 = vadd.f32 0.0, %v1853
        %v1855 = vpop.f32.mrf.mxu0
        %v1856 = vadd.f32 0.0, %v1855
        %1857 = vmatmul.bf16.gmra.mxu0 %v1376
        %v1858 = vpop.f32.mrf.mxu0
        %v1859 = vadd.f32 0.0, %v1858
        %v1860 = vpop.f32.mrf.mxu0
        %v1861 = vadd.f32 0.0, %v1860
        %1862 = vmatmul.bf16.gmra.mxu0 %v1380
        %v1863 = vpop.f32.mrf.mxu0
        %v1864 = vadd.f32 0.0, %v1863
        %v1865 = vpop.f32.mrf.mxu0
        %v1866 = vadd.f32 0.0, %v1865
        %1867 = vmatmul.bf16.gmra.mxu0 %v1384
        %v1868 = vpop.f32.mrf.mxu0
        %v1869 = vadd.f32 0.0, %v1868
        %v1870 = vpop.f32.mrf.mxu0
        %v1871 = vadd.f32 0.0, %v1870
        %1872 = vmatmul.bf16.gmra.mxu0 %v1388
        %v1873 = vpop.f32.mrf.mxu0
        %v1874 = vadd.f32 0.0, %v1873
        %v1875 = vpop.f32.mrf.mxu0
        %v1876 = vadd.f32 0.0, %v1875
        %1877 = vmatmul.bf16.gmra.mxu0 %v1392
        %v1878 = vpop.f32.mrf.mxu0
        %v1879 = vadd.f32 0.0, %v1878
        %v1880 = vpop.f32.mrf.mxu0
        %v1881 = vadd.f32 0.0, %v1880
        %1882 = vmatmul.bf16.gmra.mxu0 %v1396
        %v1883 = vpop.f32.mrf.mxu0
        %v1884 = vadd.f32 0.0, %v1883
        %v1885 = vpop.f32.mrf.mxu0
        %v1886 = vadd.f32 0.0, %v1885
        %1887 = vmatmul.bf16.gmra.mxu0 %v1400
        %v1888 = vpop.f32.mrf.mxu0
        %v1889 = vadd.f32 0.0, %v1888
        %v1890 = vpop.f32.mrf.mxu0
        %v1891 = vadd.f32 0.0, %v1890
        %1892 = vdwg.mxu0
        %1893 = vmatpush.bf16.msra.mxu0 %v1675
        %1894 = vmatpush.bf16.msra.mxu0 %v1674
        %1895 = vmatpush.bf16.msra.mxu0 %v1673
        %1896 = vmatpush.bf16.msra.mxu0 %v1672
        %1897 = vmatpush.bf16.msra.mxu0 %v1671
        %1898 = vmatpush.bf16.msra.mxu0 %v1670
        %1899 = vmatpush.bf16.msra.mxu0 %v1669
        %1900 = vmatpush.bf16.msra.mxu0 %v1668
        %1901 = vmatmul.bf16.gmra.mxu0 %v1277
        %v1902 = vpop.f32.mrf.mxu0
        %v1903 = vadd.f32 %v1734, %v1902
        %v1904 = vpop.f32.mrf.mxu0
        %v1905 = vadd.f32 %v1736, %v1904
        %1906 = vmatmul.bf16.gmra.mxu0 %v1281
        %v1907 = vpop.f32.mrf.mxu0
        %v1908 = vadd.f32 %v1739, %v1907
        %v1909 = vpop.f32.mrf.mxu0
        %v1910 = vadd.f32 %v1741, %v1909
        %1911 = vmatmul.bf16.gmra.mxu0 %v1285
        %v1912 = vpop.f32.mrf.mxu0
        %v1913 = vadd.f32 %v1744, %v1912
        %v1914 = vpop.f32.mrf.mxu0
        %v1915 = vadd.f32 %v1746, %v1914
        %1916 = vmatmul.bf16.gmra.mxu0 %v1289
        %v1917 = vpop.f32.mrf.mxu0
        %v1918 = vadd.f32 %v1749, %v1917
        %v1919 = vpop.f32.mrf.mxu0
        %v1920 = vadd.f32 %v1751, %v1919
        %1921 = vmatmul.bf16.gmra.mxu0 %v1293
        %v1922 = vpop.f32.mrf.mxu0
        %v1923 = vadd.f32 %v1754, %v1922
        %v1924 = vpop.f32.mrf.mxu0
        %v1925 = vadd.f32 %v1756, %v1924
        %1926 = vmatmul.bf16.gmra.mxu0 %v1297
        %v1927 = vpop.f32.mrf.mxu0
        %v1928 = vadd.f32 %v1759, %v1927
        %v1929 = vpop.f32.mrf.mxu0
        %v1930 = vadd.f32 %v1761, %v1929
        %1931 = vmatmul.bf16.gmra.mxu0 %v1301
        %v1932 = vpop.f32.mrf.mxu0
        %v1933 = vadd.f32 %v1764, %v1932
        %v1934 = vpop.f32.mrf.mxu0
        %v1935 = vadd.f32 %v1766, %v1934
        %1936 = vmatmul.bf16.gmra.mxu0 %v1305
        %v1937 = vpop.f32.mrf.mxu0
        %v1938 = vadd.f32 %v1769, %v1937
        %v1939 = vpop.f32.mrf.mxu0
        %v1940 = vadd.f32 %v1771, %v1939
        %1941 = vmatmul.bf16.gmra.mxu0 %v1309
        %v1942 = vpop.f32.mrf.mxu0
        %v1943 = vadd.f32 %v1774, %v1942
        %v1944 = vpop.f32.mrf.mxu0
        %v1945 = vadd.f32 %v1776, %v1944
        %1946 = vmatmul.bf16.gmra.mxu0 %v1313
        %v1947 = vpop.f32.mrf.mxu0
        %v1948 = vadd.f32 %v1779, %v1947
        %v1949 = vpop.f32.mrf.mxu0
        %v1950 = vadd.f32 %v1781, %v1949
        %1951 = vmatmul.bf16.gmra.mxu0 %v1317
        %v1952 = vpop.f32.mrf.mxu0
        %v1953 = vadd.f32 %v1784, %v1952
        %v1954 = vpop.f32.mrf.mxu0
        %v1955 = vadd.f32 %v1786, %v1954
        %1956 = vmatmul.bf16.gmra.mxu0 %v1321
        %v1957 = vpop.f32.mrf.mxu0
        %v1958 = vadd.f32 %v1789, %v1957
        %v1959 = vpop.f32.mrf.mxu0
        %v1960 = vadd.f32 %v1791, %v1959
        %1961 = vmatmul.bf16.gmra.mxu0 %v1325
        %v1962 = vpop.f32.mrf.mxu0
        %v1963 = vadd.f32 %v1794, %v1962
        %v1964 = vpop.f32.mrf.mxu0
        %v1965 = vadd.f32 %v1796, %v1964
        %1966 = vmatmul.bf16.gmra.mxu0 %v1329
        %v1967 = vpop.f32.mrf.mxu0
        %v1968 = vadd.f32 %v1799, %v1967
        %v1969 = vpop.f32.mrf.mxu0
        %v1970 = vadd.f32 %v1801, %v1969
        %1971 = vmatmul.bf16.gmra.mxu0 %v1333
        %v1972 = vpop.f32.mrf.mxu0
        %v1973 = vadd.f32 %v1804, %v1972
        %v1974 = vpop.f32.mrf.mxu0
        %v1975 = vadd.f32 %v1806, %v1974
        %1976 = vmatmul.bf16.gmra.mxu0 %v1337
        %v1977 = vpop.f32.mrf.mxu0
        %v1978 = vadd.f32 %v1809, %v1977
        %v1979 = vpop.f32.mrf.mxu0
        %v1980 = vadd.f32 %v1811, %v1979
        %1981 = vmatmul.bf16.gmra.mxu0 %v1341
        %v1982 = vpop.f32.mrf.mxu0
        %v1983 = vadd.f32 %v1814, %v1982
        %v1984 = vpop.f32.mrf.mxu0
        %v1985 = vadd.f32 %v1816, %v1984
        %1986 = vmatmul.bf16.gmra.mxu0 %v1345
        %v1987 = vpop.f32.mrf.mxu0
        %v1988 = vadd.f32 %v1819, %v1987
        %v1989 = vpop.f32.mrf.mxu0
        %v1990 = vadd.f32 %v1821, %v1989
        %1991 = vmatmul.bf16.gmra.mxu0 %v1349
        %v1992 = vpop.f32.mrf.mxu0
        %v1993 = vadd.f32 %v1824, %v1992
        %v1994 = vpop.f32.mrf.mxu0
        %v1995 = vadd.f32 %v1826, %v1994
        %1996 = vmatmul.bf16.gmra.mxu0 %v1353
        %v1997 = vpop.f32.mrf.mxu0
        %v1998 = vadd.f32 %v1829, %v1997
        %v1999 = vpop.f32.mrf.mxu0
        %v2000 = vadd.f32 %v1831, %v1999
        %2001 = vmatmul.bf16.gmra.mxu0 %v1357
        %v2002 = vpop.f32.mrf.mxu0
        %v2003 = vadd.f32 %v1834, %v2002
        %v2004 = vpop.f32.mrf.mxu0
        %v2005 = vadd.f32 %v1836, %v2004
        %2006 = vmatmul.bf16.gmra.mxu0 %v1361
        %v2007 = vpop.f32.mrf.mxu0
        %v2008 = vadd.f32 %v1839, %v2007
        %v2009 = vpop.f32.mrf.mxu0
        %v2010 = vadd.f32 %v1841, %v2009
        %2011 = vmatmul.bf16.gmra.mxu0 %v1365
        %v2012 = vpop.f32.mrf.mxu0
        %v2013 = vadd.f32 %v1844, %v2012
        %v2014 = vpop.f32.mrf.mxu0
        %v2015 = vadd.f32 %v1846, %v2014
        %2016 = vmatmul.bf16.gmra.mxu0 %v1369
        %v2017 = vpop.f32.mrf.mxu0
        %v2018 = vadd.f32 %v1849, %v2017
        %v2019 = vpop.f32.mrf.mxu0
        %v2020 = vadd.f32 %v1851, %v2019
        %2021 = vmatmul.bf16.gmra.mxu0 %v1373
        %v2022 = vpop.f32.mrf.mxu0
        %v2023 = vadd.f32 %v1854, %v2022
        %v2024 = vpop.f32.mrf.mxu0
        %v2025 = vadd.f32 %v1856, %v2024
        %2026 = vmatmul.bf16.gmra.mxu0 %v1377
        %v2027 = vpop.f32.mrf.mxu0
        %v2028 = vadd.f32 %v1859, %v2027
        %v2029 = vpop.f32.mrf.mxu0
        %v2030 = vadd.f32 %v1861, %v2029
        %2031 = vmatmul.bf16.gmra.mxu0 %v1381
        %v2032 = vpop.f32.mrf.mxu0
        %v2033 = vadd.f32 %v1864, %v2032
        %v2034 = vpop.f32.mrf.mxu0
        %v2035 = vadd.f32 %v1866, %v2034
        %2036 = vmatmul.bf16.gmra.mxu0 %v1385
        %v2037 = vpop.f32.mrf.mxu0
        %v2038 = vadd.f32 %v1869, %v2037
        %v2039 = vpop.f32.mrf.mxu0
        %v2040 = vadd.f32 %v1871, %v2039
        %2041 = vmatmul.bf16.gmra.mxu0 %v1389
        %v2042 = vpop.f32.mrf.mxu0
        %v2043 = vadd.f32 %v1874, %v2042
        %v2044 = vpop.f32.mrf.mxu0
        %v2045 = vadd.f32 %v1876, %v2044
        %2046 = vmatmul.bf16.gmra.mxu0 %v1393
        %v2047 = vpop.f32.mrf.mxu0
        %v2048 = vadd.f32 %v1879, %v2047
        %v2049 = vpop.f32.mrf.mxu0
        %v2050 = vadd.f32 %v1881, %v2049
        %2051 = vmatmul.bf16.gmra.mxu0 %v1397
        %v2052 = vpop.f32.mrf.mxu0
        %v2053 = vadd.f32 %v1884, %v2052
        %v2054 = vpop.f32.mrf.mxu0
        %v2055 = vadd.f32 %v1886, %v2054
        %2056 = vmatmul.bf16.gmra.mxu0 %v1401
        %v2057 = vpop.f32.mrf.mxu0
        %v2058 = vadd.f32 %v1889, %v2057
        %v2059 = vpop.f32.mrf.mxu0
        %v2060 = vadd.f32 %v1891, %v2059
        %2061 = vdwg.mxu0
        %2062 = vmatpush.bf16.msra.mxu0 %v1683
        %2063 = vmatpush.bf16.msra.mxu0 %v1682
        %2064 = vmatpush.bf16.msra.mxu0 %v1681
        %2065 = vmatpush.bf16.msra.mxu0 %v1680
        %2066 = vmatpush.bf16.msra.mxu0 %v1679
        %2067 = vmatpush.bf16.msra.mxu0 %v1678
        %2068 = vmatpush.bf16.msra.mxu0 %v1677
        %2069 = vmatpush.bf16.msra.mxu0 %v1676
        %2070 = vmatmul.bf16.gmra.mxu0 %v1278
        %v2071 = vpop.f32.mrf.mxu0
        %v2072 = vadd.f32 %v1903, %v2071
        %v2073 = vpop.f32.mrf.mxu0
        %v2074 = vadd.f32 %v1905, %v2073
        %2075 = vmatmul.bf16.gmra.mxu0 %v1282
        %v2076 = vpop.f32.mrf.mxu0
        %v2077 = vadd.f32 %v1908, %v2076
        %v2078 = vpop.f32.mrf.mxu0
        %v2079 = vadd.f32 %v1910, %v2078
        %2080 = vmatmul.bf16.gmra.mxu0 %v1286
        %v2081 = vpop.f32.mrf.mxu0
        %v2082 = vadd.f32 %v1913, %v2081
        %v2083 = vpop.f32.mrf.mxu0
        %v2084 = vadd.f32 %v1915, %v2083
        %2085 = vmatmul.bf16.gmra.mxu0 %v1290
        %v2086 = vpop.f32.mrf.mxu0
        %v2087 = vadd.f32 %v1918, %v2086
        %v2088 = vpop.f32.mrf.mxu0
        %v2089 = vadd.f32 %v1920, %v2088
        %2090 = vmatmul.bf16.gmra.mxu0 %v1294
        %v2091 = vpop.f32.mrf.mxu0
        %v2092 = vadd.f32 %v1923, %v2091
        %v2093 = vpop.f32.mrf.mxu0
        %v2094 = vadd.f32 %v1925, %v2093
        %2095 = vmatmul.bf16.gmra.mxu0 %v1298
        %v2096 = vpop.f32.mrf.mxu0
        %v2097 = vadd.f32 %v1928, %v2096
        %v2098 = vpop.f32.mrf.mxu0
        %v2099 = vadd.f32 %v1930, %v2098
        %2100 = vmatmul.bf16.gmra.mxu0 %v1302
        %v2101 = vpop.f32.mrf.mxu0
        %v2102 = vadd.f32 %v1933, %v2101
        %v2103 = vpop.f32.mrf.mxu0
        %v2104 = vadd.f32 %v1935, %v2103
        %2105 = vmatmul.bf16.gmra.mxu0 %v1306
        %v2106 = vpop.f32.mrf.mxu0
        %v2107 = vadd.f32 %v1938, %v2106
        %v2108 = vpop.f32.mrf.mxu0
        %v2109 = vadd.f32 %v1940, %v2108
        %2110 = vmatmul.bf16.gmra.mxu0 %v1310
        %v2111 = vpop.f32.mrf.mxu0
        %v2112 = vadd.f32 %v1943, %v2111
        %v2113 = vpop.f32.mrf.mxu0
        %v2114 = vadd.f32 %v1945, %v2113
        %2115 = vmatmul.bf16.gmra.mxu0 %v1314
        %v2116 = vpop.f32.mrf.mxu0
        %v2117 = vadd.f32 %v1948, %v2116
        %v2118 = vpop.f32.mrf.mxu0
        %v2119 = vadd.f32 %v1950, %v2118
        %2120 = vmatmul.bf16.gmra.mxu0 %v1318
        %v2121 = vpop.f32.mrf.mxu0
        %v2122 = vadd.f32 %v1953, %v2121
        %v2123 = vpop.f32.mrf.mxu0
        %v2124 = vadd.f32 %v1955, %v2123
        %2125 = vmatmul.bf16.gmra.mxu0 %v1322
        %v2126 = vpop.f32.mrf.mxu0
        %v2127 = vadd.f32 %v1958, %v2126
        %v2128 = vpop.f32.mrf.mxu0
        %v2129 = vadd.f32 %v1960, %v2128
        %2130 = vmatmul.bf16.gmra.mxu0 %v1326
        %v2131 = vpop.f32.mrf.mxu0
        %v2132 = vadd.f32 %v1963, %v2131
        %v2133 = vpop.f32.mrf.mxu0
        %v2134 = vadd.f32 %v1965, %v2133
        %2135 = vmatmul.bf16.gmra.mxu0 %v1330
        %v2136 = vpop.f32.mrf.mxu0
        %v2137 = vadd.f32 %v1968, %v2136
        %v2138 = vpop.f32.mrf.mxu0
        %v2139 = vadd.f32 %v1970, %v2138
        %2140 = vmatmul.bf16.gmra.mxu0 %v1334
        %v2141 = vpop.f32.mrf.mxu0
        %v2142 = vadd.f32 %v1973, %v2141
        %v2143 = vpop.f32.mrf.mxu0
        %v2144 = vadd.f32 %v1975, %v2143
        %2145 = vmatmul.bf16.gmra.mxu0 %v1338
        %v2146 = vpop.f32.mrf.mxu0
        %v2147 = vadd.f32 %v1978, %v2146
        %v2148 = vpop.f32.mrf.mxu0
        %v2149 = vadd.f32 %v1980, %v2148
        %2150 = vmatmul.bf16.gmra.mxu0 %v1342
        %v2151 = vpop.f32.mrf.mxu0
        %v2152 = vadd.f32 %v1983, %v2151
        %v2153 = vpop.f32.mrf.mxu0
        %v2154 = vadd.f32 %v1985, %v2153
        %2155 = vmatmul.bf16.gmra.mxu0 %v1346
        %v2156 = vpop.f32.mrf.mxu0
        %v2157 = vadd.f32 %v1988, %v2156
        %v2158 = vpop.f32.mrf.mxu0
        %v2159 = vadd.f32 %v1990, %v2158
        %2160 = vmatmul.bf16.gmra.mxu0 %v1350
        %v2161 = vpop.f32.mrf.mxu0
        %v2162 = vadd.f32 %v1993, %v2161
        %v2163 = vpop.f32.mrf.mxu0
        %v2164 = vadd.f32 %v1995, %v2163
        %2165 = vmatmul.bf16.gmra.mxu0 %v1354
        %v2166 = vpop.f32.mrf.mxu0
        %v2167 = vadd.f32 %v1998, %v2166
        %v2168 = vpop.f32.mrf.mxu0
        %v2169 = vadd.f32 %v2000, %v2168
        %2170 = vmatmul.bf16.gmra.mxu0 %v1358
        %v2171 = vpop.f32.mrf.mxu0
        %v2172 = vadd.f32 %v2003, %v2171
        %v2173 = vpop.f32.mrf.mxu0
        %v2174 = vadd.f32 %v2005, %v2173
        %2175 = vmatmul.bf16.gmra.mxu0 %v1362
        %v2176 = vpop.f32.mrf.mxu0
        %v2177 = vadd.f32 %v2008, %v2176
        %v2178 = vpop.f32.mrf.mxu0
        %v2179 = vadd.f32 %v2010, %v2178
        %2180 = vmatmul.bf16.gmra.mxu0 %v1366
        %v2181 = vpop.f32.mrf.mxu0
        %v2182 = vadd.f32 %v2013, %v2181
        %v2183 = vpop.f32.mrf.mxu0
        %v2184 = vadd.f32 %v2015, %v2183
        %2185 = vmatmul.bf16.gmra.mxu0 %v1370
        %v2186 = vpop.f32.mrf.mxu0
        %v2187 = vadd.f32 %v2018, %v2186
        %v2188 = vpop.f32.mrf.mxu0
        %v2189 = vadd.f32 %v2020, %v2188
        %2190 = vmatmul.bf16.gmra.mxu0 %v1374
        %v2191 = vpop.f32.mrf.mxu0
        %v2192 = vadd.f32 %v2023, %v2191
        %v2193 = vpop.f32.mrf.mxu0
        %v2194 = vadd.f32 %v2025, %v2193
        %2195 = vmatmul.bf16.gmra.mxu0 %v1378
        %v2196 = vpop.f32.mrf.mxu0
        %v2197 = vadd.f32 %v2028, %v2196
        %v2198 = vpop.f32.mrf.mxu0
        %v2199 = vadd.f32 %v2030, %v2198
        %2200 = vmatmul.bf16.gmra.mxu0 %v1382
        %v2201 = vpop.f32.mrf.mxu0
        %v2202 = vadd.f32 %v2033, %v2201
        %v2203 = vpop.f32.mrf.mxu0
        %v2204 = vadd.f32 %v2035, %v2203
        %2205 = vmatmul.bf16.gmra.mxu0 %v1386
        %v2206 = vpop.f32.mrf.mxu0
        %v2207 = vadd.f32 %v2038, %v2206
        %v2208 = vpop.f32.mrf.mxu0
        %v2209 = vadd.f32 %v2040, %v2208
        %2210 = vmatmul.bf16.gmra.mxu0 %v1390
        %v2211 = vpop.f32.mrf.mxu0
        %v2212 = vadd.f32 %v2043, %v2211
        %v2213 = vpop.f32.mrf.mxu0
        %v2214 = vadd.f32 %v2045, %v2213
        %2215 = vmatmul.bf16.gmra.mxu0 %v1394
        %v2216 = vpop.f32.mrf.mxu0
        %v2217 = vadd.f32 %v2048, %v2216
        %v2218 = vpop.f32.mrf.mxu0
        %v2219 = vadd.f32 %v2050, %v2218
        %2220 = vmatmul.bf16.gmra.mxu0 %v1398
        %v2221 = vpop.f32.mrf.mxu0
        %v2222 = vadd.f32 %v2053, %v2221
        %v2223 = vpop.f32.mrf.mxu0
        %v2224 = vadd.f32 %v2055, %v2223
        %2225 = vmatmul.bf16.gmra.mxu0 %v1402
        %v2226 = vpop.f32.mrf.mxu0
        %v2227 = vadd.f32 %v2058, %v2226
        %v2228 = vpop.f32.mrf.mxu0
        %v2229 = vadd.f32 %v2060, %v2228
        %2230 = vdwg.mxu0
        %2231 = vmatpush.bf16.msra.mxu0 %v1691
        %2232 = vmatpush.bf16.msra.mxu0 %v1690
        %2233 = vmatpush.bf16.msra.mxu0 %v1689
        %2234 = vmatpush.bf16.msra.mxu0 %v1688
        %2235 = vmatpush.bf16.msra.mxu0 %v1687
        %2236 = vmatpush.bf16.msra.mxu0 %v1686
        %2237 = vmatpush.bf16.msra.mxu0 %v1685
        %2238 = vmatpush.bf16.msra.mxu0 %v1684
        %2239 = vmatmul.bf16.gmra.mxu0 %v1279
        %v2240 = vpop.f32.mrf.mxu0
        %v2241 = vadd.f32 %v2072, %v2240
        %v2242 = vpop.f32.mrf.mxu0
        %v2243 = vadd.f32 %v2074, %v2242
        %2244 = vmatmul.bf16.gmra.mxu0 %v1283
        %v2245 = vpop.f32.mrf.mxu0
        %v2246 = vadd.f32 %v2077, %v2245
        %v2247 = vpop.f32.mrf.mxu0
        %v2248 = vadd.f32 %v2079, %v2247
        %2249 = vmatmul.bf16.gmra.mxu0 %v1287
        %v2250 = vpop.f32.mrf.mxu0
        %v2251 = vadd.f32 %v2082, %v2250
        %v2252 = vpop.f32.mrf.mxu0
        %v2253 = vadd.f32 %v2084, %v2252
        %2254 = vmatmul.bf16.gmra.mxu0 %v1291
        %v2255 = vpop.f32.mrf.mxu0
        %v2256 = vadd.f32 %v2087, %v2255
        %v2257 = vpop.f32.mrf.mxu0
        %v2258 = vadd.f32 %v2089, %v2257
        %2259 = vmatmul.bf16.gmra.mxu0 %v1295
        %v2260 = vpop.f32.mrf.mxu0
        %v2261 = vadd.f32 %v2092, %v2260
        %v2262 = vpop.f32.mrf.mxu0
        %v2263 = vadd.f32 %v2094, %v2262
        %2264 = vmatmul.bf16.gmra.mxu0 %v1299
        %v2265 = vpop.f32.mrf.mxu0
        %v2266 = vadd.f32 %v2097, %v2265
        %v2267 = vpop.f32.mrf.mxu0
        %v2268 = vadd.f32 %v2099, %v2267
        %2269 = vmatmul.bf16.gmra.mxu0 %v1303
        %v2270 = vpop.f32.mrf.mxu0
        %v2271 = vadd.f32 %v2102, %v2270
        %v2272 = vpop.f32.mrf.mxu0
        %v2273 = vadd.f32 %v2104, %v2272
        %2274 = vmatmul.bf16.gmra.mxu0 %v1307
        %v2275 = vpop.f32.mrf.mxu0
        %v2276 = vadd.f32 %v2107, %v2275
        %v2277 = vpop.f32.mrf.mxu0
        %v2278 = vadd.f32 %v2109, %v2277
        %2279 = vmatmul.bf16.gmra.mxu0 %v1311
        %v2280 = vpop.f32.mrf.mxu0
        %v2281 = vadd.f32 %v2112, %v2280
        %v2282 = vpop.f32.mrf.mxu0
        %v2283 = vadd.f32 %v2114, %v2282
        %2284 = vmatmul.bf16.gmra.mxu0 %v1315
        %v2285 = vpop.f32.mrf.mxu0
        %v2286 = vadd.f32 %v2117, %v2285
        %v2287 = vpop.f32.mrf.mxu0
        %v2288 = vadd.f32 %v2119, %v2287
        %2289 = vmatmul.bf16.gmra.mxu0 %v1319
        %v2290 = vpop.f32.mrf.mxu0
        %v2291 = vadd.f32 %v2122, %v2290
        %v2292 = vpop.f32.mrf.mxu0
        %v2293 = vadd.f32 %v2124, %v2292
        %2294 = vmatmul.bf16.gmra.mxu0 %v1323
        %v2295 = vpop.f32.mrf.mxu0
        %v2296 = vadd.f32 %v2127, %v2295
        %v2297 = vpop.f32.mrf.mxu0
        %v2298 = vadd.f32 %v2129, %v2297
        %2299 = vmatmul.bf16.gmra.mxu0 %v1327
        %v2300 = vpop.f32.mrf.mxu0
        %v2301 = vadd.f32 %v2132, %v2300
        %v2302 = vpop.f32.mrf.mxu0
        %v2303 = vadd.f32 %v2134, %v2302
        %2304 = vmatmul.bf16.gmra.mxu0 %v1331
        %v2305 = vpop.f32.mrf.mxu0
        %v2306 = vadd.f32 %v2137, %v2305
        %v2307 = vpop.f32.mrf.mxu0
        %v2308 = vadd.f32 %v2139, %v2307
        %2309 = vmatmul.bf16.gmra.mxu0 %v1335
        %v2310 = vpop.f32.mrf.mxu0
        %v2311 = vadd.f32 %v2142, %v2310
        %v2312 = vpop.f32.mrf.mxu0
        %v2313 = vadd.f32 %v2144, %v2312
        %2314 = vmatmul.bf16.gmra.mxu0 %v1339
        %v2315 = vpop.f32.mrf.mxu0
        %v2316 = vadd.f32 %v2147, %v2315
        %v2317 = vpop.f32.mrf.mxu0
        %v2318 = vadd.f32 %v2149, %v2317
        %2319 = vmatmul.bf16.gmra.mxu0 %v1343
        %v2320 = vpop.f32.mrf.mxu0
        %v2321 = vadd.f32 %v2152, %v2320
        %v2322 = vpop.f32.mrf.mxu0
        %v2323 = vadd.f32 %v2154, %v2322
        %2324 = vmatmul.bf16.gmra.mxu0 %v1347
        %v2325 = vpop.f32.mrf.mxu0
        %v2326 = vadd.f32 %v2157, %v2325
        %v2327 = vpop.f32.mrf.mxu0
        %v2328 = vadd.f32 %v2159, %v2327
        %2329 = vmatmul.bf16.gmra.mxu0 %v1351
        %v2330 = vpop.f32.mrf.mxu0
        %v2331 = vadd.f32 %v2162, %v2330
        %v2332 = vpop.f32.mrf.mxu0
        %v2333 = vadd.f32 %v2164, %v2332
        %2334 = vmatmul.bf16.gmra.mxu0 %v1355
        %v2335 = vpop.f32.mrf.mxu0
        %v2336 = vadd.f32 %v2167, %v2335
        %v2337 = vpop.f32.mrf.mxu0
        %v2338 = vadd.f32 %v2169, %v2337
        %2339 = vmatmul.bf16.gmra.mxu0 %v1359
        %v2340 = vpop.f32.mrf.mxu0
        %v2341 = vadd.f32 %v2172, %v2340
        %v2342 = vpop.f32.mrf.mxu0
        %v2343 = vadd.f32 %v2174, %v2342
        %2344 = vmatmul.bf16.gmra.mxu0 %v1363
        %v2345 = vpop.f32.mrf.mxu0
        %v2346 = vadd.f32 %v2177, %v2345
        %v2347 = vpop.f32.mrf.mxu0
        %v2348 = vadd.f32 %v2179, %v2347
        %2349 = vmatmul.bf16.gmra.mxu0 %v1367
        %v2350 = vpop.f32.mrf.mxu0
        %v2351 = vadd.f32 %v2182, %v2350
        %v2352 = vpop.f32.mrf.mxu0
        %v2353 = vadd.f32 %v2184, %v2352
        %2354 = vmatmul.bf16.gmra.mxu0 %v1371
        %v2355 = vpop.f32.mrf.mxu0
        %v2356 = vadd.f32 %v2187, %v2355
        %v2357 = vpop.f32.mrf.mxu0
        %v2358 = vadd.f32 %v2189, %v2357
        %2359 = vmatmul.bf16.gmra.mxu0 %v1375
        %v2360 = vpop.f32.mrf.mxu0
        %v2361 = vadd.f32 %v2192, %v2360
        %v2362 = vpop.f32.mrf.mxu0
        %v2363 = vadd.f32 %v2194, %v2362
        %2364 = vmatmul.bf16.gmra.mxu0 %v1379
        %v2365 = vpop.f32.mrf.mxu0
        %v2366 = vadd.f32 %v2197, %v2365
        %v2367 = vpop.f32.mrf.mxu0
        %v2368 = vadd.f32 %v2199, %v2367
        %2369 = vmatmul.bf16.gmra.mxu0 %v1383
        %v2370 = vpop.f32.mrf.mxu0
        %v2371 = vadd.f32 %v2202, %v2370
        %v2372 = vpop.f32.mrf.mxu0
        %v2373 = vadd.f32 %v2204, %v2372
        %2374 = vmatmul.bf16.gmra.mxu0 %v1387
        %v2375 = vpop.f32.mrf.mxu0
        %v2376 = vadd.f32 %v2207, %v2375
        %v2377 = vpop.f32.mrf.mxu0
        %v2378 = vadd.f32 %v2209, %v2377
        %2379 = vmatmul.bf16.gmra.mxu0 %v1391
        %v2380 = vpop.f32.mrf.mxu0
        %v2381 = vadd.f32 %v2212, %v2380
        %v2382 = vpop.f32.mrf.mxu0
        %v2383 = vadd.f32 %v2214, %v2382
        %2384 = vmatmul.bf16.gmra.mxu0 %v1395
        %v2385 = vpop.f32.mrf.mxu0
        %v2386 = vadd.f32 %v2217, %v2385
        %v2387 = vpop.f32.mrf.mxu0
        %v2388 = vadd.f32 %v2219, %v2387
        %2389 = vmatmul.bf16.gmra.mxu0 %v1399
        %v2390 = vpop.f32.mrf.mxu0
        %v2391 = vadd.f32 %v2222, %v2390
        %v2392 = vpop.f32.mrf.mxu0
        %v2393 = vadd.f32 %v2224, %v2392
        %2394 = vmatmul.bf16.gmra.mxu0 %v1403
        %v2395 = vpop.f32.mrf.mxu0
        %v2396 = vadd.f32 %v2227, %v2395
        %v2397 = vpop.f32.mrf.mxu0
        %v2398 = vadd.f32 %v2229, %v2397
        %2399 = vdwg.mxu0
        %v2400 = vadd.f32 %v636, %v2241
        %v2401 = vadd.f32 %v637, %v2243
        %v2402 = vadd.f32 %v638, %v2246
        %v2403 = vadd.f32 %v639, %v2248
        %v2404 = vadd.f32 %v640, %v2251
        %v2405 = vadd.f32 %v641, %v2253
        %v2406 = vadd.f32 %v642, %v2256
        %v2407 = vadd.f32 %v643, %v2258
        %v2408 = vadd.f32 %v644, %v2261
        %v2409 = vadd.f32 %v645, %v2263
        %v2410 = vadd.f32 %v646, %v2266
        %v2411 = vadd.f32 %v647, %v2268
        %v2412 = vadd.f32 %v648, %v2271
        %v2413 = vadd.f32 %v649, %v2273
        %v2414 = vadd.f32 %v650, %v2276
        %v2415 = vadd.f32 %v651, %v2278
        %v2416 = vadd.f32 %v652, %v2281
        %v2417 = vadd.f32 %v653, %v2283
        %v2418 = vadd.f32 %v654, %v2286
        %v2419 = vadd.f32 %v655, %v2288
        %v2420 = vadd.f32 %v656, %v2291
        %v2421 = vadd.f32 %v657, %v2293
        %v2422 = vadd.f32 %v658, %v2296
        %v2423 = vadd.f32 %v659, %v2298
        %v2424 = vadd.f32 %v660, %v2301
        %v2425 = vadd.f32 %v661, %v2303
        %v2426 = vadd.f32 %v662, %v2306
        %v2427 = vadd.f32 %v663, %v2308
        %v2428 = vadd.f32 %v664, %v2311
        %v2429 = vadd.f32 %v665, %v2313
        %v2430 = vadd.f32 %v666, %v2316
        %v2431 = vadd.f32 %v667, %v2318
        %v2432 = vadd.f32 %v668, %v2321
        %v2433 = vadd.f32 %v669, %v2323
        %v2434 = vadd.f32 %v670, %v2326
        %v2435 = vadd.f32 %v671, %v2328
        %v2436 = vadd.f32 %v672, %v2331
        %v2437 = vadd.f32 %v673, %v2333
        %v2438 = vadd.f32 %v674, %v2336
        %v2439 = vadd.f32 %v675, %v2338
        %v2440 = vadd.f32 %v676, %v2341
        %v2441 = vadd.f32 %v677, %v2343
        %v2442 = vadd.f32 %v678, %v2346
        %v2443 = vadd.f32 %v679, %v2348
        %v2444 = vadd.f32 %v680, %v2351
        %v2445 = vadd.f32 %v681, %v2353
        %v2446 = vadd.f32 %v682, %v2356
        %v2447 = vadd.f32 %v683, %v2358
        %v2448 = vadd.f32 %v684, %v2361
        %v2449 = vadd.f32 %v685, %v2363
        %v2450 = vadd.f32 %v686, %v2366
        %v2451 = vadd.f32 %v687, %v2368
        %v2452 = vadd.f32 %v688, %v2371
        %v2453 = vadd.f32 %v689, %v2373
        %v2454 = vadd.f32 %v690, %v2376
        %v2455 = vadd.f32 %v691, %v2378
        %v2456 = vadd.f32 %v692, %v2381
        %v2457 = vadd.f32 %v693, %v2383
        %v2458 = vadd.f32 %v694, %v2386
        %v2459 = vadd.f32 %v695, %v2388
        %v2460 = vadd.f32 %v696, %v2391
        %v2461 = vadd.f32 %v697, %v2393
        %v2462 = vadd.f32 %v698, %v2396
        %v2463 = vadd.f32 %v699, %v2398
        %2464 = vst [vmem:[#allocation2] sm:$0xff] %v2400
        %2465 = vst [vmem:[#allocation2 + $0x8] sm:$0xff] %v2401
        %2466 = vst [vmem:[#allocation2 + $0x10] sm:$0xff] %v2402
        %2467 = vst [vmem:[#allocation2 + $0x18] sm:$0xff] %v2403
        %2468 = vst [vmem:[#allocation2 + $0x20] sm:$0xff] %v2404
        %2469 = vst [vmem:[#allocation2 + $0x28] sm:$0xff] %v2405
        %2470 = vst [vmem:[#allocation2 + $0x30] sm:$0xff] %v2406
        %2471 = vst [vmem:[#allocation2 + $0x38] sm:$0xff] %v2407
        %2472 = vst [vmem:[#allocation2 + $0x40] sm:$0xff] %v2408
        %2473 = vst [vmem:[#allocation2 + $0x48] sm:$0xff] %v2409
        %2474 = vst [vmem:[#allocation2 + $0x50] sm:$0xff] %v2410
        %2475 = vst [vmem:[#allocation2 + $0x58] sm:$0xff] %v2411
        %2476 = vst [vmem:[#allocation2 + $0x60] sm:$0xff] %v2412
        %2477 = vst [vmem:[#allocation2 + $0x68] sm:$0xff] %v2413
        %2478 = vst [vmem:[#allocation2 + $0x70] sm:$0xff] %v2414
        %2479 = vst [vmem:[#allocation2 + $0x78] sm:$0xff] %v2415
        %2480 = vst [vmem:[#allocation2 + $0x80] sm:$0xff] %v2416
        %2481 = vst [vmem:[#allocation2 + $0x88] sm:$0xff] %v2417
        %2482 = vst [vmem:[#allocation2 + $0x90] sm:$0xff] %v2418
        %2483 = vst [vmem:[#allocation2 + $0x98] sm:$0xff] %v2419
        %2484 = vst [vmem:[#allocation2 + $0xa0] sm:$0xff] %v2420
        %2485 = vst [vmem:[#allocation2 + $0xa8] sm:$0xff] %v2421
        %2486 = vst [vmem:[#allocation2 + $0xb0] sm:$0xff] %v2422
        %2487 = vst [vmem:[#allocation2 + $0xb8] sm:$0xff] %v2423
        %2488 = vst [vmem:[#allocation2 + $0xc0] sm:$0xff] %v2424
        %2489 = vst [vmem:[#allocation2 + $0xc8] sm:$0xff] %v2425
        %2490 = vst [vmem:[#allocation2 + $0xd0] sm:$0xff] %v2426
        %2491 = vst [vmem:[#allocation2 + $0xd8] sm:$0xff] %v2427
        %2492 = vst [vmem:[#allocation2 + $0xe0] sm:$0xff] %v2428
        %2493 = vst [vmem:[#allocation2 + $0xe8] sm:$0xff] %v2429
        %2494 = vst [vmem:[#allocation2 + $0xf0] sm:$0xff] %v2430
        %2495 = vst [vmem:[#allocation2 + $0xf8] sm:$0xff] %v2431
        %2496 = vst [vmem:[#allocation2 + $0x100] sm:$0xff] %v2432
        %2497 = vst [vmem:[#allocation2 + $0x108] sm:$0xff] %v2433
        %2498 = vst [vmem:[#allocation2 + $0x110] sm:$0xff] %v2434
        %2499 = vst [vmem:[#allocation2 + $0x118] sm:$0xff] %v2435
        %2500 = vst [vmem:[#allocation2 + $0x120] sm:$0xff] %v2436
        %2501 = vst [vmem:[#allocation2 + $0x128] sm:$0xff] %v2437
        %2502 = vst [vmem:[#allocation2 + $0x130] sm:$0xff] %v2438
        %2503 = vst [vmem:[#allocation2 + $0x138] sm:$0xff] %v2439
        %2504 = vst [vmem:[#allocation2 + $0x140] sm:$0xff] %v2440
        %2505 = vst [vmem:[#allocation2 + $0x148] sm:$0xff] %v2441
        %2506 = vst [vmem:[#allocation2 + $0x150] sm:$0xff] %v2442
        %2507 = vst [vmem:[#allocation2 + $0x158] sm:$0xff] %v2443
        %2508 = vst [vmem:[#allocation2 + $0x160] sm:$0xff] %v2444
        %2509 = vst [vmem:[#allocation2 + $0x168] sm:$0xff] %v2445
        %2510 = vst [vmem:[#allocation2 + $0x170] sm:$0xff] %v2446
        %2511 = vst [vmem:[#allocation2 + $0x178] sm:$0xff] %v2447
        %2512 = vst [vmem:[#allocation2 + $0x180] sm:$0xff] %v2448
        %2513 = vst [vmem:[#allocation2 + $0x188] sm:$0xff] %v2449
        %2514 = vst [vmem:[#allocation2 + $0x190] sm:$0xff] %v2450
        %2515 = vst [vmem:[#allocation2 + $0x198] sm:$0xff] %v2451
        %2516 = vst [vmem:[#allocation2 + $0x1a0] sm:$0xff] %v2452
        %2517 = vst [vmem:[#allocation2 + $0x1a8] sm:$0xff] %v2453
        %2518 = vst [vmem:[#allocation2 + $0x1b0] sm:$0xff] %v2454
        %2519 = vst [vmem:[#allocation2 + $0x1b8] sm:$0xff] %v2455
        %2520 = vst [vmem:[#allocation2 + $0x1c0] sm:$0xff] %v2456
        %2521 = vst [vmem:[#allocation2 + $0x1c8] sm:$0xff] %v2457
        %2522 = vst [vmem:[#allocation2 + $0x1d0] sm:$0xff] %v2458
        %2523 = vst [vmem:[#allocation2 + $0x1d8] sm:$0xff] %v2459
        %2524 = vst [vmem:[#allocation2 + $0x1e0] sm:$0xff] %v2460
        %2525 = vst [vmem:[#allocation2 + $0x1e8] sm:$0xff] %v2461
        %2526 = vst [vmem:[#allocation2 + $0x1f0] sm:$0xff] %v2462
        %2527 = vst [vmem:[#allocation2 + $0x1f8] sm:$0xff] %v2463
        %p2528 = scmp.eq.s32.totalorder %s22, 3
        // Predicated region
        $region64: #{discriminator_forward.7} parent=54 // pred_check
          %p2529 = pneg %p2528
        $region65: #{discriminator_forward.7} parent=54 // pred_check_branch
          %2531 = sbr.rel (%p2529) target = $region67
        $region66: #{discriminator_forward.7} parent=54 // pred_region
          %v2532 = vld [vmem:[#allocation2] sm:$0xff]
          %v2533 = vld [vmem:[#allocation2 + $0x8] sm:$0xff]
          %v2534 = vld [vmem:[#allocation2 + $0x10] sm:$0xff]
          %v2535 = vld [vmem:[#allocation2 + $0x18] sm:$0xff]
          %v2536 = vld [vmem:[#allocation2 + $0x20] sm:$0xff]
          %v2537 = vld [vmem:[#allocation2 + $0x28] sm:$0xff]
          %v2538 = vld [vmem:[#allocation2 + $0x30] sm:$0xff]
          %v2539 = vld [vmem:[#allocation2 + $0x38] sm:$0xff]
          %v2540 = vld [vmem:[#allocation2 + $0x40] sm:$0xff]
          %v2541 = vld [vmem:[#allocation2 + $0x48] sm:$0xff]
          %v2542 = vld [vmem:[#allocation2 + $0x50] sm:$0xff]
          %v2543 = vld [vmem:[#allocation2 + $0x58] sm:$0xff]
          %v2544 = vld [vmem:[#allocation2 + $0x60] sm:$0xff]
          %v2545 = vld [vmem:[#allocation2 + $0x68] sm:$0xff]
          %v2546 = vld [vmem:[#allocation2 + $0x70] sm:$0xff]
          %v2547 = vld [vmem:[#allocation2 + $0x78] sm:$0xff]
          %v2548 = vld [vmem:[#allocation2 + $0x80] sm:$0xff]
          %v2549 = vld [vmem:[#allocation2 + $0x88] sm:$0xff]
          %v2550 = vld [vmem:[#allocation2 + $0x90] sm:$0xff]
          %v2551 = vld [vmem:[#allocation2 + $0x98] sm:$0xff]
          %v2552 = vld [vmem:[#allocation2 + $0xa0] sm:$0xff]
          %v2553 = vld [vmem:[#allocation2 + $0xa8] sm:$0xff]
          %v2554 = vld [vmem:[#allocation2 + $0xb0] sm:$0xff]
          %v2555 = vld [vmem:[#allocation2 + $0xb8] sm:$0xff]
          %v2556 = vld [vmem:[#allocation2 + $0xc0] sm:$0xff]
          %v2557 = vld [vmem:[#allocation2 + $0xc8] sm:$0xff]
          %v2558 = vld [vmem:[#allocation2 + $0xd0] sm:$0xff]
          %v2559 = vld [vmem:[#allocation2 + $0xd8] sm:$0xff]
          %v2560 = vld [vmem:[#allocation2 + $0xe0] sm:$0xff]
          %v2561 = vld [vmem:[#allocation2 + $0xe8] sm:$0xff]
          %v2562 = vld [vmem:[#allocation2 + $0xf0] sm:$0xff]
          %v2563 = vld [vmem:[#allocation2 + $0xf8] sm:$0xff]
          %v2564 = vld [vmem:[#allocation2 + $0x100] sm:$0xff]
          %v2565 = vld [vmem:[#allocation2 + $0x108] sm:$0xff]
          %v2566 = vld [vmem:[#allocation2 + $0x110] sm:$0xff]
          %v2567 = vld [vmem:[#allocation2 + $0x118] sm:$0xff]
          %v2568 = vld [vmem:[#allocation2 + $0x120] sm:$0xff]
          %v2569 = vld [vmem:[#allocation2 + $0x128] sm:$0xff]
          %v2570 = vld [vmem:[#allocation2 + $0x130] sm:$0xff]
          %v2571 = vld [vmem:[#allocation2 + $0x138] sm:$0xff]
          %v2572 = vld [vmem:[#allocation2 + $0x140] sm:$0xff]
          %v2573 = vld [vmem:[#allocation2 + $0x148] sm:$0xff]
          %v2574 = vld [vmem:[#allocation2 + $0x150] sm:$0xff]
          %v2575 = vld [vmem:[#allocation2 + $0x158] sm:$0xff]
          %v2576 = vld [vmem:[#allocation2 + $0x160] sm:$0xff]
          %v2577 = vld [vmem:[#allocation2 + $0x168] sm:$0xff]
          %v2578 = vld [vmem:[#allocation2 + $0x170] sm:$0xff]
          %v2579 = vld [vmem:[#allocation2 + $0x178] sm:$0xff]
          %v2580 = vld [vmem:[#allocation2 + $0x180] sm:$0xff]
          %v2581 = vld [vmem:[#allocation2 + $0x188] sm:$0xff]
          %v2582 = vld [vmem:[#allocation2 + $0x190] sm:$0xff]
          %v2583 = vld [vmem:[#allocation2 + $0x198] sm:$0xff]
          %v2584 = vld [vmem:[#allocation2 + $0x1a0] sm:$0xff]
          %v2585 = vld [vmem:[#allocation2 + $0x1a8] sm:$0xff]
          %v2586 = vld [vmem:[#allocation2 + $0x1b0] sm:$0xff]
          %v2587 = vld [vmem:[#allocation2 + $0x1b8] sm:$0xff]
          %v2588 = vld [vmem:[#allocation2 + $0x1c0] sm:$0xff]
          %v2589 = vld [vmem:[#allocation2 + $0x1c8] sm:$0xff]
          %v2590 = vld [vmem:[#allocation2 + $0x1d0] sm:$0xff]
          %v2591 = vld [vmem:[#allocation2 + $0x1d8] sm:$0xff]
          %v2592 = vld [vmem:[#allocation2 + $0x1e0] sm:$0xff]
          %v2593 = vld [vmem:[#allocation2 + $0x1e8] sm:$0xff]
          %v2594 = vld [vmem:[#allocation2 + $0x1f0] sm:$0xff]
          %v2595 = vld [vmem:[#allocation2 + $0x1f8] sm:$0xff]
          %v2596 = vadd.f32 %v2532, %v2533
          %v2597 = vadd.f32 %v2596, %v2534
          %v2598 = vadd.f32 %v2597, %v2535
          %v2599 = vadd.f32 %v2598, %v2536
          %v2600 = vadd.f32 %v2599, %v2537
          %v2601 = vadd.f32 %v2600, %v2538
          %v2602 = vadd.f32 %v2601, %v2539
          %v2603 = vadd.f32 %v2602, %v2540
          %v2604 = vadd.f32 %v2603, %v2541
          %v2605 = vadd.f32 %v2604, %v2542
          %v2606 = vadd.f32 %v2605, %v2543
          %v2607 = vadd.f32 %v2606, %v2544
          %v2608 = vadd.f32 %v2607, %v2545
          %v2609 = vadd.f32 %v2608, %v2546
          %v2610 = vadd.f32 %v2609, %v2547
          %v2611 = vadd.f32 %v2610, %v2548
          %v2612 = vadd.f32 %v2611, %v2549
          %v2613 = vadd.f32 %v2612, %v2550
          %v2614 = vadd.f32 %v2613, %v2551
          %v2615 = vadd.f32 %v2614, %v2552
          %v2616 = vadd.f32 %v2615, %v2553
          %v2617 = vadd.f32 %v2616, %v2554
          %v2618 = vadd.f32 %v2617, %v2555
          %v2619 = vadd.f32 %v2618, %v2556
          %v2620 = vadd.f32 %v2619, %v2557
          %v2621 = vadd.f32 %v2620, %v2558
          %v2622 = vadd.f32 %v2621, %v2559
          %v2623 = vadd.f32 %v2622, %v2560
          %v2624 = vadd.f32 %v2623, %v2561
          %v2625 = vadd.f32 %v2624, %v2562
          %v2626 = vadd.f32 %v2625, %v2563
          %v2627 = vadd.f32 %v2626, %v2564
          %v2628 = vadd.f32 %v2627, %v2565
          %v2629 = vadd.f32 %v2628, %v2566
          %v2630 = vadd.f32 %v2629, %v2567
          %v2631 = vadd.f32 %v2630, %v2568
          %v2632 = vadd.f32 %v2631, %v2569
          %v2633 = vadd.f32 %v2632, %v2570
          %v2634 = vadd.f32 %v2633, %v2571
          %v2635 = vadd.f32 %v2634, %v2572
          %v2636 = vadd.f32 %v2635, %v2573
          %v2637 = vadd.f32 %v2636, %v2574
          %v2638 = vadd.f32 %v2637, %v2575
          %v2639 = vadd.f32 %v2638, %v2576
          %v2640 = vadd.f32 %v2639, %v2577
          %v2641 = vadd.f32 %v2640, %v2578
          %v2642 = vadd.f32 %v2641, %v2579
          %v2643 = vadd.f32 %v2642, %v2580
          %v2644 = vadd.f32 %v2643, %v2581
          %v2645 = vadd.f32 %v2644, %v2582
          %v2646 = vadd.f32 %v2645, %v2583
          %v2647 = vadd.f32 %v2646, %v2584
          %v2648 = vadd.f32 %v2647, %v2585
          %v2649 = vadd.f32 %v2648, %v2586
          %v2650 = vadd.f32 %v2649, %v2587
          %v2651 = vadd.f32 %v2650, %v2588
          %v2652 = vadd.f32 %v2651, %v2589
          %v2653 = vadd.f32 %v2652, %v2590
          %v2654 = vadd.f32 %v2653, %v2591
          %v2655 = vadd.f32 %v2654, %v2592
          %v2656 = vadd.f32 %v2655, %v2593
          %v2657 = vadd.f32 %v2656, %v2594
          %v2658 = vadd.f32 %v2657, %v2595
          %v2659 = vrot.slane %v2658, 4
          %v2660 = vadd.f32 %v2658, %v2659
          %v2661 = vrot.slane %v2660, 2
          %v2662 = vadd.f32 %v2660, %v2661
          %v2663 = vrot.slane %v2662, 1
          %v2664 = vadd.f32 %v2662, %v2663
          %v2665 = vmul.f32 %v2532, %v2532
          %v2666 = vmul.f32 %v2533, %v2533
          %v2667 = vmul.f32 %v2534, %v2534
          %v2668 = vmul.f32 %v2535, %v2535
          %v2669 = vmul.f32 %v2536, %v2536
          %v2670 = vmul.f32 %v2537, %v2537
          %v2671 = vmul.f32 %v2538, %v2538
          %v2672 = vmul.f32 %v2539, %v2539
          %v2673 = vmul.f32 %v2540, %v2540
          %v2674 = vmul.f32 %v2541, %v2541
          %v2675 = vmul.f32 %v2542, %v2542
          %v2676 = vmul.f32 %v2543, %v2543
          %v2677 = vmul.f32 %v2544, %v2544
          %v2678 = vmul.f32 %v2545, %v2545
          %v2679 = vmul.f32 %v2546, %v2546
          %v2680 = vmul.f32 %v2547, %v2547
          %v2681 = vmul.f32 %v2548, %v2548
          %v2682 = vmul.f32 %v2549, %v2549
          %v2683 = vmul.f32 %v2550, %v2550
          %v2684 = vmul.f32 %v2551, %v2551
          %v2685 = vmul.f32 %v2552, %v2552
          %v2686 = vmul.f32 %v2553, %v2553
          %v2687 = vmul.f32 %v2554, %v2554
          %v2688 = vmul.f32 %v2555, %v2555
          %v2689 = vmul.f32 %v2556, %v2556
          %v2690 = vmul.f32 %v2557, %v2557
          %v2691 = vmul.f32 %v2558, %v2558
          %v2692 = vmul.f32 %v2559, %v2559
          %v2693 = vmul.f32 %v2560, %v2560
          %v2694 = vmul.f32 %v2561, %v2561
          %v2695 = vmul.f32 %v2562, %v2562
          %v2696 = vmul.f32 %v2563, %v2563
          %v2697 = vmul.f32 %v2564, %v2564
          %v2698 = vmul.f32 %v2565, %v2565
          %v2699 = vmul.f32 %v2566, %v2566
          %v2700 = vmul.f32 %v2567, %v2567
          %v2701 = vmul.f32 %v2568, %v2568
          %v2702 = vmul.f32 %v2569, %v2569
          %v2703 = vmul.f32 %v2570, %v2570
          %v2704 = vmul.f32 %v2571, %v2571
          %v2705 = vmul.f32 %v2572, %v2572
          %v2706 = vmul.f32 %v2573, %v2573
          %v2707 = vmul.f32 %v2574, %v2574
          %v2708 = vmul.f32 %v2575, %v2575
          %v2709 = vmul.f32 %v2576, %v2576
          %v2710 = vmul.f32 %v2577, %v2577
          %v2711 = vmul.f32 %v2578, %v2578
          %v2712 = vmul.f32 %v2579, %v2579
          %v2713 = vmul.f32 %v2580, %v2580
          %v2714 = vmul.f32 %v2581, %v2581
          %v2715 = vmul.f32 %v2582, %v2582
          %v2716 = vmul.f32 %v2583, %v2583
          %v2717 = vmul.f32 %v2584, %v2584
          %v2718 = vmul.f32 %v2585, %v2585
          %v2719 = vmul.f32 %v2586, %v2586
          %v2720 = vmul.f32 %v2587, %v2587
          %v2721 = vmul.f32 %v2588, %v2588
          %v2722 = vmul.f32 %v2589, %v2589
          %v2723 = vmul.f32 %v2590, %v2590
          %v2724 = vmul.f32 %v2591, %v2591
          %v2725 = vmul.f32 %v2592, %v2592
          %v2726 = vmul.f32 %v2593, %v2593
          %v2727 = vmul.f32 %v2594, %v2594
          %v2728 = vmul.f32 %v2595, %v2595
          %v2729 = vadd.f32 %v2665, %v2666
          %v2730 = vadd.f32 %v2729, %v2667
          %v2731 = vadd.f32 %v2730, %v2668
          %v2732 = vadd.f32 %v2731, %v2669
          %v2733 = vadd.f32 %v2732, %v2670
          %v2734 = vadd.f32 %v2733, %v2671
          %v2735 = vadd.f32 %v2734, %v2672
          %v2736 = vadd.f32 %v2735, %v2673
          %v2737 = vadd.f32 %v2736, %v2674
          %v2738 = vadd.f32 %v2737, %v2675
          %v2739 = vadd.f32 %v2738, %v2676
          %v2740 = vadd.f32 %v2739, %v2677
          %v2741 = vadd.f32 %v2740, %v2678
          %v2742 = vadd.f32 %v2741, %v2679
          %v2743 = vadd.f32 %v2742, %v2680
          %v2744 = vadd.f32 %v2743, %v2681
          %v2745 = vadd.f32 %v2744, %v2682
          %v2746 = vadd.f32 %v2745, %v2683
          %v2747 = vadd.f32 %v2746, %v2684
          %v2748 = vadd.f32 %v2747, %v2685
          %v2749 = vadd.f32 %v2748, %v2686
          %v2750 = vadd.f32 %v2749, %v2687
          %v2751 = vadd.f32 %v2750, %v2688
          %v2752 = vadd.f32 %v2751, %v2689
          %v2753 = vadd.f32 %v2752, %v2690
          %v2754 = vadd.f32 %v2753, %v2691
          %v2755 = vadd.f32 %v2754, %v2692
          %v2756 = vadd.f32 %v2755, %v2693
          %v2757 = vadd.f32 %v2756, %v2694
          %v2758 = vadd.f32 %v2757, %v2695
          %v2759 = vadd.f32 %v2758, %v2696
          %v2760 = vadd.f32 %v2759, %v2697
          %v2761 = vadd.f32 %v2760, %v2698
          %v2762 = vadd.f32 %v2761, %v2699
          %v2763 = vadd.f32 %v2762, %v2700
          %v2764 = vadd.f32 %v2763, %v2701
          %v2765 = vadd.f32 %v2764, %v2702
          %v2766 = vadd.f32 %v2765, %v2703
          %v2767 = vadd.f32 %v2766, %v2704
          %v2768 = vadd.f32 %v2767, %v2705
          %v2769 = vadd.f32 %v2768, %v2706
          %v2770 = vadd.f32 %v2769, %v2707
          %v2771 = vadd.f32 %v2770, %v2708
          %v2772 = vadd.f32 %v2771, %v2709
          %v2773 = vadd.f32 %v2772, %v2710
          %v2774 = vadd.f32 %v2773, %v2711
          %v2775 = vadd.f32 %v2774, %v2712
          %v2776 = vadd.f32 %v2775, %v2713
          %v2777 = vadd.f32 %v2776, %v2714
          %v2778 = vadd.f32 %v2777, %v2715
          %v2779 = vadd.f32 %v2778, %v2716
          %v2780 = vadd.f32 %v2779, %v2717
          %v2781 = vadd.f32 %v2780, %v2718
          %v2782 = vadd.f32 %v2781, %v2719
          %v2783 = vadd.f32 %v2782, %v2720
          %v2784 = vadd.f32 %v2783, %v2721
          %v2785 = vadd.f32 %v2784, %v2722
          %v2786 = vadd.f32 %v2785, %v2723
          %v2787 = vadd.f32 %v2786, %v2724
          %v2788 = vadd.f32 %v2787, %v2725
          %v2789 = vadd.f32 %v2788, %v2726
          %v2790 = vadd.f32 %v2789, %v2727
          %v2791 = vadd.f32 %v2790, %v2728
          %v2792 = vrot.slane %v2791, 4
          %v2793 = vadd.f32 %v2791, %v2792
          %v2794 = vrot.slane %v2793, 2
          %v2795 = vadd.f32 %v2793, %v2794
          %v2796 = vrot.slane %v2795, 1
          %v2797 = vadd.f32 %v2795, %v2796
          %v2798 = vmul.f32 %v2664, 0.001953125
          %v2799 = vmul.f32 %v2797, 0.001953125
          %v2800 = vmul.f32 %v2798, %v2798
          %v2801 = vsub.f32 %v2799, %v2800
          %v2802 = vmax.f32 %v2801, 0.0
          %v2803 = vsub.f32 %v2532, %v2798
          %v2804 = vsub.f32 %v2533, %v2798
          %v2805 = vsub.f32 %v2534, %v2798
          %v2806 = vsub.f32 %v2535, %v2798
          %v2807 = vsub.f32 %v2536, %v2798
          %v2808 = vsub.f32 %v2537, %v2798
          %v2809 = vsub.f32 %v2538, %v2798
          %v2810 = vsub.f32 %v2539, %v2798
          %v2811 = vsub.f32 %v2540, %v2798
          %v2812 = vsub.f32 %v2541, %v2798
          %v2813 = vsub.f32 %v2542, %v2798
          %v2814 = vsub.f32 %v2543, %v2798
          %v2815 = vsub.f32 %v2544, %v2798
          %v2816 = vsub.f32 %v2545, %v2798
          %v2817 = vsub.f32 %v2546, %v2798
          %v2818 = vsub.f32 %v2547, %v2798
          %v2819 = vsub.f32 %v2548, %v2798
          %v2820 = vsub.f32 %v2549, %v2798
          %v2821 = vsub.f32 %v2550, %v2798
          %v2822 = vsub.f32 %v2551, %v2798
          %v2823 = vsub.f32 %v2552, %v2798
          %v2824 = vsub.f32 %v2553, %v2798
          %v2825 = vsub.f32 %v2554, %v2798
          %v2826 = vsub.f32 %v2555, %v2798
          %v2827 = vsub.f32 %v2556, %v2798
          %v2828 = vsub.f32 %v2557, %v2798
          %v2829 = vsub.f32 %v2558, %v2798
          %v2830 = vsub.f32 %v2559, %v2798
          %v2831 = vsub.f32 %v2560, %v2798
          %v2832 = vsub.f32 %v2561, %v2798
          %v2833 = vsub.f32 %v2562, %v2798
          %v2834 = vsub.f32 %v2563, %v2798
          %v2835 = vsub.f32 %v2564, %v2798
          %v2836 = vsub.f32 %v2565, %v2798
          %v2837 = vsub.f32 %v2566, %v2798
          %v2838 = vsub.f32 %v2567, %v2798
          %v2839 = vsub.f32 %v2568, %v2798
          %v2840 = vsub.f32 %v2569, %v2798
          %v2841 = vsub.f32 %v2570, %v2798
          %v2842 = vsub.f32 %v2571, %v2798
          %v2843 = vsub.f32 %v2572, %v2798
          %v2844 = vsub.f32 %v2573, %v2798
          %v2845 = vsub.f32 %v2574, %v2798
          %v2846 = vsub.f32 %v2575, %v2798
          %v2847 = vsub.f32 %v2576, %v2798
          %v2848 = vsub.f32 %v2577, %v2798
          %v2849 = vsub.f32 %v2578, %v2798
          %v2850 = vsub.f32 %v2579, %v2798
          %v2851 = vsub.f32 %v2580, %v2798
          %v2852 = vsub.f32 %v2581, %v2798
          %v2853 = vsub.f32 %v2582, %v2798
          %v2854 = vsub.f32 %v2583, %v2798
          %v2855 = vsub.f32 %v2584, %v2798
          %v2856 = vsub.f32 %v2585, %v2798
          %v2857 = vsub.f32 %v2586, %v2798
          %v2858 = vsub.f32 %v2587, %v2798
          %v2859 = vsub.f32 %v2588, %v2798
          %v2860 = vsub.f32 %v2589, %v2798
          %v2861 = vsub.f32 %v2590, %v2798
          %v2862 = vsub.f32 %v2591, %v2798
          %v2863 = vsub.f32 %v2592, %v2798
          %v2864 = vsub.f32 %v2593, %v2798
          %v2865 = vsub.f32 %v2594, %v2798
          %v2866 = vsub.f32 %v2595, %v2798
          %v2867 = vadd.f32 %v2802, 1e-05
          %v2868 = vrsqrt.pop %v2867
          %v2869 = vmul.f32 %v2868, %v2867
          %v2870 = vmul.f32 %v2869, %v2868
          %v2871 = vmul.f32 0.5, %v2870
          %v2872 = vsub.f32 1.5, %v2871
          %v2873 = vmul.f32 %v2868, %v2872
          %vm2874 = vweird.f32 %v2867
          %vm2875 = vweird.f32 %v2868
          %vm2876 = vmor %vm2874, %vm2875
          %v2877 = vsel %vm2876, %v2868, %v2873
          %v2878 = vmul.f32 %v2803, %v2877
          %v2879 = vmul.f32 %v2804, %v2877
          %v2880 = vmul.f32 %v2805, %v2877
          %v2881 = vmul.f32 %v2806, %v2877
          %v2882 = vmul.f32 %v2807, %v2877
          %v2883 = vmul.f32 %v2808, %v2877
          %v2884 = vmul.f32 %v2809, %v2877
          %v2885 = vmul.f32 %v2810, %v2877
          %v2886 = vmul.f32 %v2811, %v2877
          %v2887 = vmul.f32 %v2812, %v2877
          %v2888 = vmul.f32 %v2813, %v2877
          %v2889 = vmul.f32 %v2814, %v2877
          %v2890 = vmul.f32 %v2815, %v2877
          %v2891 = vmul.f32 %v2816, %v2877
          %v2892 = vmul.f32 %v2817, %v2877
          %v2893 = vmul.f32 %v2818, %v2877
          %v2894 = vmul.f32 %v2819, %v2877
          %v2895 = vmul.f32 %v2820, %v2877
          %v2896 = vmul.f32 %v2821, %v2877
          %v2897 = vmul.f32 %v2822, %v2877
          %v2898 = vmul.f32 %v2823, %v2877
          %v2899 = vmul.f32 %v2824, %v2877
          %v2900 = vmul.f32 %v2825, %v2877
          %v2901 = vmul.f32 %v2826, %v2877
          %v2902 = vmul.f32 %v2827, %v2877
          %v2903 = vmul.f32 %v2828, %v2877
          %v2904 = vmul.f32 %v2829, %v2877
          %v2905 = vmul.f32 %v2830, %v2877
          %v2906 = vmul.f32 %v2831, %v2877
          %v2907 = vmul.f32 %v2832, %v2877
          %v2908 = vmul.f32 %v2833, %v2877
          %v2909 = vmul.f32 %v2834, %v2877
          %v2910 = vmul.f32 %v2835, %v2877
          %v2911 = vmul.f32 %v2836, %v2877
          %v2912 = vmul.f32 %v2837, %v2877
          %v2913 = vmul.f32 %v2838, %v2877
          %v2914 = vmul.f32 %v2839, %v2877
          %v2915 = vmul.f32 %v2840, %v2877
          %v2916 = vmul.f32 %v2841, %v2877
          %v2917 = vmul.f32 %v2842, %v2877
          %v2918 = vmul.f32 %v2843, %v2877
          %v2919 = vmul.f32 %v2844, %v2877
          %v2920 = vmul.f32 %v2845, %v2877
          %v2921 = vmul.f32 %v2846, %v2877
          %v2922 = vmul.f32 %v2847, %v2877
          %v2923 = vmul.f32 %v2848, %v2877
          %v2924 = vmul.f32 %v2849, %v2877
          %v2925 = vmul.f32 %v2850, %v2877
          %v2926 = vmul.f32 %v2851, %v2877
          %v2927 = vmul.f32 %v2852, %v2877
          %v2928 = vmul.f32 %v2853, %v2877
          %v2929 = vmul.f32 %v2854, %v2877
          %v2930 = vmul.f32 %v2855, %v2877
          %v2931 = vmul.f32 %v2856, %v2877
          %v2932 = vmul.f32 %v2857, %v2877
          %v2933 = vmul.f32 %v2858, %v2877
          %v2934 = vmul.f32 %v2859, %v2877
          %v2935 = vmul.f32 %v2860, %v2877
          %v2936 = vmul.f32 %v2861, %v2877
          %v2937 = vmul.f32 %v2862, %v2877
          %v2938 = vmul.f32 %v2863, %v2877
          %v2939 = vmul.f32 %v2864, %v2877
          %v2940 = vmul.f32 %v2865, %v2877
          %v2941 = vmul.f32 %v2866, %v2877
          %v2942 = vld [vmem:[%s555] sm:$0x1]
          %v2944 = vperm.slane %v2942, 0
          %v2946 = vmul.f32 %v2878, %v2944
          %v2947 = vmul.f32 %v2879, %v2944
          %v2948 = vmul.f32 %v2880, %v2944
          %v2949 = vmul.f32 %v2881, %v2944
          %v2950 = vmul.f32 %v2882, %v2944
          %v2951 = vmul.f32 %v2883, %v2944
          %v2952 = vmul.f32 %v2884, %v2944
          %v2953 = vmul.f32 %v2885, %v2944
          %v2954 = vmul.f32 %v2886, %v2944
          %v2955 = vmul.f32 %v2887, %v2944
          %v2956 = vmul.f32 %v2888, %v2944
          %v2957 = vmul.f32 %v2889, %v2944
          %v2958 = vmul.f32 %v2890, %v2944
          %v2959 = vmul.f32 %v2891, %v2944
          %v2960 = vmul.f32 %v2892, %v2944
          %v2961 = vmul.f32 %v2893, %v2944
          %v2962 = vmul.f32 %v2894, %v2944
          %v2963 = vmul.f32 %v2895, %v2944
          %v2964 = vmul.f32 %v2896, %v2944
          %v2965 = vmul.f32 %v2897, %v2944
          %v2966 = vmul.f32 %v2898, %v2944
          %v2967 = vmul.f32 %v2899, %v2944
          %v2968 = vmul.f32 %v2900, %v2944
          %v2969 = vmul.f32 %v2901, %v2944
          %v2970 = vmul.f32 %v2902, %v2944
          %v2971 = vmul.f32 %v2903, %v2944
          %v2972 = vmul.f32 %v2904, %v2944
          %v2973 = vmul.f32 %v2905, %v2944
          %v2974 = vmul.f32 %v2906, %v2944
          %v2975 = vmul.f32 %v2907, %v2944
          %v2976 = vmul.f32 %v2908, %v2944
          %v2977 = vmul.f32 %v2909, %v2944
          %v2978 = vmul.f32 %v2910, %v2944
          %v2979 = vmul.f32 %v2911, %v2944
          %v2980 = vmul.f32 %v2912, %v2944
          %v2981 = vmul.f32 %v2913, %v2944
          %v2982 = vmul.f32 %v2914, %v2944
          %v2983 = vmul.f32 %v2915, %v2944
          %v2984 = vmul.f32 %v2916, %v2944
          %v2985 = vmul.f32 %v2917, %v2944
          %v2986 = vmul.f32 %v2918, %v2944
          %v2987 = vmul.f32 %v2919, %v2944
          %v2988 = vmul.f32 %v2920, %v2944
          %v2989 = vmul.f32 %v2921, %v2944
          %v2990 = vmul.f32 %v2922, %v2944
          %v2991 = vmul.f32 %v2923, %v2944
          %v2992 = vmul.f32 %v2924, %v2944
          %v2993 = vmul.f32 %v2925, %v2944
          %v2994 = vmul.f32 %v2926, %v2944
          %v2995 = vmul.f32 %v2927, %v2944
          %v2996 = vmul.f32 %v2928, %v2944
          %v2997 = vmul.f32 %v2929, %v2944
          %v2998 = vmul.f32 %v2930, %v2944
          %v2999 = vmul.f32 %v2931, %v2944
          %v3000 = vmul.f32 %v2932, %v2944
          %v3001 = vmul.f32 %v2933, %v2944
          %v3002 = vmul.f32 %v2934, %v2944
          %v3003 = vmul.f32 %v2935, %v2944
          %v3004 = vmul.f32 %v2936, %v2944
          %v3005 = vmul.f32 %v2937, %v2944
          %v3006 = vmul.f32 %v2938, %v2944
          %v3007 = vmul.f32 %v2939, %v2944
          %v3008 = vmul.f32 %v2940, %v2944
          %v3009 = vmul.f32 %v2941, %v2944
          %v3010 = vld [vmem:[%s558] sm:$0x1]
          %v3012 = vperm.slane %v3010, 0
          %v3014 = vadd.f32 %v2946, %v3012
          %v3015 = vadd.f32 %v2947, %v3012
          %v3016 = vadd.f32 %v2948, %v3012
          %v3017 = vadd.f32 %v2949, %v3012
          %v3018 = vadd.f32 %v2950, %v3012
          %v3019 = vadd.f32 %v2951, %v3012
          %v3020 = vadd.f32 %v2952, %v3012
          %v3021 = vadd.f32 %v2953, %v3012
          %v3022 = vadd.f32 %v2954, %v3012
          %v3023 = vadd.f32 %v2955, %v3012
          %v3024 = vadd.f32 %v2956, %v3012
          %v3025 = vadd.f32 %v2957, %v3012
          %v3026 = vadd.f32 %v2958, %v3012
          %v3027 = vadd.f32 %v2959, %v3012
          %v3028 = vadd.f32 %v2960, %v3012
          %v3029 = vadd.f32 %v2961, %v3012
          %v3030 = vadd.f32 %v2962, %v3012
          %v3031 = vadd.f32 %v2963, %v3012
          %v3032 = vadd.f32 %v2964, %v3012
          %v3033 = vadd.f32 %v2965, %v3012
          %v3034 = vadd.f32 %v2966, %v3012
          %v3035 = vadd.f32 %v2967, %v3012
          %v3036 = vadd.f32 %v2968, %v3012
          %v3037 = vadd.f32 %v2969, %v3012
          %v3038 = vadd.f32 %v2970, %v3012
          %v3039 = vadd.f32 %v2971, %v3012
          %v3040 = vadd.f32 %v2972, %v3012
          %v3041 = vadd.f32 %v2973, %v3012
          %v3042 = vadd.f32 %v2974, %v3012
          %v3043 = vadd.f32 %v2975, %v3012
          %v3044 = vadd.f32 %v2976, %v3012
          %v3045 = vadd.f32 %v2977, %v3012
          %v3046 = vadd.f32 %v2978, %v3012
          %v3047 = vadd.f32 %v2979, %v3012
          %v3048 = vadd.f32 %v2980, %v3012
          %v3049 = vadd.f32 %v2981, %v3012
          %v3050 = vadd.f32 %v2982, %v3012
          %v3051 = vadd.f32 %v2983, %v3012
          %v3052 = vadd.f32 %v2984, %v3012
          %v3053 = vadd.f32 %v2985, %v3012
          %v3054 = vadd.f32 %v2986, %v3012
          %v3055 = vadd.f32 %v2987, %v3012
          %v3056 = vadd.f32 %v2988, %v3012
          %v3057 = vadd.f32 %v2989, %v3012
          %v3058 = vadd.f32 %v2990, %v3012
          %v3059 = vadd.f32 %v2991, %v3012
          %v3060 = vadd.f32 %v2992, %v3012
          %v3061 = vadd.f32 %v2993, %v3012
          %v3062 = vadd.f32 %v2994, %v3012
          %v3063 = vadd.f32 %v2995, %v3012
          %v3064 = vadd.f32 %v2996, %v3012
          %v3065 = vadd.f32 %v2997, %v3012
          %v3066 = vadd.f32 %v2998, %v3012
          %v3067 = vadd.f32 %v2999, %v3012
          %v3068 = vadd.f32 %v3000, %v3012
          %v3069 = vadd.f32 %v3001, %v3012
          %v3070 = vadd.f32 %v3002, %v3012
          %v3071 = vadd.f32 %v3003, %v3012
          %v3072 = vadd.f32 %v3004, %v3012
          %v3073 = vadd.f32 %v3005, %v3012
          %v3074 = vadd.f32 %v3006, %v3012
          %v3075 = vadd.f32 %v3007, %v3012
          %v3076 = vadd.f32 %v3008, %v3012
          %v3077 = vadd.f32 %v3009, %v3012
          %vm3078 = vcmp.ge.f32.partialorder %v3014, 0.0
          %vm3079 = vcmp.ge.f32.partialorder %v3015, 0.0
          %vm3080 = vcmp.ge.f32.partialorder %v3016, 0.0
          %vm3081 = vcmp.ge.f32.partialorder %v3017, 0.0
          %vm3082 = vcmp.ge.f32.partialorder %v3018, 0.0
          %vm3083 = vcmp.ge.f32.partialorder %v3019, 0.0
          %vm3084 = vcmp.ge.f32.partialorder %v3020, 0.0
          %vm3085 = vcmp.ge.f32.partialorder %v3021, 0.0
          %vm3086 = vcmp.ge.f32.partialorder %v3022, 0.0
          %vm3087 = vcmp.ge.f32.partialorder %v3023, 0.0
          %vm3088 = vcmp.ge.f32.partialorder %v3024, 0.0
          %vm3089 = vcmp.ge.f32.partialorder %v3025, 0.0
          %vm3090 = vcmp.ge.f32.partialorder %v3026, 0.0
          %vm3091 = vcmp.ge.f32.partialorder %v3027, 0.0
          %vm3092 = vcmp.ge.f32.partialorder %v3028, 0.0
          %vm3093 = vcmp.ge.f32.partialorder %v3029, 0.0
          %vm3094 = vcmp.ge.f32.partialorder %v3030, 0.0
          %vm3095 = vcmp.ge.f32.partialorder %v3031, 0.0
          %vm3096 = vcmp.ge.f32.partialorder %v3032, 0.0
          %vm3097 = vcmp.ge.f32.partialorder %v3033, 0.0
          %vm3098 = vcmp.ge.f32.partialorder %v3034, 0.0
          %vm3099 = vcmp.ge.f32.partialorder %v3035, 0.0
          %vm3100 = vcmp.ge.f32.partialorder %v3036, 0.0
          %vm3101 = vcmp.ge.f32.partialorder %v3037, 0.0
          %vm3102 = vcmp.ge.f32.partialorder %v3038, 0.0
          %vm3103 = vcmp.ge.f32.partialorder %v3039, 0.0
          %vm3104 = vcmp.ge.f32.partialorder %v3040, 0.0
          %vm3105 = vcmp.ge.f32.partialorder %v3041, 0.0
          %vm3106 = vcmp.ge.f32.partialorder %v3042, 0.0
          %vm3107 = vcmp.ge.f32.partialorder %v3043, 0.0
          %vm3108 = vcmp.ge.f32.partialorder %v3044, 0.0
          %vm3109 = vcmp.ge.f32.partialorder %v3045, 0.0
          %vm3110 = vcmp.ge.f32.partialorder %v3046, 0.0
          %vm3111 = vcmp.ge.f32.partialorder %v3047, 0.0
          %vm3112 = vcmp.ge.f32.partialorder %v3048, 0.0
          %vm3113 = vcmp.ge.f32.partialorder %v3049, 0.0
          %vm3114 = vcmp.ge.f32.partialorder %v3050, 0.0
          %vm3115 = vcmp.ge.f32.partialorder %v3051, 0.0
          %vm3116 = vcmp.ge.f32.partialorder %v3052, 0.0
          %vm3117 = vcmp.ge.f32.partialorder %v3053, 0.0
          %vm3118 = vcmp.ge.f32.partialorder %v3054, 0.0
          %vm3119 = vcmp.ge.f32.partialorder %v3055, 0.0
          %vm3120 = vcmp.ge.f32.partialorder %v3056, 0.0
          %vm3121 = vcmp.ge.f32.partialorder %v3057, 0.0
          %vm3122 = vcmp.ge.f32.partialorder %v3058, 0.0
          %vm3123 = vcmp.ge.f32.partialorder %v3059, 0.0
          %vm3124 = vcmp.ge.f32.partialorder %v3060, 0.0
          %vm3125 = vcmp.ge.f32.partialorder %v3061, 0.0
          %vm3126 = vcmp.ge.f32.partialorder %v3062, 0.0
          %vm3127 = vcmp.ge.f32.partialorder %v3063, 0.0
          %vm3128 = vcmp.ge.f32.partialorder %v3064, 0.0
          %vm3129 = vcmp.ge.f32.partialorder %v3065, 0.0
          %vm3130 = vcmp.ge.f32.partialorder %v3066, 0.0
          %vm3131 = vcmp.ge.f32.partialorder %v3067, 0.0
          %vm3132 = vcmp.ge.f32.partialorder %v3068, 0.0
          %vm3133 = vcmp.ge.f32.partialorder %v3069, 0.0
          %vm3134 = vcmp.ge.f32.partialorder %v3070, 0.0
          %vm3135 = vcmp.ge.f32.partialorder %v3071, 0.0
          %vm3136 = vcmp.ge.f32.partialorder %v3072, 0.0
          %vm3137 = vcmp.ge.f32.partialorder %v3073, 0.0
          %vm3138 = vcmp.ge.f32.partialorder %v3074, 0.0
          %vm3139 = vcmp.ge.f32.partialorder %v3075, 0.0
          %vm3140 = vcmp.ge.f32.partialorder %v3076, 0.0
          %vm3141 = vcmp.ge.f32.partialorder %v3077, 0.0
          %v3142 = vmul.f32 %v3014, 0.2
          %v3143 = vmul.f32 %v3015, 0.2
          %v3144 = vmul.f32 %v3016, 0.2
          %v3145 = vmul.f32 %v3017, 0.2
          %v3146 = vmul.f32 %v3018, 0.2
          %v3147 = vmul.f32 %v3019, 0.2
          %v3148 = vmul.f32 %v3020, 0.2
          %v3149 = vmul.f32 %v3021, 0.2
          %v3150 = vmul.f32 %v3022, 0.2
          %v3151 = vmul.f32 %v3023, 0.2
          %v3152 = vmul.f32 %v3024, 0.2
          %v3153 = vmul.f32 %v3025, 0.2
          %v3154 = vmul.f32 %v3026, 0.2
          %v3155 = vmul.f32 %v3027, 0.2
          %v3156 = vmul.f32 %v3028, 0.2
          %v3157 = vmul.f32 %v3029, 0.2
          %v3158 = vmul.f32 %v3030, 0.2
          %v3159 = vmul.f32 %v3031, 0.2
          %v3160 = vmul.f32 %v3032, 0.2
          %v3161 = vmul.f32 %v3033, 0.2
          %v3162 = vmul.f32 %v3034, 0.2
          %v3163 = vmul.f32 %v3035, 0.2
          %v3164 = vmul.f32 %v3036, 0.2
          %v3165 = vmul.f32 %v3037, 0.2
          %v3166 = vmul.f32 %v3038, 0.2
          %v3167 = vmul.f32 %v3039, 0.2
          %v3168 = vmul.f32 %v3040, 0.2
          %v3169 = vmul.f32 %v3041, 0.2
          %v3170 = vmul.f32 %v3042, 0.2
          %v3171 = vmul.f32 %v3043, 0.2
          %v3172 = vmul.f32 %v3044, 0.2
          %v3173 = vmul.f32 %v3045, 0.2
          %v3174 = vmul.f32 %v3046, 0.2
          %v3175 = vmul.f32 %v3047, 0.2
          %v3176 = vmul.f32 %v3048, 0.2
          %v3177 = vmul.f32 %v3049, 0.2
          %v3178 = vmul.f32 %v3050, 0.2
          %v3179 = vmul.f32 %v3051, 0.2
          %v3180 = vmul.f32 %v3052, 0.2
          %v3181 = vmul.f32 %v3053, 0.2
          %v3182 = vmul.f32 %v3054, 0.2
          %v3183 = vmul.f32 %v3055, 0.2
          %v3184 = vmul.f32 %v3056, 0.2
          %v3185 = vmul.f32 %v3057, 0.2
          %v3186 = vmul.f32 %v3058, 0.2
          %v3187 = vmul.f32 %v3059, 0.2
          %v3188 = vmul.f32 %v3060, 0.2
          %v3189 = vmul.f32 %v3061, 0.2
          %v3190 = vmul.f32 %v3062, 0.2
          %v3191 = vmul.f32 %v3063, 0.2
          %v3192 = vmul.f32 %v3064, 0.2
          %v3193 = vmul.f32 %v3065, 0.2
          %v3194 = vmul.f32 %v3066, 0.2
          %v3195 = vmul.f32 %v3067, 0.2
          %v3196 = vmul.f32 %v3068, 0.2
          %v3197 = vmul.f32 %v3069, 0.2
          %v3198 = vmul.f32 %v3070, 0.2
          %v3199 = vmul.f32 %v3071, 0.2
          %v3200 = vmul.f32 %v3072, 0.2
          %v3201 = vmul.f32 %v3073, 0.2
          %v3202 = vmul.f32 %v3074, 0.2
          %v3203 = vmul.f32 %v3075, 0.2
          %v3204 = vmul.f32 %v3076, 0.2
          %v3205 = vmul.f32 %v3077, 0.2
          %v3206 = vsel %vm3078, %v3014, %v3142
          %v3207 = vsel %vm3079, %v3015, %v3143
          %v3208 = vsel %vm3080, %v3016, %v3144
          %v3209 = vsel %vm3081, %v3017, %v3145
          %v3210 = vsel %vm3082, %v3018, %v3146
          %v3211 = vsel %vm3083, %v3019, %v3147
          %v3212 = vsel %vm3084, %v3020, %v3148
          %v3213 = vsel %vm3085, %v3021, %v3149
          %v3214 = vsel %vm3086, %v3022, %v3150
          %v3215 = vsel %vm3087, %v3023, %v3151
          %v3216 = vsel %vm3088, %v3024, %v3152
          %v3217 = vsel %vm3089, %v3025, %v3153
          %v3218 = vsel %vm3090, %v3026, %v3154
          %v3219 = vsel %vm3091, %v3027, %v3155
          %v3220 = vsel %vm3092, %v3028, %v3156
          %v3221 = vsel %vm3093, %v3029, %v3157
          %v3222 = vsel %vm3094, %v3030, %v3158
          %v3223 = vsel %vm3095, %v3031, %v3159
          %v3224 = vsel %vm3096, %v3032, %v3160
          %v3225 = vsel %vm3097, %v3033, %v3161
          %v3226 = vsel %vm3098, %v3034, %v3162
          %v3227 = vsel %vm3099, %v3035, %v3163
          %v3228 = vsel %vm3100, %v3036, %v3164
          %v3229 = vsel %vm3101, %v3037, %v3165
          %v3230 = vsel %vm3102, %v3038, %v3166
          %v3231 = vsel %vm3103, %v3039, %v3167
          %v3232 = vsel %vm3104, %v3040, %v3168
          %v3233 = vsel %vm3105, %v3041, %v3169
          %v3234 = vsel %vm3106, %v3042, %v3170
          %v3235 = vsel %vm3107, %v3043, %v3171
          %v3236 = vsel %vm3108, %v3044, %v3172
          %v3237 = vsel %vm3109, %v3045, %v3173
          %v3238 = vsel %vm3110, %v3046, %v3174
          %v3239 = vsel %vm3111, %v3047, %v3175
          %v3240 = vsel %vm3112, %v3048, %v3176
          %v3241 = vsel %vm3113, %v3049, %v3177
          %v3242 = vsel %vm3114, %v3050, %v3178
          %v3243 = vsel %vm3115, %v3051, %v3179
          %v3244 = vsel %vm3116, %v3052, %v3180
          %v3245 = vsel %vm3117, %v3053, %v3181
          %v3246 = vsel %vm3118, %v3054, %v3182
          %v3247 = vsel %vm3119, %v3055, %v3183
          %v3248 = vsel %vm3120, %v3056, %v3184
          %v3249 = vsel %vm3121, %v3057, %v3185
          %v3250 = vsel %vm3122, %v3058, %v3186
          %v3251 = vsel %vm3123, %v3059, %v3187
          %v3252 = vsel %vm3124, %v3060, %v3188
          %v3253 = vsel %vm3125, %v3061, %v3189
          %v3254 = vsel %vm3126, %v3062, %v3190
          %v3255 = vsel %vm3127, %v3063, %v3191
          %v3256 = vsel %vm3128, %v3064, %v3192
          %v3257 = vsel %vm3129, %v3065, %v3193
          %v3258 = vsel %vm3130, %v3066, %v3194
          %v3259 = vsel %vm3131, %v3067, %v3195
          %v3260 = vsel %vm3132, %v3068, %v3196
          %v3261 = vsel %vm3133, %v3069, %v3197
          %v3262 = vsel %vm3134, %v3070, %v3198
          %v3263 = vsel %vm3135, %v3071, %v3199
          %v3264 = vsel %vm3136, %v3072, %v3200
          %v3265 = vsel %vm3137, %v3073, %v3201
          %v3266 = vsel %vm3138, %v3074, %v3202
          %v3267 = vsel %vm3139, %v3075, %v3203
          %v3268 = vsel %vm3140, %v3076, %v3204
          %v3269 = vsel %vm3141, %v3077, %v3205
          %v3270 = vpack.c.bf16 %v3206, %v3206
          %v3271 = vpack.c.bf16 %v3207, %v3207
          %v3272 = vpack.c.bf16 %v3208, %v3208
          %v3273 = vpack.c.bf16 %v3209, %v3209
          %v3274 = vpack.c.bf16 %v3210, %v3210
          %v3275 = vpack.c.bf16 %v3211, %v3211
          %v3276 = vpack.c.bf16 %v3212, %v3212
          %v3277 = vpack.c.bf16 %v3213, %v3213
          %v3278 = vpack.c.bf16 %v3214, %v3214
          %v3279 = vpack.c.bf16 %v3215, %v3215
          %v3280 = vpack.c.bf16 %v3216, %v3216
          %v3281 = vpack.c.bf16 %v3217, %v3217
          %v3282 = vpack.c.bf16 %v3218, %v3218
          %v3283 = vpack.c.bf16 %v3219, %v3219
          %v3284 = vpack.c.bf16 %v3220, %v3220
          %v3285 = vpack.c.bf16 %v3221, %v3221
          %v3286 = vpack.c.bf16 %v3222, %v3222
          %v3287 = vpack.c.bf16 %v3223, %v3223
          %v3288 = vpack.c.bf16 %v3224, %v3224
          %v3289 = vpack.c.bf16 %v3225, %v3225
          %v3290 = vpack.c.bf16 %v3226, %v3226
          %v3291 = vpack.c.bf16 %v3227, %v3227
          %v3292 = vpack.c.bf16 %v3228, %v3228
          %v3293 = vpack.c.bf16 %v3229, %v3229
          %v3294 = vpack.c.bf16 %v3230, %v3230
          %v3295 = vpack.c.bf16 %v3231, %v3231
          %v3296 = vpack.c.bf16 %v3232, %v3232
          %v3297 = vpack.c.bf16 %v3233, %v3233
          %v3298 = vpack.c.bf16 %v3234, %v3234
          %v3299 = vpack.c.bf16 %v3235, %v3235
          %v3300 = vpack.c.bf16 %v3236, %v3236
          %v3301 = vpack.c.bf16 %v3237, %v3237
          %v3302 = vpack.c.bf16 %v3238, %v3238
          %v3303 = vpack.c.bf16 %v3239, %v3239
          %v3304 = vpack.c.bf16 %v3240, %v3240
          %v3305 = vpack.c.bf16 %v3241, %v3241
          %v3306 = vpack.c.bf16 %v3242, %v3242
          %v3307 = vpack.c.bf16 %v3243, %v3243
          %v3308 = vpack.c.bf16 %v3244, %v3244
          %v3309 = vpack.c.bf16 %v3245, %v3245
          %v3310 = vpack.c.bf16 %v3246, %v3246
          %v3311 = vpack.c.bf16 %v3247, %v3247
          %v3312 = vpack.c.bf16 %v3248, %v3248
          %v3313 = vpack.c.bf16 %v3249, %v3249
          %v3314 = vpack.c.bf16 %v3250, %v3250
          %v3315 = vpack.c.bf16 %v3251, %v3251
          %v3316 = vpack.c.bf16 %v3252, %v3252
          %v3317 = vpack.c.bf16 %v3253, %v3253
          %v3318 = vpack.c.bf16 %v3254, %v3254
          %v3319 = vpack.c.bf16 %v3255, %v3255
          %v3320 = vpack.c.bf16 %v3256, %v3256
          %v3321 = vpack.c.bf16 %v3257, %v3257
          %v3322 = vpack.c.bf16 %v3258, %v3258
          %v3323 = vpack.c.bf16 %v3259, %v3259
          %v3324 = vpack.c.bf16 %v3260, %v3260
          %v3325 = vpack.c.bf16 %v3261, %v3261
          %v3326 = vpack.c.bf16 %v3262, %v3262
          %v3327 = vpack.c.bf16 %v3263, %v3263
          %v3328 = vpack.c.bf16 %v3264, %v3264
          %v3329 = vpack.c.bf16 %v3265, %v3265
          %v3330 = vpack.c.bf16 %v3266, %v3266
          %v3331 = vpack.c.bf16 %v3267, %v3267
          %v3332 = vpack.c.bf16 %v3268, %v3268
          %v3333 = vpack.c.bf16 %v3269, %v3269
          %3334 = vst [vmem:[%s566] sm:$0xf] %v3270
          %3335 = vst [vmem:[%s566 + $0x4] sm:$0xf] %v3271
          %3336 = vst [vmem:[%s566 + $0x8] sm:$0xf] %v3272
          %3337 = vst [vmem:[%s566 + $0xc] sm:$0xf] %v3273
          %3338 = vst [vmem:[%s566 + $0x10] sm:$0xf] %v3274
          %3339 = vst [vmem:[%s566 + $0x14] sm:$0xf] %v3275
          %3340 = vst [vmem:[%s566 + $0x18] sm:$0xf] %v3276
          %3341 = vst [vmem:[%s566 + $0x1c] sm:$0xf] %v3277
          %3342 = vst [vmem:[%s566 + $0x20] sm:$0xf] %v3278
          %3343 = vst [vmem:[%s566 + $0x24] sm:$0xf] %v3279
          %3344 = vst [vmem:[%s566 + $0x28] sm:$0xf] %v3280
          %3345 = vst [vmem:[%s566 + $0x2c] sm:$0xf] %v3281
          %3346 = vst [vmem:[%s566 + $0x30] sm:$0xf] %v3282
          %3347 = vst [vmem:[%s566 + $0x34] sm:$0xf] %v3283
          %3348 = vst [vmem:[%s566 + $0x38] sm:$0xf] %v3284
          %3349 = vst [vmem:[%s566 + $0x3c] sm:$0xf] %v3285
          %3350 = vst [vmem:[%s566 + $0x40] sm:$0xf] %v3286
          %3351 = vst [vmem:[%s566 + $0x44] sm:$0xf] %v3287
          %3352 = vst [vmem:[%s566 + $0x48] sm:$0xf] %v3288
          %3353 = vst [vmem:[%s566 + $0x4c] sm:$0xf] %v3289
          %3354 = vst [vmem:[%s566 + $0x50] sm:$0xf] %v3290
          %3355 = vst [vmem:[%s566 + $0x54] sm:$0xf] %v3291
          %3356 = vst [vmem:[%s566 + $0x58] sm:$0xf] %v3292
          %3357 = vst [vmem:[%s566 + $0x5c] sm:$0xf] %v3293
          %3358 = vst [vmem:[%s566 + $0x60] sm:$0xf] %v3294
          %3359 = vst [vmem:[%s566 + $0x64] sm:$0xf] %v3295
          %3360 = vst [vmem:[%s566 + $0x68] sm:$0xf] %v3296
          %3361 = vst [vmem:[%s566 + $0x6c] sm:$0xf] %v3297
          %3362 = vst [vmem:[%s566 + $0x70] sm:$0xf] %v3298
          %3363 = vst [vmem:[%s566 + $0x74] sm:$0xf] %v3299
          %3364 = vst [vmem:[%s566 + $0x78] sm:$0xf] %v3300
          %3365 = vst [vmem:[%s566 + $0x7c] sm:$0xf] %v3301
          %3366 = vst [vmem:[%s566 + $0x80] sm:$0xf] %v3302
          %3367 = vst [vmem:[%s566 + $0x84] sm:$0xf] %v3303
          %3368 = vst [vmem:[%s566 + $0x88] sm:$0xf] %v3304
          %3369 = vst [vmem:[%s566 + $0x8c] sm:$0xf] %v3305
          %3370 = vst [vmem:[%s566 + $0x90] sm:$0xf] %v3306
          %3371 = vst [vmem:[%s566 + $0x94] sm:$0xf] %v3307
          %3372 = vst [vmem:[%s566 + $0x98] sm:$0xf] %v3308
          %3373 = vst [vmem:[%s566 + $0x9c] sm:$0xf] %v3309
          %3374 = vst [vmem:[%s566 + $0xa0] sm:$0xf] %v3310
          %3375 = vst [vmem:[%s566 + $0xa4] sm:$0xf] %v3311
          %3376 = vst [vmem:[%s566 + $0xa8] sm:$0xf] %v3312
          %3377 = vst [vmem:[%s566 + $0xac] sm:$0xf] %v3313
          %3378 = vst [vmem:[%s566 + $0xb0] sm:$0xf] %v3314
          %3379 = vst [vmem:[%s566 + $0xb4] sm:$0xf] %v3315
          %3380 = vst [vmem:[%s566 + $0xb8] sm:$0xf] %v3316
          %3381 = vst [vmem:[%s566 + $0xbc] sm:$0xf] %v3317
          %3382 = vst [vmem:[%s566 + $0xc0] sm:$0xf] %v3318
          %3383 = vst [vmem:[%s566 + $0xc4] sm:$0xf] %v3319
          %3384 = vst [vmem:[%s566 + $0xc8] sm:$0xf] %v3320
          %3385 = vst [vmem:[%s566 + $0xcc] sm:$0xf] %v3321
          %3386 = vst [vmem:[%s566 + $0xd0] sm:$0xf] %v3322
          %3387 = vst [vmem:[%s566 + $0xd4] sm:$0xf] %v3323
          %3388 = vst [vmem:[%s566 + $0xd8] sm:$0xf] %v3324
          %3389 = vst [vmem:[%s566 + $0xdc] sm:$0xf] %v3325
          %3390 = vst [vmem:[%s566 + $0xe0] sm:$0xf] %v3326
          %3391 = vst [vmem:[%s566 + $0xe4] sm:$0xf] %v3327
          %3392 = vst [vmem:[%s566 + $0xe8] sm:$0xf] %v3328
          %3393 = vst [vmem:[%s566 + $0xec] sm:$0xf] %v3329
          %3394 = vst [vmem:[%s566 + $0xf0] sm:$0xf] %v3330
          %3395 = vst [vmem:[%s566 + $0xf4] sm:$0xf] %v3331
          %3396 = vst [vmem:[%s566 + $0xf8] sm:$0xf] %v3332
          %3397 = vst [vmem:[%s566 + $0xfc] sm:$0xf] %v3333
        $region67: #{discriminator_forward.7} parent=54 // pred_fallthru
          _
        %s3398 = smul.u32 64, %s20
        %p3399 = scmp.lt.s32.totalorder %s3398, 63
        %s3400 = scalar_select %p3399, %s3398, 63
        %p3401 = scmp.lt.s32.totalorder %s21, 0
        %s3402 = scalar_select %p3401, %s21, 0
        %s3403 = sadd.s32 %s3402, %s3400
        %s3404 = smul.addr %s3403, 4
        %s3405 = scalar_lea.vmem %s4, %s3404
        // Predicated region
        $region68: #{discriminator_forward.7} parent=54 // pred_check
          %p3406 = pneg %p162
        $region69: #{discriminator_forward.7} parent=54 // pred_check_branch
          %3408 = sbr.rel (%p3406) target = $region71
        $region70: #{discriminator_forward.7} parent=54 // pred_region
          %s3409 = smul.u32 64, %s20
        $region71: #{discriminator_forward.7} parent=54 // pred_fallthru
          _
        // Predicated region
        $region72: #{discriminator_forward.7} parent=54 // pred_check
          %p3410 = pneg %p162
        $region73: #{discriminator_forward.7} parent=54 // pred_check_branch
          %3412 = sbr.rel (%p3410) target = $region75
        $region74: #{discriminator_forward.7} parent=54 // pred_region
          %s3413 = smul.u32 64, %s20
          %p3414 = scmp.lt.s32.totalorder %s3413, 63
          %s3415 = scalar_select %p3414, %s3413, 63
          %p3416 = scmp.lt.s32.totalorder %s21, 0
          %s3417 = scalar_select %p3416, %s21, 0
          %s3418 = sadd.s32 %s3417, %s3415
          %s3419 = smul.addr %s3418, 4
          %s3420 = scalar_lea.vmem %s4, %s3419
        $region75: #{discriminator_forward.7} parent=54 // pred_fallthru
          _
      $region55: #{discriminator_forward.7} parent=5 // pred_fallthru
        _
      %p3421 = scmp.le.s32.totalorder 2, %s10
      // Predicated region
      $region76: #{discriminator_forward.7} parent=5 // pred_check
        %p3422 = pneg %p3421
      $region77: #{discriminator_forward.7} parent=5 // pred_check_branch
        %3424 = sbr.rel (%p3422) target = $region79
      $region78: #{discriminator_forward.7} parent=5 // pred_region
        %s3425 = ssub.s32 %s10, 2
      $region79: #{discriminator_forward.7} parent=5 // pred_fallthru
        _
    $region6: #{discriminator_forward.7} parent=1 // loop_footer
      %s14 = sadd.s32 1, %s10
    $region7: #{discriminator_forward.7} parent=1 // loop_footer_branch
      %9 = sbr.rel target = $region3
    $region8: #{discriminator_forward.7} parent=1 // loop_exit
      _

// kernel: discriminator_forward.8
$region0: #{discriminator_forward.8}
  #allocation0 [shape = 'u32[]', space=smem, size = 0x4, offset = 0x4, fixed_abs, tag = 'smem constant byte address 0x4 - core index']
  #allocation1 [shape = 'u32[72,128]{1,0:T(1,128)}', space=vmem, size = 0x9000, scoped, tag = 'internal scratch']
  #allocation2 [shape = 'f32[128,256]{1,0:T(8,128)}', space=vmem, size = 0x20000, scoped, tag = 'scratch operand']
  %s0 = inlined_call_operand.vmem [shape: bf16[128,2048], index: 0, kind: input, shape index: {}]
  %s1 = inlined_call_operand.vmem [shape: bf16[2048,256], index: 1, kind: input, shape index: {}]
  %s2 = inlined_call_operand.vmem [shape: f32[1,256], index: 2, kind: input, shape index: {}]
  %s3 = inlined_call_operand.vmem [shape: f32[1,256], index: 3, kind: input, shape index: {}]
  %s4 = inlined_call_operand.vmem [shape: bf16[128,256], index: 4, kind: output, shape index: {}]
  %s5 = sld [smem:[#allocation0]]
  $region80: #{discriminator_forward.8} parent=0
    _
  %s7 = ssub.s32 1, %s5
  %s8 = scalar_select 0, %s7, %s5
  $region1: #{discriminator_forward.8} parent=0
    #allocation3 [shape = 'u8[262144]{0}', space=vmem, size = 0x40000, scoped, tag = 'input window, operand 0']
    loop: start=0, step=1, limit=6
    $region2: #{discriminator_forward.8} parent=1 // loop_pre_header
      _
    $region3: #{discriminator_forward.8} parent=1 // loop_header
      %s10 = sphi 0, %s14
      %p11 = scmp.ge.s32.totalorder %s10, 6
      %s17 = sphi 0, %s36
      %s18 = sphi 0, %s32
      %s19 = sphi 0, %s28
      %s20 = sphi 0, %s17
      %s21 = sphi 0, %s18
      %s22 = sphi 0, %s19
      %s23 = sphi 0, %s20
      %s24 = sphi 0, %s21
      %s25 = sphi 0, %s22
      %s41 = sphi 0, %s43
      %s44 = sphi 0, %s41
      %s45 = sphi 0, %s44
      %s61 = sphi 0, %s45
      %s69 = sphi 0, %s71
      %s72 = sphi 0, %s69
      %s73 = sphi 0, %s72
      %s89 = sphi 0, %s73
      %s95 = sphi 0, %s97
      %s98 = sphi 0, %s95
      %s99 = sphi 0, %s98
      %s115 = sphi 0, %s99
      %s121 = sphi 0, %s123
      %s124 = sphi 0, %s121
      %s125 = sphi 0, %s124
      %s141 = sphi 0, %s125
      %s149 = sphi 0, %s151
      %s152 = sphi 0, %s149
      %s153 = sphi 0, %s152
      %s169 = sphi 0, %s153
    $region4: #{discriminator_forward.8} parent=1 // loop_header_branch
      %13 = sbr.rel (%p11) target = $region8
    $region5: #{discriminator_forward.8} parent=1 // loop_body
      %s15 = ssub.s32 %s10, 1
      %s16 = ssub.s32 %s10, 2
      %s26 = sadd.s32 1, %s19
      %p27 = scmp.ge.s32.totalorder %s26, 4
      %s28 = scalar_select %p27, 0, %s26
      %s29 = sadd.s32 1, %s18
      %s30 = scalar_select %p27, %s29, %s18
      %p31 = scmp.ge.s32.totalorder %s30, 1
      %s32 = scalar_select %p31, 0, %s30
      %s33 = sadd.s32 1, %s17
      %s34 = scalar_select %p31, %s33, %s17
      %p35 = scmp.ge.s32.totalorder %s34, 1
      %s36 = scalar_select %p35, 0, %s34
      %s37 = ssub.s32 %s17, %s36
      %s38 = ssub.s32 %s19, %s28
      %s39 = sor.u32 %s37, %s38
      %p40 = scmp.eq.s32.totalorder %s39, 0
      %s42 = sadd.s32 %s41, 1
      %s43 = scalar_select %p40, %s41, %s42
      %p46 = pneg %p40
      %p47 = scmp.eq.s32.totalorder %s10, 3
      %p48 = por %p46, %p47
      %p49 = scmp.ne.s32.totalorder %s41, %s44
      %p50 = scmp.eq.s32.totalorder %s10, 0
      %p51 = por %p49, %p50
      %p52 = scmp.ne.s32.totalorder %s41, %s44
      %p53 = scmp.eq.s32.totalorder %s15, 3
      %p54 = por %p52, %p53
      %p55 = scmp.ne.s32.totalorder %s44, %s45
      %p56 = scmp.eq.s32.totalorder %s15, 0
      %p57 = por %p55, %p56
      %p58 = scmp.ne.s32.totalorder %s44, %s45
      %p59 = scmp.eq.s32.totalorder %s16, 3
      %p60 = por %p58, %p59
      %p62 = scmp.ne.s32.totalorder %s45, %s61
      %p63 = scmp.eq.s32.totalorder %s16, 0
      %p64 = por %p62, %p63
      %s65 = ssub.s32 %s19, %s28
      %s66 = ssub.s32 %s18, %s32
      %s67 = sor.u32 %s65, %s66
      %p68 = scmp.eq.s32.totalorder %s67, 0
      %s70 = sadd.s32 %s69, 1
      %s71 = scalar_select %p68, %s69, %s70
      %p74 = pneg %p68
      %p75 = scmp.eq.s32.totalorder %s10, 3
      %p76 = por %p74, %p75
      %p77 = scmp.ne.s32.totalorder %s69, %s72
      %p78 = scmp.eq.s32.totalorder %s10, 0
      %p79 = por %p77, %p78
      %p80 = scmp.ne.s32.totalorder %s69, %s72
      %p81 = scmp.eq.s32.totalorder %s15, 3
      %p82 = por %p80, %p81
      %p83 = scmp.ne.s32.totalorder %s72, %s73
      %p84 = scmp.eq.s32.totalorder %s15, 0
      %p85 = por %p83, %p84
      %p86 = scmp.ne.s32.totalorder %s72, %s73
      %p87 = scmp.eq.s32.totalorder %s16, 3
      %p88 = por %p86, %p87
      %p90 = scmp.ne.s32.totalorder %s73, %s89
      %p91 = scmp.eq.s32.totalorder %s16, 0
      %p92 = por %p90, %p91
      %s93 = ssub.s32 %s18, %s32
      %p94 = scmp.eq.s32.totalorder %s93, 0
      %s96 = sadd.s32 %s95, 1
      %s97 = scalar_select %p94, %s95, %s96
      %p100 = pneg %p94
      %p101 = scmp.eq.s32.totalorder %s10, 3
      %p102 = por %p100, %p101
      %p103 = scmp.ne.s32.totalorder %s95, %s98
      %p104 = scmp.eq.s32.totalorder %s10, 0
      %p105 = por %p103, %p104
      %p106 = scmp.ne.s32.totalorder %s95, %s98
      %p107 = scmp.eq.s32.totalorder %s15, 3
      %p108 = por %p106, %p107
      %p109 = scmp.ne.s32.totalorder %s98, %s99
      %p110 = scmp.eq.s32.totalorder %s15, 0
      %p111 = por %p109, %p110
      %p112 = scmp.ne.s32.totalorder %s98, %s99
      %p113 = scmp.eq.s32.totalorder %s16, 3
      %p114 = por %p112, %p113
      %p116 = scmp.ne.s32.totalorder %s99, %s115
      %p117 = scmp.eq.s32.totalorder %s16, 0
      %p118 = por %p116, %p117
      %s119 = ssub.s32 %s18, %s32
      %p120 = scmp.eq.s32.totalorder %s119, 0
      %s122 = sadd.s32 %s121, 1
      %s123 = scalar_select %p120, %s121, %s122
      %p126 = pneg %p120
      %p127 = scmp.eq.s32.totalorder %s10, 3
      %p128 = por %p126, %p127
      %p129 = scmp.ne.s32.totalorder %s121, %s124
      %p130 = scmp.eq.s32.totalorder %s10, 0
      %p131 = por %p129, %p130
      %p132 = scmp.ne.s32.totalorder %s121, %s124
      %p133 = scmp.eq.s32.totalorder %s15, 3
      %p134 = por %p132, %p133
      %p135 = scmp.ne.s32.totalorder %s124, %s125
      %p136 = scmp.eq.s32.totalorder %s15, 0
      %p137 = por %p135, %p136
      %p138 = scmp.ne.s32.totalorder %s124, %s125
      %p139 = scmp.eq.s32.totalorder %s16, 3
      %p140 = por %p138, %p139
      %p142 = scmp.ne.s32.totalorder %s125, %s141
      %p143 = scmp.eq.s32.totalorder %s16, 0
      %p144 = por %p142, %p143
      %s145 = ssub.s32 %s17, %s36
      %s146 = ssub.s32 %s18, %s32
      %s147 = sor.u32 %s145, %s146
      %p148 = scmp.eq.s32.totalorder %s147, 0
      %s150 = sadd.s32 %s149, 1
      %s151 = scalar_select %p148, %s149, %s150
      %p154 = pneg %p148
      %p155 = scmp.eq.s32.totalorder %s10, 3
      %p156 = por %p154, %p155
      %p157 = scmp.ne.s32.totalorder %s149, %s152
      %p158 = scmp.eq.s32.totalorder %s10, 0
      %p159 = por %p157, %p158
      %p160 = scmp.ne.s32.totalorder %s149, %s152
      %p161 = scmp.eq.s32.totalorder %s15, 3
      %p162 = por %p160, %p161
      %p163 = scmp.ne.s32.totalorder %s152, %s153
      %p164 = scmp.eq.s32.totalorder %s15, 0
      %p165 = por %p163, %p164
      %p166 = scmp.ne.s32.totalorder %s152, %s153
      %p167 = scmp.eq.s32.totalorder %s16, 3
      %p168 = por %p166, %p167
      %p170 = scmp.ne.s32.totalorder %s153, %s169
      %p171 = scmp.eq.s32.totalorder %s16, 0
      %p172 = por %p170, %p171
      %p173 = scmp.le.s32.totalorder 1, %s10
      %p174 = scmp.lt.s32.totalorder %s10, 5
      %p175 = pnand %p173, %p174
      %p176 = pneg %p175
      // Predicated region
      $region9: #{discriminator_forward.8} parent=5 // pred_check
        _
      $region10: #{discriminator_forward.8} parent=5 // pred_check_branch
        %178 = sbr.rel (%p175) target = $region12
      $region11: #{discriminator_forward.8} parent=5 // pred_region
        %s179 = ssub.s32 %s10, 1
        // Predicated region
        $region13: #{discriminator_forward.8} parent=11 // pred_check
          %p180 = pneg %p111
        $region14: #{discriminator_forward.8} parent=11 // pred_check_branch
          %182 = sbr.rel (%p180) target = $region16
        $region15: #{discriminator_forward.8} parent=11 // pred_region
          %s183 = smul.u32 2, %s21
          %p184 = scmp.lt.s32.totalorder %s183, 1
          %s185 = scalar_select %p184, %s183, 1
          %s186 = scalar_lea.vmem %s2, %s185
          %s187 = smul.u32 2, %s21
        $region16: #{discriminator_forward.8} parent=11 // pred_fallthru
          _
        // Predicated region
        $region17: #{discriminator_forward.8} parent=11 // pred_check
          %p188 = pneg %p137
        $region18: #{discriminator_forward.8} parent=11 // pred_check_branch
          %190 = sbr.rel (%p188) target = $region20
        $region19: #{discriminator_forward.8} parent=11 // pred_region
          %s191 = smul.u32 2, %s21
          %p192 = scmp.lt.s32.totalorder %s191, 1
          %s193 = scalar_select %p192, %s191, 1
          %s194 = scalar_lea.vmem %s3, %s193
          %s195 = smul.u32 2, %s21
        $region20: #{discriminator_forward.8} parent=11 // pred_fallthru
          _
      $region12: #{discriminator_forward.8} parent=5 // pred_fallthru
        _
      %p196 = scmp.lt.s32.totalorder %s10, 4
      // Predicated region
      $region21: #{discriminator_forward.8} parent=5 // pred_check
        %p197 = pneg %p196
      $region22: #{discriminator_forward.8} parent=5 // pred_check_branch
        %199 = sbr.rel (%p197) target = $region24
      $region23: #{discriminator_forward.8} parent=5 // pred_region
        // Predicated region
        $region25: #{discriminator_forward.8} parent=23 // pred_check
          %p200 = pneg %p51
        $region26: #{discriminator_forward.8} parent=23 // pred_check_branch
          %202 = sbr.rel (%p200) target = $region28
        $region27: #{discriminator_forward.8} parent=23 // pred_region
          %s203 = sand.u32 %s41, 1
          %s204 = sand.u32 %s41, 1
          %s205 = smul.addr %s204, 256
          %s206 = scalar_lea.vmem [#allocation3], %s205
          %s207 = smul.u32 16, %s17
          %s208 = smul.u32 4, %s19
          %s209 = smul.addr %s207, 16
          %s210 = sadd.s32 %s208, %s209
          %s211 = smul.addr %s210, 4
          %s212 = scalar_lea.vmem %s0, %s211
          // Predicated region
          $region29: #{discriminator_forward.8} parent=27 // pred_check
            _
          $region30: #{discriminator_forward.8} parent=27 // pred_check_branch
            %214 = sbr.rel (0) target = $region32
          $region31: #{discriminator_forward.8} parent=27 // pred_region
            // Predicated region
            $region33: #{discriminator_forward.8} parent=31 // pred_check
              _
            $region34: #{discriminator_forward.8} parent=31 // pred_check_branch
              %216 = sbr.rel (0) target = $region36
            $region35: #{discriminator_forward.8} parent=31 // pred_region
              loop: start=0, step=1, limit=1
              $region37: #{discriminator_forward.8} parent=35 // loop_pre_header
                _
              $region38: #{discriminator_forward.8} parent=35 // loop_header
                %s218 = sphi 0, %s222
                %p219 = scmp.ge.s32.totalorder %s218, 1
                %s223 = sphi %s212, %s212
                %s224 = sphi %s206, %s206
              $region39: #{discriminator_forward.8} parent=35 // loop_header_branch
                %221 = sbr.rel (%p219) target = $region43
              $region40: #{discriminator_forward.8} parent=35 // loop_body
                %v225 = vld [vmem:[%s223] sm:$0xff]
                %226 = vst [vmem:[%s224] sm:$0xff] %v225
                %v227 = vld [vmem:[%s223 + $0x8] sm:$0xff]
                %228 = vst [vmem:[%s224 + $0x8] sm:$0xff] %v227
                %v229 = vld [vmem:[%s223 + $0x40] sm:$0xff]
                %230 = vst [vmem:[%s224 + $0x10] sm:$0xff] %v229
                %v231 = vld [vmem:[%s223 + $0x48] sm:$0xff]
                %232 = vst [vmem:[%s224 + $0x18] sm:$0xff] %v231
                %v233 = vld [vmem:[%s223 + $0x80] sm:$0xff]
                %234 = vst [vmem:[%s224 + $0x20] sm:$0xff] %v233
                %v235 = vld [vmem:[%s223 + $0x88] sm:$0xff]
                %236 = vst [vmem:[%s224 + $0x28] sm:$0xff] %v235
                %v237 = vld [vmem:[%s223 + $0xc0] sm:$0xff]
                %238 = vst [vmem:[%s224 + $0x30] sm:$0xff] %v237
                %v239 = vld [vmem:[%s223 + $0xc8] sm:$0xff]
                %240 = vst [vmem:[%s224 + $0x38] sm:$0xff] %v239
                %v241 = vld [vmem:[%s223 + $0x100] sm:$0xff]
                %242 = vst [vmem:[%s224 + $0x40] sm:$0xff] %v241
                %v243 = vld [vmem:[%s223 + $0x108] sm:$0xff]
                %244 = vst [vmem:[%s224 + $0x48] sm:$0xff] %v243
                %v245 = vld [vmem:[%s223 + $0x140] sm:$0xff]
                %246 = vst [vmem:[%s224 + $0x50] sm:$0xff] %v245
                %v247 = vld [vmem:[%s223 + $0x148] sm:$0xff]
                %248 = vst [vmem:[%s224 + $0x58] sm:$0xff] %v247
                %v249 = vld [vmem:[%s223 + $0x180] sm:$0xff]
                %250 = vst [vmem:[%s224 + $0x60] sm:$0xff] %v249
                %v251 = vld [vmem:[%s223 + $0x188] sm:$0xff]
                %252 = vst [vmem:[%s224 + $0x68] sm:$0xff] %v251
                %v253 = vld [vmem:[%s223 + $0x1c0] sm:$0xff]
                %254 = vst [vmem:[%s224 + $0x70] sm:$0xff] %v253
                %v255 = vld [vmem:[%s223 + $0x1c8] sm:$0xff]
                %256 = vst [vmem:[%s224 + $0x78] sm:$0xff] %v255
                %v257 = vld [vmem:[%s223 + $0x200] sm:$0xff]
                %258 = vst [vmem:[%s224 + $0x80] sm:$0xff] %v257
                %v259 = vld [vmem:[%s223 + $0x208] sm:$0xff]
                %260 = vst [vmem:[%s224 + $0x88] sm:$0xff] %v259
                %v261 = vld [vmem:[%s223 + $0x240] sm:$0xff]
                %262 = vst [vmem:[%s224 + $0x90] sm:$0xff] %v261
                %v263 = vld [vmem:[%s223 + $0x248] sm:$0xff]
                %264 = vst [vmem:[%s224 + $0x98] sm:$0xff] %v263
                %v265 = vld [vmem:[%s223 + $0x280] sm:$0xff]
                %266 = vst [vmem:[%s224 + $0xa0] sm:$0xff] %v265
                %v267 = vld [vmem:[%s223 + $0x288] sm:$0xff]
                %268 = vst [vmem:[%s224 + $0xa8] sm:$0xff] %v267
                %v269 = vld [vmem:[%s223 + $0x2c0] sm:$0xff]
                %270 = vst [vmem:[%s224 + $0xb0] sm:$0xff] %v269
                %v271 = vld [vmem:[%s223 + $0x2c8] sm:$0xff]
                %272 = vst [vmem:[%s224 + $0xb8] sm:$0xff] %v271
                %v273 = vld [vmem:[%s223 + $0x300] sm:$0xff]
                %274 = vst [vmem:[%s224 + $0xc0] sm:$0xff] %v273
                %v275 = vld [vmem:[%s223 + $0x308] sm:$0xff]
                %276 = vst [vmem:[%s224 + $0xc8] sm:$0xff] %v275
                %v277 = vld [vmem:[%s223 + $0x340] sm:$0xff]
                %278 = vst [vmem:[%s224 + $0xd0] sm:$0xff] %v277
                %v279 = vld [vmem:[%s223 + $0x348] sm:$0xff]
                %280 = vst [vmem:[%s224 + $0xd8] sm:$0xff] %v279
                %v281 = vld [vmem:[%s223 + $0x380] sm:$0xff]
                %282 = vst [vmem:[%s224 + $0xe0] sm:$0xff] %v281
                %v283 = vld [vmem:[%s223 + $0x388] sm:$0xff]
                %284 = vst [vmem:[%s224 + $0xe8] sm:$0xff] %v283
                %v285 = vld [vmem:[%s223 + $0x3c0] sm:$0xff]
                %286 = vst [vmem:[%s224 + $0xf0] sm:$0xff] %v285
                %v287 = vld [vmem:[%s223 + $0x3c8] sm:$0xff]
                %288 = vst [vmem:[%s224 + $0xf8] sm:$0xff] %v287
              $region41: #{discriminator_forward.8} parent=35 // loop_footer
                %s222 = sadd.s32 1, %s218
              $region42: #{discriminator_forward.8} parent=35 // loop_footer_branch
                %217 = sbr.rel target = $region38
              $region43: #{discriminator_forward.8} parent=35 // loop_exit
                _
            $region36: #{discriminator_forward.8} parent=31 // pred_fallthru
              _
            // Predicated region
            $region44: #{discriminator_forward.8} parent=31 // pred_check
              _
            $region45: #{discriminator_forward.8} parent=31 // pred_check_branch
              %290 = sbr.rel target = $region47
            $region46: #{discriminator_forward.8} parent=31 // pred_region
              _
            $region47: #{discriminator_forward.8} parent=31 // pred_fallthru
              _
          $region32: #{discriminator_forward.8} parent=27 // pred_fallthru
            _
          %291 = vnop
        $region28: #{discriminator_forward.8} parent=23 // pred_fallthru
          _
        // Predicated region
        $region48: #{discriminator_forward.8} parent=23 // pred_check
          %p292 = pneg %p79
        $region49: #{discriminator_forward.8} parent=23 // pred_check_branch
          %294 = sbr.rel (%p292) target = $region51
        $region50: #{discriminator_forward.8} parent=23 // pred_region
          %s295 = smul.u32 64, %s19
          %s296 = smul.u32 2, %s18
          %p297 = scmp.lt.s32.totalorder %s295, 255
          %s298 = scalar_select %p297, %s295, 255
          %p299 = scmp.lt.s32.totalorder %s296, 1
          %s300 = scalar_select %p299, %s296, 1
          %s301 = smul.addr %s298, 2
          %s302 = sadd.s32 %s300, %s301
          %s303 = smul.addr %s302, 4
          %s304 = scalar_lea.vmem %s1, %s303
          %s305 = smul.u32 64, %s19
          %s306 = smul.u32 2, %s18
        $region51: #{discriminator_forward.8} parent=23 // pred_fallthru
          _
      $region24: #{discriminator_forward.8} parent=5 // pred_fallthru
        _
      %p307 = scmp.le.s32.totalorder 1, %s10
      %p308 = scmp.lt.s32.totalorder %s10, 5
      %p309 = pnand %p307, %p308
      %p310 = pneg %p309
      // Predicated region
      $region52: #{discriminator_forward.8} parent=5 // pred_check
        _
      $region53: #{discriminator_forward.8} parent=5 // pred_check_branch
        %312 = sbr.rel (%p309) target = $region55
      $region54: #{discriminator_forward.8} parent=5 // pred_region
        %s313 = ssub.s32 %s10, 1
        %s314 = sand.u32 %s44, 1
        %s315 = sand.u32 %s44, 1
        %s316 = smul.addr %s315, 256
        %s317 = scalar_lea.vmem [#allocation3], %s316
        // Predicated region
        $region56: #{discriminator_forward.8} parent=54 // pred_check
          %p318 = pneg %p57
        $region57: #{discriminator_forward.8} parent=54 // pred_check_branch
          %320 = sbr.rel (%p318) target = $region59
        $region58: #{discriminator_forward.8} parent=54 // pred_region
          _
        $region59: #{discriminator_forward.8} parent=54 // pred_fallthru
          _
        %s321 = sand.u32 %s44, 1
        %s322 = sand.u32 %s44, 1
        %s323 = smul.addr %s322, 256
        %s324 = scalar_lea.vmem [#allocation3], %s323
        %p325 = pneg %p57
        %p326 = pneg %p54
        %s327 = smul.u32 64, %s22
        %s328 = smul.u32 2, %s21
        %p329 = scmp.lt.s32.totalorder %s327, 255
        %s330 = scalar_select %p329, %s327, 255
        %p331 = scmp.lt.s32.totalorder %s328, 1
        %s332 = scalar_select %p331, %s328, 1
        %s333 = smul.addr %s330, 2
        %s334 = sadd.s32 %s332, %s333
        %s335 = smul.addr %s334, 4
        %s336 = scalar_lea.vmem %s1, %s335
        %p337 = pneg %p85
        %p338 = pneg %p82
        %s339 = smul.u32 2, %s21
        %p340 = scmp.lt.s32.totalorder %s339, 1
        %s341 = scalar_select %p340, %s339, 1
        %s342 = scalar_lea.vmem %s2, %s341
        %p343 = pneg %p111
        %p344 = pneg %p108
        %s345 = smul.u32 2, %s21
        %p346 = scmp.lt.s32.totalorder %s345, 1
        %s347 = scalar_select %p346, %s345, 1
        %s348 = scalar_lea.vmem %s3, %s347
        %p349 = pneg %p137
        %p350 = pneg %p134
        %p351 = pneg %p165
        %p352 = pneg %p162
        %s353 = smul.u32 16, %s20
        %s354 = smul.u32 2, %s21
        %p355 = scmp.lt.s32.totalorder %s353, 15
        %s356 = scalar_select %p355, %s353, 15
        %p357 = scmp.lt.s32.totalorder %s354, 1
        %s358 = scalar_select %p357, %s354, 1
        %s359 = smul.addr %s356, 2
        %s360 = sadd.s32 %s358, %s359
        %s361 = smul.addr %s360, 4
        %s362 = scalar_lea.vmem %s4, %s361
        %s363 = smul.u32 16, %s20
        %s364 = smul.u32 4, %s22
        %s365 = smul.u32 64, %s22
        %s366 = smul.u32 2, %s21
        %p367 = scmp.lt.s32.totalorder %s365, 255
        %s368 = scalar_select %p367, %s365, 255
        %p369 = scmp.lt.s32.totalorder %s366, 1
        %s370 = scalar_select %p369, %s366, 1
        %s371 = smul.addr %s368, 2
        %s372 = sadd.s32 %s370, %s371
        %s373 = smul.addr %s372, 4
        %s374 = scalar_lea.vmem %s1, %s373
        %s375 = smul.u32 64, %s22
        %s376 = smul.u32 2, %s21
        %s377 = smul.u32 2, %s21
        %p378 = scmp.lt.s32.totalorder %s377, 1
        %s379 = scalar_select %p378, %s377, 1
        %s380 = scalar_lea.vmem %s2, %s379
        %s381 = smul.u32 2, %s21
        %s382 = smul.u32 2, %s21
        %p383 = scmp.lt.s32.totalorder %s382, 1
        %s384 = scalar_select %p383, %s382, 1
        %s385 = scalar_lea.vmem %s3, %s384
        %s386 = smul.u32 2, %s21
        %s387 = smul.u32 16, %s20
        %s388 = smul.u32 2, %s21
        %p389 = scmp.lt.s32.totalorder %s387, 15
        %s390 = scalar_select %p389, %s387, 15
        %p391 = scmp.lt.s32.totalorder %s388, 1
        %s392 = scalar_select %p391, %s388, 1
        %s393 = smul.addr %s390, 2
        %s394 = sadd.s32 %s392, %s393
        %s395 = smul.addr %s394, 4
        %s396 = scalar_lea.vmem %s4, %s395
        %s397 = smul.u32 16, %s20
        %s398 = smul.u32 2, %s21
        %p399 = scmp.eq.s32.totalorder %s22, 0
        // Predicated region
        $region60: #{discriminator_forward.8} parent=54 // pred_check
          %p400 = pneg %p399
        $region61: #{discriminator_forward.8} parent=54 // pred_check_branch
          %402 = sbr.rel (%p400) target = $region63
        $region62: #{discriminator_forward.8} parent=54 // pred_region
          %403 = vst [vmem:[#allocation2] sm:$0xff] 0.0
          %404 = vst [vmem:[#allocation2 + $0x8] sm:$0xff] 0.0
          %405 = vst [vmem:[#allocation2 + $0x10] sm:$0xff] 0.0
          %406 = vst [vmem:[#allocation2 + $0x18] sm:$0xff] 0.0
          %407 = vst [vmem:[#allocation2 + $0x20] sm:$0xff] 0.0
          %408 = vst [vmem:[#allocation2 + $0x28] sm:$0xff] 0.0
          %409 = vst [vmem:[#allocation2 + $0x30] sm:$0xff] 0.0
          %410 = vst [vmem:[#allocation2 + $0x38] sm:$0xff] 0.0
          %411 = vst [vmem:[#allocation2 + $0x40] sm:$0xff] 0.0
          %412 = vst [vmem:[#allocation2 + $0x48] sm:$0xff] 0.0
          %413 = vst [vmem:[#allocation2 + $0x50] sm:$0xff] 0.0
          %414 = vst [vmem:[#allocation2 + $0x58] sm:$0xff] 0.0
          %415 = vst [vmem:[#allocation2 + $0x60] sm:$0xff] 0.0
          %416 = vst [vmem:[#allocation2 + $0x68] sm:$0xff] 0.0
          %417 = vst [vmem:[#allocation2 + $0x70] sm:$0xff] 0.0
          %418 = vst [vmem:[#allocation2 + $0x78] sm:$0xff] 0.0
          %419 = vst [vmem:[#allocation2 + $0x80] sm:$0xff] 0.0
          %420 = vst [vmem:[#allocation2 + $0x88] sm:$0xff] 0.0
          %421 = vst [vmem:[#allocation2 + $0x90] sm:$0xff] 0.0
          %422 = vst [vmem:[#allocation2 + $0x98] sm:$0xff] 0.0
          %423 = vst [vmem:[#allocation2 + $0xa0] sm:$0xff] 0.0
          %424 = vst [vmem:[#allocation2 + $0xa8] sm:$0xff] 0.0
          %425 = vst [vmem:[#allocation2 + $0xb0] sm:$0xff] 0.0
          %426 = vst [vmem:[#allocation2 + $0xb8] sm:$0xff] 0.0
          %427 = vst [vmem:[#allocation2 + $0xc0] sm:$0xff] 0.0
          %428 = vst [vmem:[#allocation2 + $0xc8] sm:$0xff] 0.0
          %429 = vst [vmem:[#allocation2 + $0xd0] sm:$0xff] 0.0
          %430 = vst [vmem:[#allocation2 + $0xd8] sm:$0xff] 0.0
          %431 = vst [vmem:[#allocation2 + $0xe0] sm:$0xff] 0.0
          %432 = vst [vmem:[#allocation2 + $0xe8] sm:$0xff] 0.0
          %433 = vst [vmem:[#allocation2 + $0xf0] sm:$0xff] 0.0
          %434 = vst [vmem:[#allocation2 + $0xf8] sm:$0xff] 0.0
        $region63: #{discriminator_forward.8} parent=54 // pred_fallthru
          _
        %v435 = vld [vmem:[#allocation2] sm:$0xff]
        %v436 = vld [vmem:[#allocation2 + $0x8] sm:$0xff]
        %v437 = vld [vmem:[#allocation2 + $0x10] sm:$0xff]
        %v438 = vld [vmem:[#allocation2 + $0x18] sm:$0xff]
        %v439 = vld [vmem:[#allocation2 + $0x20] sm:$0xff]
        %v440 = vld [vmem:[#allocation2 + $0x28] sm:$0xff]
        %v441 = vld [vmem:[#allocation2 + $0x30] sm:$0xff]
        %v442 = vld [vmem:[#allocation2 + $0x38] sm:$0xff]
        %v443 = vld [vmem:[#allocation2 + $0x40] sm:$0xff]
        %v444 = vld [vmem:[#allocation2 + $0x48] sm:$0xff]
        %v445 = vld [vmem:[#allocation2 + $0x50] sm:$0xff]
        %v446 = vld [vmem:[#allocation2 + $0x58] sm:$0xff]
        %v447 = vld [vmem:[#allocation2 + $0x60] sm:$0xff]
        %v448 = vld [vmem:[#allocation2 + $0x68] sm:$0xff]
        %v449 = vld [vmem:[#allocation2 + $0x70] sm:$0xff]
        %v450 = vld [vmem:[#allocation2 + $0x78] sm:$0xff]
        %v451 = vld [vmem:[#allocation2 + $0x80] sm:$0xff]
        %v452 = vld [vmem:[#allocation2 + $0x88] sm:$0xff]
        %v453 = vld [vmem:[#allocation2 + $0x90] sm:$0xff]
        %v454 = vld [vmem:[#allocation2 + $0x98] sm:$0xff]
        %v455 = vld [vmem:[#allocation2 + $0xa0] sm:$0xff]
        %v456 = vld [vmem:[#allocation2 + $0xa8] sm:$0xff]
        %v457 = vld [vmem:[#allocation2 + $0xb0] sm:$0xff]
        %v458 = vld [vmem:[#allocation2 + $0xb8] sm:$0xff]
        %v459 = vld [vmem:[#allocation2 + $0xc0] sm:$0xff]
        %v460 = vld [vmem:[#allocation2 + $0xc8] sm:$0xff]
        %v461 = vld [vmem:[#allocation2 + $0xd0] sm:$0xff]
        %v462 = vld [vmem:[#allocation2 + $0xd8] sm:$0xff]
        %v463 = vld [vmem:[#allocation2 + $0xe0] sm:$0xff]
        %v464 = vld [vmem:[#allocation2 + $0xe8] sm:$0xff]
        %v465 = vld [vmem:[#allocation2 + $0xf0] sm:$0xff]
        %v466 = vld [vmem:[#allocation2 + $0xf8] sm:$0xff]
        %v467 = vld [vmem:[%s317] sm:$0xff]
        %v468 = vld [vmem:[%s317 + $0x8] sm:$0xff]
        %v469 = vld [vmem:[%s317 + $0x10] sm:$0xff]
        %v470 = vld [vmem:[%s317 + $0x18] sm:$0xff]
        %v471 = vld [vmem:[%s317 + $0x20] sm:$0xff]
        %v472 = vld [vmem:[%s317 + $0x28] sm:$0xff]
        %v473 = vld [vmem:[%s317 + $0x30] sm:$0xff]
        %v474 = vld [vmem:[%s317 + $0x38] sm:$0xff]
        %v475 = vld [vmem:[%s317 + $0x40] sm:$0xff]
        %v476 = vld [vmem:[%s317 + $0x48] sm:$0xff]
        %v477 = vld [vmem:[%s317 + $0x50] sm:$0xff]
        %v478 = vld [vmem:[%s317 + $0x58] sm:$0xff]
        %v479 = vld [vmem:[%s317 + $0x60] sm:$0xff]
        %v480 = vld [vmem:[%s317 + $0x68] sm:$0xff]
        %v481 = vld [vmem:[%s317 + $0x70] sm:$0xff]
        %v482 = vld [vmem:[%s317 + $0x78] sm:$0xff]
        %v483 = vld [vmem:[%s317 + $0x80] sm:$0xff]
        %v484 = vld [vmem:[%s317 + $0x88] sm:$0xff]
        %v485 = vld [vmem:[%s317 + $0x90] sm:$0xff]
        %v486 = vld [vmem:[%s317 + $0x98] sm:$0xff]
        %v487 = vld [vmem:[%s317 + $0xa0] sm:$0xff]
        %v488 = vld [vmem:[%s317 + $0xa8] sm:$0xff]
        %v489 = vld [vmem:[%s317 + $0xb0] sm:$0xff]
        %v490 = vld [vmem:[%s317 + $0xb8] sm:$0xff]
        %v491 = vld [vmem:[%s317 + $0xc0] sm:$0xff]
        %v492 = vld [vmem:[%s317 + $0xc8] sm:$0xff]
        %v493 = vld [vmem:[%s317 + $0xd0] sm:$0xff]
        %v494 = vld [vmem:[%s317 + $0xd8] sm:$0xff]
        %v495 = vld [vmem:[%s317 + $0xe0] sm:$0xff]
        %v496 = vld [vmem:[%s317 + $0xe8] sm:$0xff]
        %v497 = vld [vmem:[%s317 + $0xf0] sm:$0xff]
        %v498 = vld [vmem:[%s317 + $0xf8] sm:$0xff]
        %v499 = vld [vmem:[%s374] sm:$0xff]
        %v500 = vld [vmem:[%s374 + $0x8] sm:$0xff]
        %v501 = vld [vmem:[%s374 + $0x10] sm:$0xff]
        %v502 = vld [vmem:[%s374 + $0x18] sm:$0xff]
        %v503 = vld [vmem:[%s374 + $0x20] sm:$0xff]
        %v504 = vld [vmem:[%s374 + $0x28] sm:$0xff]
        %v505 = vld [vmem:[%s374 + $0x30] sm:$0xff]
        %v506 = vld [vmem:[%s374 + $0x38] sm:$0xff]
        %v507 = vld [vmem:[%s374 + $0x40] sm:$0xff]
        %v508 = vld [vmem:[%s374 + $0x48] sm:$0xff]
        %v509 = vld [vmem:[%s374 + $0x50] sm:$0xff]
        %v510 = vld [vmem:[%s374 + $0x58] sm:$0xff]
        %v511 = vld [vmem:[%s374 + $0x60] sm:$0xff]
        %v512 = vld [vmem:[%s374 + $0x68] sm:$0xff]
        %v513 = vld [vmem:[%s374 + $0x70] sm:$0xff]
        %v514 = vld [vmem:[%s374 + $0x78] sm:$0xff]
        %v515 = vld [vmem:[%s374 + $0x80] sm:$0xff]
        %v516 = vld [vmem:[%s374 + $0x88] sm:$0xff]
        %v517 = vld [vmem:[%s374 + $0x90] sm:$0xff]
        %v518 = vld [vmem:[%s374 + $0x98] sm:$0xff]
        %v519 = vld [vmem:[%s374 + $0xa0] sm:$0xff]
        %v520 = vld [vmem:[%s374 + $0xa8] sm:$0xff]
        %v521 = vld [vmem:[%s374 + $0xb0] sm:$0xff]
        %v522 = vld [vmem:[%s374 + $0xb8] sm:$0xff]
        %v523 = vld [vmem:[%s374 + $0xc0] sm:$0xff]
        %v524 = vld [vmem:[%s374 + $0xc8] sm:$0xff]
        %v525 = vld [vmem:[%s374 + $0xd0] sm:$0xff]
        %v526 = vld [vmem:[%s374 + $0xd8] sm:$0xff]
        %v527 = vld [vmem:[%s374 + $0xe0] sm:$0xff]
        %v528 = vld [vmem:[%s374 + $0xe8] sm:$0xff]
        %v529 = vld [vmem:[%s374 + $0xf0] sm:$0xff]
        %v530 = vld [vmem:[%s374 + $0xf8] sm:$0xff]
        %v531 = vld [vmem:[%s374 + $0x100] sm:$0xff]
        %v532 = vld [vmem:[%s374 + $0x108] sm:$0xff]
        %v533 = vld [vmem:[%s374 + $0x110] sm:$0xff]
        %v534 = vld [vmem:[%s374 + $0x118] sm:$0xff]
        %v535 = vld [vmem:[%s374 + $0x120] sm:$0xff]
        %v536 = vld [vmem:[%s374 + $0x128] sm:$0xff]
        %v537 = vld [vmem:[%s374 + $0x130] sm:$0xff]
        %v538 = vld [vmem:[%s374 + $0x138] sm:$0xff]
        %v539 = vld [vmem:[%s374 + $0x140] sm:$0xff]
        %v540 = vld [vmem:[%s374 + $0x148] sm:$0xff]
        %v541 = vld [vmem:[%s374 + $0x150] sm:$0xff]
        %v542 = vld [vmem:[%s374 + $0x158] sm:$0xff]
        %v543 = vld [vmem:[%s374 + $0x160] sm:$0xff]
        %v544 = vld [vmem:[%s374 + $0x168] sm:$0xff]
        %v545 = vld [vmem:[%s374 + $0x170] sm:$0xff]
        %v546 = vld [vmem:[%s374 + $0x178] sm:$0xff]
        %v547 = vld [vmem:[%s374 + $0x180] sm:$0xff]
        %v548 = vld [vmem:[%s374 + $0x188] sm:$0xff]
        %v549 = vld [vmem:[%s374 + $0x190] sm:$0xff]
        %v550 = vld [vmem:[%s374 + $0x198] sm:$0xff]
        %v551 = vld [vmem:[%s374 + $0x1a0] sm:$0xff]
        %v552 = vld [vmem:[%s374 + $0x1a8] sm:$0xff]
        %v553 = vld [vmem:[%s374 + $0x1b0] sm:$0xff]
        %v554 = vld [vmem:[%s374 + $0x1b8] sm:$0xff]
        %v555 = vld [vmem:[%s374 + $0x1c0] sm:$0xff]
        %v556 = vld [vmem:[%s374 + $0x1c8] sm:$0xff]
        %v557 = vld [vmem:[%s374 + $0x1d0] sm:$0xff]
        %v558 = vld [vmem:[%s374 + $0x1d8] sm:$0xff]
        %v559 = vld [vmem:[%s374 + $0x1e0] sm:$0xff]
        %v560 = vld [vmem:[%s374 + $0x1e8] sm:$0xff]
        %v561 = vld [vmem:[%s374 + $0x1f0] sm:$0xff]
        %v562 = vld [vmem:[%s374 + $0x1f8] sm:$0xff]
        %v595 = vunpack.c.l.b16 %v467
        %v596 = vunpack.c.h.b16 %v467
        %v597 = vunpack.c.l.b16 %v468
        %v598 = vunpack.c.h.b16 %v468
        %v599 = vunpack.c.l.b16 %v469
        %v600 = vunpack.c.h.b16 %v469
        %v601 = vunpack.c.l.b16 %v470
        %v602 = vunpack.c.h.b16 %v470
        %v603 = vunpack.c.l.b16 %v471
        %v604 = vunpack.c.h.b16 %v471
        %v605 = vunpack.c.l.b16 %v472
        %v606 = vunpack.c.h.b16 %v472
        %v607 = vunpack.c.l.b16 %v473
        %v608 = vunpack.c.h.b16 %v473
        %v609 = vunpack.c.l.b16 %v474
        %v610 = vunpack.c.h.b16 %v474
        %v611 = vunpack.c.l.b16 %v475
        %v612 = vunpack.c.h.b16 %v475
        %v613 = vunpack.c.l.b16 %v476
        %v614 = vunpack.c.h.b16 %v476
        %v615 = vunpack.c.l.b16 %v477
        %v616 = vunpack.c.h.b16 %v477
        %v617 = vunpack.c.l.b16 %v478
        %v618 = vunpack.c.h.b16 %v478
        %v619 = vunpack.c.l.b16 %v479
        %v620 = vunpack.c.h.b16 %v479
        %v621 = vunpack.c.l.b16 %v480
        %v622 = vunpack.c.h.b16 %v480
        %v623 = vunpack.c.l.b16 %v481
        %v624 = vunpack.c.h.b16 %v481
        %v625 = vunpack.c.l.b16 %v482
        %v626 = vunpack.c.h.b16 %v482
        %v627 = vunpack.c.l.b16 %v483
        %v628 = vunpack.c.h.b16 %v483
        %v629 = vunpack.c.l.b16 %v484
        %v630 = vunpack.c.h.b16 %v484
        %v631 = vunpack.c.l.b16 %v485
        %v632 = vunpack.c.h.b16 %v485
        %v633 = vunpack.c.l.b16 %v486
        %v634 = vunpack.c.h.b16 %v486
        %v635 = vunpack.c.l.b16 %v487
        %v636 = vunpack.c.h.b16 %v487
        %v637 = vunpack.c.l.b16 %v488
        %v638 = vunpack.c.h.b16 %v488
        %v639 = vunpack.c.l.b16 %v489
        %v640 = vunpack.c.h.b16 %v489
        %v641 = vunpack.c.l.b16 %v490
        %v642 = vunpack.c.h.b16 %v490
        %v643 = vunpack.c.l.b16 %v491
        %v644 = vunpack.c.h.b16 %v491
        %v645 = vunpack.c.l.b16 %v492
        %v646 = vunpack.c.h.b16 %v492
        %v647 = vunpack.c.l.b16 %v493
        %v648 = vunpack.c.h.b16 %v493
        %v649 = vunpack.c.l.b16 %v494
        %v650 = vunpack.c.h.b16 %v494
        %v651 = vunpack.c.l.b16 %v495
        %v652 = vunpack.c.h.b16 %v495
        %v653 = vunpack.c.l.b16 %v496
        %v654 = vunpack.c.h.b16 %v496
        %v655 = vunpack.c.l.b16 %v497
        %v656 = vunpack.c.h.b16 %v497
        %v657 = vunpack.c.l.b16 %v498
        %v658 = vunpack.c.h.b16 %v498
        %v659 = vpack.c.b16 %v599, %v595
        %v660 = vpack.c.b16 %v600, %v596
        %v661 = vpack.c.b16 %v601, %v597
        %v662 = vpack.c.b16 %v602, %v598
        %v663 = vpack.c.b16 %v607, %v603
        %v664 = vpack.c.b16 %v608, %v604
        %v665 = vpack.c.b16 %v609, %v605
        %v666 = vpack.c.b16 %v610, %v606
        %v667 = vpack.c.b16 %v615, %v611
        %v668 = vpack.c.b16 %v616, %v612
        %v669 = vpack.c.b16 %v617, %v613
        %v670 = vpack.c.b16 %v618, %v614
        %v671 = vpack.c.b16 %v623, %v619
        %v672 = vpack.c.b16 %v624, %v620
        %v673 = vpack.c.b16 %v625, %v621
        %v674 = vpack.c.b16 %v626, %v622
        %v675 = vpack.c.b16 %v631, %v627
        %v676 = vpack.c.b16 %v632, %v628
        %v677 = vpack.c.b16 %v633, %v629
        %v678 = vpack.c.b16 %v634, %v630
        %v679 = vpack.c.b16 %v639, %v635
        %v680 = vpack.c.b16 %v640, %v636
        %v681 = vpack.c.b16 %v641, %v637
        %v682 = vpack.c.b16 %v642, %v638
        %v683 = vpack.c.b16 %v647, %v643
        %v684 = vpack.c.b16 %v648, %v644
        %v685 = vpack.c.b16 %v649, %v645
        %v686 = vpack.c.b16 %v650, %v646
        %v687 = vpack.c.b16 %v655, %v651
        %v688 = vpack.c.b16 %v656, %v652
        %v689 = vpack.c.b16 %v657, %v653
        %v690 = vpack.c.b16 %v658, %v654
        %v787 = vunpack.c.l.b16 %v499
        %v788 = vunpack.c.h.b16 %v499
        %v789 = vunpack.c.l.b16 %v500
        %v790 = vunpack.c.h.b16 %v500
        %v791 = vunpack.c.l.b16 %v501
        %v792 = vunpack.c.h.b16 %v501
        %v793 = vunpack.c.l.b16 %v502
        %v794 = vunpack.c.h.b16 %v502
        %v795 = vunpack.c.l.b16 %v503
        %v796 = vunpack.c.h.b16 %v503
        %v797 = vunpack.c.l.b16 %v504
        %v798 = vunpack.c.h.b16 %v504
        %v799 = vunpack.c.l.b16 %v505
        %v800 = vunpack.c.h.b16 %v505
        %v801 = vunpack.c.l.b16 %v506
        %v802 = vunpack.c.h.b16 %v506
        %v803 = vunpack.c.l.b16 %v507
        %v804 = vunpack.c.h.b16 %v507
        %v805 = vunpack.c.l.b16 %v508
        %v806 = vunpack.c.h.b16 %v508
        %v807 = vunpack.c.l.b16 %v509
        %v808 = vunpack.c.h.b16 %v509
        %v809 = vunpack.c.l.b16 %v510
        %v810 = vunpack.c.h.b16 %v510
        %v811 = vunpack.c.l.b16 %v511
        %v812 = vunpack.c.h.b16 %v511
        %v813 = vunpack.c.l.b16 %v512
        %v814 = vunpack.c.h.b16 %v512
        %v815 = vunpack.c.l.b16 %v513
        %v816 = vunpack.c.h.b16 %v513
        %v817 = vunpack.c.l.b16 %v514
        %v818 = vunpack.c.h.b16 %v514
        %v819 = vunpack.c.l.b16 %v515
        %v820 = vunpack.c.h.b16 %v515
        %v821 = vunpack.c.l.b16 %v516
        %v822 = vunpack.c.h.b16 %v516
        %v823 = vunpack.c.l.b16 %v517
        %v824 = vunpack.c.h.b16 %v517
        %v825 = vunpack.c.l.b16 %v518
        %v826 = vunpack.c.h.b16 %v518
        %v827 = vunpack.c.l.b16 %v519
        %v828 = vunpack.c.h.b16 %v519
        %v829 = vunpack.c.l.b16 %v520
        %v830 = vunpack.c.h.b16 %v520
        %v831 = vunpack.c.l.b16 %v521
        %v832 = vunpack.c.h.b16 %v521
        %v833 = vunpack.c.l.b16 %v522
        %v834 = vunpack.c.h.b16 %v522
        %v835 = vunpack.c.l.b16 %v523
        %v836 = vunpack.c.h.b16 %v523
        %v837 = vunpack.c.l.b16 %v524
        %v838 = vunpack.c.h.b16 %v524
        %v839 = vunpack.c.l.b16 %v525
        %v840 = vunpack.c.h.b16 %v525
        %v841 = vunpack.c.l.b16 %v526
        %v842 = vunpack.c.h.b16 %v526
        %v843 = vunpack.c.l.b16 %v527
        %v844 = vunpack.c.h.b16 %v527
        %v845 = vunpack.c.l.b16 %v528
        %v846 = vunpack.c.h.b16 %v528
        %v847 = vunpack.c.l.b16 %v529
        %v848 = vunpack.c.h.b16 %v529
        %v849 = vunpack.c.l.b16 %v530
        %v850 = vunpack.c.h.b16 %v530
        %v851 = vunpack.c.l.b16 %v531
        %v852 = vunpack.c.h.b16 %v531
        %v853 = vunpack.c.l.b16 %v532
        %v854 = vunpack.c.h.b16 %v532
        %v855 = vunpack.c.l.b16 %v533
        %v856 = vunpack.c.h.b16 %v533
        %v857 = vunpack.c.l.b16 %v534
        %v858 = vunpack.c.h.b16 %v534
        %v859 = vunpack.c.l.b16 %v535
        %v860 = vunpack.c.h.b16 %v535
        %v861 = vunpack.c.l.b16 %v536
        %v862 = vunpack.c.h.b16 %v536
        %v863 = vunpack.c.l.b16 %v537
        %v864 = vunpack.c.h.b16 %v537
        %v865 = vunpack.c.l.b16 %v538
        %v866 = vunpack.c.h.b16 %v538
        %v867 = vunpack.c.l.b16 %v539
        %v868 = vunpack.c.h.b16 %v539
        %v869 = vunpack.c.l.b16 %v540
        %v870 = vunpack.c.h.b16 %v540
        %v871 = vunpack.c.l.b16 %v541
        %v872 = vunpack.c.h.b16 %v541
        %v873 = vunpack.c.l.b16 %v542
        %v874 = vunpack.c.h.b16 %v542
        %v875 = vunpack.c.l.b16 %v543
        %v876 = vunpack.c.h.b16 %v543
        %v877 = vunpack.c.l.b16 %v544
        %v878 = vunpack.c.h.b16 %v544
        %v879 = vunpack.c.l.b16 %v545
        %v880 = vunpack.c.h.b16 %v545
        %v881 = vunpack.c.l.b16 %v546
        %v882 = vunpack.c.h.b16 %v546
        %v883 = vunpack.c.l.b16 %v547
        %v884 = vunpack.c.h.b16 %v547
        %v885 = vunpack.c.l.b16 %v548
        %v886 = vunpack.c.h.b16 %v548
        %v887 = vunpack.c.l.b16 %v549
        %v888 = vunpack.c.h.b16 %v549
        %v889 = vunpack.c.l.b16 %v550
        %v890 = vunpack.c.h.b16 %v550
        %v891 = vunpack.c.l.b16 %v551
        %v892 = vunpack.c.h.b16 %v551
        %v893 = vunpack.c.l.b16 %v552
        %v894 = vunpack.c.h.b16 %v552
        %v895 = vunpack.c.l.b16 %v553
        %v896 = vunpack.c.h.b16 %v553
        %v897 = vunpack.c.l.b16 %v554
        %v898 = vunpack.c.h.b16 %v554
        %v899 = vunpack.c.l.b16 %v555
        %v900 = vunpack.c.h.b16 %v555
        %v901 = vunpack.c.l.b16 %v556
        %v902 = vunpack.c.h.b16 %v556
        %v903 = vunpack.c.l.b16 %v557
        %v904 = vunpack.c.h.b16 %v557
        %v905 = vunpack.c.l.b16 %v558
        %v906 = vunpack.c.h.b16 %v558
        %v907 = vunpack.c.l.b16 %v559
        %v908 = vunpack.c.h.b16 %v559
        %v909 = vunpack.c.l.b16 %v560
        %v910 = vunpack.c.h.b16 %v560
        %v911 = vunpack.c.l.b16 %v561
        %v912 = vunpack.c.h.b16 %v561
        %v913 = vunpack.c.l.b16 %v562
        %v914 = vunpack.c.h.b16 %v562
        %v915 = vpack.c.b16 %v789, %v787
        %v916 = vpack.c.b16 %v790, %v788
        %v917 = vpack.c.b16 %v793, %v791
        %v918 = vpack.c.b16 %v794, %v792
        %v919 = vpack.c.b16 %v797, %v795
        %v920 = vpack.c.b16 %v798, %v796
        %v921 = vpack.c.b16 %v801, %v799
        %v922 = vpack.c.b16 %v802, %v800
        %v923 = vpack.c.b16 %v805, %v803
        %v924 = vpack.c.b16 %v806, %v804
        %v925 = vpack.c.b16 %v809, %v807
        %v926 = vpack.c.b16 %v810, %v808
        %v927 = vpack.c.b16 %v813, %v811
        %v928 = vpack.c.b16 %v814, %v812
        %v929 = vpack.c.b16 %v817, %v815
        %v930 = vpack.c.b16 %v818, %v816
        %v931 = vpack.c.b16 %v821, %v819
        %v932 = vpack.c.b16 %v822, %v820
        %v933 = vpack.c.b16 %v825, %v823
        %v934 = vpack.c.b16 %v826, %v824
        %v935 = vpack.c.b16 %v829, %v827
        %v936 = vpack.c.b16 %v830, %v828
        %v937 = vpack.c.b16 %v833, %v831
        %v938 = vpack.c.b16 %v834, %v832
        %v939 = vpack.c.b16 %v837, %v835
        %v940 = vpack.c.b16 %v838, %v836
        %v941 = vpack.c.b16 %v841, %v839
        %v942 = vpack.c.b16 %v842, %v840
        %v943 = vpack.c.b16 %v845, %v843
        %v944 = vpack.c.b16 %v846, %v844
        %v945 = vpack.c.b16 %v849, %v847
        %v946 = vpack.c.b16 %v850, %v848
        %v947 = vpack.c.b16 %v853, %v851
        %v948 = vpack.c.b16 %v854, %v852
        %v949 = vpack.c.b16 %v857, %v855
        %v950 = vpack.c.b16 %v858, %v856
        %v951 = vpack.c.b16 %v861, %v859
        %v952 = vpack.c.b16 %v862, %v860
        %v953 = vpack.c.b16 %v865, %v863
        %v954 = vpack.c.b16 %v866, %v864
        %v955 = vpack.c.b16 %v869, %v867
        %v956 = vpack.c.b16 %v870, %v868
        %v957 = vpack.c.b16 %v873, %v871
        %v958 = vpack.c.b16 %v874, %v872
        %v959 = vpack.c.b16 %v877, %v875
        %v960 = vpack.c.b16 %v878, %v876
        %v961 = vpack.c.b16 %v881, %v879
        %v962 = vpack.c.b16 %v882, %v880
        %v963 = vpack.c.b16 %v885, %v883
        %v964 = vpack.c.b16 %v886, %v884
        %v965 = vpack.c.b16 %v889, %v887
        %v966 = vpack.c.b16 %v890, %v888
        %v967 = vpack.c.b16 %v893, %v891
        %v968 = vpack.c.b16 %v894, %v892
        %v969 = vpack.c.b16 %v897, %v895
        %v970 = vpack.c.b16 %v898, %v896
        %v971 = vpack.c.b16 %v901, %v899
        %v972 = vpack.c.b16 %v902, %v900
        %v973 = vpack.c.b16 %v905, %v903
        %v974 = vpack.c.b16 %v906, %v904
        %v975 = vpack.c.b16 %v909, %v907
        %v976 = vpack.c.b16 %v910, %v908
        %v977 = vpack.c.b16 %v913, %v911
        %v978 = vpack.c.b16 %v914, %v912
        %1043 = vmatpush.bf16.msra.mxu0 %v929
        %1044 = vmatpush.bf16.msra.mxu0 %v927
        %1045 = vmatpush.bf16.msra.mxu0 %v925
        %1046 = vmatpush.bf16.msra.mxu0 %v923
        %1047 = vmatpush.bf16.msra.mxu0 %v921
        %1048 = vmatpush.bf16.msra.mxu0 %v919
        %1049 = vmatpush.bf16.msra.mxu0 %v917
        %1050 = vmatpush.bf16.msra.mxu0 %v915
        %1051 = vmatmul.bf16.gmra.mxu0 %v659
        %v1052 = vpop.f32.mrf.mxu0
        %v1053 = vadd.f32 0.0, %v1052
        %v1054 = vpop.f32.mrf.mxu0
        %v1055 = vadd.f32 0.0, %v1054
        %1056 = vmatmul.bf16.gmra.mxu0 %v663
        %v1057 = vpop.f32.mrf.mxu0
        %v1058 = vadd.f32 0.0, %v1057
        %v1059 = vpop.f32.mrf.mxu0
        %v1060 = vadd.f32 0.0, %v1059
        %1061 = vmatmul.bf16.gmra.mxu0 %v667
        %v1062 = vpop.f32.mrf.mxu0
        %v1063 = vadd.f32 0.0, %v1062
        %v1064 = vpop.f32.mrf.mxu0
        %v1065 = vadd.f32 0.0, %v1064
        %1066 = vmatmul.bf16.gmra.mxu0 %v671
        %v1067 = vpop.f32.mrf.mxu0
        %v1068 = vadd.f32 0.0, %v1067
        %v1069 = vpop.f32.mrf.mxu0
        %v1070 = vadd.f32 0.0, %v1069
        %1071 = vmatmul.bf16.gmra.mxu0 %v675
        %v1072 = vpop.f32.mrf.mxu0
        %v1073 = vadd.f32 0.0, %v1072
        %v1074 = vpop.f32.mrf.mxu0
        %v1075 = vadd.f32 0.0, %v1074
        %1076 = vmatmul.bf16.gmra.mxu0 %v679
        %v1077 = vpop.f32.mrf.mxu0
        %v1078 = vadd.f32 0.0, %v1077
        %v1079 = vpop.f32.mrf.mxu0
        %v1080 = vadd.f32 0.0, %v1079
        %1081 = vmatmul.bf16.gmra.mxu0 %v683
        %v1082 = vpop.f32.mrf.mxu0
        %v1083 = vadd.f32 0.0, %v1082
        %v1084 = vpop.f32.mrf.mxu0
        %v1085 = vadd.f32 0.0, %v1084
        %1086 = vmatmul.bf16.gmra.mxu0 %v687
        %v1087 = vpop.f32.mrf.mxu0
        %v1088 = vadd.f32 0.0, %v1087
        %v1089 = vpop.f32.mrf.mxu0
        %v1090 = vadd.f32 0.0, %v1089
        %1091 = vdwg.mxu0
        %1092 = vmatpush.bf16.msra.mxu0 %v945
        %1093 = vmatpush.bf16.msra.mxu0 %v943
        %1094 = vmatpush.bf16.msra.mxu0 %v941
        %1095 = vmatpush.bf16.msra.mxu0 %v939
        %1096 = vmatpush.bf16.msra.mxu0 %v937
        %1097 = vmatpush.bf16.msra.mxu0 %v935
        %1098 = vmatpush.bf16.msra.mxu0 %v933
        %1099 = vmatpush.bf16.msra.mxu0 %v931
        %1100 = vmatmul.bf16.gmra.mxu0 %v660
        %v1101 = vpop.f32.mrf.mxu0
        %v1102 = vadd.f32 %v1053, %v1101
        %v1103 = vpop.f32.mrf.mxu0
        %v1104 = vadd.f32 %v1055, %v1103
        %1105 = vmatmul.bf16.gmra.mxu0 %v664
        %v1106 = vpop.f32.mrf.mxu0
        %v1107 = vadd.f32 %v1058, %v1106
        %v1108 = vpop.f32.mrf.mxu0
        %v1109 = vadd.f32 %v1060, %v1108
        %1110 = vmatmul.bf16.gmra.mxu0 %v668
        %v1111 = vpop.f32.mrf.mxu0
        %v1112 = vadd.f32 %v1063, %v1111
        %v1113 = vpop.f32.mrf.mxu0
        %v1114 = vadd.f32 %v1065, %v1113
        %1115 = vmatmul.bf16.gmra.mxu0 %v672
        %v1116 = vpop.f32.mrf.mxu0
        %v1117 = vadd.f32 %v1068, %v1116
        %v1118 = vpop.f32.mrf.mxu0
        %v1119 = vadd.f32 %v1070, %v1118
        %1120 = vmatmul.bf16.gmra.mxu0 %v676
        %v1121 = vpop.f32.mrf.mxu0
        %v1122 = vadd.f32 %v1073, %v1121
        %v1123 = vpop.f32.mrf.mxu0
        %v1124 = vadd.f32 %v1075, %v1123
        %1125 = vmatmul.bf16.gmra.mxu0 %v680
        %v1126 = vpop.f32.mrf.mxu0
        %v1127 = vadd.f32 %v1078, %v1126
        %v1128 = vpop.f32.mrf.mxu0
        %v1129 = vadd.f32 %v1080, %v1128
        %1130 = vmatmul.bf16.gmra.mxu0 %v684
        %v1131 = vpop.f32.mrf.mxu0
        %v1132 = vadd.f32 %v1083, %v1131
        %v1133 = vpop.f32.mrf.mxu0
        %v1134 = vadd.f32 %v1085, %v1133
        %1135 = vmatmul.bf16.gmra.mxu0 %v688
        %v1136 = vpop.f32.mrf.mxu0
        %v1137 = vadd.f32 %v1088, %v1136
        %v1138 = vpop.f32.mrf.mxu0
        %v1139 = vadd.f32 %v1090, %v1138
        %1140 = vdwg.mxu0
        %1141 = vmatpush.bf16.msra.mxu0 %v961
        %1142 = vmatpush.bf16.msra.mxu0 %v959
        %1143 = vmatpush.bf16.msra.mxu0 %v957
        %1144 = vmatpush.bf16.msra.mxu0 %v955
        %1145 = vmatpush.bf16.msra.mxu0 %v953
        %1146 = vmatpush.bf16.msra.mxu0 %v951
        %1147 = vmatpush.bf16.msra.mxu0 %v949
        %1148 = vmatpush.bf16.msra.mxu0 %v947
        %1149 = vmatmul.bf16.gmra.mxu0 %v661
        %v1150 = vpop.f32.mrf.mxu0
        %v1151 = vadd.f32 %v1102, %v1150
        %v1152 = vpop.f32.mrf.mxu0
        %v1153 = vadd.f32 %v1104, %v1152
        %1154 = vmatmul.bf16.gmra.mxu0 %v665
        %v1155 = vpop.f32.mrf.mxu0
        %v1156 = vadd.f32 %v1107, %v1155
        %v1157 = vpop.f32.mrf.mxu0
        %v1158 = vadd.f32 %v1109, %v1157
        %1159 = vmatmul.bf16.gmra.mxu0 %v669
        %v1160 = vpop.f32.mrf.mxu0
        %v1161 = vadd.f32 %v1112, %v1160
        %v1162 = vpop.f32.mrf.mxu0
        %v1163 = vadd.f32 %v1114, %v1162
        %1164 = vmatmul.bf16.gmra.mxu0 %v673
        %v1165 = vpop.f32.mrf.mxu0
        %v1166 = vadd.f32 %v1117, %v1165
        %v1167 = vpop.f32.mrf.mxu0
        %v1168 = vadd.f32 %v1119, %v1167
        %1169 = vmatmul.bf16.gmra.mxu0 %v677
        %v1170 = vpop.f32.mrf.mxu0
        %v1171 = vadd.f32 %v1122, %v1170
        %v1172 = vpop.f32.mrf.mxu0
        %v1173 = vadd.f32 %v1124, %v1172
        %1174 = vmatmul.bf16.gmra.mxu0 %v681
        %v1175 = vpop.f32.mrf.mxu0
        %v1176 = vadd.f32 %v1127, %v1175
        %v1177 = vpop.f32.mrf.mxu0
        %v1178 = vadd.f32 %v1129, %v1177
        %1179 = vmatmul.bf16.gmra.mxu0 %v685
        %v1180 = vpop.f32.mrf.mxu0
        %v1181 = vadd.f32 %v1132, %v1180
        %v1182 = vpop.f32.mrf.mxu0
        %v1183 = vadd.f32 %v1134, %v1182
        %1184 = vmatmul.bf16.gmra.mxu0 %v689
        %v1185 = vpop.f32.mrf.mxu0
        %v1186 = vadd.f32 %v1137, %v1185
        %v1187 = vpop.f32.mrf.mxu0
        %v1188 = vadd.f32 %v1139, %v1187
        %1189 = vdwg.mxu0
        %1190 = vmatpush.bf16.msra.mxu0 %v977
        %1191 = vmatpush.bf16.msra.mxu0 %v975
        %1192 = vmatpush.bf16.msra.mxu0 %v973
        %1193 = vmatpush.bf16.msra.mxu0 %v971
        %1194 = vmatpush.bf16.msra.mxu0 %v969
        %1195 = vmatpush.bf16.msra.mxu0 %v967
        %1196 = vmatpush.bf16.msra.mxu0 %v965
        %1197 = vmatpush.bf16.msra.mxu0 %v963
        %1198 = vmatmul.bf16.gmra.mxu0 %v662
        %v1199 = vpop.f32.mrf.mxu0
        %v1200 = vadd.f32 %v1151, %v1199
        %v1201 = vpop.f32.mrf.mxu0
        %v1202 = vadd.f32 %v1153, %v1201
        %1203 = vmatmul.bf16.gmra.mxu0 %v666
        %v1204 = vpop.f32.mrf.mxu0
        %v1205 = vadd.f32 %v1156, %v1204
        %v1206 = vpop.f32.mrf.mxu0
        %v1207 = vadd.f32 %v1158, %v1206
        %1208 = vmatmul.bf16.gmra.mxu0 %v670
        %v1209 = vpop.f32.mrf.mxu0
        %v1210 = vadd.f32 %v1161, %v1209
        %v1211 = vpop.f32.mrf.mxu0
        %v1212 = vadd.f32 %v1163, %v1211
        %1213 = vmatmul.bf16.gmra.mxu0 %v674
        %v1214 = vpop.f32.mrf.mxu0
        %v1215 = vadd.f32 %v1166, %v1214
        %v1216 = vpop.f32.mrf.mxu0
        %v1217 = vadd.f32 %v1168, %v1216
        %1218 = vmatmul.bf16.gmra.mxu0 %v678
        %v1219 = vpop.f32.mrf.mxu0
        %v1220 = vadd.f32 %v1171, %v1219
        %v1221 = vpop.f32.mrf.mxu0
        %v1222 = vadd.f32 %v1173, %v1221
        %1223 = vmatmul.bf16.gmra.mxu0 %v682
        %v1224 = vpop.f32.mrf.mxu0
        %v1225 = vadd.f32 %v1176, %v1224
        %v1226 = vpop.f32.mrf.mxu0
        %v1227 = vadd.f32 %v1178, %v1226
        %1228 = vmatmul.bf16.gmra.mxu0 %v686
        %v1229 = vpop.f32.mrf.mxu0
        %v1230 = vadd.f32 %v1181, %v1229
        %v1231 = vpop.f32.mrf.mxu0
        %v1232 = vadd.f32 %v1183, %v1231
        %1233 = vmatmul.bf16.gmra.mxu0 %v690
        %v1234 = vpop.f32.mrf.mxu0
        %v1235 = vadd.f32 %v1186, %v1234
        %v1236 = vpop.f32.mrf.mxu0
        %v1237 = vadd.f32 %v1188, %v1236
        %1238 = vdwg.mxu0
        %1239 = vmatpush.bf16.msra.mxu0 %v930
        %1240 = vmatpush.bf16.msra.mxu0 %v928
        %1241 = vmatpush.bf16.msra.mxu0 %v926
        %1242 = vmatpush.bf16.msra.mxu0 %v924
        %1243 = vmatpush.bf16.msra.mxu0 %v922
        %1244 = vmatpush.bf16.msra.mxu0 %v920
        %1245 = vmatpush.bf16.msra.mxu0 %v918
        %1246 = vmatpush.bf16.msra.mxu0 %v916
        %1247 = vmatmul.bf16.gmra.mxu0 %v659
        %v1248 = vpop.f32.mrf.mxu0
        %v1249 = vadd.f32 0.0, %v1248
        %v1250 = vpop.f32.mrf.mxu0
        %v1251 = vadd.f32 0.0, %v1250
        %1252 = vmatmul.bf16.gmra.mxu0 %v663
        %v1253 = vpop.f32.mrf.mxu0
        %v1254 = vadd.f32 0.0, %v1253
        %v1255 = vpop.f32.mrf.mxu0
        %v1256 = vadd.f32 0.0, %v1255
        %1257 = vmatmul.bf16.gmra.mxu0 %v667
        %v1258 = vpop.f32.mrf.mxu0
        %v1259 = vadd.f32 0.0, %v1258
        %v1260 = vpop.f32.mrf.mxu0
        %v1261 = vadd.f32 0.0, %v1260
        %1262 = vmatmul.bf16.gmra.mxu0 %v671
        %v1263 = vpop.f32.mrf.mxu0
        %v1264 = vadd.f32 0.0, %v1263
        %v1265 = vpop.f32.mrf.mxu0
        %v1266 = vadd.f32 0.0, %v1265
        %1267 = vmatmul.bf16.gmra.mxu0 %v675
        %v1268 = vpop.f32.mrf.mxu0
        %v1269 = vadd.f32 0.0, %v1268
        %v1270 = vpop.f32.mrf.mxu0
        %v1271 = vadd.f32 0.0, %v1270
        %1272 = vmatmul.bf16.gmra.mxu0 %v679
        %v1273 = vpop.f32.mrf.mxu0
        %v1274 = vadd.f32 0.0, %v1273
        %v1275 = vpop.f32.mrf.mxu0
        %v1276 = vadd.f32 0.0, %v1275
        %1277 = vmatmul.bf16.gmra.mxu0 %v683
        %v1278 = vpop.f32.mrf.mxu0
        %v1279 = vadd.f32 0.0, %v1278
        %v1280 = vpop.f32.mrf.mxu0
        %v1281 = vadd.f32 0.0, %v1280
        %1282 = vmatmul.bf16.gmra.mxu0 %v687
        %v1283 = vpop.f32.mrf.mxu0
        %v1284 = vadd.f32 0.0, %v1283
        %v1285 = vpop.f32.mrf.mxu0
        %v1286 = vadd.f32 0.0, %v1285
        %1287 = vdwg.mxu0
        %1288 = vmatpush.bf16.msra.mxu0 %v946
        %1289 = vmatpush.bf16.msra.mxu0 %v944
        %1290 = vmatpush.bf16.msra.mxu0 %v942
        %1291 = vmatpush.bf16.msra.mxu0 %v940
        %1292 = vmatpush.bf16.msra.mxu0 %v938
        %1293 = vmatpush.bf16.msra.mxu0 %v936
        %1294 = vmatpush.bf16.msra.mxu0 %v934
        %1295 = vmatpush.bf16.msra.mxu0 %v932
        %1296 = vmatmul.bf16.gmra.mxu0 %v660
        %v1297 = vpop.f32.mrf.mxu0
        %v1298 = vadd.f32 %v1249, %v1297
        %v1299 = vpop.f32.mrf.mxu0
        %v1300 = vadd.f32 %v1251, %v1299
        %1301 = vmatmul.bf16.gmra.mxu0 %v664
        %v1302 = vpop.f32.mrf.mxu0
        %v1303 = vadd.f32 %v1254, %v1302
        %v1304 = vpop.f32.mrf.mxu0
        %v1305 = vadd.f32 %v1256, %v1304
        %1306 = vmatmul.bf16.gmra.mxu0 %v668
        %v1307 = vpop.f32.mrf.mxu0
        %v1308 = vadd.f32 %v1259, %v1307
        %v1309 = vpop.f32.mrf.mxu0
        %v1310 = vadd.f32 %v1261, %v1309
        %1311 = vmatmul.bf16.gmra.mxu0 %v672
        %v1312 = vpop.f32.mrf.mxu0
        %v1313 = vadd.f32 %v1264, %v1312
        %v1314 = vpop.f32.mrf.mxu0
        %v1315 = vadd.f32 %v1266, %v1314
        %1316 = vmatmul.bf16.gmra.mxu0 %v676
        %v1317 = vpop.f32.mrf.mxu0
        %v1318 = vadd.f32 %v1269, %v1317
        %v1319 = vpop.f32.mrf.mxu0
        %v1320 = vadd.f32 %v1271, %v1319
        %1321 = vmatmul.bf16.gmra.mxu0 %v680
        %v1322 = vpop.f32.mrf.mxu0
        %v1323 = vadd.f32 %v1274, %v1322
        %v1324 = vpop.f32.mrf.mxu0
        %v1325 = vadd.f32 %v1276, %v1324
        %1326 = vmatmul.bf16.gmra.mxu0 %v684
        %v1327 = vpop.f32.mrf.mxu0
        %v1328 = vadd.f32 %v1279, %v1327
        %v1329 = vpop.f32.mrf.mxu0
        %v1330 = vadd.f32 %v1281, %v1329
        %1331 = vmatmul.bf16.gmra.mxu0 %v688
        %v1332 = vpop.f32.mrf.mxu0
        %v1333 = vadd.f32 %v1284, %v1332
        %v1334 = vpop.f32.mrf.mxu0
        %v1335 = vadd.f32 %v1286, %v1334
        %1336 = vdwg.mxu0
        %1337 = vmatpush.bf16.msra.mxu0 %v962
        %1338 = vmatpush.bf16.msra.mxu0 %v960
        %1339 = vmatpush.bf16.msra.mxu0 %v958
        %1340 = vmatpush.bf16.msra.mxu0 %v956
        %1341 = vmatpush.bf16.msra.mxu0 %v954
        %1342 = vmatpush.bf16.msra.mxu0 %v952
        %1343 = vmatpush.bf16.msra.mxu0 %v950
        %1344 = vmatpush.bf16.msra.mxu0 %v948
        %1345 = vmatmul.bf16.gmra.mxu0 %v661
        %v1346 = vpop.f32.mrf.mxu0
        %v1347 = vadd.f32 %v1298, %v1346
        %v1348 = vpop.f32.mrf.mxu0
        %v1349 = vadd.f32 %v1300, %v1348
        %1350 = vmatmul.bf16.gmra.mxu0 %v665
        %v1351 = vpop.f32.mrf.mxu0
        %v1352 = vadd.f32 %v1303, %v1351
        %v1353 = vpop.f32.mrf.mxu0
        %v1354 = vadd.f32 %v1305, %v1353
        %1355 = vmatmul.bf16.gmra.mxu0 %v669
        %v1356 = vpop.f32.mrf.mxu0
        %v1357 = vadd.f32 %v1308, %v1356
        %v1358 = vpop.f32.mrf.mxu0
        %v1359 = vadd.f32 %v1310, %v1358
        %1360 = vmatmul.bf16.gmra.mxu0 %v673
        %v1361 = vpop.f32.mrf.mxu0
        %v1362 = vadd.f32 %v1313, %v1361
        %v1363 = vpop.f32.mrf.mxu0
        %v1364 = vadd.f32 %v1315, %v1363
        %1365 = vmatmul.bf16.gmra.mxu0 %v677
        %v1366 = vpop.f32.mrf.mxu0
        %v1367 = vadd.f32 %v1318, %v1366
        %v1368 = vpop.f32.mrf.mxu0
        %v1369 = vadd.f32 %v1320, %v1368
        %1370 = vmatmul.bf16.gmra.mxu0 %v681
        %v1371 = vpop.f32.mrf.mxu0
        %v1372 = vadd.f32 %v1323, %v1371
        %v1373 = vpop.f32.mrf.mxu0
        %v1374 = vadd.f32 %v1325, %v1373
        %1375 = vmatmul.bf16.gmra.mxu0 %v685
        %v1376 = vpop.f32.mrf.mxu0
        %v1377 = vadd.f32 %v1328, %v1376
        %v1378 = vpop.f32.mrf.mxu0
        %v1379 = vadd.f32 %v1330, %v1378
        %1380 = vmatmul.bf16.gmra.mxu0 %v689
        %v1381 = vpop.f32.mrf.mxu0
        %v1382 = vadd.f32 %v1333, %v1381
        %v1383 = vpop.f32.mrf.mxu0
        %v1384 = vadd.f32 %v1335, %v1383
        %1385 = vdwg.mxu0
        %1386 = vmatpush.bf16.msra.mxu0 %v978
        %1387 = vmatpush.bf16.msra.mxu0 %v976
        %1388 = vmatpush.bf16.msra.mxu0 %v974
        %1389 = vmatpush.bf16.msra.mxu0 %v972
        %1390 = vmatpush.bf16.msra.mxu0 %v970
        %1391 = vmatpush.bf16.msra.mxu0 %v968
        %1392 = vmatpush.bf16.msra.mxu0 %v966
        %1393 = vmatpush.bf16.msra.mxu0 %v964
        %1394 = vmatmul.bf16.gmra.mxu0 %v662
        %v1395 = vpop.f32.mrf.mxu0
        %v1396 = vadd.f32 %v1347, %v1395
        %v1397 = vpop.f32.mrf.mxu0
        %v1398 = vadd.f32 %v1349, %v1397
        %1399 = vmatmul.bf16.gmra.mxu0 %v666
        %v1400 = vpop.f32.mrf.mxu0
        %v1401 = vadd.f32 %v1352, %v1400
        %v1402 = vpop.f32.mrf.mxu0
        %v1403 = vadd.f32 %v1354, %v1402
        %1404 = vmatmul.bf16.gmra.mxu0 %v670
        %v1405 = vpop.f32.mrf.mxu0
        %v1406 = vadd.f32 %v1357, %v1405
        %v1407 = vpop.f32.mrf.mxu0
        %v1408 = vadd.f32 %v1359, %v1407
        %1409 = vmatmul.bf16.gmra.mxu0 %v674
        %v1410 = vpop.f32.mrf.mxu0
        %v1411 = vadd.f32 %v1362, %v1410
        %v1412 = vpop.f32.mrf.mxu0
        %v1413 = vadd.f32 %v1364, %v1412
        %1414 = vmatmul.bf16.gmra.mxu0 %v678
        %v1415 = vpop.f32.mrf.mxu0
        %v1416 = vadd.f32 %v1367, %v1415
        %v1417 = vpop.f32.mrf.mxu0
        %v1418 = vadd.f32 %v1369, %v1417
        %1419 = vmatmul.bf16.gmra.mxu0 %v682
        %v1420 = vpop.f32.mrf.mxu0
        %v1421 = vadd.f32 %v1372, %v1420
        %v1422 = vpop.f32.mrf.mxu0
        %v1423 = vadd.f32 %v1374, %v1422
        %1424 = vmatmul.bf16.gmra.mxu0 %v686
        %v1425 = vpop.f32.mrf.mxu0
        %v1426 = vadd.f32 %v1377, %v1425
        %v1427 = vpop.f32.mrf.mxu0
        %v1428 = vadd.f32 %v1379, %v1427
        %1429 = vmatmul.bf16.gmra.mxu0 %v690
        %v1430 = vpop.f32.mrf.mxu0
        %v1431 = vadd.f32 %v1382, %v1430
        %v1432 = vpop.f32.mrf.mxu0
        %v1433 = vadd.f32 %v1384, %v1432
        %1434 = vdwg.mxu0
        %v1435 = vadd.f32 %v435, %v1200
        %v1436 = vadd.f32 %v436, %v1396
        %v1437 = vadd.f32 %v437, %v1202
        %v1438 = vadd.f32 %v438, %v1398
        %v1439 = vadd.f32 %v439, %v1205
        %v1440 = vadd.f32 %v440, %v1401
        %v1441 = vadd.f32 %v441, %v1207
        %v1442 = vadd.f32 %v442, %v1403
        %v1443 = vadd.f32 %v443, %v1210
        %v1444 = vadd.f32 %v444, %v1406
        %v1445 = vadd.f32 %v445, %v1212
        %v1446 = vadd.f32 %v446, %v1408
        %v1447 = vadd.f32 %v447, %v1215
        %v1448 = vadd.f32 %v448, %v1411
        %v1449 = vadd.f32 %v449, %v1217
        %v1450 = vadd.f32 %v450, %v1413
        %v1451 = vadd.f32 %v451, %v1220
        %v1452 = vadd.f32 %v452, %v1416
        %v1453 = vadd.f32 %v453, %v1222
        %v1454 = vadd.f32 %v454, %v1418
        %v1455 = vadd.f32 %v455, %v1225
        %v1456 = vadd.f32 %v456, %v1421
        %v1457 = vadd.f32 %v457, %v1227
        %v1458 = vadd.f32 %v458, %v1423
        %v1459 = vadd.f32 %v459, %v1230
        %v1460 = vadd.f32 %v460, %v1426
        %v1461 = vadd.f32 %v461, %v1232
        %v1462 = vadd.f32 %v462, %v1428
        %v1463 = vadd.f32 %v463, %v1235
        %v1464 = vadd.f32 %v464, %v1431
        %v1465 = vadd.f32 %v465, %v1237
        %v1466 = vadd.f32 %v466, %v1433
        %1467 = vst [vmem:[#allocation2] sm:$0xff] %v1435
        %1468 = vst [vmem:[#allocation2 + $0x8] sm:$0xff] %v1436
        %1469 = vst [vmem:[#allocation2 + $0x10] sm:$0xff] %v1437
        %1470 = vst [vmem:[#allocation2 + $0x18] sm:$0xff] %v1438
        %1471 = vst [vmem:[#allocation2 + $0x20] sm:$0xff] %v1439
        %1472 = vst [vmem:[#allocation2 + $0x28] sm:$0xff] %v1440
        %1473 = vst [vmem:[#allocation2 + $0x30] sm:$0xff] %v1441
        %1474 = vst [vmem:[#allocation2 + $0x38] sm:$0xff] %v1442
        %1475 = vst [vmem:[#allocation2 + $0x40] sm:$0xff] %v1443
        %1476 = vst [vmem:[#allocation2 + $0x48] sm:$0xff] %v1444
        %1477 = vst [vmem:[#allocation2 + $0x50] sm:$0xff] %v1445
        %1478 = vst [vmem:[#allocation2 + $0x58] sm:$0xff] %v1446
        %1479 = vst [vmem:[#allocation2 + $0x60] sm:$0xff] %v1447
        %1480 = vst [vmem:[#allocation2 + $0x68] sm:$0xff] %v1448
        %1481 = vst [vmem:[#allocation2 + $0x70] sm:$0xff] %v1449
        %1482 = vst [vmem:[#allocation2 + $0x78] sm:$0xff] %v1450
        %1483 = vst [vmem:[#allocation2 + $0x80] sm:$0xff] %v1451
        %1484 = vst [vmem:[#allocation2 + $0x88] sm:$0xff] %v1452
        %1485 = vst [vmem:[#allocation2 + $0x90] sm:$0xff] %v1453
        %1486 = vst [vmem:[#allocation2 + $0x98] sm:$0xff] %v1454
        %1487 = vst [vmem:[#allocation2 + $0xa0] sm:$0xff] %v1455
        %1488 = vst [vmem:[#allocation2 + $0xa8] sm:$0xff] %v1456
        %1489 = vst [vmem:[#allocation2 + $0xb0] sm:$0xff] %v1457
        %1490 = vst [vmem:[#allocation2 + $0xb8] sm:$0xff] %v1458
        %1491 = vst [vmem:[#allocation2 + $0xc0] sm:$0xff] %v1459
        %1492 = vst [vmem:[#allocation2 + $0xc8] sm:$0xff] %v1460
        %1493 = vst [vmem:[#allocation2 + $0xd0] sm:$0xff] %v1461
        %1494 = vst [vmem:[#allocation2 + $0xd8] sm:$0xff] %v1462
        %1495 = vst [vmem:[#allocation2 + $0xe0] sm:$0xff] %v1463
        %1496 = vst [vmem:[#allocation2 + $0xe8] sm:$0xff] %v1464
        %1497 = vst [vmem:[#allocation2 + $0xf0] sm:$0xff] %v1465
        %1498 = vst [vmem:[#allocation2 + $0xf8] sm:$0xff] %v1466
        %p1499 = scmp.eq.s32.totalorder %s22, 3
        // Predicated region
        $region64: #{discriminator_forward.8} parent=54 // pred_check
          %p1500 = pneg %p1499
        $region65: #{discriminator_forward.8} parent=54 // pred_check_branch
          %1502 = sbr.rel (%p1500) target = $region67
        $region66: #{discriminator_forward.8} parent=54 // pred_region
          %v1503 = vld [vmem:[#allocation2] sm:$0xff]
          %v1504 = vld [vmem:[#allocation2 + $0x8] sm:$0xff]
          %v1505 = vld [vmem:[#allocation2 + $0x10] sm:$0xff]
          %v1506 = vld [vmem:[#allocation2 + $0x18] sm:$0xff]
          %v1507 = vld [vmem:[#allocation2 + $0x20] sm:$0xff]
          %v1508 = vld [vmem:[#allocation2 + $0x28] sm:$0xff]
          %v1509 = vld [vmem:[#allocation2 + $0x30] sm:$0xff]
          %v1510 = vld [vmem:[#allocation2 + $0x38] sm:$0xff]
          %v1511 = vld [vmem:[#allocation2 + $0x40] sm:$0xff]
          %v1512 = vld [vmem:[#allocation2 + $0x48] sm:$0xff]
          %v1513 = vld [vmem:[#allocation2 + $0x50] sm:$0xff]
          %v1514 = vld [vmem:[#allocation2 + $0x58] sm:$0xff]
          %v1515 = vld [vmem:[#allocation2 + $0x60] sm:$0xff]
          %v1516 = vld [vmem:[#allocation2 + $0x68] sm:$0xff]
          %v1517 = vld [vmem:[#allocation2 + $0x70] sm:$0xff]
          %v1518 = vld [vmem:[#allocation2 + $0x78] sm:$0xff]
          %v1519 = vld [vmem:[#allocation2 + $0x80] sm:$0xff]
          %v1520 = vld [vmem:[#allocation2 + $0x88] sm:$0xff]
          %v1521 = vld [vmem:[#allocation2 + $0x90] sm:$0xff]
          %v1522 = vld [vmem:[#allocation2 + $0x98] sm:$0xff]
          %v1523 = vld [vmem:[#allocation2 + $0xa0] sm:$0xff]
          %v1524 = vld [vmem:[#allocation2 + $0xa8] sm:$0xff]
          %v1525 = vld [vmem:[#allocation2 + $0xb0] sm:$0xff]
          %v1526 = vld [vmem:[#allocation2 + $0xb8] sm:$0xff]
          %v1527 = vld [vmem:[#allocation2 + $0xc0] sm:$0xff]
          %v1528 = vld [vmem:[#allocation2 + $0xc8] sm:$0xff]
          %v1529 = vld [vmem:[#allocation2 + $0xd0] sm:$0xff]
          %v1530 = vld [vmem:[#allocation2 + $0xd8] sm:$0xff]
          %v1531 = vld [vmem:[#allocation2 + $0xe0] sm:$0xff]
          %v1532 = vld [vmem:[#allocation2 + $0xe8] sm:$0xff]
          %v1533 = vld [vmem:[#allocation2 + $0xf0] sm:$0xff]
          %v1534 = vld [vmem:[#allocation2 + $0xf8] sm:$0xff]
          %v1535 = vadd.f32 %v1503, %v1505
          %v1536 = vadd.f32 %v1535, %v1507
          %v1537 = vadd.f32 %v1536, %v1509
          %v1538 = vadd.f32 %v1537, %v1511
          %v1539 = vadd.f32 %v1538, %v1513
          %v1540 = vadd.f32 %v1539, %v1515
          %v1541 = vadd.f32 %v1540, %v1517
          %v1542 = vadd.f32 %v1541, %v1519
          %v1543 = vadd.f32 %v1542, %v1521
          %v1544 = vadd.f32 %v1543, %v1523
          %v1545 = vadd.f32 %v1544, %v1525
          %v1546 = vadd.f32 %v1545, %v1527
          %v1547 = vadd.f32 %v1546, %v1529
          %v1548 = vadd.f32 %v1547, %v1531
          %v1549 = vadd.f32 %v1548, %v1533
          %v1550 = vrot.slane %v1549, 4
          %v1551 = vadd.f32 %v1549, %v1550
          %v1552 = vrot.slane %v1551, 2
          %v1553 = vadd.f32 %v1551, %v1552
          %v1554 = vrot.slane %v1553, 1
          %v1555 = vadd.f32 %v1553, %v1554
          %v1556 = vadd.f32 %v1504, %v1506
          %v1557 = vadd.f32 %v1556, %v1508
          %v1558 = vadd.f32 %v1557, %v1510
          %v1559 = vadd.f32 %v1558, %v1512
          %v1560 = vadd.f32 %v1559, %v1514
          %v1561 = vadd.f32 %v1560, %v1516
          %v1562 = vadd.f32 %v1561, %v1518
          %v1563 = vadd.f32 %v1562, %v1520
          %v1564 = vadd.f32 %v1563, %v1522
          %v1565 = vadd.f32 %v1564, %v1524
          %v1566 = vadd.f32 %v1565, %v1526
          %v1567 = vadd.f32 %v1566, %v1528
          %v1568 = vadd.f32 %v1567, %v1530
          %v1569 = vadd.f32 %v1568, %v1532
          %v1570 = vadd.f32 %v1569, %v1534
          %v1571 = vrot.slane %v1570, 4
          %v1572 = vadd.f32 %v1570, %v1571
          %v1573 = vrot.slane %v1572, 2
          %v1574 = vadd.f32 %v1572, %v1573
          %v1575 = vrot.slane %v1574, 1
          %v1576 = vadd.f32 %v1574, %v1575
          %v1577 = vmul.f32 %v1503, %v1503
          %v1578 = vmul.f32 %v1504, %v1504
          %v1579 = vmul.f32 %v1505, %v1505
          %v1580 = vmul.f32 %v1506, %v1506
          %v1581 = vmul.f32 %v1507, %v1507
          %v1582 = vmul.f32 %v1508, %v1508
          %v1583 = vmul.f32 %v1509, %v1509
          %v1584 = vmul.f32 %v1510, %v1510
          %v1585 = vmul.f32 %v1511, %v1511
          %v1586 = vmul.f32 %v1512, %v1512
          %v1587 = vmul.f32 %v1513, %v1513
          %v1588 = vmul.f32 %v1514, %v1514
          %v1589 = vmul.f32 %v1515, %v1515
          %v1590 = vmul.f32 %v1516, %v1516
          %v1591 = vmul.f32 %v1517, %v1517
          %v1592 = vmul.f32 %v1518, %v1518
          %v1593 = vmul.f32 %v1519, %v1519
          %v1594 = vmul.f32 %v1520, %v1520
          %v1595 = vmul.f32 %v1521, %v1521
          %v1596 = vmul.f32 %v1522, %v1522
          %v1597 = vmul.f32 %v1523, %v1523
          %v1598 = vmul.f32 %v1524, %v1524
          %v1599 = vmul.f32 %v1525, %v1525
          %v1600 = vmul.f32 %v1526, %v1526
          %v1601 = vmul.f32 %v1527, %v1527
          %v1602 = vmul.f32 %v1528, %v1528
          %v1603 = vmul.f32 %v1529, %v1529
          %v1604 = vmul.f32 %v1530, %v1530
          %v1605 = vmul.f32 %v1531, %v1531
          %v1606 = vmul.f32 %v1532, %v1532
          %v1607 = vmul.f32 %v1533, %v1533
          %v1608 = vmul.f32 %v1534, %v1534
          %v1609 = vadd.f32 %v1577, %v1579
          %v1610 = vadd.f32 %v1609, %v1581
          %v1611 = vadd.f32 %v1610, %v1583
          %v1612 = vadd.f32 %v1611, %v1585
          %v1613 = vadd.f32 %v1612, %v1587
          %v1614 = vadd.f32 %v1613, %v1589
          %v1615 = vadd.f32 %v1614, %v1591
          %v1616 = vadd.f32 %v1615, %v1593
          %v1617 = vadd.f32 %v1616, %v1595
          %v1618 = vadd.f32 %v1617, %v1597
          %v1619 = vadd.f32 %v1618, %v1599
          %v1620 = vadd.f32 %v1619, %v1601
          %v1621 = vadd.f32 %v1620, %v1603
          %v1622 = vadd.f32 %v1621, %v1605
          %v1623 = vadd.f32 %v1622, %v1607
          %v1624 = vrot.slane %v1623, 4
          %v1625 = vadd.f32 %v1623, %v1624
          %v1626 = vrot.slane %v1625, 2
          %v1627 = vadd.f32 %v1625, %v1626
          %v1628 = vrot.slane %v1627, 1
          %v1629 = vadd.f32 %v1627, %v1628
          %v1630 = vadd.f32 %v1578, %v1580
          %v1631 = vadd.f32 %v1630, %v1582
          %v1632 = vadd.f32 %v1631, %v1584
          %v1633 = vadd.f32 %v1632, %v1586
          %v1634 = vadd.f32 %v1633, %v1588
          %v1635 = vadd.f32 %v1634, %v1590
          %v1636 = vadd.f32 %v1635, %v1592
          %v1637 = vadd.f32 %v1636, %v1594
          %v1638 = vadd.f32 %v1637, %v1596
          %v1639 = vadd.f32 %v1638, %v1598
          %v1640 = vadd.f32 %v1639, %v1600
          %v1641 = vadd.f32 %v1640, %v1602
          %v1642 = vadd.f32 %v1641, %v1604
          %v1643 = vadd.f32 %v1642, %v1606
          %v1644 = vadd.f32 %v1643, %v1608
          %v1645 = vrot.slane %v1644, 4
          %v1646 = vadd.f32 %v1644, %v1645
          %v1647 = vrot.slane %v1646, 2
          %v1648 = vadd.f32 %v1646, %v1647
          %v1649 = vrot.slane %v1648, 1
          %v1650 = vadd.f32 %v1648, %v1649
          %v1651 = vmul.f32 %v1555, 0.0078125
          %v1652 = vmul.f32 %v1576, 0.0078125
          %v1653 = vmul.f32 %v1629, 0.0078125
          %v1654 = vmul.f32 %v1650, 0.0078125
          %v1655 = vmul.f32 %v1651, %v1651
          %v1656 = vmul.f32 %v1652, %v1652
          %v1657 = vsub.f32 %v1653, %v1655
          %v1658 = vsub.f32 %v1654, %v1656
          %v1659 = vmax.f32 %v1657, 0.0
          %v1660 = vmax.f32 %v1658, 0.0
          %v1661 = vsub.f32 %v1503, %v1651
          %v1662 = vsub.f32 %v1504, %v1652
          %v1663 = vsub.f32 %v1505, %v1651
          %v1664 = vsub.f32 %v1506, %v1652
          %v1665 = vsub.f32 %v1507, %v1651
          %v1666 = vsub.f32 %v1508, %v1652
          %v1667 = vsub.f32 %v1509, %v1651
          %v1668 = vsub.f32 %v1510, %v1652
          %v1669 = vsub.f32 %v1511, %v1651
          %v1670 = vsub.f32 %v1512, %v1652
          %v1671 = vsub.f32 %v1513, %v1651
          %v1672 = vsub.f32 %v1514, %v1652
          %v1673 = vsub.f32 %v1515, %v1651
          %v1674 = vsub.f32 %v1516, %v1652
          %v1675 = vsub.f32 %v1517, %v1651
          %v1676 = vsub.f32 %v1518, %v1652
          %v1677 = vsub.f32 %v1519, %v1651
          %v1678 = vsub.f32 %v1520, %v1652
          %v1679 = vsub.f32 %v1521, %v1651
          %v1680 = vsub.f32 %v1522, %v1652
          %v1681 = vsub.f32 %v1523, %v1651
          %v1682 = vsub.f32 %v1524, %v1652
          %v1683 = vsub.f32 %v1525, %v1651
          %v1684 = vsub.f32 %v1526, %v1652
          %v1685 = vsub.f32 %v1527, %v1651
          %v1686 = vsub.f32 %v1528, %v1652
          %v1687 = vsub.f32 %v1529, %v1651
          %v1688 = vsub.f32 %v1530, %v1652
          %v1689 = vsub.f32 %v1531, %v1651
          %v1690 = vsub.f32 %v1532, %v1652
          %v1691 = vsub.f32 %v1533, %v1651
          %v1692 = vsub.f32 %v1534, %v1652
          %v1693 = vadd.f32 %v1659, 1e-05
          %v1694 = vadd.f32 %v1660, 1e-05
          %v1695 = vrsqrt.pop %v1693
          %v1696 = vmul.f32 %v1695, %v1693
          %v1697 = vmul.f32 %v1696, %v1695
          %v1698 = vmul.f32 0.5, %v1697
          %v1699 = vsub.f32 1.5, %v1698
          %v1700 = vmul.f32 %v1695, %v1699
          %vm1701 = vweird.f32 %v1693
          %vm1702 = vweird.f32 %v1695
          %vm1703 = vmor %vm1701, %vm1702
          %v1704 = vsel %vm1703, %v1695, %v1700
          %v1705 = vrsqrt.pop %v1694
          %v1706 = vmul.f32 %v1705, %v1694
          %v1707 = vmul.f32 %v1706, %v1705
          %v1708 = vmul.f32 0.5, %v1707
          %v1709 = vsub.f32 1.5, %v1708
          %v1710 = vmul.f32 %v1705, %v1709
          %vm1711 = vweird.f32 %v1694
          %vm1712 = vweird.f32 %v1705
          %vm1713 = vmor %vm1711, %vm1712
          %v1714 = vsel %vm1713, %v1705, %v1710
          %v1715 = vmul.f32 %v1661, %v1704
          %v1716 = vmul.f32 %v1662, %v1714
          %v1717 = vmul.f32 %v1663, %v1704
          %v1718 = vmul.f32 %v1664, %v1714
          %v1719 = vmul.f32 %v1665, %v1704
          %v1720 = vmul.f32 %v1666, %v1714
          %v1721 = vmul.f32 %v1667, %v1704
          %v1722 = vmul.f32 %v1668, %v1714
          %v1723 = vmul.f32 %v1669, %v1704
          %v1724 = vmul.f32 %v1670, %v1714
          %v1725 = vmul.f32 %v1671, %v1704
          %v1726 = vmul.f32 %v1672, %v1714
          %v1727 = vmul.f32 %v1673, %v1704
          %v1728 = vmul.f32 %v1674, %v1714
          %v1729 = vmul.f32 %v1675, %v1704
          %v1730 = vmul.f32 %v1676, %v1714
          %v1731 = vmul.f32 %v1677, %v1704
          %v1732 = vmul.f32 %v1678, %v1714
          %v1733 = vmul.f32 %v1679, %v1704
          %v1734 = vmul.f32 %v1680, %v1714
          %v1735 = vmul.f32 %v1681, %v1704
          %v1736 = vmul.f32 %v1682, %v1714
          %v1737 = vmul.f32 %v1683, %v1704
          %v1738 = vmul.f32 %v1684, %v1714
          %v1739 = vmul.f32 %v1685, %v1704
          %v1740 = vmul.f32 %v1686, %v1714
          %v1741 = vmul.f32 %v1687, %v1704
          %v1742 = vmul.f32 %v1688, %v1714
          %v1743 = vmul.f32 %v1689, %v1704
          %v1744 = vmul.f32 %v1690, %v1714
          %v1745 = vmul.f32 %v1691, %v1704
          %v1746 = vmul.f32 %v1692, %v1714
          %v1747 = vld [vmem:[%s380] sm:$0x3]
          %v1749 = vperm.slane %v1747, 0
          %v1750 = vperm.slane %v1747, 1
          %v1753 = vmul.f32 %v1715, %v1749
          %v1754 = vmul.f32 %v1716, %v1750
          %v1755 = vmul.f32 %v1717, %v1749
          %v1756 = vmul.f32 %v1718, %v1750
          %v1757 = vmul.f32 %v1719, %v1749
          %v1758 = vmul.f32 %v1720, %v1750
          %v1759 = vmul.f32 %v1721, %v1749
          %v1760 = vmul.f32 %v1722, %v1750
          %v1761 = vmul.f32 %v1723, %v1749
          %v1762 = vmul.f32 %v1724, %v1750
          %v1763 = vmul.f32 %v1725, %v1749
          %v1764 = vmul.f32 %v1726, %v1750
          %v1765 = vmul.f32 %v1727, %v1749
          %v1766 = vmul.f32 %v1728, %v1750
          %v1767 = vmul.f32 %v1729, %v1749
          %v1768 = vmul.f32 %v1730, %v1750
          %v1769 = vmul.f32 %v1731, %v1749
          %v1770 = vmul.f32 %v1732, %v1750
          %v1771 = vmul.f32 %v1733, %v1749
          %v1772 = vmul.f32 %v1734, %v1750
          %v1773 = vmul.f32 %v1735, %v1749
          %v1774 = vmul.f32 %v1736, %v1750
          %v1775 = vmul.f32 %v1737, %v1749
          %v1776 = vmul.f32 %v1738, %v1750
          %v1777 = vmul.f32 %v1739, %v1749
          %v1778 = vmul.f32 %v1740, %v1750
          %v1779 = vmul.f32 %v1741, %v1749
          %v1780 = vmul.f32 %v1742, %v1750
          %v1781 = vmul.f32 %v1743, %v1749
          %v1782 = vmul.f32 %v1744, %v1750
          %v1783 = vmul.f32 %v1745, %v1749
          %v1784 = vmul.f32 %v1746, %v1750
          %v1785 = vld [vmem:[%s385] sm:$0x3]
          %v1787 = vperm.slane %v1785, 0
          %v1788 = vperm.slane %v1785, 1
          %v1791 = vadd.f32 %v1753, %v1787
          %v1792 = vadd.f32 %v1754, %v1788
          %v1793 = vadd.f32 %v1755, %v1787
          %v1794 = vadd.f32 %v1756, %v1788
          %v1795 = vadd.f32 %v1757, %v1787
          %v1796 = vadd.f32 %v1758, %v1788
          %v1797 = vadd.f32 %v1759, %v1787
          %v1798 = vadd.f32 %v1760, %v1788
          %v1799 = vadd.f32 %v1761, %v1787
          %v1800 = vadd.f32 %v1762, %v1788
          %v1801 = vadd.f32 %v1763, %v1787
          %v1802 = vadd.f32 %v1764, %v1788
          %v1803 = vadd.f32 %v1765, %v1787
          %v1804 = vadd.f32 %v1766, %v1788
          %v1805 = vadd.f32 %v1767, %v1787
          %v1806 = vadd.f32 %v1768, %v1788
          %v1807 = vadd.f32 %v1769, %v1787
          %v1808 = vadd.f32 %v1770, %v1788
          %v1809 = vadd.f32 %v1771, %v1787
          %v1810 = vadd.f32 %v1772, %v1788
          %v1811 = vadd.f32 %v1773, %v1787
          %v1812 = vadd.f32 %v1774, %v1788
          %v1813 = vadd.f32 %v1775, %v1787
          %v1814 = vadd.f32 %v1776, %v1788
          %v1815 = vadd.f32 %v1777, %v1787
          %v1816 = vadd.f32 %v1778, %v1788
          %v1817 = vadd.f32 %v1779, %v1787
          %v1818 = vadd.f32 %v1780, %v1788
          %v1819 = vadd.f32 %v1781, %v1787
          %v1820 = vadd.f32 %v1782, %v1788
          %v1821 = vadd.f32 %v1783, %v1787
          %v1822 = vadd.f32 %v1784, %v1788
          %vm1823 = vcmp.ge.f32.partialorder %v1791, 0.0
          %vm1824 = vcmp.ge.f32.partialorder %v1792, 0.0
          %vm1825 = vcmp.ge.f32.partialorder %v1793, 0.0
          %vm1826 = vcmp.ge.f32.partialorder %v1794, 0.0
          %vm1827 = vcmp.ge.f32.partialorder %v1795, 0.0
          %vm1828 = vcmp.ge.f32.partialorder %v1796, 0.0
          %vm1829 = vcmp.ge.f32.partialorder %v1797, 0.0
          %vm1830 = vcmp.ge.f32.partialorder %v1798, 0.0
          %vm1831 = vcmp.ge.f32.partialorder %v1799, 0.0
          %vm1832 = vcmp.ge.f32.partialorder %v1800, 0.0
          %vm1833 = vcmp.ge.f32.partialorder %v1801, 0.0
          %vm1834 = vcmp.ge.f32.partialorder %v1802, 0.0
          %vm1835 = vcmp.ge.f32.partialorder %v1803, 0.0
          %vm1836 = vcmp.ge.f32.partialorder %v1804, 0.0
          %vm1837 = vcmp.ge.f32.partialorder %v1805, 0.0
          %vm1838 = vcmp.ge.f32.partialorder %v1806, 0.0
          %vm1839 = vcmp.ge.f32.partialorder %v1807, 0.0
          %vm1840 = vcmp.ge.f32.partialorder %v1808, 0.0
          %vm1841 = vcmp.ge.f32.partialorder %v1809, 0.0
          %vm1842 = vcmp.ge.f32.partialorder %v1810, 0.0
          %vm1843 = vcmp.ge.f32.partialorder %v1811, 0.0
          %vm1844 = vcmp.ge.f32.partialorder %v1812, 0.0
          %vm1845 = vcmp.ge.f32.partialorder %v1813, 0.0
          %vm1846 = vcmp.ge.f32.partialorder %v1814, 0.0
          %vm1847 = vcmp.ge.f32.partialorder %v1815, 0.0
          %vm1848 = vcmp.ge.f32.partialorder %v1816, 0.0
          %vm1849 = vcmp.ge.f32.partialorder %v1817, 0.0
          %vm1850 = vcmp.ge.f32.partialorder %v1818, 0.0
          %vm1851 = vcmp.ge.f32.partialorder %v1819, 0.0
          %vm1852 = vcmp.ge.f32.partialorder %v1820, 0.0
          %vm1853 = vcmp.ge.f32.partialorder %v1821, 0.0
          %vm1854 = vcmp.ge.f32.partialorder %v1822, 0.0
          %v1855 = vmul.f32 %v1791, 0.2
          %v1856 = vmul.f32 %v1792, 0.2
          %v1857 = vmul.f32 %v1793, 0.2
          %v1858 = vmul.f32 %v1794, 0.2
          %v1859 = vmul.f32 %v1795, 0.2
          %v1860 = vmul.f32 %v1796, 0.2
          %v1861 = vmul.f32 %v1797, 0.2
          %v1862 = vmul.f32 %v1798, 0.2
          %v1863 = vmul.f32 %v1799, 0.2
          %v1864 = vmul.f32 %v1800, 0.2
          %v1865 = vmul.f32 %v1801, 0.2
          %v1866 = vmul.f32 %v1802, 0.2
          %v1867 = vmul.f32 %v1803, 0.2
          %v1868 = vmul.f32 %v1804, 0.2
          %v1869 = vmul.f32 %v1805, 0.2
          %v1870 = vmul.f32 %v1806, 0.2
          %v1871 = vmul.f32 %v1807, 0.2
          %v1872 = vmul.f32 %v1808, 0.2
          %v1873 = vmul.f32 %v1809, 0.2
          %v1874 = vmul.f32 %v1810, 0.2
          %v1875 = vmul.f32 %v1811, 0.2
          %v1876 = vmul.f32 %v1812, 0.2
          %v1877 = vmul.f32 %v1813, 0.2
          %v1878 = vmul.f32 %v1814, 0.2
          %v1879 = vmul.f32 %v1815, 0.2
          %v1880 = vmul.f32 %v1816, 0.2
          %v1881 = vmul.f32 %v1817, 0.2
          %v1882 = vmul.f32 %v1818, 0.2
          %v1883 = vmul.f32 %v1819, 0.2
          %v1884 = vmul.f32 %v1820, 0.2
          %v1885 = vmul.f32 %v1821, 0.2
          %v1886 = vmul.f32 %v1822, 0.2
          %v1887 = vsel %vm1823, %v1791, %v1855
          %v1888 = vsel %vm1824, %v1792, %v1856
          %v1889 = vsel %vm1825, %v1793, %v1857
          %v1890 = vsel %vm1826, %v1794, %v1858
          %v1891 = vsel %vm1827, %v1795, %v1859
          %v1892 = vsel %vm1828, %v1796, %v1860
          %v1893 = vsel %vm1829, %v1797, %v1861
          %v1894 = vsel %vm1830, %v1798, %v1862
          %v1895 = vsel %vm1831, %v1799, %v1863
          %v1896 = vsel %vm1832, %v1800, %v1864
          %v1897 = vsel %vm1833, %v1801, %v1865
          %v1898 = vsel %vm1834, %v1802, %v1866
          %v1899 = vsel %vm1835, %v1803, %v1867
          %v1900 = vsel %vm1836, %v1804, %v1868
          %v1901 = vsel %vm1837, %v1805, %v1869
          %v1902 = vsel %vm1838, %v1806, %v1870
          %v1903 = vsel %vm1839, %v1807, %v1871
          %v1904 = vsel %vm1840, %v1808, %v1872
          %v1905 = vsel %vm1841, %v1809, %v1873
          %v1906 = vsel %vm1842, %v1810, %v1874
          %v1907 = vsel %vm1843, %v1811, %v1875
          %v1908 = vsel %vm1844, %v1812, %v1876
          %v1909 = vsel %vm1845, %v1813, %v1877
          %v1910 = vsel %vm1846, %v1814, %v1878
          %v1911 = vsel %vm1847, %v1815, %v1879
          %v1912 = vsel %vm1848, %v1816, %v1880
          %v1913 = vsel %vm1849, %v1817, %v1881
          %v1914 = vsel %vm1850, %v1818, %v1882
          %v1915 = vsel %vm1851, %v1819, %v1883
          %v1916 = vsel %vm1852, %v1820, %v1884
          %v1917 = vsel %vm1853, %v1821, %v1885
          %v1918 = vsel %vm1854, %v1822, %v1886
          %v1919 = vpack.c.bf16 %v1888, %v1887
          %v1920 = vpack.c.bf16 %v1890, %v1889
          %v1921 = vpack.c.bf16 %v1892, %v1891
          %v1922 = vpack.c.bf16 %v1894, %v1893
          %v1923 = vpack.c.bf16 %v1896, %v1895
          %v1924 = vpack.c.bf16 %v1898, %v1897
          %v1925 = vpack.c.bf16 %v1900, %v1899
          %v1926 = vpack.c.bf16 %v1902, %v1901
          %v1927 = vpack.c.bf16 %v1904, %v1903
          %v1928 = vpack.c.bf16 %v1906, %v1905
          %v1929 = vpack.c.bf16 %v1908, %v1907
          %v1930 = vpack.c.bf16 %v1910, %v1909
          %v1931 = vpack.c.bf16 %v1912, %v1911
          %v1932 = vpack.c.bf16 %v1914, %v1913
          %v1933 = vpack.c.bf16 %v1916, %v1915
          %v1934 = vpack.c.bf16 %v1918, %v1917
          %1935 = vst [vmem:[%s396] sm:$0xff] %v1919
          %1936 = vst [vmem:[%s396 + $0x8] sm:$0xff] %v1920
          %1937 = vst [vmem:[%s396 + $0x10] sm:$0xff] %v1921
          %1938 = vst [vmem:[%s396 + $0x18] sm:$0xff] %v1922
          %1939 = vst [vmem:[%s396 + $0x20] sm:$0xff] %v1923
          %1940 = vst [vmem:[%s396 + $0x28] sm:$0xff] %v1924
          %1941 = vst [vmem:[%s396 + $0x30] sm:$0xff] %v1925
          %1942 = vst [vmem:[%s396 + $0x38] sm:$0xff] %v1926
          %1943 = vst [vmem:[%s396 + $0x40] sm:$0xff] %v1927
          %1944 = vst [vmem:[%s396 + $0x48] sm:$0xff] %v1928
          %1945 = vst [vmem:[%s396 + $0x50] sm:$0xff] %v1929
          %1946 = vst [vmem:[%s396 + $0x58] sm:$0xff] %v1930
          %1947 = vst [vmem:[%s396 + $0x60] sm:$0xff] %v1931
          %1948 = vst [vmem:[%s396 + $0x68] sm:$0xff] %v1932
          %1949 = vst [vmem:[%s396 + $0x70] sm:$0xff] %v1933
          %1950 = vst [vmem:[%s396 + $0x78] sm:$0xff] %v1934
        $region67: #{discriminator_forward.8} parent=54 // pred_fallthru
          _
        %s1951 = smul.u32 16, %s20
        %s1952 = smul.u32 2, %s21
        %p1953 = scmp.lt.s32.totalorder %s1951, 15
        %s1954 = scalar_select %p1953, %s1951, 15
        %p1955 = scmp.lt.s32.totalorder %s1952, 1
        %s1956 = scalar_select %p1955, %s1952, 1
        %s1957 = smul.addr %s1954, 2
        %s1958 = sadd.s32 %s1956, %s1957
        %s1959 = smul.addr %s1958, 4
        %s1960 = scalar_lea.vmem %s4, %s1959
        // Predicated region
        $region68: #{discriminator_forward.8} parent=54 // pred_check
          %p1961 = pneg %p162
        $region69: #{discriminator_forward.8} parent=54 // pred_check_branch
          %1963 = sbr.rel (%p1961) target = $region71
        $region70: #{discriminator_forward.8} parent=54 // pred_region
          %s1964 = smul.u32 16, %s20
          %s1965 = smul.u32 2, %s21
        $region71: #{discriminator_forward.8} parent=54 // pred_fallthru
          _
        // Predicated region
        $region72: #{discriminator_forward.8} parent=54 // pred_check
          %p1966 = pneg %p162
        $region73: #{discriminator_forward.8} parent=54 // pred_check_branch
          %1968 = sbr.rel (%p1966) target = $region75
        $region74: #{discriminator_forward.8} parent=54 // pred_region
          %s1969 = smul.u32 16, %s20
          %s1970 = smul.u32 2, %s21
          %p1971 = scmp.lt.s32.totalorder %s1969, 15
          %s1972 = scalar_select %p1971, %s1969, 15
          %p1973 = scmp.lt.s32.totalorder %s1970, 1
          %s1974 = scalar_select %p1973, %s1970, 1
          %s1975 = smul.addr %s1972, 2
          %s1976 = sadd.s32 %s1974, %s1975
          %s1977 = smul.addr %s1976, 4
          %s1978 = scalar_lea.vmem %s4, %s1977
        $region75: #{discriminator_forward.8} parent=54 // pred_fallthru
          _
      $region55: #{discriminator_forward.8} parent=5 // pred_fallthru
        _
      %p1979 = scmp.le.s32.totalorder 2, %s10
      // Predicated region
      $region76: #{discriminator_forward.8} parent=5 // pred_check
        %p1980 = pneg %p1979
      $region77: #{discriminator_forward.8} parent=5 // pred_check_branch
        %1982 = sbr.rel (%p1980) target = $region79
      $region78: #{discriminator_forward.8} parent=5 // pred_region
        %s1983 = ssub.s32 %s10, 2
      $region79: #{discriminator_forward.8} parent=5 // pred_fallthru
        _
    $region6: #{discriminator_forward.8} parent=1 // loop_footer
      %s14 = sadd.s32 1, %s10
    $region7: #{discriminator_forward.8} parent=1 // loop_footer_branch
      %9 = sbr.rel target = $region3
    $region8: #{discriminator_forward.8} parent=1 // loop_exit
      _

// kernel: discriminator_forward.10
$region0: #{discriminator_forward.10}
  #allocation0 [shape = 'u32[]', space=smem, size = 0x4, offset = 0x4, fixed_abs, tag = 'smem constant byte address 0x4 - core index']
  #allocation1 [shape = 'u32[72,128]{1,0:T(1,128)}', space=vmem, size = 0x9000, scoped, tag = 'internal scratch']
  %s0 = inlined_call_operand.vmem [shape: bf16[2,32], index: 0, kind: input, shape index: {}]
  %s1 = inlined_call_operand.vmem [shape: bf16[32,128], index: 1, kind: input, shape index: {}]
  %s2 = inlined_call_operand.vmem [shape: f32[1,128], index: 2, kind: input, shape index: {}]
  %s3 = inlined_call_operand.vmem [shape: f32[1,128], index: 3, kind: input, shape index: {}]
  %s4 = inlined_call_operand.vmem [shape: f32[1,128], index: 4, kind: input, shape index: {}]
  %s5 = inlined_call_operand.vmem [shape: bf16[2,128], index: 5, kind: output, shape index: {}]
  %s6 = sld [smem:[#allocation0]]
  $region30: #{discriminator_forward.10} parent=0
    _
  %s8 = ssub.s32 1, %s6
  %s9 = scalar_select 0, %s8, %s6
  // Predicated region
  $region2: #{discriminator_forward.10} parent=0 // pred_check
    _
  $region3: #{discriminator_forward.10} parent=0 // pred_check_branch
    %11 = sbr.rel (0) target = $region5
  $region4: #{discriminator_forward.10} parent=0 // pred_region
    _
  $region5: #{discriminator_forward.10} parent=0 // pred_fallthru
    _
  // Predicated region
  $region6: #{discriminator_forward.10} parent=0 // pred_check
    _
  $region7: #{discriminator_forward.10} parent=0 // pred_check_branch
    %13 = sbr.rel (0) target = $region9
  $region8: #{discriminator_forward.10} parent=0 // pred_region
    _
  $region9: #{discriminator_forward.10} parent=0 // pred_fallthru
    _
  // Predicated region
  $region10: #{discriminator_forward.10} parent=0 // pred_check
    _
  $region11: #{discriminator_forward.10} parent=0 // pred_check_branch
    %15 = sbr.rel (0) target = $region13
  $region12: #{discriminator_forward.10} parent=0 // pred_region
    _
  $region13: #{discriminator_forward.10} parent=0 // pred_fallthru
    _
  // Predicated region
  $region14: #{discriminator_forward.10} parent=0 // pred_check
    _
  $region15: #{discriminator_forward.10} parent=0 // pred_check_branch
    %17 = sbr.rel (0) target = $region17
  $region16: #{discriminator_forward.10} parent=0 // pred_region
    _
  $region17: #{discriminator_forward.10} parent=0 // pred_fallthru
    _
  // Predicated region
  $region18: #{discriminator_forward.10} parent=0 // pred_check
    _
  $region19: #{discriminator_forward.10} parent=0 // pred_check_branch
    %19 = sbr.rel (0) target = $region21
  $region20: #{discriminator_forward.10} parent=0 // pred_region
    _
  $region21: #{discriminator_forward.10} parent=0 // pred_fallthru
    _
  %v21 = vld [vmem:[%s0] sm:$0x1]
  %v22 = vld [vmem:[%s1] sm:$0xf]
  %v23 = vld [vmem:[%s1 + $0x4] sm:$0xf]
  %v24 = vld [vmem:[%s1 + $0x8] sm:$0xf]
  %v25 = vld [vmem:[%s1 + $0xc] sm:$0xf]
  %v26 = vld [vmem:[%s2] sm:$0x1]
  %v28 = vperm.slane %v26, 0
  %v34 = vunpack.c.l.b16 %v22
  %v35 = vunpack.c.l.b16 %v23
  %v36 = vunpack.c.l.b16 %v24
  %v37 = vunpack.c.l.b16 %v25
  %v38 = vpack.c.b16 %v35, %v34
  %v39 = vpack.c.b16 %v37, %v36
  %vm42 = vcmask 261120
  %v44 = vsel %vm42, %v21, 0
  %46 = vmatpush.bf16.msra.mxu0 0
  %47 = vmatpush.bf16.msra.mxu0 0
  %48 = vmatpush.bf16.msra.mxu0 0
  %49 = vmatpush.bf16.msra.mxu0 0
  %50 = vmatpush.bf16.msra.mxu0 0
  %51 = vmatpush.bf16.msra.mxu0 0
  %52 = vmatpush.bf16.msra.mxu0 %v39
  %53 = vmatpush.bf16.msra.mxu0 %v38
  %54 = vmatmul.bf16.gmra.mxu0 %v44
  %v55 = vpop.f32.mrf.mxu0
  %v56 = vadd.f32 %v28, %v55
  %v57 = vpop.f32.mrf.mxu0
  %58 = vdwg.mxu0
  %vm59 = vcmask 1041408
  %v60 = vsel %vm59, %v56, 0.0
  %v61 = vrot.slane %v60, 4
  %v62 = vadd.f32 %v60, %v61
  %v63 = vrot.slane %v62, 2
  %v64 = vadd.f32 %v62, %v63
  %v65 = vrot.slane %v64, 1
  %v66 = vadd.f32 %v64, %v65
  %v67 = vmul.f32 %v56, %v56
  %v68 = vsel %vm59, %v67, 0.0
  %v69 = vrot.slane %v68, 4
  %v70 = vadd.f32 %v68, %v69
  %v71 = vrot.slane %v70, 2
  %v72 = vadd.f32 %v70, %v71
  %v73 = vrot.slane %v72, 1
  %v74 = vadd.f32 %v72, %v73
  %v75 = vmul.f32 %v66, 0.5
  %v76 = vmul.f32 %v74, 0.5
  %v77 = vmul.f32 %v75, %v75
  %v78 = vsub.f32 %v76, %v77
  %v79 = vmax.f32 %v78, 0.0
  %v80 = vsub.f32 %v56, %v75
  %v81 = vadd.f32 %v79, 1e-05
  %v82 = vrsqrt.pop %v81
  %v83 = vmul.f32 %v82, %v81
  %v84 = vmul.f32 %v83, %v82
  %v85 = vmul.f32 0.5, %v84
  %v86 = vsub.f32 1.5, %v85
  %v87 = vmul.f32 %v82, %v86
  %vm88 = vweird.f32 %v81
  %vm89 = vweird.f32 %v82
  %vm90 = vmor %vm88, %vm89
  %v91 = vsel %vm90, %v82, %v87
  %v92 = vmul.f32 %v80, %v91
  %v93 = vld [vmem:[%s3] sm:$0x1]
  %v95 = vperm.slane %v93, 0
  %v97 = vmul.f32 %v92, %v95
  %v98 = vld [vmem:[%s4] sm:$0x1]
  %v100 = vperm.slane %v98, 0
  %v102 = vadd.f32 %v97, %v100
  %vm103 = vcmp.ge.f32.partialorder %v102, 0.0
  %v104 = vmul.f32 %v102, 0.2
  %v105 = vsel %vm103, %v102, %v104
  %v106 = vpack.c.bf16 %v105, %v105
  %107 = vst [vmem:[%s5] sm:$0x1] %v106
  // Predicated region
  $region22: #{discriminator_forward.10} parent=0 // pred_check
    _
  $region23: #{discriminator_forward.10} parent=0 // pred_check_branch
    %109 = sbr.rel (0) target = $region25
  $region24: #{discriminator_forward.10} parent=0 // pred_region
    _
  $region25: #{discriminator_forward.10} parent=0 // pred_fallthru
    _
  // Predicated region
  $region26: #{discriminator_forward.10} parent=0 // pred_check
    _
  $region27: #{discriminator_forward.10} parent=0 // pred_check_branch
    %111 = sbr.rel (0) target = $region29
  $region28: #{discriminator_forward.10} parent=0 // pred_region
    _
  $region29: #{discriminator_forward.10} parent=0 // pred_fallthru
    _

// kernel: discriminator_forward.11
$region0: #{discriminator_forward.11}
  #allocation0 [shape = 'u32[]', space=smem, size = 0x4, offset = 0x4, fixed_abs, tag = 'smem constant byte address 0x4 - core index']
  #allocation1 [shape = 'u32[72,128]{1,0:T(1,128)}', space=vmem, size = 0x9000, scoped, tag = 'internal scratch']
  #allocation2 [shape = 'f32[2,1]{1,0:T(2,128)}', space=vmem, size = 0x400, scoped, tag = 'scratch operand']
  %s0 = inlined_call_operand.vmem [shape: bf16[2,10240], index: 0, kind: input, shape index: {}]
  %s1 = inlined_call_operand.vmem [shape: bf16[1,10240], index: 1, kind: input, shape index: {}]
  %s2 = inlined_call_operand.vmem [shape: f32[2,1], index: 2, kind: output, shape index: {}]
  %s3 = sld [smem:[#allocation0]]
  $region49: #{discriminator_forward.11} parent=0
    _
  %s5 = ssub.s32 1, %s3
  %s6 = scalar_select 0, %s5, %s3
  loop: start=0, step=1, limit=7
  $region2: #{discriminator_forward.11} parent=0 // loop_pre_header
    _
  $region3: #{discriminator_forward.11} parent=0 // loop_header
    %s8 = sphi 0, %s12
    %p9 = scmp.ge.s32.totalorder %s8, 7
    %s15 = sphi 0, %s27
    %s16 = sphi 0, %s23
    %s17 = sphi 0, %s15
    %s18 = sphi 0, %s16
    %s19 = sphi 0, %s17
    %s20 = sphi 0, %s18
    %s32 = sphi 0, %s34
    %s35 = sphi 0, %s32
    %s36 = sphi 0, %s35
    %s52 = sphi 0, %s36
    %s58 = sphi 0, %s60
    %s61 = sphi 0, %s58
    %s62 = sphi 0, %s61
    %s78 = sphi 0, %s62
    %s84 = sphi 0, %s86
    %s87 = sphi 0, %s84
    %s88 = sphi 0, %s87
    %s104 = sphi 0, %s88
  $region4: #{discriminator_forward.11} parent=0 // loop_header_branch
    %11 = sbr.rel (%p9) target = $region8
  $region5: #{discriminator_forward.11} parent=0 // loop_body
    %s13 = ssub.s32 %s8, 1
    %s14 = ssub.s32 %s8, 2
    %s21 = sadd.s32 1, %s16
    %p22 = scmp.ge.s32.totalorder %s21, 5
    %s23 = scalar_select %p22, 0, %s21
    %s24 = sadd.s32 1, %s15
    %s25 = scalar_select %p22, %s24, %s15
    %p26 = scmp.ge.s32.totalorder %s25, 1
    %s27 = scalar_select %p26, 0, %s25
    %s28 = ssub.s32 %s15, %s27
    %s29 = ssub.s32 %s16, %s23
    %s30 = sor.u32 %s28, %s29
    %p31 = scmp.eq.s32.totalorder %s30, 0
    %s33 = sadd.s32 %s32, 1
    %s34 = scalar_select %p31, %s32, %s33
    %p37 = pneg %p31
    %p38 = scmp.eq.s32.totalorder %s8, 4
    %p39 = por %p37, %p38
    %p40 = scmp.ne.s32.totalorder %s32, %s35
    %p41 = scmp.eq.s32.totalorder %s8, 0
    %p42 = por %p40, %p41
    %p43 = scmp.ne.s32.totalorder %s32, %s35
    %p44 = scmp.eq.s32.totalorder %s13, 4
    %p45 = por %p43, %p44
    %p46 = scmp.ne.s32.totalorder %s35, %s36
    %p47 = scmp.eq.s32.totalorder %s13, 0
    %p48 = por %p46, %p47
    %p49 = scmp.ne.s32.totalorder %s35, %s36
    %p50 = scmp.eq.s32.totalorder %s14, 4
    %p51 = por %p49, %p50
    %p53 = scmp.ne.s32.totalorder %s36, %s52
    %p54 = scmp.eq.s32.totalorder %s14, 0
    %p55 = por %p53, %p54
    %s56 = ssub.s32 %s16, %s23
    %p57 = scmp.eq.s32.totalorder %s56, 0
    %s59 = sadd.s32 %s58, 1
    %s60 = scalar_select %p57, %s58, %s59
    %p63 = pneg %p57
    %p64 = scmp.eq.s32.totalorder %s8, 4
    %p65 = por %p63, %p64
    %p66 = scmp.ne.s32.totalorder %s58, %s61
    %p67 = scmp.eq.s32.totalorder %s8, 0
    %p68 = por %p66, %p67
    %p69 = scmp.ne.s32.totalorder %s58, %s61
    %p70 = scmp.eq.s32.totalorder %s13, 4
    %p71 = por %p69, %p70
    %p72 = scmp.ne.s32.totalorder %s61, %s62
    %p73 = scmp.eq.s32.totalorder %s13, 0
    %p74 = por %p72, %p73
    %p75 = scmp.ne.s32.totalorder %s61, %s62
    %p76 = scmp.eq.s32.totalorder %s14, 4
    %p77 = por %p75, %p76
    %p79 = scmp.ne.s32.totalorder %s62, %s78
    %p80 = scmp.eq.s32.totalorder %s14, 0
    %p81 = por %p79, %p80
    %s82 = ssub.s32 %s15, %s27
    %p83 = scmp.eq.s32.totalorder %s82, 0
    %s85 = sadd.s32 %s84, 1
    %s86 = scalar_select %p83, %s84, %s85
    %p89 = pneg %p83
    %p90 = scmp.eq.s32.totalorder %s8, 4
    %p91 = por %p89, %p90
    %p92 = scmp.ne.s32.totalorder %s84, %s87
    %p93 = scmp.eq.s32.totalorder %s8, 0
    %p94 = por %p92, %p93
    %p95 = scmp.ne.s32.totalorder %s84, %s87
    %p96 = scmp.eq.s32.totalorder %s13, 4
    %p97 = por %p95, %p96
    %p98 = scmp.ne.s32.totalorder %s87, %s88
    %p99 = scmp.eq.s32.totalorder %s13, 0
    %p100 = por %p98, %p99
    %p101 = scmp.ne.s32.totalorder %s87, %s88
    %p102 = scmp.eq.s32.totalorder %s14, 4
    %p103 = por %p101, %p102
    %p105 = scmp.ne.s32.totalorder %s88, %s104
    %p106 = scmp.eq.s32.totalorder %s14, 0
    %p107 = por %p105, %p106
    %p108 = scmp.le.s32.totalorder 1, %s8
    %p109 = scmp.lt.s32.totalorder %s8, 6
    %p110 = pnand %p108, %p109
    %p111 = pneg %p110
    // Predicated region
    $region9: #{discriminator_forward.11} parent=5 // pred_check
      _
    $region10: #{discriminator_forward.11} parent=5 // pred_check_branch
      %113 = sbr.rel (%p110) target = $region12
    $region11: #{discriminator_forward.11} parent=5 // pred_region
      %s114 = ssub.s32 %s8, 1
    $region12: #{discriminator_forward.11} parent=5 // pred_fallthru
      _
    %p115 = scmp.lt.s32.totalorder %s8, 5
    // Predicated region
    $region13: #{discriminator_forward.11} parent=5 // pred_check
      %p116 = pneg %p115
    $region14: #{discriminator_forward.11} parent=5 // pred_check_branch
      %118 = sbr.rel (%p116) target = $region16
    $region15: #{discriminator_forward.11} parent=5 // pred_region
      // Predicated region
      $region17: #{discriminator_forward.11} parent=15 // pred_check
        %p119 = pneg %p42
      $region18: #{discriminator_forward.11} parent=15 // pred_check_branch
        %121 = sbr.rel (%p119) target = $region20
      $region19: #{discriminator_forward.11} parent=15 // pred_region
        %s122 = smul.u32 16, %s16
        %p123 = scmp.lt.s32.totalorder %s15, 0
        %s124 = scalar_select %p123, %s15, 0
        %p125 = scmp.lt.s32.totalorder %s122, 79
        %s126 = scalar_select %p125, %s122, 79
        %s127 = smul.addr %s124, 80
        %s128 = sadd.s32 %s126, %s127
        %s129 = scalar_lea.vmem %s0, %s128
        %s130 = smul.u32 16, %s16
      $region20: #{discriminator_forward.11} parent=15 // pred_fallthru
        _
      // Predicated region
      $region21: #{discriminator_forward.11} parent=15 // pred_check
        %p131 = pneg %p68
      $region22: #{discriminator_forward.11} parent=15 // pred_check_branch
        %133 = sbr.rel (%p131) target = $region24
      $region23: #{discriminator_forward.11} parent=15 // pred_region
        %s134 = smul.u32 16, %s16
        %p135 = scmp.lt.s32.totalorder %s134, 79
        %s136 = scalar_select %p135, %s134, 79
        %s137 = scalar_lea.vmem %s1, %s136
        %s138 = smul.u32 16, %s16
      $region24: #{discriminator_forward.11} parent=15 // pred_fallthru
        _
    $region16: #{discriminator_forward.11} parent=5 // pred_fallthru
      _
    %p139 = scmp.le.s32.totalorder 1, %s8
    %p140 = scmp.lt.s32.totalorder %s8, 6
    %p141 = pnand %p139, %p140
    %p142 = pneg %p141
    // Predicated region
    $region25: #{discriminator_forward.11} parent=5 // pred_check
      _
    $region26: #{discriminator_forward.11} parent=5 // pred_check_branch
      %144 = sbr.rel (%p141) target = $region28
    $region27: #{discriminator_forward.11} parent=5 // pred_region
      %s145 = ssub.s32 %s8, 1
      %s146 = smul.u32 16, %s18
      %p147 = scmp.lt.s32.totalorder %s17, 0
      %s148 = scalar_select %p147, %s17, 0
      %p149 = scmp.lt.s32.totalorder %s146, 79
      %s150 = scalar_select %p149, %s146, 79
      %s151 = smul.addr %s148, 80
      %s152 = sadd.s32 %s150, %s151
      %s153 = scalar_lea.vmem %s0, %s152
      %p154 = pneg %p48
      %p155 = pneg %p45
      %s156 = smul.u32 16, %s18
      %p157 = scmp.lt.s32.totalorder %s156, 79
      %s158 = scalar_select %p157, %s156, 79
      %s159 = scalar_lea.vmem %s1, %s158
      %p160 = pneg %p74
      %p161 = pneg %p71
      %p162 = pneg %p100
      %p163 = pneg %p97
      %p164 = scmp.lt.s32.totalorder %s17, 0
      %s165 = scalar_select %p164, %s17, 0
      %s166 = smul.addr %s165, 2
      %s167 = scalar_lea.vmem %s2, %s166
      %s168 = smul.u32 16, %s18
      %p169 = scmp.lt.s32.totalorder %s17, 0
      %s170 = scalar_select %p169, %s17, 0
      %p171 = scmp.lt.s32.totalorder %s168, 79
      %s172 = scalar_select %p171, %s168, 79
      %s173 = smul.addr %s170, 80
      %s174 = sadd.s32 %s172, %s173
      %s175 = scalar_lea.vmem %s0, %s174
      %s176 = smul.u32 16, %s18
      %s177 = smul.u32 16, %s18
      %p178 = scmp.lt.s32.totalorder %s177, 79
      %s179 = scalar_select %p178, %s177, 79
      %s180 = scalar_lea.vmem %s1, %s179
      %s181 = smul.u32 16, %s18
      %p182 = scmp.lt.s32.totalorder %s17, 0
      %s183 = scalar_select %p182, %s17, 0
      %s184 = smul.addr %s183, 2
      %s185 = scalar_lea.vmem %s2, %s184
      %p186 = scmp.eq.s32.totalorder %s18, 0
      // Predicated region
      $region29: #{discriminator_forward.11} parent=27 // pred_check
        %p187 = pneg %p186
      $region30: #{discriminator_forward.11} parent=27 // pred_check_branch
        %189 = sbr.rel (%p187) target = $region32
      $region31: #{discriminator_forward.11} parent=27 // pred_region
        %vm190 = vcmask 1024
        %191 = vst.msk [vmem:[#allocation2] sm:$0x3] %vm190, 0.0
      $region32: #{discriminator_forward.11} parent=27 // pred_fallthru
        _
      %v192 = vld [vmem:[%s175] sm:$0xff]
      %v193 = vld [vmem:[%s175 + $0x8] sm:$0xff]
      %v194 = vunpack.c.l.bf16 %v192
      %v195 = vunpack.c.h.bf16 %v192
      %v196 = vunpack.c.l.bf16 %v193
      %v197 = vunpack.c.h.bf16 %v193
      %v198 = vld [vmem:[%s180] sm:$0xff]
      %v199 = vld [vmem:[%s180 + $0x8] sm:$0xff]
      %v200 = vunpack.c.l.bf16 %v198
      %v201 = vunpack.c.h.bf16 %v198
      %v202 = vunpack.c.l.bf16 %v199
      %v203 = vunpack.c.h.bf16 %v199
      %v204 = vld [vmem:[#allocation2] sm:$0x3]
      %v209 = vperm.slane %v200, 0
      %v210 = vperm.slane %v200, 2
      %v211 = vperm.slane %v200, 4
      %v212 = vperm.slane %v200, 6
      %v213 = vperm.slane %v201, 0
      %v214 = vperm.slane %v201, 2
      %v215 = vperm.slane %v201, 4
      %v216 = vperm.slane %v201, 6
      %v217 = vperm.slane %v202, 0
      %v218 = vperm.slane %v202, 2
      %v219 = vperm.slane %v202, 4
      %v220 = vperm.slane %v202, 6
      %v221 = vperm.slane %v203, 0
      %v222 = vperm.slane %v203, 2
      %v223 = vperm.slane %v203, 4
      %v224 = vperm.slane %v203, 6
      %v241 = vperm.slane %v209, 0
      %v242 = vperm.slane %v210, 0
      %v243 = vperm.slane %v211, 0
      %v244 = vperm.slane %v212, 0
      %v245 = vperm.slane %v213, 0
      %v246 = vperm.slane %v214, 0
      %v247 = vperm.slane %v215, 0
      %v248 = vperm.slane %v216, 0
      %v249 = vperm.slane %v217, 0
      %v250 = vperm.slane %v218, 0
      %v251 = vperm.slane %v219, 0
      %v252 = vperm.slane %v220, 0
      %v253 = vperm.slane %v221, 0
      %v254 = vperm.slane %v222, 0
      %v255 = vperm.slane %v223, 0
      %v256 = vperm.slane %v224, 0
      %v273 = vrot.slane %v242, 6
      %v274 = vrot.slane %v243, 4
      %v275 = vrot.slane %v244, 2
      %v276 = vrot.slane %v246, 6
      %v277 = vrot.slane %v247, 4
      %v278 = vrot.slane %v248, 2
      %v279 = vrot.slane %v250, 6
      %v280 = vrot.slane %v251, 4
      %v281 = vrot.slane %v252, 2
      %v282 = vrot.slane %v254, 6
      %v283 = vrot.slane %v255, 4
      %v284 = vrot.slane %v256, 2
      %vm285 = vcmask 1041408
      %v286 = vsel %vm285, %v241, %v273
      %vm287 = vcmask 1045508
      %v288 = vsel %vm287, %v274, %v275
      %vm289 = vcmask 1043456
      %v290 = vsel %vm289, %v286, %v288
      %v291 = vsel %vm285, %v245, %v276
      %v292 = vsel %vm287, %v277, %v278
      %v293 = vsel %vm289, %v291, %v292
      %v294 = vsel %vm285, %v249, %v279
      %v295 = vsel %vm287, %v280, %v281
      %v296 = vsel %vm289, %v294, %v295
      %v297 = vsel %vm285, %v253, %v282
      %v298 = vsel %vm287, %v283, %v284
      %v299 = vsel %vm289, %v297, %v298
      %v304 = vmul.f32 %v194, %v290
      %v305 = vmul.f32 %v195, %v293
      %v306 = vmul.f32 %v196, %v296
      %v307 = vmul.f32 %v197, %v299
      %312 = vst [vmem:[#allocation1] ss:$4 sm:$0xff] %v304
      %s313 = scalar_lea.vmem [#allocation1], 32
      %314 = vst [vmem:[%s313] ss:$4 sm:$0xff] %v305
      %v315 = vld.sshfl [vmem:[#allocation1] sm:$0xff pattern:$0x73625140]
      %v316 = vld.sshfl [vmem:[#allocation1 + $0x8] sm:$0xff pattern:$0x73625140]
      %v317 = vld.sshfl [vmem:[#allocation1 + $0x10] sm:$0xff pattern:$0x73625140]
      %v318 = vld.sshfl [vmem:[#allocation1 + $0x18] sm:$0xff pattern:$0x73625140]
      %v319 = vld.sshfl [vmem:[#allocation1 + $0x20] sm:$0xff pattern:$0x73625140]
      %v320 = vld.sshfl [vmem:[#allocation1 + $0x28] sm:$0xff pattern:$0x73625140]
      %v321 = vld.sshfl [vmem:[#allocation1 + $0x30] sm:$0xff pattern:$0x73625140]
      %v322 = vld.sshfl [vmem:[#allocation1 + $0x38] sm:$0xff pattern:$0x73625140]
      %323 = vst [vmem:[#allocation1] ss:$4 sm:$0xff] %v306
      %324 = vst [vmem:[%s313] ss:$4 sm:$0xff] %v307
      %v325 = vld.sshfl [vmem:[#allocation1] sm:$0xff pattern:$0x73625140]
      %v326 = vld.sshfl [vmem:[#allocation1 + $0x8] sm:$0xff pattern:$0x73625140]
      %v327 = vld.sshfl [vmem:[#allocation1 + $0x10] sm:$0xff pattern:$0x73625140]
      %v328 = vld.sshfl [vmem:[#allocation1 + $0x18] sm:$0xff pattern:$0x73625140]
      %v329 = vld.sshfl [vmem:[#allocation1 + $0x20] sm:$0xff pattern:$0x73625140]
      %v330 = vld.sshfl [vmem:[#allocation1 + $0x28] sm:$0xff pattern:$0x73625140]
      %v331 = vld.sshfl [vmem:[#allocation1 + $0x30] sm:$0xff pattern:$0x73625140]
      %v332 = vld.sshfl [vmem:[#allocation1 + $0x38] sm:$0xff pattern:$0x73625140]
      %v349 = vsel %vm285, %v315, 0.0
      %v350 = vsel %vm285, %v316, 0.0
      %v351 = vadd.f32 %v349, %v350
      %v352 = vsel %vm285, %v317, 0.0
      %v353 = vadd.f32 %v351, %v352
      %v354 = vsel %vm285, %v318, 0.0
      %v355 = vadd.f32 %v353, %v354
      %v356 = vsel %vm285, %v319, 0.0
      %v357 = vadd.f32 %v355, %v356
      %v358 = vsel %vm285, %v320, 0.0
      %v359 = vadd.f32 %v357, %v358
      %v360 = vsel %vm285, %v321, 0.0
      %v361 = vadd.f32 %v359, %v360
      %v362 = vsel %vm285, %v322, 0.0
      %v363 = vadd.f32 %v361, %v362
      %v364 = vsel %vm285, %v325, 0.0
      %v365 = vadd.f32 %v363, %v364
      %v366 = vsel %vm285, %v326, 0.0
      %v367 = vadd.f32 %v365, %v366
      %v368 = vsel %vm285, %v327, 0.0
      %v369 = vadd.f32 %v367, %v368
      %v370 = vsel %vm285, %v328, 0.0
      %v371 = vadd.f32 %v369, %v370
      %v372 = vsel %vm285, %v329, 0.0
      %v373 = vadd.f32 %v371, %v372
      %v374 = vsel %vm285, %v330, 0.0
      %v375 = vadd.f32 %v373, %v374
      %v376 = vsel %vm285, %v331, 0.0
      %v377 = vadd.f32 %v375, %v376
      %v378 = vsel %vm285, %v332, 0.0
      %v379 = vadd.f32 %v377, %v378
      %380 = vadd.xlane.f32.xlu0 %v379
      %v381 = vpop.xlane.xlu0 %380
      %v382 = vadd.f32 %v204, %v381
      %vm383 = vcmask 1024
      %384 = vst.msk [vmem:[#allocation2] sm:$0x3] %vm383, %v382
      %p385 = scmp.eq.s32.totalorder %s18, 4
      // Predicated region
      $region33: #{discriminator_forward.11} parent=27 // pred_check
        %p386 = pneg %p385
      $region34: #{discriminator_forward.11} parent=27 // pred_check_branch
        %388 = sbr.rel (%p386) target = $region36
      $region35: #{discriminator_forward.11} parent=27 // pred_region
        %v389 = vld [vmem:[#allocation2] sm:$0x3]
        %v390 = vxor.u32 %v389, 2147483648
        %v391 = vmul.f32 %v390, 1.442695
        %v392 = vpow.pop %v391
        %v393 = vadd.f32 %v392, 1.0
        %v394 = vrcp.pop %v393
        %v395 = vmul.f32 %v393, %v394
        %v396 = vsub.f32 1.0, %v395
        %v397 = vmul.f32 %v394, %v396
        %v398 = vadd.f32 %v394, %v397
        %vm399 = vweird.f32 %v393
        %vm400 = vweird.f32 %v394
        %vm401 = vmor %vm399, %vm400
        %v402 = vsel %vm401, %v394, %v398
        %v403 = vand.u32 2147483647, %v393
        %vm404 = vcmp.eq.f32.partialorder %v403, 8.507059e+37
        %v405 = vand.u32 %v393, 2147483648
        %v406 = vor.u32 1.1754944e-38, %v405
        %v407 = vsel %vm404, %v406, %v402
        %v408 = vmul.f32 1.0, %v407
        %409 = vst.msk [vmem:[%s185] sm:$0x3] %vm383, %v408
      $region36: #{discriminator_forward.11} parent=27 // pred_fallthru
        _
      %p410 = scmp.lt.s32.totalorder %s17, 0
      %s411 = scalar_select %p410, %s17, 0
      %s412 = smul.addr %s411, 2
      %s413 = scalar_lea.vmem %s2, %s412
      // Predicated region
      $region37: #{discriminator_forward.11} parent=27 // pred_check
        %p414 = pneg %p97
      $region38: #{discriminator_forward.11} parent=27 // pred_check_branch
        %416 = sbr.rel (%p414) target = $region40
      $region39: #{discriminator_forward.11} parent=27 // pred_region
        _
      $region40: #{discriminator_forward.11} parent=27 // pred_fallthru
        _
      // Predicated region
      $region41: #{discriminator_forward.11} parent=27 // pred_check
        %p417 = pneg %p97
      $region42: #{discriminator_forward.11} parent=27 // pred_check_branch
        %419 = sbr.rel (%p417) target = $region44
      $region43: #{discriminator_forward.11} parent=27 // pred_region
        %p420 = scmp.lt.s32.totalorder %s17, 0
        %s421 = scalar_select %p420, %s17, 0
        %s422 = smul.addr %s421, 2
        %s423 = scalar_lea.vmem %s2, %s422
      $region44: #{discriminator_forward.11} parent=27 // pred_fallthru
        _
    $region28: #{discriminator_forward.11} parent=5 // pred_fallthru
      _
    %p424 = scmp.le.s32.totalorder 2, %s8
    // Predicated region
    $region45: #{discriminator_forward.11} parent=5 // pred_check
      %p425 = pneg %p424
    $region46: #{discriminator_forward.11} parent=5 // pred_check_branch
      %427 = sbr.rel (%p425) target = $region48
    $region47: #{discriminator_forward.11} parent=5 // pred_region
      %s428 = ssub.s32 %s8, 2
    $region48: #{discriminator_forward.11} parent=5 // pred_fallthru
      _
  $region6: #{discriminator_forward.11} parent=0 // loop_footer
    %s12 = sadd.s32 1, %s8
  $region7: #{discriminator_forward.11} parent=0 // loop_footer_branch
    %7 = sbr.rel target = $region3
  $region8: #{discriminator_forward.11} parent=0 // loop_exit
    _

// kernel: discriminator_forward.9
$region0: #{discriminator_forward.9}
  #allocation0 [shape = 'u32[]', space=smem, size = 0x4, offset = 0x4, fixed_abs, tag = 'smem constant byte address 0x4 - core index']
  #allocation1 [shape = 'u32[72,128]{1,0:T(1,128)}', space=vmem, size = 0x9000, scoped, tag = 'internal scratch']
  #allocation2 [shape = 'f32[32,256]{1,0:T(8,128)}', space=vmem, size = 0x8000, scoped, tag = 'scratch operand']
  %s0 = inlined_call_operand.vmem [shape: bf16[32,4096], index: 0, kind: input, shape index: {}]
  %s1 = inlined_call_operand.vmem [shape: bf16[4096,512], index: 1, kind: input, shape index: {}]
  %s2 = inlined_call_operand.vmem [shape: f32[1,512], index: 2, kind: input, shape index: {}]
  %s3 = inlined_call_operand.vmem [shape: f32[1,512], index: 3, kind: input, shape index: {}]
  %s4 = inlined_call_operand.vmem [shape: bf16[32,512], index: 4, kind: output, shape index: {}]
  %s5 = sld [smem:[#allocation0]]
  $region152: #{discriminator_forward.9} parent=0
    _
  %s7 = ssub.s32 1, %s5
  %s8 = scalar_select 0, %s7, %s5
  $region1: #{discriminator_forward.9} parent=0
    #allocation3 [shape = 'u8[65536]{0}', space=vmem, size = 0x10000, scoped, tag = 'input window, operand 0']
    #allocation4 [shape = 'u8[524288]{0}', space=vmem, size = 0x80000, scoped, tag = 'input window, operand 1']
    #allocation5 [shape = 'u8[32768]{0}', space=vmem, size = 0x8000, scoped, tag = 'output window, operand 0']
    loop: start=0, step=1, limit=18
    $region2: #{discriminator_forward.9} parent=1 // loop_pre_header
      _
    $region3: #{discriminator_forward.9} parent=1 // loop_header
      %s10 = sphi 0, %s14
      %p11 = scmp.ge.s32.totalorder %s10, 18
      %s17 = sphi 0, %s36
      %s18 = sphi 0, %s32
      %s19 = sphi 0, %s28
      %s20 = sphi 0, %s17
      %s21 = sphi 0, %s18
      %s22 = sphi 0, %s19
      %s23 = sphi 0, %s20
      %s24 = sphi 0, %s21
      %s25 = sphi 0, %s22
      %s41 = sphi 0, %s43
      %s44 = sphi 0, %s41
      %s45 = sphi 0, %s44
      %s61 = sphi 0, %s45
      %s69 = sphi 0, %s71
      %s72 = sphi 0, %s69
      %s73 = sphi 0, %s72
      %s89 = sphi 0, %s73
      %s95 = sphi 0, %s97
      %s98 = sphi 0, %s95
      %s99 = sphi 0, %s98
      %s115 = sphi 0, %s99
      %s121 = sphi 0, %s123
      %s124 = sphi 0, %s121
      %s125 = sphi 0, %s124
      %s141 = sphi 0, %s125
      %s149 = sphi 0, %s151
      %s152 = sphi 0, %s149
      %s153 = sphi 0, %s152
      %s169 = sphi 0, %s153
    $region4: #{discriminator_forward.9} parent=1 // loop_header_branch
      %13 = sbr.rel (%p11) target = $region8
    $region5: #{discriminator_forward.9} parent=1 // loop_body
      %s15 = ssub.s32 %s10, 1
      %s16 = ssub.s32 %s10, 2
      %s26 = sadd.s32 1, %s19
      %p27 = scmp.ge.s32.totalorder %s26, 8
      %s28 = scalar_select %p27, 0, %s26
      %s29 = sadd.s32 1, %s18
      %s30 = scalar_select %p27, %s29, %s18
      %p31 = scmp.ge.s32.totalorder %s30, 2
      %s32 = scalar_select %p31, 0, %s30
      %s33 = sadd.s32 1, %s17
      %s34 = scalar_select %p31, %s33, %s17
      %p35 = scmp.ge.s32.totalorder %s34, 1
      %s36 = scalar_select %p35, 0, %s34
      %s37 = ssub.s32 %s17, %s36
      %s38 = ssub.s32 %s19, %s28
      %s39 = sor.u32 %s37, %s38
      %p40 = scmp.eq.s32.totalorder %s39, 0
      %s42 = sadd.s32 %s41, 1
      %s43 = scalar_select %p40, %s41, %s42
      %p46 = pneg %p40
      %p47 = scmp.eq.s32.totalorder %s10, 15
      %p48 = por %p46, %p47
      %p49 = scmp.ne.s32.totalorder %s41, %s44
      %p50 = scmp.eq.s32.totalorder %s10, 0
      %p51 = por %p49, %p50
      %p52 = scmp.ne.s32.totalorder %s41, %s44
      %p53 = scmp.eq.s32.totalorder %s15, 15
      %p54 = por %p52, %p53
      %p55 = scmp.ne.s32.totalorder %s44, %s45
      %p56 = scmp.eq.s32.totalorder %s15, 0
      %p57 = por %p55, %p56
      %p58 = scmp.ne.s32.totalorder %s44, %s45
      %p59 = scmp.eq.s32.totalorder %s16, 15
      %p60 = por %p58, %p59
      %p62 = scmp.ne.s32.totalorder %s45, %s61
      %p63 = scmp.eq.s32.totalorder %s16, 0
      %p64 = por %p62, %p63
      %s65 = ssub.s32 %s19, %s28
      %s66 = ssub.s32 %s18, %s32
      %s67 = sor.u32 %s65, %s66
      %p68 = scmp.eq.s32.totalorder %s67, 0
      %s70 = sadd.s32 %s69, 1
      %s71 = scalar_select %p68, %s69, %s70
      %p74 = pneg %p68
      %p75 = scmp.eq.s32.totalorder %s10, 15
      %p76 = por %p74, %p75
      %p77 = scmp.ne.s32.totalorder %s69, %s72
      %p78 = scmp.eq.s32.totalorder %s10, 0
      %p79 = por %p77, %p78
      %p80 = scmp.ne.s32.totalorder %s69, %s72
      %p81 = scmp.eq.s32.totalorder %s15, 15
      %p82 = por %p80, %p81
      %p83 = scmp.ne.s32.totalorder %s72, %s73
      %p84 = scmp.eq.s32.totalorder %s15, 0
      %p85 = por %p83, %p84
      %p86 = scmp.ne.s32.totalorder %s72, %s73
      %p87 = scmp.eq.s32.totalorder %s16, 15
      %p88 = por %p86, %p87
      %p90 = scmp.ne.s32.totalorder %s73, %s89
      %p91 = scmp.eq.s32.totalorder %s16, 0
      %p92 = por %p90, %p91
      %s93 = ssub.s32 %s18, %s32
      %p94 = scmp.eq.s32.totalorder %s93, 0
      %s96 = sadd.s32 %s95, 1
      %s97 = scalar_select %p94, %s95, %s96
      %p100 = pneg %p94
      %p101 = scmp.eq.s32.totalorder %s10, 15
      %p102 = por %p100, %p101
      %p103 = scmp.ne.s32.totalorder %s95, %s98
      %p104 = scmp.eq.s32.totalorder %s10, 0
      %p105 = por %p103, %p104
      %p106 = scmp.ne.s32.totalorder %s95, %s98
      %p107 = scmp.eq.s32.totalorder %s15, 15
      %p108 = por %p106, %p107
      %p109 = scmp.ne.s32.totalorder %s98, %s99
      %p110 = scmp.eq.s32.totalorder %s15, 0
      %p111 = por %p109, %p110
      %p112 = scmp.ne.s32.totalorder %s98, %s99
      %p113 = scmp.eq.s32.totalorder %s16, 15
      %p114 = por %p112, %p113
      %p116 = scmp.ne.s32.totalorder %s99, %s115
      %p117 = scmp.eq.s32.totalorder %s16, 0
      %p118 = por %p116, %p117
      %s119 = ssub.s32 %s18, %s32
      %p120 = scmp.eq.s32.totalorder %s119, 0
      %s122 = sadd.s32 %s121, 1
      %s123 = scalar_select %p120, %s121, %s122
      %p126 = pneg %p120
      %p127 = scmp.eq.s32.totalorder %s10, 15
      %p128 = por %p126, %p127
      %p129 = scmp.ne.s32.totalorder %s121, %s124
      %p130 = scmp.eq.s32.totalorder %s10, 0
      %p131 = por %p129, %p130
      %p132 = scmp.ne.s32.totalorder %s121, %s124
      %p133 = scmp.eq.s32.totalorder %s15, 15
      %p134 = por %p132, %p133
      %p135 = scmp.ne.s32.totalorder %s124, %s125
      %p136 = scmp.eq.s32.totalorder %s15, 0
      %p137 = por %p135, %p136
      %p138 = scmp.ne.s32.totalorder %s124, %s125
      %p139 = scmp.eq.s32.totalorder %s16, 15
      %p140 = por %p138, %p139
      %p142 = scmp.ne.s32.totalorder %s125, %s141
      %p143 = scmp.eq.s32.totalorder %s16, 0
      %p144 = por %p142, %p143
      %s145 = ssub.s32 %s17, %s36
      %s146 = ssub.s32 %s18, %s32
      %s147 = sor.u32 %s145, %s146
      %p148 = scmp.eq.s32.totalorder %s147, 0
      %s150 = sadd.s32 %s149, 1
      %s151 = scalar_select %p148, %s149, %s150
      %p154 = pneg %p148
      %p155 = scmp.eq.s32.totalorder %s10, 15
      %p156 = por %p154, %p155
      %p157 = scmp.ne.s32.totalorder %s149, %s152
      %p158 = scmp.eq.s32.totalorder %s10, 0
      %p159 = por %p157, %p158
      %p160 = scmp.ne.s32.totalorder %s149, %s152
      %p161 = scmp.eq.s32.totalorder %s15, 15
      %p162 = por %p160, %p161
      %p163 = scmp.ne.s32.totalorder %s152, %s153
      %p164 = scmp.eq.s32.totalorder %s15, 0
      %p165 = por %p163, %p164
      %p166 = scmp.ne.s32.totalorder %s152, %s153
      %p167 = scmp.eq.s32.totalorder %s16, 15
      %p168 = por %p166, %p167
      %p170 = scmp.ne.s32.totalorder %s153, %s169
      %p171 = scmp.eq.s32.totalorder %s16, 0
      %p172 = por %p170, %p171
      %p173 = scmp.le.s32.totalorder 1, %s10
      %p174 = scmp.lt.s32.totalorder %s10, 17
      %p175 = pnand %p173, %p174
      %p176 = pneg %p175
      // Predicated region
      $region9: #{discriminator_forward.9} parent=5 // pred_check
        _
      $region10: #{discriminator_forward.9} parent=5 // pred_check_branch
        %178 = sbr.rel (%p175) target = $region12
      $region11: #{discriminator_forward.9} parent=5 // pred_region
        %s179 = ssub.s32 %s10, 1
      $region12: #{discriminator_forward.9} parent=5 // pred_fallthru
        _
      %p180 = scmp.lt.s32.totalorder %s10, 16
      // Predicated region
      $region13: #{discriminator_forward.9} parent=5 // pred_check
        %p181 = pneg %p180
      $region14: #{discriminator_forward.9} parent=5 // pred_check_branch
        %183 = sbr.rel (%p181) target = $region16
      $region15: #{discriminator_forward.9} parent=5 // pred_region
        // Predicated region
        $region17: #{discriminator_forward.9} parent=15 // pred_check
          %p184 = pneg %p51
        $region18: #{discriminator_forward.9} parent=15 // pred_check_branch
          %186 = sbr.rel (%p184) target = $region20
        $region19: #{discriminator_forward.9} parent=15 // pred_region
          %s187 = sand.u32 %s41, 1
          %s188 = sand.u32 %s41, 1
          %s189 = smul.addr %s188, 64
          %s190 = scalar_lea.vmem [#allocation3], %s189
          %s191 = smul.u32 4, %s17
          %s192 = smul.u32 4, %s19
          %s193 = smul.addr %s191, 32
          %s194 = sadd.s32 %s192, %s193
          %s195 = smul.addr %s194, 4
          %s196 = scalar_lea.vmem %s0, %s195
          // Predicated region
          $region21: #{discriminator_forward.9} parent=19 // pred_check
            _
          $region22: #{discriminator_forward.9} parent=19 // pred_check_branch
            %198 = sbr.rel (0) target = $region24
          $region23: #{discriminator_forward.9} parent=19 // pred_region
            // Predicated region
            $region25: #{discriminator_forward.9} parent=23 // pred_check
              _
            $region26: #{discriminator_forward.9} parent=23 // pred_check_branch
              %200 = sbr.rel (0) target = $region28
            $region27: #{discriminator_forward.9} parent=23 // pred_region
              loop: start=0, step=1, limit=1
              $region29: #{discriminator_forward.9} parent=27 // loop_pre_header
                _
              $region30: #{discriminator_forward.9} parent=27 // loop_header
                %s202 = sphi 0, %s206
                %p203 = scmp.ge.s32.totalorder %s202, 1
                %s207 = sphi %s196, %s196
                %s208 = sphi %s190, %s190
              $region31: #{discriminator_forward.9} parent=27 // loop_header_branch
                %205 = sbr.rel (%p203) target = $region35
              $region32: #{discriminator_forward.9} parent=27 // loop_body
                %v209 = vld [vmem:[%s207] sm:$0xff]
                %210 = vst [vmem:[%s208] sm:$0xff] %v209
                %v211 = vld [vmem:[%s207 + $0x8] sm:$0xff]
                %212 = vst [vmem:[%s208 + $0x8] sm:$0xff] %v211
                %v213 = vld [vmem:[%s207 + $0x80] sm:$0xff]
                %214 = vst [vmem:[%s208 + $0x10] sm:$0xff] %v213
                %v215 = vld [vmem:[%s207 + $0x88] sm:$0xff]
                %216 = vst [vmem:[%s208 + $0x18] sm:$0xff] %v215
                %v217 = vld [vmem:[%s207 + $0x100] sm:$0xff]
                %218 = vst [vmem:[%s208 + $0x20] sm:$0xff] %v217
                %v219 = vld [vmem:[%s207 + $0x108] sm:$0xff]
                %220 = vst [vmem:[%s208 + $0x28] sm:$0xff] %v219
                %v221 = vld [vmem:[%s207 + $0x180] sm:$0xff]
                %222 = vst [vmem:[%s208 + $0x30] sm:$0xff] %v221
                %v223 = vld [vmem:[%s207 + $0x188] sm:$0xff]
                %224 = vst [vmem:[%s208 + $0x38] sm:$0xff] %v223
              $region33: #{discriminator_forward.9} parent=27 // loop_footer
                %s206 = sadd.s32 1, %s202
              $region34: #{discriminator_forward.9} parent=27 // loop_footer_branch
                %201 = sbr.rel target = $region30
              $region35: #{discriminator_forward.9} parent=27 // loop_exit
                _
            $region28: #{discriminator_forward.9} parent=23 // pred_fallthru
              _
            // Predicated region
            $region36: #{discriminator_forward.9} parent=23 // pred_check
              _
            $region37: #{discriminator_forward.9} parent=23 // pred_check_branch
              %226 = sbr.rel target = $region39
            $region38: #{discriminator_forward.9} parent=23 // pred_region
              _
            $region39: #{discriminator_forward.9} parent=23 // pred_fallthru
              _
          $region24: #{discriminator_forward.9} parent=19 // pred_fallthru
            _
          %227 = vnop
        $region20: #{discriminator_forward.9} parent=15 // pred_fallthru
          _
        // Predicated region
        $region40: #{discriminator_forward.9} parent=15 // pred_check
          %p228 = pneg %p79
        $region41: #{discriminator_forward.9} parent=15 // pred_check_branch
          %230 = sbr.rel (%p228) target = $region43
        $region42: #{discriminator_forward.9} parent=15 // pred_region
          %s231 = sand.u32 %s69, 1
          %s232 = sand.u32 %s69, 1
          %s233 = smul.addr %s232, 512
          %s234 = scalar_lea.vmem [#allocation4], %s233
          %s235 = smul.u32 64, %s19
          %s236 = smul.u32 2, %s18
          %s237 = smul.addr %s235, 4
          %s238 = sadd.s32 %s236, %s237
          %s239 = smul.addr %s238, 4
          %s240 = scalar_lea.vmem %s1, %s239
          // Predicated region
          $region44: #{discriminator_forward.9} parent=42 // pred_check
            _
          $region45: #{discriminator_forward.9} parent=42 // pred_check_branch
            %242 = sbr.rel (0) target = $region47
          $region46: #{discriminator_forward.9} parent=42 // pred_region
            // Predicated region
            $region48: #{discriminator_forward.9} parent=46 // pred_check
              _
            $region49: #{discriminator_forward.9} parent=46 // pred_check_branch
              %244 = sbr.rel (0) target = $region51
            $region50: #{discriminator_forward.9} parent=46 // pred_region
              // Predicated region
              $region63: #{discriminator_forward.9} parent=50 // pred_check
                _
              $region64: #{discriminator_forward.9} parent=50 // pred_check_branch
                %386 = sbr.rel (0) target = $region66
              $region65: #{discriminator_forward.9} parent=50 // pred_region
                loop: start=0, step=1, limit=1
                $region67: #{discriminator_forward.9} parent=65 // loop_pre_header
                  _
                $region68: #{discriminator_forward.9} parent=65 // loop_header
                  %s388 = sphi 0, %s392
                  %p389 = scmp.ge.s32.totalorder %s388, 1
                  %s393 = sphi %s240, %s240
                  %s394 = sphi %s234, %s234
                $region69: #{discriminator_forward.9} parent=65 // loop_header_branch
                  %391 = sbr.rel (%p389) target = $region73
                $region70: #{discriminator_forward.9} parent=65 // loop_body
                  %v395 = vld [vmem:[%s393] sm:$0xff]
                  %396 = vst [vmem:[%s394] sm:$0xff] %v395
                  %v397 = vld [vmem:[%s393 + $0x10] sm:$0xff]
                  %398 = vst [vmem:[%s394 + $0x8] sm:$0xff] %v397
                  %v399 = vld [vmem:[%s393 + $0x20] sm:$0xff]
                  %400 = vst [vmem:[%s394 + $0x10] sm:$0xff] %v399
                  %v401 = vld [vmem:[%s393 + $0x30] sm:$0xff]
                  %402 = vst [vmem:[%s394 + $0x18] sm:$0xff] %v401
                  %v403 = vld [vmem:[%s393 + $0x40] sm:$0xff]
                  %404 = vst [vmem:[%s394 + $0x20] sm:$0xff] %v403
                  %v405 = vld [vmem:[%s393 + $0x50] sm:$0xff]
                  %406 = vst [vmem:[%s394 + $0x28] sm:$0xff] %v405
                  %v407 = vld [vmem:[%s393 + $0x60] sm:$0xff]
                  %408 = vst [vmem:[%s394 + $0x30] sm:$0xff] %v407
                  %v409 = vld [vmem:[%s393 + $0x70] sm:$0xff]
                  %410 = vst [vmem:[%s394 + $0x38] sm:$0xff] %v409
                  %v411 = vld [vmem:[%s393 + $0x80] sm:$0xff]
                  %412 = vst [vmem:[%s394 + $0x40] sm:$0xff] %v411
                  %v413 = vld [vmem:[%s393 + $0x90] sm:$0xff]
                  %414 = vst [vmem:[%s394 + $0x48] sm:$0xff] %v413
                  %v415 = vld [vmem:[%s393 + $0xa0] sm:$0xff]
                  %416 = vst [vmem:[%s394 + $0x50] sm:$0xff] %v415
                  %v417 = vld [vmem:[%s393 + $0xb0] sm:$0xff]
                  %418 = vst [vmem:[%s394 + $0x58] sm:$0xff] %v417
                  %v419 = vld [vmem:[%s393 + $0xc0] sm:$0xff]
                  %420 = vst [vmem:[%s394 + $0x60] sm:$0xff] %v419
                  %v421 = vld [vmem:[%s393 + $0xd0] sm:$0xff]
                  %422 = vst [vmem:[%s394 + $0x68] sm:$0xff] %v421
                  %v423 = vld [vmem:[%s393 + $0xe0] sm:$0xff]
                  %424 = vst [vmem:[%s394 + $0x70] sm:$0xff] %v423
                  %v425 = vld [vmem:[%s393 + $0xf0] sm:$0xff]
                  %426 = vst [vmem:[%s394 + $0x78] sm:$0xff] %v425
                  %v427 = vld [vmem:[%s393 + $0x100] sm:$0xff]
                  %428 = vst [vmem:[%s394 + $0x80] sm:$0xff] %v427
                  %v429 = vld [vmem:[%s393 + $0x110] sm:$0xff]
                  %430 = vst [vmem:[%s394 + $0x88] sm:$0xff] %v429
                  %v431 = vld [vmem:[%s393 + $0x120] sm:$0xff]
                  %432 = vst [vmem:[%s394 + $0x90] sm:$0xff] %v431
                  %v433 = vld [vmem:[%s393 + $0x130] sm:$0xff]
                  %434 = vst [vmem:[%s394 + $0x98] sm:$0xff] %v433
                  %v435 = vld [vmem:[%s393 + $0x140] sm:$0xff]
                  %436 = vst [vmem:[%s394 + $0xa0] sm:$0xff] %v435
                  %v437 = vld [vmem:[%s393 + $0x150] sm:$0xff]
                  %438 = vst [vmem:[%s394 + $0xa8] sm:$0xff] %v437
                  %v439 = vld [vmem:[%s393 + $0x160] sm:$0xff]
                  %440 = vst [vmem:[%s394 + $0xb0] sm:$0xff] %v439
                  %v441 = vld [vmem:[%s393 + $0x170] sm:$0xff]
                  %442 = vst [vmem:[%s394 + $0xb8] sm:$0xff] %v441
                  %v443 = vld [vmem:[%s393 + $0x180] sm:$0xff]
                  %444 = vst [vmem:[%s394 + $0xc0] sm:$0xff] %v443
                  %v445 = vld [vmem:[%s393 + $0x190] sm:$0xff]
                  %446 = vst [vmem:[%s394 + $0xc8] sm:$0xff] %v445
                  %v447 = vld [vmem:[%s393 + $0x1a0] sm:$0xff]
                  %448 = vst [vmem:[%s394 + $0xd0] sm:$0xff] %v447
                  %v449 = vld [vmem:[%s393 + $0x1b0] sm:$0xff]
                  %450 = vst [vmem:[%s394 + $0xd8] sm:$0xff] %v449
                  %v451 = vld [vmem:[%s393 + $0x1c0] sm:$0xff]
                  %452 = vst [vmem:[%s394 + $0xe0] sm:$0xff] %v451
                  %v453 = vld [vmem:[%s393 + $0x1d0] sm:$0xff]
                  %454 = vst [vmem:[%s394 + $0xe8] sm:$0xff] %v453
                  %v455 = vld [vmem:[%s393 + $0x1e0] sm:$0xff]
                  %456 = vst [vmem:[%s394 + $0xf0] sm:$0xff] %v455
                  %v457 = vld [vmem:[%s393 + $0x1f0] sm:$0xff]
                  %458 = vst [vmem:[%s394 + $0xf8] sm:$0xff] %v457
                  %v459 = vld [vmem:[%s393 + $0x200] sm:$0xff]
                  %460 = vst [vmem:[%s394 + $0x100] sm:$0xff] %v459
                  %v461 = vld [vmem:[%s393 + $0x210] sm:$0xff]
                  %462 = vst [vmem:[%s394 + $0x108] sm:$0xff] %v461
                  %v463 = vld [vmem:[%s393 + $0x220] sm:$0xff]
                  %464 = vst [vmem:[%s394 + $0x110] sm:$0xff] %v463
                  %v465 = vld [vmem:[%s393 + $0x230] sm:$0xff]
                  %466 = vst [vmem:[%s394 + $0x118] sm:$0xff] %v465
                  %v467 = vld [vmem:[%s393 + $0x240] sm:$0xff]
                  %468 = vst [vmem:[%s394 + $0x120] sm:$0xff] %v467
                  %v469 = vld [vmem:[%s393 + $0x250] sm:$0xff]
                  %470 = vst [vmem:[%s394 + $0x128] sm:$0xff] %v469
                  %v471 = vld [vmem:[%s393 + $0x260] sm:$0xff]
                  %472 = vst [vmem:[%s394 + $0x130] sm:$0xff] %v471
                  %v473 = vld [vmem:[%s393 + $0x270] sm:$0xff]
                  %474 = vst [vmem:[%s394 + $0x138] sm:$0xff] %v473
                  %v475 = vld [vmem:[%s393 + $0x280] sm:$0xff]
                  %476 = vst [vmem:[%s394 + $0x140] sm:$0xff] %v475
                  %v477 = vld [vmem:[%s393 + $0x290] sm:$0xff]
                  %478 = vst [vmem:[%s394 + $0x148] sm:$0xff] %v477
                  %v479 = vld [vmem:[%s393 + $0x2a0] sm:$0xff]
                  %480 = vst [vmem:[%s394 + $0x150] sm:$0xff] %v479
                  %v481 = vld [vmem:[%s393 + $0x2b0] sm:$0xff]
                  %482 = vst [vmem:[%s394 + $0x158] sm:$0xff] %v481
                  %v483 = vld [vmem:[%s393 + $0x2c0] sm:$0xff]
                  %484 = vst [vmem:[%s394 + $0x160] sm:$0xff] %v483
                  %v485 = vld [vmem:[%s393 + $0x2d0] sm:$0xff]
                  %486 = vst [vmem:[%s394 + $0x168] sm:$0xff] %v485
                  %v487 = vld [vmem:[%s393 + $0x2e0] sm:$0xff]
                  %488 = vst [vmem:[%s394 + $0x170] sm:$0xff] %v487
                  %v489 = vld [vmem:[%s393 + $0x2f0] sm:$0xff]
                  %490 = vst [vmem:[%s394 + $0x178] sm:$0xff] %v489
                  %v491 = vld [vmem:[%s393 + $0x300] sm:$0xff]
                  %492 = vst [vmem:[%s394 + $0x180] sm:$0xff] %v491
                  %v493 = vld [vmem:[%s393 + $0x310] sm:$0xff]
                  %494 = vst [vmem:[%s394 + $0x188] sm:$0xff] %v493
                  %v495 = vld [vmem:[%s393 + $0x320] sm:$0xff]
                  %496 = vst [vmem:[%s394 + $0x190] sm:$0xff] %v495
                  %v497 = vld [vmem:[%s393 + $0x330] sm:$0xff]
                  %498 = vst [vmem:[%s394 + $0x198] sm:$0xff] %v497
                  %v499 = vld [vmem:[%s393 + $0x340] sm:$0xff]
                  %500 = vst [vmem:[%s394 + $0x1a0] sm:$0xff] %v499
                  %v501 = vld [vmem:[%s393 + $0x350] sm:$0xff]
                  %502 = vst [vmem:[%s394 + $0x1a8] sm:$0xff] %v501
                  %v503 = vld [vmem:[%s393 + $0x360] sm:$0xff]
                  %504 = vst [vmem:[%s394 + $0x1b0] sm:$0xff] %v503
                  %v505 = vld [vmem:[%s393 + $0x370] sm:$0xff]
                  %506 = vst [vmem:[%s394 + $0x1b8] sm:$0xff] %v505
                  %v507 = vld [vmem:[%s393 + $0x380] sm:$0xff]
                  %508 = vst [vmem:[%s394 + $0x1c0] sm:$0xff] %v507
                  %v509 = vld [vmem:[%s393 + $0x390] sm:$0xff]
                  %510 = vst [vmem:[%s394 + $0x1c8] sm:$0xff] %v509
                  %v511 = vld [vmem:[%s393 + $0x3a0] sm:$0xff]
                  %512 = vst [vmem:[%s394 + $0x1d0] sm:$0xff] %v511
                  %v513 = vld [vmem:[%s393 + $0x3b0] sm:$0xff]
                  %514 = vst [vmem:[%s394 + $0x1d8] sm:$0xff] %v513
                  %v515 = vld [vmem:[%s393 + $0x3c0] sm:$0xff]
                  %516 = vst [vmem:[%s394 + $0x1e0] sm:$0xff] %v515
                  %v517 = vld [vmem:[%s393 + $0x3d0] sm:$0xff]
                  %518 = vst [vmem:[%s394 + $0x1e8] sm:$0xff] %v517
                  %v519 = vld [vmem:[%s393 + $0x3e0] sm:$0xff]
                  %520 = vst [vmem:[%s394 + $0x1f0] sm:$0xff] %v519
                  %v521 = vld [vmem:[%s393 + $0x3f0] sm:$0xff]
                  %522 = vst [vmem:[%s394 + $0x1f8] sm:$0xff] %v521
                $region71: #{discriminator_forward.9} parent=65 // loop_footer
                  %s392 = sadd.s32 1, %s388
                $region72: #{discriminator_forward.9} parent=65 // loop_footer_branch
                  %387 = sbr.rel target = $region68
                $region73: #{discriminator_forward.9} parent=65 // loop_exit
                  _
              $region66: #{discriminator_forward.9} parent=50 // pred_fallthru
                _
              // Predicated region
              $region74: #{discriminator_forward.9} parent=50 // pred_check
                _
              $region75: #{discriminator_forward.9} parent=50 // pred_check_branch
                %524 = sbr.rel target = $region77
              $region76: #{discriminator_forward.9} parent=50 // pred_region
                _
              $region77: #{discriminator_forward.9} parent=50 // pred_fallthru
                _
            $region51: #{discriminator_forward.9} parent=46 // pred_fallthru
              _
            // Predicated region
            $region52: #{discriminator_forward.9} parent=46 // pred_check
              _
            $region53: #{discriminator_forward.9} parent=46 // pred_check_branch
              %246 = sbr.rel target = $region55
            $region54: #{discriminator_forward.9} parent=46 // pred_region
              %s248 = ssub.s32 256, 1
              loop: start=0, step=1, limit=1
              $region56: #{discriminator_forward.9} parent=54 // loop_pre_header
                _
              $region57: #{discriminator_forward.9} parent=54 // loop_header
                %s250 = sphi 0, %s254
                %p251 = scmp.ge.s32.totalorder %s250, 1
                %s255 = sphi %s240, %s240
                %s256 = sphi %s234, %s234
              $region58: #{discriminator_forward.9} parent=54 // loop_header_branch
                %253 = sbr.rel (%p251) target = $region62
              $region59: #{discriminator_forward.9} parent=54 // loop_body
                %v257 = vld [vmem:[%s255] sm:%s248]
                %258 = vst [vmem:[%s256] sm:%s248] %v257
                %v259 = vld [vmem:[%s255 + $0x10] sm:%s248]
                %260 = vst [vmem:[%s256 + $0x8] sm:%s248] %v259
                %v261 = vld [vmem:[%s255 + $0x20] sm:%s248]
                %262 = vst [vmem:[%s256 + $0x10] sm:%s248] %v261
                %v263 = vld [vmem:[%s255 + $0x30] sm:%s248]
                %264 = vst [vmem:[%s256 + $0x18] sm:%s248] %v263
                %v265 = vld [vmem:[%s255 + $0x40] sm:%s248]
                %266 = vst [vmem:[%s256 + $0x20] sm:%s248] %v265
                %v267 = vld [vmem:[%s255 + $0x50] sm:%s248]
                %268 = vst [vmem:[%s256 + $0x28] sm:%s248] %v267
                %v269 = vld [vmem:[%s255 + $0x60] sm:%s248]
                %270 = vst [vmem:[%s256 + $0x30] sm:%s248] %v269
                %v271 = vld [vmem:[%s255 + $0x70] sm:%s248]
                %272 = vst [vmem:[%s256 + $0x38] sm:%s248] %v271
                %v273 = vld [vmem:[%s255 + $0x80] sm:%s248]
                %274 = vst [vmem:[%s256 + $0x40] sm:%s248] %v273
                %v275 = vld [vmem:[%s255 + $0x90] sm:%s248]
                %276 = vst [vmem:[%s256 + $0x48] sm:%s248] %v275
                %v277 = vld [vmem:[%s255 + $0xa0] sm:%s248]
                %278 = vst [vmem:[%s256 + $0x50] sm:%s248] %v277
                %v279 = vld [vmem:[%s255 + $0xb0] sm:%s248]
                %280 = vst [vmem:[%s256 + $0x58] sm:%s248] %v279
                %v281 = vld [vmem:[%s255 + $0xc0] sm:%s248]
                %282 = vst [vmem:[%s256 + $0x60] sm:%s248] %v281
                %v283 = vld [vmem:[%s255 + $0xd0] sm:%s248]
                %284 = vst [vmem:[%s256 + $0x68] sm:%s248] %v283
                %v285 = vld [vmem:[%s255 + $0xe0] sm:%s248]
                %286 = vst [vmem:[%s256 + $0x70] sm:%s248] %v285
                %v287 = vld [vmem:[%s255 + $0xf0] sm:%s248]
                %288 = vst [vmem:[%s256 + $0x78] sm:%s248] %v287
                %v289 = vld [vmem:[%s255 + $0x100] sm:%s248]
                %290 = vst [vmem:[%s256 + $0x80] sm:%s248] %v289
                %v291 = vld [vmem:[%s255 + $0x110] sm:%s248]
                %292 = vst [vmem:[%s256 + $0x88] sm:%s248] %v291
                %v293 = vld [vmem:[%s255 + $0x120] sm:%s248]
                %294 = vst [vmem:[%s256 + $0x90] sm:%s248] %v293
                %v295 = vld [vmem:[%s255 + $0x130] sm:%s248]
                %296 = vst [vmem:[%s256 + $0x98] sm:%s248] %v295
                %v297 = vld [vmem:[%s255 + $0x140] sm:%s248]
                %298 = vst [vmem:[%s256 + $0xa0] sm:%s248] %v297
                %v299 = vld [vmem:[%s255 + $0x150] sm:%s248]
                %300 = vst [vmem:[%s256 + $0xa8] sm:%s248] %v299
                %v301 = vld [vmem:[%s255 + $0x160] sm:%s248]
                %302 = vst [vmem:[%s256 + $0xb0] sm:%s248] %v301
                %v303 = vld [vmem:[%s255 + $0x170] sm:%s248]
                %304 = vst [vmem:[%s256 + $0xb8] sm:%s248] %v303
                %v305 = vld [vmem:[%s255 + $0x180] sm:%s248]
                %306 = vst [vmem:[%s256 + $0xc0] sm:%s248] %v305
                %v307 = vld [vmem:[%s255 + $0x190] sm:%s248]
                %308 = vst [vmem:[%s256 + $0xc8] sm:%s248] %v307
                %v309 = vld [vmem:[%s255 + $0x1a0] sm:%s248]
                %310 = vst [vmem:[%s256 + $0xd0] sm:%s248] %v309
                %v311 = vld [vmem:[%s255 + $0x1b0] sm:%s248]
                %312 = vst [vmem:[%s256 + $0xd8] sm:%s248] %v311
                %v313 = vld [vmem:[%s255 + $0x1c0] sm:%s248]
                %314 = vst [vmem:[%s256 + $0xe0] sm:%s248] %v313
                %v315 = vld [vmem:[%s255 + $0x1d0] sm:%s248]
                %316 = vst [vmem:[%s256 + $0xe8] sm:%s248] %v315
                %v317 = vld [vmem:[%s255 + $0x1e0] sm:%s248]
                %318 = vst [vmem:[%s256 + $0xf0] sm:%s248] %v317
                %v319 = vld [vmem:[%s255 + $0x1f0] sm:%s248]
                %320 = vst [vmem:[%s256 + $0xf8] sm:%s248] %v319
                %v321 = vld [vmem:[%s255 + $0x200] sm:%s248]
                %322 = vst [vmem:[%s256 + $0x100] sm:%s248] %v321
                %v323 = vld [vmem:[%s255 + $0x210] sm:%s248]
                %324 = vst [vmem:[%s256 + $0x108] sm:%s248] %v323
                %v325 = vld [vmem:[%s255 + $0x220] sm:%s248]
                %326 = vst [vmem:[%s256 + $0x110] sm:%s248] %v325
                %v327 = vld [vmem:[%s255 + $0x230] sm:%s248]
                %328 = vst [vmem:[%s256 + $0x118] sm:%s248] %v327
                %v329 = vld [vmem:[%s255 + $0x240] sm:%s248]
                %330 = vst [vmem:[%s256 + $0x120] sm:%s248] %v329
                %v331 = vld [vmem:[%s255 + $0x250] sm:%s248]
                %332 = vst [vmem:[%s256 + $0x128] sm:%s248] %v331
                %v333 = vld [vmem:[%s255 + $0x260] sm:%s248]
                %334 = vst [vmem:[%s256 + $0x130] sm:%s248] %v333
                %v335 = vld [vmem:[%s255 + $0x270] sm:%s248]
                %336 = vst [vmem:[%s256 + $0x138] sm:%s248] %v335
                %v337 = vld [vmem:[%s255 + $0x280] sm:%s248]
                %338 = vst [vmem:[%s256 + $0x140] sm:%s248] %v337
                %v339 = vld [vmem:[%s255 + $0x290] sm:%s248]
                %340 = vst [vmem:[%s256 + $0x148] sm:%s248] %v339
                %v341 = vld [vmem:[%s255 + $0x2a0] sm:%s248]
                %342 = vst [vmem:[%s256 + $0x150] sm:%s248] %v341
                %v343 = vld [vmem:[%s255 + $0x2b0] sm:%s248]
                %344 = vst [vmem:[%s256 + $0x158] sm:%s248] %v343
                %v345 = vld [vmem:[%s255 + $0x2c0] sm:%s248]
                %346 = vst [vmem:[%s256 + $0x160] sm:%s248] %v345
                %v347 = vld [vmem:[%s255 + $0x2d0] sm:%s248]
                %348 = vst [vmem:[%s256 + $0x168] sm:%s248] %v347
                %v349 = vld [vmem:[%s255 + $0x2e0] sm:%s248]
                %350 = vst [vmem:[%s256 + $0x170] sm:%s248] %v349
                %v351 = vld [vmem:[%s255 + $0x2f0] sm:%s248]
                %352 = vst [vmem:[%s256 + $0x178] sm:%s248] %v351
                %v353 = vld [vmem:[%s255 + $0x300] sm:%s248]
                %354 = vst [vmem:[%s256 + $0x180] sm:%s248] %v353
                %v355 = vld [vmem:[%s255 + $0x310] sm:%s248]
                %356 = vst [vmem:[%s256 + $0x188] sm:%s248] %v355
                %v357 = vld [vmem:[%s255 + $0x320] sm:%s248]
                %358 = vst [vmem:[%s256 + $0x190] sm:%s248] %v357
                %v359 = vld [vmem:[%s255 + $0x330] sm:%s248]
                %360 = vst [vmem:[%s256 + $0x198] sm:%s248] %v359
                %v361 = vld [vmem:[%s255 + $0x340] sm:%s248]
                %362 = vst [vmem:[%s256 + $0x1a0] sm:%s248] %v361
                %v363 = vld [vmem:[%s255 + $0x350] sm:%s248]
                %364 = vst [vmem:[%s256 + $0x1a8] sm:%s248] %v363
                %v365 = vld [vmem:[%s255 + $0x360] sm:%s248]
                %366 = vst [vmem:[%s256 + $0x1b0] sm:%s248] %v365
                %v367 = vld [vmem:[%s255 + $0x370] sm:%s248]
                %368 = vst [vmem:[%s256 + $0x1b8] sm:%s248] %v367
                %v369 = vld [vmem:[%s255 + $0x380] sm:%s248]
                %370 = vst [vmem:[%s256 + $0x1c0] sm:%s248] %v369
                %v371 = vld [vmem:[%s255 + $0x390] sm:%s248]
                %372 = vst [vmem:[%s256 + $0x1c8] sm:%s248] %v371
                %v373 = vld [vmem:[%s255 + $0x3a0] sm:%s248]
                %374 = vst [vmem:[%s256 + $0x1d0] sm:%s248] %v373
                %v375 = vld [vmem:[%s255 + $0x3b0] sm:%s248]
                %376 = vst [vmem:[%s256 + $0x1d8] sm:%s248] %v375
                %v377 = vld [vmem:[%s255 + $0x3c0] sm:%s248]
                %378 = vst [vmem:[%s256 + $0x1e0] sm:%s248] %v377
                %v379 = vld [vmem:[%s255 + $0x3d0] sm:%s248]
                %380 = vst [vmem:[%s256 + $0x1e8] sm:%s248] %v379
                %v381 = vld [vmem:[%s255 + $0x3e0] sm:%s248]
                %382 = vst [vmem:[%s256 + $0x1f0] sm:%s248] %v381
                %v383 = vld [vmem:[%s255 + $0x3f0] sm:%s248]
                %384 = vst [vmem:[%s256 + $0x1f8] sm:%s248] %v383
              $region60: #{discriminator_forward.9} parent=54 // loop_footer
                %s254 = sadd.s32 1, %s250
              $region61: #{discriminator_forward.9} parent=54 // loop_footer_branch
                %249 = sbr.rel target = $region57
              $region62: #{discriminator_forward.9} parent=54 // loop_exit
                _
            $region55: #{discriminator_forward.9} parent=46 // pred_fallthru
              _
          $region47: #{discriminator_forward.9} parent=42 // pred_fallthru
            _
          %525 = vnop
        $region43: #{discriminator_forward.9} parent=15 // pred_fallthru
          _
        // Predicated region
        $region78: #{discriminator_forward.9} parent=15 // pred_check
          %p526 = pneg %p105
        $region79: #{discriminator_forward.9} parent=15 // pred_check_branch
          %528 = sbr.rel (%p526) target = $region81
        $region80: #{discriminator_forward.9} parent=15 // pred_region
          %s529 = smul.u32 2, %s18
          %p530 = scmp.lt.s32.totalorder %s529, 3
          %s531 = scalar_select %p530, %s529, 3
          %s532 = scalar_lea.vmem %s2, %s531
          %s533 = smul.u32 2, %s18
        $region81: #{discriminator_forward.9} parent=15 // pred_fallthru
          _
        // Predicated region
        $region82: #{discriminator_forward.9} parent=15 // pred_check
          %p534 = pneg %p131
        $region83: #{discriminator_forward.9} parent=15 // pred_check_branch
          %536 = sbr.rel (%p534) target = $region85
        $region84: #{discriminator_forward.9} parent=15 // pred_region
          %s537 = smul.u32 2, %s18
          %p538 = scmp.lt.s32.totalorder %s537, 3
          %s539 = scalar_select %p538, %s537, 3
          %s540 = scalar_lea.vmem %s3, %s539
          %s541 = smul.u32 2, %s18
        $region85: #{discriminator_forward.9} parent=15 // pred_fallthru
          _
      $region16: #{discriminator_forward.9} parent=5 // pred_fallthru
        _
      %p542 = scmp.le.s32.totalorder 1, %s10
      %p543 = scmp.lt.s32.totalorder %s10, 17
      %p544 = pnand %p542, %p543
      %p545 = pneg %p544
      // Predicated region
      $region86: #{discriminator_forward.9} parent=5 // pred_check
        _
      $region87: #{discriminator_forward.9} parent=5 // pred_check_branch
        %547 = sbr.rel (%p544) target = $region89
      $region88: #{discriminator_forward.9} parent=5 // pred_region
        %s548 = ssub.s32 %s10, 1
        %s549 = sand.u32 %s44, 1
        %s550 = sand.u32 %s44, 1
        %s551 = smul.addr %s550, 64
        %s552 = scalar_lea.vmem [#allocation3], %s551
        // Predicated region
        $region90: #{discriminator_forward.9} parent=88 // pred_check
          %p553 = pneg %p57
        $region91: #{discriminator_forward.9} parent=88 // pred_check_branch
          %555 = sbr.rel (%p553) target = $region93
        $region92: #{discriminator_forward.9} parent=88 // pred_region
          _
        $region93: #{discriminator_forward.9} parent=88 // pred_fallthru
          _
        %s556 = sand.u32 %s72, 1
        %s557 = sand.u32 %s72, 1
        %s558 = smul.addr %s557, 512
        %s559 = scalar_lea.vmem [#allocation4], %s558
        // Predicated region
        $region94: #{discriminator_forward.9} parent=88 // pred_check
          %p560 = pneg %p85
        $region95: #{discriminator_forward.9} parent=88 // pred_check_branch
          %562 = sbr.rel (%p560) target = $region97
        $region96: #{discriminator_forward.9} parent=88 // pred_region
          _
        $region97: #{discriminator_forward.9} parent=88 // pred_fallthru
          _
        %s563 = sand.u32 %s44, 1
        %s564 = sand.u32 %s44, 1
        %s565 = smul.addr %s564, 64
        %s566 = scalar_lea.vmem [#allocation3], %s565
        %p567 = pneg %p57
        %p568 = pneg %p54
        %s569 = sand.u32 %s72, 1
        %s570 = sand.u32 %s72, 1
        %s571 = smul.addr %s570, 512
        %s572 = scalar_lea.vmem [#allocation4], %s571
        %p573 = pneg %p85
        %p574 = pneg %p82
        %s575 = smul.u32 2, %s21
        %p576 = scmp.lt.s32.totalorder %s575, 3
        %s577 = scalar_select %p576, %s575, 3
        %s578 = scalar_lea.vmem %s2, %s577
        %p579 = pneg %p111
        %p580 = pneg %p108
        %s581 = smul.u32 2, %s21
        %p582 = scmp.lt.s32.totalorder %s581, 3
        %s583 = scalar_select %p582, %s581, 3
        %s584 = scalar_lea.vmem %s3, %s583
        %p585 = pneg %p137
        %p586 = pneg %p134
        %p587 = pneg %p165
        %p588 = pneg %p162
        %s589 = sand.u32 %s152, 1
        %s590 = sand.u32 %s152, 1
        %s591 = smul.addr %s590, 32
        %s592 = scalar_lea.vmem [#allocation5], %s591
        %s593 = smul.u32 4, %s20
        %s594 = smul.u32 4, %s22
        %s595 = smul.u32 64, %s22
        %s596 = smul.u32 2, %s21
        %s597 = smul.u32 2, %s21
        %p598 = scmp.lt.s32.totalorder %s597, 3
        %s599 = scalar_select %p598, %s597, 3
        %s600 = scalar_lea.vmem %s2, %s599
        %s601 = smul.u32 2, %s21
        %s602 = smul.u32 2, %s21
        %p603 = scmp.lt.s32.totalorder %s602, 3
        %s604 = scalar_select %p603, %s602, 3
        %s605 = scalar_lea.vmem %s3, %s604
        %s606 = smul.u32 2, %s21
        %s607 = smul.u32 4, %s20
        %s608 = smul.u32 2, %s21
        %p609 = scmp.eq.s32.totalorder %s22, 0
        // Predicated region
        $region98: #{discriminator_forward.9} parent=88 // pred_check
          %p610 = pneg %p609
        $region99: #{discriminator_forward.9} parent=88 // pred_check_branch
          %612 = sbr.rel (%p610) target = $region101
        $region100: #{discriminator_forward.9} parent=88 // pred_region
          %613 = vst [vmem:[#allocation2] sm:$0xff] 0.0
          %614 = vst [vmem:[#allocation2 + $0x8] sm:$0xff] 0.0
          %615 = vst [vmem:[#allocation2 + $0x10] sm:$0xff] 0.0
          %616 = vst [vmem:[#allocation2 + $0x18] sm:$0xff] 0.0
          %617 = vst [vmem:[#allocation2 + $0x20] sm:$0xff] 0.0
          %618 = vst [vmem:[#allocation2 + $0x28] sm:$0xff] 0.0
          %619 = vst [vmem:[#allocation2 + $0x30] sm:$0xff] 0.0
          %620 = vst [vmem:[#allocation2 + $0x38] sm:$0xff] 0.0
        $region101: #{discriminator_forward.9} parent=88 // pred_fallthru
          _
        %v621 = vld [vmem:[#allocation2] sm:$0xff]
        %v622 = vld [vmem:[#allocation2 + $0x8] sm:$0xff]
        %v623 = vld [vmem:[#allocation2 + $0x10] sm:$0xff]
        %v624 = vld [vmem:[#allocation2 + $0x18] sm:$0xff]
        %v625 = vld [vmem:[#allocation2 + $0x20] sm:$0xff]
        %v626 = vld [vmem:[#allocation2 + $0x28] sm:$0xff]
        %v627 = vld [vmem:[#allocation2 + $0x30] sm:$0xff]
        %v628 = vld [vmem:[#allocation2 + $0x38] sm:$0xff]
        %v629 = vld [vmem:[%s552] sm:$0xff]
        %v630 = vld [vmem:[%s552 + $0x8] sm:$0xff]
        %v631 = vld [vmem:[%s552 + $0x10] sm:$0xff]
        %v632 = vld [vmem:[%s552 + $0x18] sm:$0xff]
        %v633 = vld [vmem:[%s552 + $0x20] sm:$0xff]
        %v634 = vld [vmem:[%s552 + $0x28] sm:$0xff]
        %v635 = vld [vmem:[%s552 + $0x30] sm:$0xff]
        %v636 = vld [vmem:[%s552 + $0x38] sm:$0xff]
        %v637 = vld [vmem:[%s559] sm:$0xff]
        %v638 = vld [vmem:[%s559 + $0x8] sm:$0xff]
        %v639 = vld [vmem:[%s559 + $0x10] sm:$0xff]
        %v640 = vld [vmem:[%s559 + $0x18] sm:$0xff]
        %v641 = vld [vmem:[%s559 + $0x20] sm:$0xff]
        %v642 = vld [vmem:[%s559 + $0x28] sm:$0xff]
        %v643 = vld [vmem:[%s559 + $0x30] sm:$0xff]
        %v644 = vld [vmem:[%s559 + $0x38] sm:$0xff]
        %v645 = vld [vmem:[%s559 + $0x40] sm:$0xff]
        %v646 = vld [vmem:[%s559 + $0x48] sm:$0xff]
        %v647 = vld [vmem:[%s559 + $0x50] sm:$0xff]
        %v648 = vld [vmem:[%s559 + $0x58] sm:$0xff]
        %v649 = vld [vmem:[%s559 + $0x60] sm:$0xff]
        %v650 = vld [vmem:[%s559 + $0x68] sm:$0xff]
        %v651 = vld [vmem:[%s559 + $0x70] sm:$0xff]
        %v652 = vld [vmem:[%s559 + $0x78] sm:$0xff]
        %v653 = vld [vmem:[%s559 + $0x80] sm:$0xff]
        %v654 = vld [vmem:[%s559 + $0x88] sm:$0xff]
        %v655 = vld [vmem:[%s559 + $0x90] sm:$0xff]
        %v656 = vld [vmem:[%s559 + $0x98] sm:$0xff]
        %v657 = vld [vmem:[%s559 + $0xa0] sm:$0xff]
        %v658 = vld [vmem:[%s559 + $0xa8] sm:$0xff]
        %v659 = vld [vmem:[%s559 + $0xb0] sm:$0xff]
        %v660 = vld [vmem:[%s559 + $0xb8] sm:$0xff]
        %v661 = vld [vmem:[%s559 + $0xc0] sm:$0xff]
        %v662 = vld [vmem:[%s559 + $0xc8] sm:$0xff]
        %v663 = vld [vmem:[%s559 + $0xd0] sm:$0xff]
        %v664 = vld [vmem:[%s559 + $0xd8] sm:$0xff]
        %v665 = vld [vmem:[%s559 + $0xe0] sm:$0xff]
        %v666 = vld [vmem:[%s559 + $0xe8] sm:$0xff]
        %v667 = vld [vmem:[%s559 + $0xf0] sm:$0xff]
        %v668 = vld [vmem:[%s559 + $0xf8] sm:$0xff]
        %v669 = vld [vmem:[%s559 + $0x100] sm:$0xff]
        %v670 = vld [vmem:[%s559 + $0x108] sm:$0xff]
        %v671 = vld [vmem:[%s559 + $0x110] sm:$0xff]
        %v672 = vld [vmem:[%s559 + $0x118] sm:$0xff]
        %v673 = vld [vmem:[%s559 + $0x120] sm:$0xff]
        %v674 = vld [vmem:[%s559 + $0x128] sm:$0xff]
        %v675 = vld [vmem:[%s559 + $0x130] sm:$0xff]
        %v676 = vld [vmem:[%s559 + $0x138] sm:$0xff]
        %v677 = vld [vmem:[%s559 + $0x140] sm:$0xff]
        %v678 = vld [vmem:[%s559 + $0x148] sm:$0xff]
        %v679 = vld [vmem:[%s559 + $0x150] sm:$0xff]
        %v680 = vld [vmem:[%s559 + $0x158] sm:$0xff]
        %v681 = vld [vmem:[%s559 + $0x160] sm:$0xff]
        %v682 = vld [vmem:[%s559 + $0x168] sm:$0xff]
        %v683 = vld [vmem:[%s559 + $0x170] sm:$0xff]
        %v684 = vld [vmem:[%s559 + $0x178] sm:$0xff]
        %v685 = vld [vmem:[%s559 + $0x180] sm:$0xff]
        %v686 = vld [vmem:[%s559 + $0x188] sm:$0xff]
        %v687 = vld [vmem:[%s559 + $0x190] sm:$0xff]
        %v688 = vld [vmem:[%s559 + $0x198] sm:$0xff]
        %v689 = vld [vmem:[%s559 + $0x1a0] sm:$0xff]
        %v690 = vld [vmem:[%s559 + $0x1a8] sm:$0xff]
        %v691 = vld [vmem:[%s559 + $0x1b0] sm:$0xff]
        %v692 = vld [vmem:[%s559 + $0x1b8] sm:$0xff]
        %v693 = vld [vmem:[%s559 + $0x1c0] sm:$0xff]
        %v694 = vld [vmem:[%s559 + $0x1c8] sm:$0xff]
        %v695 = vld [vmem:[%s559 + $0x1d0] sm:$0xff]
        %v696 = vld [vmem:[%s559 + $0x1d8] sm:$0xff]
        %v697 = vld [vmem:[%s559 + $0x1e0] sm:$0xff]
        %v698 = vld [vmem:[%s559 + $0x1e8] sm:$0xff]
        %v699 = vld [vmem:[%s559 + $0x1f0] sm:$0xff]
        %v700 = vld [vmem:[%s559 + $0x1f8] sm:$0xff]
        %v709 = vunpack.c.l.b16 %v629
        %v710 = vunpack.c.h.b16 %v629
        %v711 = vunpack.c.l.b16 %v630
        %v712 = vunpack.c.h.b16 %v630
        %v713 = vunpack.c.l.b16 %v631
        %v714 = vunpack.c.h.b16 %v631
        %v715 = vunpack.c.l.b16 %v632
        %v716 = vunpack.c.h.b16 %v632
        %v717 = vunpack.c.l.b16 %v633
        %v718 = vunpack.c.h.b16 %v633
        %v719 = vunpack.c.l.b16 %v634
        %v720 = vunpack.c.h.b16 %v634
        %v721 = vunpack.c.l.b16 %v635
        %v722 = vunpack.c.h.b16 %v635
        %v723 = vunpack.c.l.b16 %v636
        %v724 = vunpack.c.h.b16 %v636
        %v725 = vpack.c.b16 %v713, %v709
        %v726 = vpack.c.b16 %v714, %v710
        %v727 = vpack.c.b16 %v715, %v711
        %v728 = vpack.c.b16 %v716, %v712
        %v729 = vpack.c.b16 %v721, %v717
        %v730 = vpack.c.b16 %v722, %v718
        %v731 = vpack.c.b16 %v723, %v719
        %v732 = vpack.c.b16 %v724, %v720
        %v805 = vunpack.c.l.b16 %v637
        %v806 = vunpack.c.h.b16 %v637
        %v807 = vunpack.c.l.b16 %v638
        %v808 = vunpack.c.h.b16 %v638
        %v809 = vunpack.c.l.b16 %v639
        %v810 = vunpack.c.h.b16 %v639
        %v811 = vunpack.c.l.b16 %v640
        %v812 = vunpack.c.h.b16 %v640
        %v813 = vunpack.c.l.b16 %v641
        %v814 = vunpack.c.h.b16 %v641
        %v815 = vunpack.c.l.b16 %v642
        %v816 = vunpack.c.h.b16 %v642
        %v817 = vunpack.c.l.b16 %v643
        %v818 = vunpack.c.h.b16 %v643
        %v819 = vunpack.c.l.b16 %v644
        %v820 = vunpack.c.h.b16 %v644
        %v821 = vunpack.c.l.b16 %v645
        %v822 = vunpack.c.h.b16 %v645
        %v823 = vunpack.c.l.b16 %v646
        %v824 = vunpack.c.h.b16 %v646
        %v825 = vunpack.c.l.b16 %v647
        %v826 = vunpack.c.h.b16 %v647
        %v827 = vunpack.c.l.b16 %v648
        %v828 = vunpack.c.h.b16 %v648
        %v829 = vunpack.c.l.b16 %v649
        %v830 = vunpack.c.h.b16 %v649
        %v831 = vunpack.c.l.b16 %v650
        %v832 = vunpack.c.h.b16 %v650
        %v833 = vunpack.c.l.b16 %v651
        %v834 = vunpack.c.h.b16 %v651
        %v835 = vunpack.c.l.b16 %v652
        %v836 = vunpack.c.h.b16 %v652
        %v837 = vunpack.c.l.b16 %v653
        %v838 = vunpack.c.h.b16 %v653
        %v839 = vunpack.c.l.b16 %v654
        %v840 = vunpack.c.h.b16 %v654
        %v841 = vunpack.c.l.b16 %v655
        %v842 = vunpack.c.h.b16 %v655
        %v843 = vunpack.c.l.b16 %v656
        %v844 = vunpack.c.h.b16 %v656
        %v845 = vunpack.c.l.b16 %v657
        %v846 = vunpack.c.h.b16 %v657
        %v847 = vunpack.c.l.b16 %v658
        %v848 = vunpack.c.h.b16 %v658
        %v849 = vunpack.c.l.b16 %v659
        %v850 = vunpack.c.h.b16 %v659
        %v851 = vunpack.c.l.b16 %v660
        %v852 = vunpack.c.h.b16 %v660
        %v853 = vunpack.c.l.b16 %v661
        %v854 = vunpack.c.h.b16 %v661
        %v855 = vunpack.c.l.b16 %v662
        %v856 = vunpack.c.h.b16 %v662
        %v857 = vunpack.c.l.b16 %v663
        %v858 = vunpack.c.h.b16 %v663
        %v859 = vunpack.c.l.b16 %v664
        %v860 = vunpack.c.h.b16 %v664
        %v861 = vunpack.c.l.b16 %v665
        %v862 = vunpack.c.h.b16 %v665
        %v863 = vunpack.c.l.b16 %v666
        %v864 = vunpack.c.h.b16 %v666
        %v865 = vunpack.c.l.b16 %v667
        %v866 = vunpack.c.h.b16 %v667
        %v867 = vunpack.c.l.b16 %v668
        %v868 = vunpack.c.h.b16 %v668
        %v869 = vunpack.c.l.b16 %v669
        %v870 = vunpack.c.h.b16 %v669
        %v871 = vunpack.c.l.b16 %v670
        %v872 = vunpack.c.h.b16 %v670
        %v873 = vunpack.c.l.b16 %v671
        %v874 = vunpack.c.h.b16 %v671
        %v875 = vunpack.c.l.b16 %v672
        %v876 = vunpack.c.h.b16 %v672
        %v877 = vunpack.c.l.b16 %v673
        %v878 = vunpack.c.h.b16 %v673
        %v879 = vunpack.c.l.b16 %v674
        %v880 = vunpack.c.h.b16 %v674
        %v881 = vunpack.c.l.b16 %v675
        %v882 = vunpack.c.h.b16 %v675
        %v883 = vunpack.c.l.b16 %v676
        %v884 = vunpack.c.h.b16 %v676
        %v885 = vunpack.c.l.b16 %v677
        %v886 = vunpack.c.h.b16 %v677
        %v887 = vunpack.c.l.b16 %v678
        %v888 = vunpack.c.h.b16 %v678
        %v889 = vunpack.c.l.b16 %v679
        %v890 = vunpack.c.h.b16 %v679
        %v891 = vunpack.c.l.b16 %v680
        %v892 = vunpack.c.h.b16 %v680
        %v893 = vunpack.c.l.b16 %v681
        %v894 = vunpack.c.h.b16 %v681
        %v895 = vunpack.c.l.b16 %v682
        %v896 = vunpack.c.h.b16 %v682
        %v897 = vunpack.c.l.b16 %v683
        %v898 = vunpack.c.h.b16 %v683
        %v899 = vunpack.c.l.b16 %v684
        %v900 = vunpack.c.h.b16 %v684
        %v901 = vunpack.c.l.b16 %v685
        %v902 = vunpack.c.h.b16 %v685
        %v903 = vunpack.c.l.b16 %v686
        %v904 = vunpack.c.h.b16 %v686
        %v905 = vunpack.c.l.b16 %v687
        %v906 = vunpack.c.h.b16 %v687
        %v907 = vunpack.c.l.b16 %v688
        %v908 = vunpack.c.h.b16 %v688
        %v909 = vunpack.c.l.b16 %v689
        %v910 = vunpack.c.h.b16 %v689
        %v911 = vunpack.c.l.b16 %v690
        %v912 = vunpack.c.h.b16 %v690
        %v913 = vunpack.c.l.b16 %v691
        %v914 = vunpack.c.h.b16 %v691
        %v915 = vunpack.c.l.b16 %v692
        %v916 = vunpack.c.h.b16 %v692
        %v917 = vunpack.c.l.b16 %v693
        %v918 = vunpack.c.h.b16 %v693
        %v919 = vunpack.c.l.b16 %v694
        %v920 = vunpack.c.h.b16 %v694
        %v921 = vunpack.c.l.b16 %v695
        %v922 = vunpack.c.h.b16 %v695
        %v923 = vunpack.c.l.b16 %v696
        %v924 = vunpack.c.h.b16 %v696
        %v925 = vunpack.c.l.b16 %v697
        %v926 = vunpack.c.h.b16 %v697
        %v927 = vunpack.c.l.b16 %v698
        %v928 = vunpack.c.h.b16 %v698
        %v929 = vunpack.c.l.b16 %v699
        %v930 = vunpack.c.h.b16 %v699
        %v931 = vunpack.c.l.b16 %v700
        %v932 = vunpack.c.h.b16 %v700
        %v933 = vpack.c.b16 %v807, %v805
        %v934 = vpack.c.b16 %v808, %v806
        %v935 = vpack.c.b16 %v811, %v809
        %v936 = vpack.c.b16 %v812, %v810
        %v937 = vpack.c.b16 %v815, %v813
        %v938 = vpack.c.b16 %v816, %v814
        %v939 = vpack.c.b16 %v819, %v817
        %v940 = vpack.c.b16 %v820, %v818
        %v941 = vpack.c.b16 %v823, %v821
        %v942 = vpack.c.b16 %v824, %v822
        %v943 = vpack.c.b16 %v827, %v825
        %v944 = vpack.c.b16 %v828, %v826
        %v945 = vpack.c.b16 %v831, %v829
        %v946 = vpack.c.b16 %v832, %v830
        %v947 = vpack.c.b16 %v835, %v833
        %v948 = vpack.c.b16 %v836, %v834
        %v949 = vpack.c.b16 %v839, %v837
        %v950 = vpack.c.b16 %v840, %v838
        %v951 = vpack.c.b16 %v843, %v841
        %v952 = vpack.c.b16 %v844, %v842
        %v953 = vpack.c.b16 %v847, %v845
        %v954 = vpack.c.b16 %v848, %v846
        %v955 = vpack.c.b16 %v851, %v849
        %v956 = vpack.c.b16 %v852, %v850
        %v957 = vpack.c.b16 %v855, %v853
        %v958 = vpack.c.b16 %v856, %v854
        %v959 = vpack.c.b16 %v859, %v857
        %v960 = vpack.c.b16 %v860, %v858
        %v961 = vpack.c.b16 %v863, %v861
        %v962 = vpack.c.b16 %v864, %v862
        %v963 = vpack.c.b16 %v867, %v865
        %v964 = vpack.c.b16 %v868, %v866
        %v965 = vpack.c.b16 %v871, %v869
        %v966 = vpack.c.b16 %v872, %v870
        %v967 = vpack.c.b16 %v875, %v873
        %v968 = vpack.c.b16 %v876, %v874
        %v969 = vpack.c.b16 %v879, %v877
        %v970 = vpack.c.b16 %v880, %v878
        %v971 = vpack.c.b16 %v883, %v881
        %v972 = vpack.c.b16 %v884, %v882
        %v973 = vpack.c.b16 %v887, %v885
        %v974 = vpack.c.b16 %v888, %v886
        %v975 = vpack.c.b16 %v891, %v889
        %v976 = vpack.c.b16 %v892, %v890
        %v977 = vpack.c.b16 %v895, %v893
        %v978 = vpack.c.b16 %v896, %v894
        %v979 = vpack.c.b16 %v899, %v897
        %v980 = vpack.c.b16 %v900, %v898
        %v981 = vpack.c.b16 %v903, %v901
        %v982 = vpack.c.b16 %v904, %v902
        %v983 = vpack.c.b16 %v907, %v905
        %v984 = vpack.c.b16 %v908, %v906
        %v985 = vpack.c.b16 %v911, %v909
        %v986 = vpack.c.b16 %v912, %v910
        %v987 = vpack.c.b16 %v915, %v913
        %v988 = vpack.c.b16 %v916, %v914
        %v989 = vpack.c.b16 %v919, %v917
        %v990 = vpack.c.b16 %v920, %v918
        %v991 = vpack.c.b16 %v923, %v921
        %v992 = vpack.c.b16 %v924, %v922
        %v993 = vpack.c.b16 %v927, %v925
        %v994 = vpack.c.b16 %v928, %v926
        %v995 = vpack.c.b16 %v931, %v929
        %v996 = vpack.c.b16 %v932, %v930
        %1061 = vmatpush.bf16.msra.mxu0 %v947
        %1062 = vmatpush.bf16.msra.mxu0 %v945
        %1063 = vmatpush.bf16.msra.mxu0 %v943
        %1064 = vmatpush.bf16.msra.mxu0 %v941
        %1065 = vmatpush.bf16.msra.mxu0 %v939
        %1066 = vmatpush.bf16.msra.mxu0 %v937
        %1067 = vmatpush.bf16.msra.mxu0 %v935
        %1068 = vmatpush.bf16.msra.mxu0 %v933
        %1069 = vmatmul.bf16.gmra.mxu0 %v725
        %v1070 = vpop.f32.mrf.mxu0
        %v1071 = vadd.f32 0.0, %v1070
        %v1072 = vpop.f32.mrf.mxu0
        %v1073 = vadd.f32 0.0, %v1072
        %1074 = vmatmul.bf16.gmra.mxu0 %v729
        %v1075 = vpop.f32.mrf.mxu0
        %v1076 = vadd.f32 0.0, %v1075
        %v1077 = vpop.f32.mrf.mxu0
        %v1078 = vadd.f32 0.0, %v1077
        %1079 = vdwg.mxu0
        %1080 = vmatpush.bf16.msra.mxu0 %v963
        %1081 = vmatpush.bf16.msra.mxu0 %v961
        %1082 = vmatpush.bf16.msra.mxu0 %v959
        %1083 = vmatpush.bf16.msra.mxu0 %v957
        %1084 = vmatpush.bf16.msra.mxu0 %v955
        %1085 = vmatpush.bf16.msra.mxu0 %v953
        %1086 = vmatpush.bf16.msra.mxu0 %v951
        %1087 = vmatpush.bf16.msra.mxu0 %v949
        %1088 = vmatmul.bf16.gmra.mxu0 %v726
        %v1089 = vpop.f32.mrf.mxu0
        %v1090 = vadd.f32 %v1071, %v1089
        %v1091 = vpop.f32.mrf.mxu0
        %v1092 = vadd.f32 %v1073, %v1091
        %1093 = vmatmul.bf16.gmra.mxu0 %v730
        %v1094 = vpop.f32.mrf.mxu0
        %v1095 = vadd.f32 %v1076, %v1094
        %v1096 = vpop.f32.mrf.mxu0
        %v1097 = vadd.f32 %v1078, %v1096
        %1098 = vdwg.mxu0
        %1099 = vmatpush.bf16.msra.mxu0 %v979
        %1100 = vmatpush.bf16.msra.mxu0 %v977
        %1101 = vmatpush.bf16.msra.mxu0 %v975
        %1102 = vmatpush.bf16.msra.mxu0 %v973
        %1103 = vmatpush.bf16.msra.mxu0 %v971
        %1104 = vmatpush.bf16.msra.mxu0 %v969
        %1105 = vmatpush.bf16.msra.mxu0 %v967
        %1106 = vmatpush.bf16.msra.mxu0 %v965
        %1107 = vmatmul.bf16.gmra.mxu0 %v727
        %v1108 = vpop.f32.mrf.mxu0
        %v1109 = vadd.f32 %v1090, %v1108
        %v1110 = vpop.f32.mrf.mxu0
        %v1111 = vadd.f32 %v1092, %v1110
        %1112 = vmatmul.bf16.gmra.mxu0 %v731
        %v1113 = vpop.f32.mrf.mxu0
        %v1114 = vadd.f32 %v1095, %v1113
        %v1115 = vpop.f32.mrf.mxu0
        %v1116 = vadd.f32 %v1097, %v1115
        %1117 = vdwg.mxu0
        %1118 = vmatpush.bf16.msra.mxu0 %v995
        %1119 = vmatpush.bf16.msra.mxu0 %v993
        %1120 = vmatpush.bf16.msra.mxu0 %v991
        %1121 = vmatpush.bf16.msra.mxu0 %v989
        %1122 = vmatpush.bf16.msra.mxu0 %v987
        %1123 = vmatpush.bf16.msra.mxu0 %v985
        %1124 = vmatpush.bf16.msra.mxu0 %v983
        %1125 = vmatpush.bf16.msra.mxu0 %v981
        %1126 = vmatmul.bf16.gmra.mxu0 %v728
        %v1127 = vpop.f32.mrf.mxu0
        %v1128 = vadd.f32 %v1109, %v1127
        %v1129 = vpop.f32.mrf.mxu0
        %v1130 = vadd.f32 %v1111, %v1129
        %1131 = vmatmul.bf16.gmra.mxu0 %v732
        %v1132 = vpop.f32.mrf.mxu0
        %v1133 = vadd.f32 %v1114, %v1132
        %v1134 = vpop.f32.mrf.mxu0
        %v1135 = vadd.f32 %v1116, %v1134
        %1136 = vdwg.mxu0
        %1137 = vmatpush.bf16.msra.mxu0 %v948
        %1138 = vmatpush.bf16.msra.mxu0 %v946
        %1139 = vmatpush.bf16.msra.mxu0 %v944
        %1140 = vmatpush.bf16.msra.mxu0 %v942
        %1141 = vmatpush.bf16.msra.mxu0 %v940
        %1142 = vmatpush.bf16.msra.mxu0 %v938
        %1143 = vmatpush.bf16.msra.mxu0 %v936
        %1144 = vmatpush.bf16.msra.mxu0 %v934
        %1145 = vmatmul.bf16.gmra.mxu0 %v725
        %v1146 = vpop.f32.mrf.mxu0
        %v1147 = vadd.f32 0.0, %v1146
        %v1148 = vpop.f32.mrf.mxu0
        %v1149 = vadd.f32 0.0, %v1148
        %1150 = vmatmul.bf16.gmra.mxu0 %v729
        %v1151 = vpop.f32.mrf.mxu0
        %v1152 = vadd.f32 0.0, %v1151
        %v1153 = vpop.f32.mrf.mxu0
        %v1154 = vadd.f32 0.0, %v1153
        %1155 = vdwg.mxu0
        %1156 = vmatpush.bf16.msra.mxu0 %v964
        %1157 = vmatpush.bf16.msra.mxu0 %v962
        %1158 = vmatpush.bf16.msra.mxu0 %v960
        %1159 = vmatpush.bf16.msra.mxu0 %v958
        %1160 = vmatpush.bf16.msra.mxu0 %v956
        %1161 = vmatpush.bf16.msra.mxu0 %v954
        %1162 = vmatpush.bf16.msra.mxu0 %v952
        %1163 = vmatpush.bf16.msra.mxu0 %v950
        %1164 = vmatmul.bf16.gmra.mxu0 %v726
        %v1165 = vpop.f32.mrf.mxu0
        %v1166 = vadd.f32 %v1147, %v1165
        %v1167 = vpop.f32.mrf.mxu0
        %v1168 = vadd.f32 %v1149, %v1167
        %1169 = vmatmul.bf16.gmra.mxu0 %v730
        %v1170 = vpop.f32.mrf.mxu0
        %v1171 = vadd.f32 %v1152, %v1170
        %v1172 = vpop.f32.mrf.mxu0
        %v1173 = vadd.f32 %v1154, %v1172
        %1174 = vdwg.mxu0
        %1175 = vmatpush.bf16.msra.mxu0 %v980
        %1176 = vmatpush.bf16.msra.mxu0 %v978
        %1177 = vmatpush.bf16.msra.mxu0 %v976
        %1178 = vmatpush.bf16.msra.mxu0 %v974
        %1179 = vmatpush.bf16.msra.mxu0 %v972
        %1180 = vmatpush.bf16.msra.mxu0 %v970
        %1181 = vmatpush.bf16.msra.mxu0 %v968
        %1182 = vmatpush.bf16.msra.mxu0 %v966
        %1183 = vmatmul.bf16.gmra.mxu0 %v727
        %v1184 = vpop.f32.mrf.mxu0
        %v1185 = vadd.f32 %v1166, %v1184
        %v1186 = vpop.f32.mrf.mxu0
        %v1187 = vadd.f32 %v1168, %v1186
        %1188 = vmatmul.bf16.gmra.mxu0 %v731
        %v1189 = vpop.f32.mrf.mxu0
        %v1190 = vadd.f32 %v1171, %v1189
        %v1191 = vpop.f32.mrf.mxu0
        %v1192 = vadd.f32 %v1173, %v1191
        %1193 = vdwg.mxu0
        %1194 = vmatpush.bf16.msra.mxu0 %v996
        %1195 = vmatpush.bf16.msra.mxu0 %v994
        %1196 = vmatpush.bf16.msra.mxu0 %v992
        %1197 = vmatpush.bf16.msra.mxu0 %v990
        %1198 = vmatpush.bf16.msra.mxu0 %v988
        %1199 = vmatpush.bf16.msra.mxu0 %v986
        %1200 = vmatpush.bf16.msra.mxu0 %v984
        %1201 = vmatpush.bf16.msra.mxu0 %v982
        %1202 = vmatmul.bf16.gmra.mxu0 %v728
        %v1203 = vpop.f32.mrf.mxu0
        %v1204 = vadd.f32 %v1185, %v1203
        %v1205 = vpop.f32.mrf.mxu0
        %v1206 = vadd.f32 %v1187, %v1205
        %1207 = vmatmul.bf16.gmra.mxu0 %v732
        %v1208 = vpop.f32.mrf.mxu0
        %v1209 = vadd.f32 %v1190, %v1208
        %v1210 = vpop.f32.mrf.mxu0
        %v1211 = vadd.f32 %v1192, %v1210
        %1212 = vdwg.mxu0
        %v1213 = vadd.f32 %v621, %v1128
        %v1214 = vadd.f32 %v622, %v1204
        %v1215 = vadd.f32 %v623, %v1130
        %v1216 = vadd.f32 %v624, %v1206
        %v1217 = vadd.f32 %v625, %v1133
        %v1218 = vadd.f32 %v626, %v1209
        %v1219 = vadd.f32 %v627, %v1135
        %v1220 = vadd.f32 %v628, %v1211
        %1221 = vst [vmem:[#allocation2] sm:$0xff] %v1213
        %1222 = vst [vmem:[#allocation2 + $0x8] sm:$0xff] %v1214
        %1223 = vst [vmem:[#allocation2 + $0x10] sm:$0xff] %v1215
        %1224 = vst [vmem:[#allocation2 + $0x18] sm:$0xff] %v1216
        %1225 = vst [vmem:[#allocation2 + $0x20] sm:$0xff] %v1217
        %1226 = vst [vmem:[#allocation2 + $0x28] sm:$0xff] %v1218
        %1227 = vst [vmem:[#allocation2 + $0x30] sm:$0xff] %v1219
        %1228 = vst [vmem:[#allocation2 + $0x38] sm:$0xff] %v1220
        %p1229 = scmp.eq.s32.totalorder %s22, 7
        // Predicated region
        $region102: #{discriminator_forward.9} parent=88 // pred_check
          %p1230 = pneg %p1229
        $region103: #{discriminator_forward.9} parent=88 // pred_check_branch
          %1232 = sbr.rel (%p1230) target = $region105
        $region104: #{discriminator_forward.9} parent=88 // pred_region
          %v1233 = vld [vmem:[#allocation2] sm:$0xff]
          %v1234 = vld [vmem:[#allocation2 + $0x8] sm:$0xff]
          %v1235 = vld [vmem:[#allocation2 + $0x10] sm:$0xff]
          %v1236 = vld [vmem:[#allocation2 + $0x18] sm:$0xff]
          %v1237 = vld [vmem:[#allocation2 + $0x20] sm:$0xff]
          %v1238 = vld [vmem:[#allocation2 + $0x28] sm:$0xff]
          %v1239 = vld [vmem:[#allocation2 + $0x30] sm:$0xff]
          %v1240 = vld [vmem:[#allocation2 + $0x38] sm:$0xff]
          %v1241 = vadd.f32 %v1233, %v1235
          %v1242 = vadd.f32 %v1241, %v1237
          %v1243 = vadd.f32 %v1242, %v1239
          %v1244 = vrot.slane %v1243, 4
          %v1245 = vadd.f32 %v1243, %v1244
          %v1246 = vrot.slane %v1245, 2
          %v1247 = vadd.f32 %v1245, %v1246
          %v1248 = vrot.slane %v1247, 1
          %v1249 = vadd.f32 %v1247, %v1248
          %v1250 = vadd.f32 %v1234, %v1236
          %v1251 = vadd.f32 %v1250, %v1238
          %v1252 = vadd.f32 %v1251, %v1240
          %v1253 = vrot.slane %v1252, 4
          %v1254 = vadd.f32 %v1252, %v1253
          %v1255 = vrot.slane %v1254, 2
          %v1256 = vadd.f32 %v1254, %v1255
          %v1257 = vrot.slane %v1256, 1
          %v1258 = vadd.f32 %v1256, %v1257
          %v1259 = vmul.f32 %v1233, %v1233
          %v1260 = vmul.f32 %v1234, %v1234
          %v1261 = vmul.f32 %v1235, %v1235
          %v1262 = vmul.f32 %v1236, %v1236
          %v1263 = vmul.f32 %v1237, %v1237
          %v1264 = vmul.f32 %v1238, %v1238
          %v1265 = vmul.f32 %v1239, %v1239
          %v1266 = vmul.f32 %v1240, %v1240
          %v1267 = vadd.f32 %v1259, %v1261
          %v1268 = vadd.f32 %v1267, %v1263
          %v1269 = vadd.f32 %v1268, %v1265
          %v1270 = vrot.slane %v1269, 4
          %v1271 = vadd.f32 %v1269, %v1270
          %v1272 = vrot.slane %v1271, 2
          %v1273 = vadd.f32 %v1271, %v1272
          %v1274 = vrot.slane %v1273, 1
          %v1275 = vadd.f32 %v1273, %v1274
          %v1276 = vadd.f32 %v1260, %v1262
          %v1277 = vadd.f32 %v1276, %v1264
          %v1278 = vadd.f32 %v1277, %v1266
          %v1279 = vrot.slane %v1278, 4
          %v1280 = vadd.f32 %v1278, %v1279
          %v1281 = vrot.slane %v1280, 2
          %v1282 = vadd.f32 %v1280, %v1281
          %v1283 = vrot.slane %v1282, 1
          %v1284 = vadd.f32 %v1282, %v1283
          %v1285 = vmul.f32 %v1249, 0.03125
          %v1286 = vmul.f32 %v1258, 0.03125
          %v1287 = vmul.f32 %v1275, 0.03125
          %v1288 = vmul.f32 %v1284, 0.03125
          %v1289 = vmul.f32 %v1285, %v1285
          %v1290 = vmul.f32 %v1286, %v1286
          %v1291 = vsub.f32 %v1287, %v1289
          %v1292 = vsub.f32 %v1288, %v1290
          %v1293 = vmax.f32 %v1291, 0.0
          %v1294 = vmax.f32 %v1292, 0.0
          %v1295 = vsub.f32 %v1233, %v1285
          %v1296 = vsub.f32 %v1234, %v1286
          %v1297 = vsub.f32 %v1235, %v1285
          %v1298 = vsub.f32 %v1236, %v1286
          %v1299 = vsub.f32 %v1237, %v1285
          %v1300 = vsub.f32 %v1238, %v1286
          %v1301 = vsub.f32 %v1239, %v1285
          %v1302 = vsub.f32 %v1240, %v1286
          %v1303 = vadd.f32 %v1293, 1e-05
          %v1304 = vadd.f32 %v1294, 1e-05
          %v1305 = vrsqrt.pop %v1303
          %v1306 = vmul.f32 %v1305, %v1303
          %v1307 = vmul.f32 %v1306, %v1305
          %v1308 = vmul.f32 0.5, %v1307
          %v1309 = vsub.f32 1.5, %v1308
          %v1310 = vmul.f32 %v1305, %v1309
          %vm1311 = vweird.f32 %v1303
          %vm1312 = vweird.f32 %v1305
          %vm1313 = vmor %vm1311, %vm1312
          %v1314 = vsel %vm1313, %v1305, %v1310
          %v1315 = vrsqrt.pop %v1304
          %v1316 = vmul.f32 %v1315, %v1304
          %v1317 = vmul.f32 %v1316, %v1315
          %v1318 = vmul.f32 0.5, %v1317
          %v1319 = vsub.f32 1.5, %v1318
          %v1320 = vmul.f32 %v1315, %v1319
          %vm1321 = vweird.f32 %v1304
          %vm1322 = vweird.f32 %v1315
          %vm1323 = vmor %vm1321, %vm1322
          %v1324 = vsel %vm1323, %v1315, %v1320
          %v1325 = vmul.f32 %v1295, %v1314
          %v1326 = vmul.f32 %v1296, %v1324
          %v1327 = vmul.f32 %v1297, %v1314
          %v1328 = vmul.f32 %v1298, %v1324
          %v1329 = vmul.f32 %v1299, %v1314
          %v1330 = vmul.f32 %v1300, %v1324
          %v1331 = vmul.f32 %v1301, %v1314
          %v1332 = vmul.f32 %v1302, %v1324
          %v1333 = vld [vmem:[%s600] sm:$0x3]
          %v1335 = vperm.slane %v1333, 0
          %v1336 = vperm.slane %v1333, 1
          %v1339 = vmul.f32 %v1325, %v1335
          %v1340 = vmul.f32 %v1326, %v1336
          %v1341 = vmul.f32 %v1327, %v1335
          %v1342 = vmul.f32 %v1328, %v1336
          %v1343 = vmul.f32 %v1329, %v1335
          %v1344 = vmul.f32 %v1330, %v1336
          %v1345 = vmul.f32 %v1331, %v1335
          %v1346 = vmul.f32 %v1332, %v1336
          %v1347 = vld [vmem:[%s605] sm:$0x3]
          %v1349 = vperm.slane %v1347, 0
          %v1350 = vperm.slane %v1347, 1
          %v1353 = vadd.f32 %v1339, %v1349
          %v1354 = vadd.f32 %v1340, %v1350
          %v1355 = vadd.f32 %v1341, %v1349
          %v1356 = vadd.f32 %v1342, %v1350
          %v1357 = vadd.f32 %v1343, %v1349
          %v1358 = vadd.f32 %v1344, %v1350
          %v1359 = vadd.f32 %v1345, %v1349
          %v1360 = vadd.f32 %v1346, %v1350
          %vm1361 = vcmp.ge.f32.partialorder %v1353, 0.0
          %vm1362 = vcmp.ge.f32.partialorder %v1354, 0.0
          %vm1363 = vcmp.ge.f32.partialorder %v1355, 0.0
          %vm1364 = vcmp.ge.f32.partialorder %v1356, 0.0
          %vm1365 = vcmp.ge.f32.partialorder %v1357, 0.0
          %vm1366 = vcmp.ge.f32.partialorder %v1358, 0.0
          %vm1367 = vcmp.ge.f32.partialorder %v1359, 0.0
          %vm1368 = vcmp.ge.f32.partialorder %v1360, 0.0
          %v1369 = vmul.f32 %v1353, 0.2
          %v1370 = vmul.f32 %v1354, 0.2
          %v1371 = vmul.f32 %v1355, 0.2
          %v1372 = vmul.f32 %v1356, 0.2
          %v1373 = vmul.f32 %v1357, 0.2
          %v1374 = vmul.f32 %v1358, 0.2
          %v1375 = vmul.f32 %v1359, 0.2
          %v1376 = vmul.f32 %v1360, 0.2
          %v1377 = vsel %vm1361, %v1353, %v1369
          %v1378 = vsel %vm1362, %v1354, %v1370
          %v1379 = vsel %vm1363, %v1355, %v1371
          %v1380 = vsel %vm1364, %v1356, %v1372
          %v1381 = vsel %vm1365, %v1357, %v1373
          %v1382 = vsel %vm1366, %v1358, %v1374
          %v1383 = vsel %vm1367, %v1359, %v1375
          %v1384 = vsel %vm1368, %v1360, %v1376
          %v1385 = vpack.c.bf16 %v1378, %v1377
          %v1386 = vpack.c.bf16 %v1380, %v1379
          %v1387 = vpack.c.bf16 %v1382, %v1381
          %v1388 = vpack.c.bf16 %v1384, %v1383
          %1389 = vst [vmem:[%s592] sm:$0xff] %v1385
          %1390 = vst [vmem:[%s592 + $0x8] sm:$0xff] %v1386
          %1391 = vst [vmem:[%s592 + $0x10] sm:$0xff] %v1387
          %1392 = vst [vmem:[%s592 + $0x18] sm:$0xff] %v1388
        $region105: #{discriminator_forward.9} parent=88 // pred_fallthru
          _
        %s1393 = sand.u32 %s152, 1
        %s1394 = sand.u32 %s152, 1
        %s1395 = smul.addr %s1394, 32
        %s1396 = scalar_lea.vmem [#allocation5], %s1395
        // Predicated region
        $region106: #{discriminator_forward.9} parent=88 // pred_check
          %p1397 = pneg %p162
        $region107: #{discriminator_forward.9} parent=88 // pred_check_branch
          %1399 = sbr.rel (%p1397) target = $region109
        $region108: #{discriminator_forward.9} parent=88 // pred_region
          %s1400 = smul.u32 4, %s20
          %s1401 = smul.u32 2, %s21
          %s1402 = smul.addr %s1400, 4
          %s1403 = sadd.s32 %s1401, %s1402
          %s1404 = smul.addr %s1403, 4
          %s1405 = scalar_lea.vmem %s4, %s1404
          // Predicated region
          $region110: #{discriminator_forward.9} parent=108 // pred_check
            _
          $region111: #{discriminator_forward.9} parent=108 // pred_check_branch
            %1407 = sbr.rel (0) target = $region113
          $region112: #{discriminator_forward.9} parent=108 // pred_region
            // Predicated region
            $region114: #{discriminator_forward.9} parent=112 // pred_check
              _
            $region115: #{discriminator_forward.9} parent=112 // pred_check_branch
              %1409 = sbr.rel (0) target = $region117
            $region116: #{discriminator_forward.9} parent=112 // pred_region
              // Predicated region
              $region129: #{discriminator_forward.9} parent=116 // pred_check
                _
              $region130: #{discriminator_forward.9} parent=116 // pred_check_branch
                %1431 = sbr.rel (0) target = $region132
              $region131: #{discriminator_forward.9} parent=116 // pred_region
                loop: start=0, step=1, limit=1
                $region133: #{discriminator_forward.9} parent=131 // loop_pre_header
                  _
                $region134: #{discriminator_forward.9} parent=131 // loop_header
                  %s1433 = sphi 0, %s1437
                  %p1434 = scmp.ge.s32.totalorder %s1433, 1
                  %s1438 = sphi %s1396, %s1396
                  %s1439 = sphi %s1405, %s1405
                $region135: #{discriminator_forward.9} parent=131 // loop_header_branch
                  %1436 = sbr.rel (%p1434) target = $region139
                $region136: #{discriminator_forward.9} parent=131 // loop_body
                  %v1440 = vld [vmem:[%s1438] sm:$0xff]
                  %1441 = vst [vmem:[%s1439] sm:$0xff] %v1440
                  %v1442 = vld [vmem:[%s1438 + $0x8] sm:$0xff]
                  %1443 = vst [vmem:[%s1439 + $0x10] sm:$0xff] %v1442
                  %v1444 = vld [vmem:[%s1438 + $0x10] sm:$0xff]
                  %1445 = vst [vmem:[%s1439 + $0x20] sm:$0xff] %v1444
                  %v1446 = vld [vmem:[%s1438 + $0x18] sm:$0xff]
                  %1447 = vst [vmem:[%s1439 + $0x30] sm:$0xff] %v1446
                $region137: #{discriminator_forward.9} parent=131 // loop_footer
                  %s1437 = sadd.s32 1, %s1433
                $region138: #{discriminator_forward.9} parent=131 // loop_footer_branch
                  %1432 = sbr.rel target = $region134
                $region139: #{discriminator_forward.9} parent=131 // loop_exit
                  _
              $region132: #{discriminator_forward.9} parent=116 // pred_fallthru
                _
              // Predicated region
              $region140: #{discriminator_forward.9} parent=116 // pred_check
                _
              $region141: #{discriminator_forward.9} parent=116 // pred_check_branch
                %1449 = sbr.rel target = $region143
              $region142: #{discriminator_forward.9} parent=116 // pred_region
                _
              $region143: #{discriminator_forward.9} parent=116 // pred_fallthru
                _
            $region117: #{discriminator_forward.9} parent=112 // pred_fallthru
              _
            // Predicated region
            $region118: #{discriminator_forward.9} parent=112 // pred_check
              _
            $region119: #{discriminator_forward.9} parent=112 // pred_check_branch
              %1411 = sbr.rel target = $region121
            $region120: #{discriminator_forward.9} parent=112 // pred_region
              %s1413 = ssub.s32 256, 1
              loop: start=0, step=1, limit=1
              $region122: #{discriminator_forward.9} parent=120 // loop_pre_header
                _
              $region123: #{discriminator_forward.9} parent=120 // loop_header
                %s1415 = sphi 0, %s1419
                %p1416 = scmp.ge.s32.totalorder %s1415, 1
                %s1420 = sphi %s1396, %s1396
                %s1421 = sphi %s1405, %s1405
              $region124: #{discriminator_forward.9} parent=120 // loop_header_branch
                %1418 = sbr.rel (%p1416) target = $region128
              $region125: #{discriminator_forward.9} parent=120 // loop_body
                %v1422 = vld [vmem:[%s1420] sm:%s1413]
                %1423 = vst [vmem:[%s1421] sm:%s1413] %v1422
                %v1424 = vld [vmem:[%s1420 + $0x8] sm:%s1413]
                %1425 = vst [vmem:[%s1421 + $0x10] sm:%s1413] %v1424
                %v1426 = vld [vmem:[%s1420 + $0x10] sm:%s1413]
                %1427 = vst [vmem:[%s1421 + $0x20] sm:%s1413] %v1426
                %v1428 = vld [vmem:[%s1420 + $0x18] sm:%s1413]
                %1429 = vst [vmem:[%s1421 + $0x30] sm:%s1413] %v1428
              $region126: #{discriminator_forward.9} parent=120 // loop_footer
                %s1419 = sadd.s32 1, %s1415
              $region127: #{discriminator_forward.9} parent=120 // loop_footer_branch
                %1414 = sbr.rel target = $region123
              $region128: #{discriminator_forward.9} parent=120 // loop_exit
                _
            $region121: #{discriminator_forward.9} parent=112 // pred_fallthru
              _
          $region113: #{discriminator_forward.9} parent=108 // pred_fallthru
            _
          %1450 = vnop
        $region109: #{discriminator_forward.9} parent=88 // pred_fallthru
          _
      $region89: #{discriminator_forward.9} parent=5 // pred_fallthru
        _
      %p1451 = scmp.le.s32.totalorder 2, %s10
      // Predicated region
      $region144: #{discriminator_forward.9} parent=5 // pred_check
        %p1452 = pneg %p1451
      $region145: #{discriminator_forward.9} parent=5 // pred_check_branch
        %1454 = sbr.rel (%p1452) target = $region147
      $region146: #{discriminator_forward.9} parent=5 // pred_region
        %s1455 = ssub.s32 %s10, 2
        // Predicated region
        $region148: #{discriminator_forward.9} parent=146 // pred_check
          %p1456 = pneg %p168
        $region149: #{discriminator_forward.9} parent=146 // pred_check_branch
          %1458 = sbr.rel (%p1456) target = $region151
        $region150: #{discriminator_forward.9} parent=146 // pred_region
          %s1459 = sand.u32 %s153, 1
          %s1460 = sand.u32 %s153, 1
          %s1461 = smul.addr %s1460, 32
          %s1462 = scalar_lea.vmem [#allocation5], %s1461
        $region151: #{discriminator_forward.9} parent=146 // pred_fallthru
          _
      $region147: #{discriminator_forward.9} parent=5 // pred_fallthru
        _
    $region6: #{discriminator_forward.9} parent=1 // loop_footer
      %s14 = sadd.s32 1, %s10
    $region7: #{discriminator_forward.9} parent=1 // loop_footer_branch
      %9 = sbr.rel target = $region3
    $region8: #{discriminator_forward.9} parent=1 // loop_exit
      _

</llo_original>
